<compile_context>
chip_gen: v7x
topology: tpu7x:2x2x1
jax: 0.10.0
libtpu: 0.0.40
codegen_flags: <defaults>
</compile_context>

<pallas_src>
import functools

import numpy as np
import jax
import jax.numpy as jnp
from jax import lax
from jax.experimental import pallas as pl
from jax.experimental.pallas import tpu as pltpu

# Model hyper-parameters: structurally identical to the module (nstacks=2, nblocks=1,
# Hourglass depth=4, bottleneck mid = out // 2); channel/joint counts scaled down.
BATCH = 2
CH = 32          # module uses 256
NJOINTS = 8      # module default is 21
SPATIAL = 16     # divisible by 2**DEPTH
NSTACKS = 2
NBLOCKS = 1
DEPTH = 4

# 3x3 taps in PyTorch (kh, kw) order; spatial offsets (oy, ox) = (kh - 1, kw - 1).
_TAPS = tuple((oy, ox) for oy in (-1, 0, 1) for ox in (-1, 0, 1))


# ---------------------------------------------------------------------------
# Pallas kernels
# ---------------------------------------------------------------------------
def _bottleneck_kernel(x_ref, m_ref, w1_ref, b1_ref, w2_ref, b2_ref,
                       w3_ref, b3_ref, s3_ref, o_ref, *, H, W):
    """Whole BottleneckBlock for one image.

    x_ref : (Cin, H*W)   channels on sublanes, flattened spatial on lanes
    m_ref : (9, 1, H*W)  per-tap zero-padding validity masks
    w*/b*/s3 : BN-prefolded conv params (see fold_block)
    o_ref : (Cout, H*W)
    """
    HW = H * W
    x = x_ref[...]

    # conv1 1x1 (+ folded bn1) + relu                                   (mid, HW)
    out1 = jnp.dot(w1_ref[...], x, preferred_element_type=jnp.float32) + b1_ref[...]
    out1 = jnp.maximum(out1, 0.0)
    mid = out1.shape[0]

    # conv2 3x3 / pad=1 (+ folded bn2) + relu: nine shifted taps, all VMEM resident
    # (fused im2col).  A flat lane shift of k = oy*W + ox with zero fill plus a
    # per-tap boundary mask reproduces zero padding exactly.
    acc = None
    for t, (oy, ox) in enumerate(_TAPS):
        if (H == 1 and oy != 0) or (W == 1 and ox != 0):
            continue                               # tap never lands inside the image
        k = oy * W + ox
        if k > 0:
            shifted = jnp.concatenate(
                [out1[:, k:], jnp.zeros((mid, k), jnp.float32)], axis=1)
        elif k < 0:
            shifted = jnp.concatenate(
                [jnp.zeros((mid, -k), jnp.float32), out1[:, :HW + k]], axis=1)
        else:
            shifted = out1
        if oy != 0 or ox != 0:
            shifted = shifted * m_ref[t]           # zero rows/cols that wrapped
        tap = jnp.dot(w2_ref[t], shifted, preferred_element_type=jnp.float32)
        acc = tap if acc is None else acc + tap
    out2 = jnp.maximum(acc + b2_ref[...], 0.0)                           # (mid, HW)

    # conv3 1x1 -> += residual -> bn3 -> relu.  PyTorch adds the residual BEFORE
    # bn3, so with bn3 folded into w3/b3 the residual picks up the bn3 scale s3.
    out3 = jnp.dot(w3_ref[...], out2, preferred_element_type=jnp.float32)
    out3 = out3 + b3_ref[...] + s3_ref[...] * x
    o_ref[...] = jnp.maximum(out3, 0.0).astype(o_ref.dtype)


def _head_kernel(x_ref, whm_ref, bhm_ref, wfc1_ref, wfc2_ref, hfc_ref,
                 hm_ref, fc_ref):
    """hm3d 1x1 conv + sigmoid, then fc = relu(bn(conv1x1(cat(net, hm3d)))).

    The channel concat is replaced by two accumulating dots (wfc1 @ net + wfc2 @ hm),
    so the concatenated tensor is never materialized.
    """
    x = x_ref[...]                                                       # (CH, HW)
    hm = jax.nn.sigmoid(
        jnp.dot(whm_ref[...], x, preferred_element_type=jnp.float32) + bhm_ref[...])
    fc = jnp.dot(wfc1_ref[...], x, preferred_element_type=jnp.float32)
    fc = fc + jnp.dot(wfc2_ref[...], hm, preferred_element_type=jnp.float32)
    fc = jnp.maximum(fc + hfc_ref[...], 0.0)
    hm_ref[...] = hm.astype(hm_ref.dtype)
    fc_ref[...] = fc.astype(fc_ref.dtype)


# ---------------------------------------------------------------------------
# Kernel wrappers
# ---------------------------------------------------------------------------
def _replicated(shape):
    """BlockSpec for an operand loaded whole and shared by every grid step."""
    return pl.BlockSpec(shape, lambda *_: (0,) * len(shape))


def _conv3x3_masks(H, W):
    """(9, 1, H*W) f32 validity masks (zero padding) for the 9 taps."""
    h = np.repeat(np.arange(H), W)
    w = np.tile(np.arange(W), H)
    ms = [((h + oy >= 0) & (h + oy < H) & (w + ox >= 0) & (w + ox < W))
          for oy, ox in _TAPS]
    return jnp.asarray(np.stack(ms)[:, None, :].astype(np.float32))


def bottleneck_block(p, x):
    """One fused BottleneckBlock pallas_call.  x: (N, C, H, W) NCHW."""
    n, c, H, W = x.shape
    HW = H * W
    mid, cout = p["w1"].shape[0], p["w3"].shape[0]
    assert c == cout  # this model only uses in_planes == out_planes (no conv4 branch)
    out = pl.pallas_call(
        functools.partial(_bottleneck_kernel, H=H, W=W),
        out_shape=jax.ShapeDtypeStruct((n, cout, HW), jnp.float32),
        grid=(n,),
        in_specs=[
            pl.BlockSpec((None, c, HW), lambda b: (b, 0, 0)),   # one image per step
            _replicated((9, 1, HW)),                            # 3x3 boundary masks
            _replicated((mid, c)),                              # W1 * s1
            _replicated((mid, 1)),                              # s1*b1 + h1
            _replicated((9, mid, mid)),                         # W2 taps * s2
            _replicated((mid, 1)),                              # s2*b2 + h2
            _replicated((cout, mid)),                           # W3 * s3
            _replicated((cout, 1)),                             # s3*b3 + h3
            _replicated((cout, 1)),                             # s3 (scales residual)
        ],
        out_specs=pl.BlockSpec((None, cout, HW), lambda b: (b, 0, 0)),
        compiler_params=pltpu.CompilerParams(
            dimension_semantics=("parallel",)),                 # batch -> both v7x TCs
    )(x.reshape(n, c, HW), _conv3x3_masks(H, W),
      p["w1"], p["b1"], p["w2"], p["b2"], p["w3"], p["b3"], p["s3"])
    return out.reshape(n, cout, H, W)


def head_block(p, x):
    """Fused hm3d(1x1)+sigmoid and fc = relu(bn(conv1x1(cat(net, hm3d))))."""
    n, c, H, W = x.shape
    HW = H * W
    nj2 = p["whm"].shape[0]
    hm, fc = pl.pallas_call(
        _head_kernel,
        out_shape=(jax.ShapeDtypeStruct((n, nj2, HW), jnp.float32),
                   jax.ShapeDtypeStruct((n, c, HW), jnp.float32)),
        grid=(n,),
        in_specs=[
            pl.BlockSpec((None, c, HW), lambda b: (b, 0, 0)),
            _replicated((nj2, c)),     # hm3d conv weight
            _replicated((nj2, 1)),     # hm3d conv bias
            _replicated((c, c)),       # fc weight (net half)  * s_fc
            _replicated((c, nj2)),     # fc weight (hm3d half) * s_fc
            _replicated((c, 1)),       # fc bn shift
        ],
        out_specs=(pl.BlockSpec((None, nj2, HW), lambda b: (b, 0, 0)),
                   pl.BlockSpec((None, c, HW), lambda b: (b, 0, 0))),
        compiler_params=pltpu.CompilerParams(dimension_semantics=("parallel",)),
    )(x.reshape(n, c, HW), p["whm"], p["bhm"], p["wfc1"], p["wfc2"], p["hfc"])
    return hm.reshape(n, nj2, H, W), fc.reshape(n, c, H, W)


# ---------------------------------------------------------------------------
# Negligible-FLOP layout glue (plain JAX, NCHW)
# ---------------------------------------------------------------------------
def maxpool2(x):                      # F.max_pool2d(x, 2, stride=2)
    n, c, h, w = x.shape
    return jnp.max(x.reshape(n, c, h // 2, 2, w // 2, 2), axis=(3, 5))


def upsample2(x):                     # F.interpolate(scale_factor=2), mode='nearest'
    n, c, h, w = x.shape
    return jnp.broadcast_to(x[:, :, :, None, :, None],
                            (n, c, h, 2, w, 2)).reshape(n, c, 2 * h, 2 * w)


# ---------------------------------------------------------------------------
# Parameter init (raw PyTorch-style OIHW + BN affine) and host-side BN folding
# ---------------------------------------------------------------------------
def make_keygen(key):
    counter = [0]

    def kg():
        counter[0] += 1
        return jax.random.fold_in(key, counter[0])

    return kg


def _rand(kg, shape, scl):
    return jax.random.normal(kg(), shape, jnp.float32) * scl


def _bn(kg, c):
    # BatchNorm2d in eval mode == per-channel affine y = s*x + h.
    return 1.0 + _rand(kg, (c,), 0.1), _rand(kg, (c,), 0.1)


def init_block_raw(kg, cin, cout):
    mid = cout // 2 if cout >= cin else cin // 2
    r = {}
    r["w1"], r["b1"] = _rand(kg, (mid, cin, 1, 1), 0.08), _rand(kg, (mid,), 0.01)
    r["s1"], r["h1"] = _bn(kg, mid)
    r["w2"], r["b2"] = _rand(kg, (mid, mid, 3, 3), 0.05), _rand(kg, (mid,), 0.01)
    r["s2"], r["h2"] = _bn(kg, mid)
    r["w3"], r["b3"] = _rand(kg, (cout, mid, 1, 1), 0.08), _rand(kg, (cout,), 0.01)
    r["s3"], r["h3"] = _bn(kg, cout)
    return r


def init_head_raw(kg, ch, njoints):
    r = {}
    r["whm"] = _rand(kg, (2 * njoints, ch, 1, 1), 0.08)
    r["bhm"] = _rand(kg, (2 * njoints,), 0.01)
    r["wfc"] = _rand(kg, (ch, ch + 2 * njoints, 1, 1), 0.08)   # fc conv, bias=False
    r["sfc"], r["hfc"] = _bn(kg, ch)
    return r


def init_params_raw(key):
    kg = make_keygen(key)
    raw = {"hg": [], "res": [], "head": []}
    for _ in range(NSTACKS):
        hg = []
        for i in range(DEPTH):
            res = [[init_block_raw(kg, CH, CH) for _ in range(NBLOCKS)]
                   for _ in range(3)]
            if i == 0:
                res.append([init_block_raw(kg, CH, CH) for _ in range(NBLOCKS)])
            hg.append(res)
        raw["hg"].append(hg)
        raw["res"].append([init_block_raw(kg, CH, CH) for _ in range(NBLOCKS)])
        raw["head"].append(init_head_raw(kg, CH, NJOINTS))
    return raw


def fold_block(r):
    """Fold eval-mode BatchNorm into the conv weights/biases (one-time, host side).
    Weight layout is (out, in) so the kernel computes W @ X with X = (C, H*W)."""
    p = {}
    p["w1"] = r["w1"][:, :, 0, 0] * r["s1"][:, None]
    p["b1"] = (r["s1"] * r["b1"] + r["h1"])[:, None]
    # 3x3 taps stacked in PyTorch (kh, kw) order, matching _TAPS offsets.
    w2 = jnp.stack([r["w2"][:, :, kh, kw] for kh in range(3) for kw in range(3)])
    p["w2"] = w2 * r["s2"][None, :, None]
    p["b2"] = (r["s2"] * r["b2"] + r["h2"])[:, None]
    p["w3"] = r["w3"][:, :, 0, 0] * r["s3"][:, None]
    p["b3"] = (r["s3"] * r["b3"] + r["h3"])[:, None]
    p["s3"] = r["s3"][:, None]          # residual is added BEFORE bn3 in PyTorch
    return p


def fold_head(r, ch):
    p = {}
    p["whm"] = r["whm"][:, :, 0, 0]
    p["bhm"] = r["bhm"][:, None]
    wfc = r["wfc"][:, :, 0, 0] * r["sfc"][:, None]
    p["wfc1"] = wfc[:, :ch]             # applies to net  (replaces channel concat)
    p["wfc2"] = wfc[:, ch:]             # applies to hm3d
    p["hfc"] = r["hfc"][:, None]
    return p


def fold_params(raw):
    return {
        "hg": [[[ [fold_block(b) for b in seq] for seq in level] for level in hg]
               for hg in raw["hg"]],
        "res": [[fold_block(b) for b in seq] for seq in raw["res"]],
        "head": [fold_head(r, CH) for r in raw["head"]],
    }


# ---------------------------------------------------------------------------
# Forward pass (mirrors the PyTorch module structure)
# ---------------------------------------------------------------------------
def apply_res(seq, x):
    for p in seq:
        x = bottleneck_block(p, x)
    return x


def hourglass_forward(hg, n, x):
    up1 = apply_res(hg[n - 1][0], x)
    low1 = maxpool2(x)
    low1 = apply_res(hg[n - 1][1], low1)
    if n > 1:
        low2 = hourglass_forward(hg, n - 1, low1)
    else:
        low2 = apply_res(hg[n - 1][3], low1)
    low3 = apply_res(hg[n - 1][2], low2)
    return up1 + upsample2(low3)


def hand2d_to_3d_forward(params, enc):
    """enc: (N, C, H, W) NCHW, exactly like the PyTorch module."""
    l_est_hm3d, l_enc3d = [], []
    net = enc
    for i in range(NSTACKS):
        net = hourglass_forward(params["hg"][i], DEPTH, net)
        net = apply_res(params["res"][i], net)
        hm3d, net = head_block(params["head"][i], net)
        l_est_hm3d.append(hm3d)
        l_enc3d.append(net)
    return l_est_hm3d, l_enc3d


# ---------------------------------------------------------------------------
# Pure-JAX/XLA reference of the original (unfused) module, from RAW params
# ---------------------------------------------------------------------------
def _conv_ref(x, w, b=None, padding="VALID"):
    y = lax.conv_general_dilated(
        x, w, window_strides=(1, 1), padding=padding,
        dimension_numbers=("NCHW", "OIHW", "NCHW"),
        precision=lax.Precision.HIGHEST)
    if b is not None:
        y = y + b[None, :, None, None]
    return y


def _bn_ref(x, s, h):
    return x * s[None, :, None, None] + h[None, :, None, None]


def ref_block(r, x):
    out = jax.nn.relu(_bn_ref(_conv_ref(x, r["w1"], r["b1"]), r["s1"], r["h1"]))
    out = jax.nn.relu(_bn_ref(_conv_ref(out, r["w2"], r["b2"], "SAME"),
                              r["s2"], r["h2"]))
    out = _conv_ref(out, r["w3"], r["b3"]) + x
    return jax.nn.relu(_bn_ref(out, r["s3"], r["h3"]))


def ref_res(seq, x):
    for r in seq:
        x = ref_block(r, x)
    return x


def ref_hourglass(hg, n, x):
    up1 = ref_res(hg[n - 1][0], x)
    low1 = maxpool2(x)
    low1 = ref_res(hg[n - 1][1], low1)
    low2 = ref_hourglass(hg, n - 1, low1) if n > 1 else ref_res(hg[n - 1][3], low1)
    low3 = ref_res(hg[n - 1][2], low2)
    return up1 + upsample2(low3)


def ref_forward(raw, enc):
    l_hm, l_enc = [], []
    net = enc
    for i in range(NSTACKS):
        net = ref_hourglass(raw["hg"][i], DEPTH, net)
        net = ref_res(raw["res"][i], net)
        r = raw["head"][i]
        hm = jax.nn.sigmoid(_conv_ref(net, r["whm"], r["bhm"]))
        net = jnp.concatenate([net, hm], axis=1)
        net = jax.nn.relu(_bn_ref(_conv_ref(net, r["wfc"]), r["sfc"], r["hfc"]))
        l_hm.append(hm)
        l_enc.append(net)
    return l_hm, l_enc


# ---------------------------------------------------------------------------
if __name__ == "__main__":
    key = jax.random.PRNGKey(0)
    raw = init_params_raw(key)
    params = fold_params(raw)            # one-time host-side BN folding
    enc = jax.random.normal(jax.random.fold_in(key, 12345),
                            (BATCH, CH, SPATIAL, SPATIAL), jnp.float32)

    fwd = jax.jit(hand2d_to_3d_forward)
    l_hm3d, l_enc3d = fwd(params, enc)
    jax.block_until_ready((l_hm3d, l_enc3d))

    assert len(l_hm3d) == NSTACKS and len(l_enc3d) == NSTACKS
    assert l_hm3d[0].shape == (BATCH, 2 * NJOINTS, SPATIAL, SPATIAL)
    assert l_enc3d[0].shape == (BATCH, CH, SPATIAL, SPATIAL)

    # Numerical check against the unfused pure-JAX reference of the PyTorch module.
    r_hm3d, r_enc3d = jax.jit(ref_forward)(raw, enc)
    for got, want in zip(list(l_hm3d) + list(l_enc3d), list(r_hm3d) + list(r_enc3d)):
        err = float(jnp.max(jnp.abs(got - want)))
        assert err < 5e-2, f"Pallas vs reference mismatch: max abs err = {err}"

    print("KERNEL_OK")
</pallas_src>

<mosaic_0001>
module attributes {stable_mosaic.version = 11 : i64} {
  func.func @_bottleneck_kernel(%arg0: i32, %arg1: memref<1x32x64xf32, #tpu.memory_space<vmem>>, %arg2: memref<9x1x64xf32, #tpu.memory_space<vmem>>, %arg3: memref<16x32xf32, #tpu.memory_space<vmem>>, %arg4: memref<16x1xf32, #tpu.memory_space<vmem>>, %arg5: memref<9x16x16xf32, #tpu.memory_space<vmem>>, %arg6: memref<16x1xf32, #tpu.memory_space<vmem>>, %arg7: memref<32x16xf32, #tpu.memory_space<vmem>>, %arg8: memref<32x1xf32, #tpu.memory_space<vmem>>, %arg9: memref<32x1xf32, #tpu.memory_space<vmem>>, %arg10: memref<1x32x64xf32, #tpu.memory_space<vmem>>) attributes {dimension_semantics = [#tpu.dimension_semantics<parallel>], iteration_bounds = array<i64: 2>, scalar_prefetch = 0 : i64, scratch_operands = 0 : i64, tpu.core_type = #tpu.core_type<tc>, window_params = [{transform_indices = @transform_0, window_bounds = array<i64: 1, 32, 64>}, {pipeline_mode = #tpu.pipeline_mode<synchronous>, transform_indices = @transform_1, window_bounds = array<i64: 9, 1, 64>}, {pipeline_mode = #tpu.pipeline_mode<synchronous>, transform_indices = @transform_2, window_bounds = array<i64: 16, 32>}, {pipeline_mode = #tpu.pipeline_mode<synchronous>, transform_indices = @transform_3, window_bounds = array<i64: 16, 1>}, {pipeline_mode = #tpu.pipeline_mode<synchronous>, transform_indices = @transform_4, window_bounds = array<i64: 9, 16, 16>}, {pipeline_mode = #tpu.pipeline_mode<synchronous>, transform_indices = @transform_5, window_bounds = array<i64: 16, 1>}, {pipeline_mode = #tpu.pipeline_mode<synchronous>, transform_indices = @transform_6, window_bounds = array<i64: 32, 16>}, {pipeline_mode = #tpu.pipeline_mode<synchronous>, transform_indices = @transform_7, window_bounds = array<i64: 32, 1>}, {pipeline_mode = #tpu.pipeline_mode<synchronous>, transform_indices = @transform_8, window_bounds = array<i64: 32, 1>}, {transform_indices = @transform_9, window_bounds = array<i64: 1, 32, 64>}]} {
    %c0 = arith.constant 0 : index
    %c0_0 = arith.constant 0 : index
    %c0_1 = arith.constant 0 : index
    %0 = vector.load %arg1[%c0, %c0_0, %c0_1] : memref<1x32x64xf32, #tpu.memory_space<vmem>>, vector<1x32x64xf32>
    %1 = vector.shape_cast %0 : vector<1x32x64xf32> to vector<32x64xf32>
    %c0_2 = arith.constant 0 : index
    %c0_3 = arith.constant 0 : index
    %2 = vector.load %arg3[%c0_2, %c0_3] : memref<16x32xf32, #tpu.memory_space<vmem>>, vector<16x32xf32>
    %cst = arith.constant dense<0.000000e+00> : vector<16x64xf32>
    %3 = tpu.matmul %2, %1, %cst {dimension_numbers = #tpu.dot_dimension_numbers<[1], [0], [0], [1], [0, 0, 1, 1], [], []>} : vector<16x32xf32>, vector<32x64xf32>, vector<16x64xf32> -> vector<16x64xf32>
    %c0_4 = arith.constant 0 : index
    %c0_5 = arith.constant 0 : index
    %4 = vector.load %arg4[%c0_4, %c0_5] : memref<16x1xf32, #tpu.memory_space<vmem>>, vector<16x1xf32>
    %5 = vector.broadcast %4 : vector<16x1xf32> to vector<16x64xf32>
    %6 = arith.addf %3, %5 : vector<16x64xf32>
    %cst_6 = arith.constant 0.000000e+00 : f32
    %7 = vector.broadcast %cst_6 : f32 to vector<16x64xf32>
    %8 = arith.maximumf %6, %7 : vector<16x64xf32>
    %cst_7 = arith.constant 0.000000e+00 : f32
    %9 = vector.broadcast %cst_7 : f32 to vector<16x9xf32>
    %10 = vector.extract_strided_slice %8 {offsets = [0, 0], sizes = [16, 55], strides = [1, 1]} : vector<16x64xf32> to vector<16x55xf32>
    %11 = tpu.concatenate %9, %10 in 1 : vector<16x9xf32>, vector<16x55xf32> -> vector<16x64xf32>
    %c0_8 = arith.constant 0 : index
    %c0_9 = arith.constant 0 : index
    %c0_10 = arith.constant 0 : index
    %12 = vector.load %arg2[%c0_8, %c0_9, %c0_10] : memref<9x1x64xf32, #tpu.memory_space<vmem>>, vector<1x1x64xf32>
    %13 = vector.shape_cast %12 : vector<1x1x64xf32> to vector<1x64xf32>
    %14 = vector.broadcast %13 : vector<1x64xf32> to vector<16x64xf32>
    %15 = arith.mulf %11, %14 : vector<16x64xf32>
    %c0_11 = arith.constant 0 : index
    %c0_12 = arith.constant 0 : index
    %c0_13 = arith.constant 0 : index
    %16 = vector.load %arg5[%c0_11, %c0_12, %c0_13] : memref<9x16x16xf32, #tpu.memory_space<vmem>>, vector<1x16x16xf32>
    %17 = vector.shape_cast %16 : vector<1x16x16xf32> to vector<16x16xf32>
    %cst_14 = arith.constant dense<0.000000e+00> : vector<16x64xf32>
    %18 = tpu.matmul %17, %15, %cst_14 {dimension_numbers = #tpu.dot_dimension_numbers<[1], [0], [0], [1], [0, 0, 1, 1], [], []>} : vector<16x16xf32>, vector<16x64xf32>, vector<16x64xf32> -> vector<16x64xf32>
    %cst_15 = arith.constant 0.000000e+00 : f32
    %19 = vector.broadcast %cst_15 : f32 to vector<16x8xf32>
    %20 = vector.extract_strided_slice %8 {offsets = [0, 0], sizes = [16, 56], strides = [1, 1]} : vector<16x64xf32> to vector<16x56xf32>
    %21 = tpu.concatenate %19, %20 in 1 : vector<16x8xf32>, vector<16x56xf32> -> vector<16x64xf32>
    %c1 = arith.constant 1 : index
    %c0_16 = arith.constant 0 : index
    %c0_17 = arith.constant 0 : index
    %22 = vector.load %arg2[%c1, %c0_16, %c0_17] : memref<9x1x64xf32, #tpu.memory_space<vmem>>, vector<1x1x64xf32>
    %23 = vector.shape_cast %22 : vector<1x1x64xf32> to vector<1x64xf32>
    %24 = vector.broadcast %23 : vector<1x64xf32> to vector<16x64xf32>
    %25 = arith.mulf %21, %24 : vector<16x64xf32>
    %c1_18 = arith.constant 1 : index
    %c0_19 = arith.constant 0 : index
    %c0_20 = arith.constant 0 : index
    %26 = vector.load %arg5[%c1_18, %c0_19, %c0_20] : memref<9x16x16xf32, #tpu.memory_space<vmem>>, vector<1x16x16xf32>
    %27 = vector.shape_cast %26 : vector<1x16x16xf32> to vector<16x16xf32>
    %cst_21 = arith.constant dense<0.000000e+00> : vector<16x64xf32>
    %28 = tpu.matmul %27, %25, %cst_21 {dimension_numbers = #tpu.dot_dimension_numbers<[1], [0], [0], [1], [0, 0, 1, 1], [], []>} : vector<16x16xf32>, vector<16x64xf32>, vector<16x64xf32> -> vector<16x64xf32>
    %29 = arith.addf %18, %28 : vector<16x64xf32>
    %cst_22 = arith.constant 0.000000e+00 : f32
    %30 = vector.broadcast %cst_22 : f32 to vector<16x7xf32>
    %31 = vector.extract_strided_slice %8 {offsets = [0, 0], sizes = [16, 57], strides = [1, 1]} : vector<16x64xf32> to vector<16x57xf32>
    %32 = tpu.concatenate %30, %31 in 1 : vector<16x7xf32>, vector<16x57xf32> -> vector<16x64xf32>
    %c2 = arith.constant 2 : index
    %c0_23 = arith.constant 0 : index
    %c0_24 = arith.constant 0 : index
    %33 = vector.load %arg2[%c2, %c0_23, %c0_24] : memref<9x1x64xf32, #tpu.memory_space<vmem>>, vector<1x1x64xf32>
    %34 = vector.shape_cast %33 : vector<1x1x64xf32> to vector<1x64xf32>
    %35 = vector.broadcast %34 : vector<1x64xf32> to vector<16x64xf32>
    %36 = arith.mulf %32, %35 : vector<16x64xf32>
    %c2_25 = arith.constant 2 : index
    %c0_26 = arith.constant 0 : index
    %c0_27 = arith.constant 0 : index
    %37 = vector.load %arg5[%c2_25, %c0_26, %c0_27] : memref<9x16x16xf32, #tpu.memory_space<vmem>>, vector<1x16x16xf32>
    %38 = vector.shape_cast %37 : vector<1x16x16xf32> to vector<16x16xf32>
    %cst_28 = arith.constant dense<0.000000e+00> : vector<16x64xf32>
    %39 = tpu.matmul %38, %36, %cst_28 {dimension_numbers = #tpu.dot_dimension_numbers<[1], [0], [0], [1], [0, 0, 1, 1], [], []>} : vector<16x16xf32>, vector<16x64xf32>, vector<16x64xf32> -> vector<16x64xf32>
    %40 = arith.addf %29, %39 : vector<16x64xf32>
    %cst_29 = arith.constant 0.000000e+00 : f32
    %41 = vector.broadcast %cst_29 : f32 to vector<16x1xf32>
    %42 = vector.extract_strided_slice %8 {offsets = [0, 0], sizes = [16, 63], strides = [1, 1]} : vector<16x64xf32> to vector<16x63xf32>
    %43 = tpu.concatenate %41, %42 in 1 : vector<16x1xf32>, vector<16x63xf32> -> vector<16x64xf32>
    %c3 = arith.constant 3 : index
    %c0_30 = arith.constant 0 : index
    %c0_31 = arith.constant 0 : index
    %44 = vector.load %arg2[%c3, %c0_30, %c0_31] : memref<9x1x64xf32, #tpu.memory_space<vmem>>, vector<1x1x64xf32>
    %45 = vector.shape_cast %44 : vector<1x1x64xf32> to vector<1x64xf32>
    %46 = vector.broadcast %45 : vector<1x64xf32> to vector<16x64xf32>
    %47 = arith.mulf %43, %46 : vector<16x64xf32>
    %c3_32 = arith.constant 3 : index
    %c0_33 = arith.constant 0 : index
    %c0_34 = arith.constant 0 : index
    %48 = vector.load %arg5[%c3_32, %c0_33, %c0_34] : memref<9x16x16xf32, #tpu.memory_space<vmem>>, vector<1x16x16xf32>
    %49 = vector.shape_cast %48 : vector<1x16x16xf32> to vector<16x16xf32>
    %cst_35 = arith.constant dense<0.000000e+00> : vector<16x64xf32>
    %50 = tpu.matmul %49, %47, %cst_35 {dimension_numbers = #tpu.dot_dimension_numbers<[1], [0], [0], [1], [0, 0, 1, 1], [], []>} : vector<16x16xf32>, vector<16x64xf32>, vector<16x64xf32> -> vector<16x64xf32>
    %51 = arith.addf %40, %50 : vector<16x64xf32>
    %c4 = arith.constant 4 : index
    %c0_36 = arith.constant 0 : index
    %c0_37 = arith.constant 0 : index
    %52 = vector.load %arg5[%c4, %c0_36, %c0_37] : memref<9x16x16xf32, #tpu.memory_space<vmem>>, vector<1x16x16xf32>
    %53 = vector.shape_cast %52 : vector<1x16x16xf32> to vector<16x16xf32>
    %cst_38 = arith.constant dense<0.000000e+00> : vector<16x64xf32>
    %54 = tpu.matmul %53, %8, %cst_38 {dimension_numbers = #tpu.dot_dimension_numbers<[1], [0], [0], [1], [0, 0, 1, 1], [], []>} : vector<16x16xf32>, vector<16x64xf32>, vector<16x64xf32> -> vector<16x64xf32>
    %55 = arith.addf %51, %54 : vector<16x64xf32>
    %56 = vector.extract_strided_slice %8 {offsets = [0, 1], sizes = [16, 63], strides = [1, 1]} : vector<16x64xf32> to vector<16x63xf32>
    %cst_39 = arith.constant 0.000000e+00 : f32
    %57 = vector.broadcast %cst_39 : f32 to vector<16x1xf32>
    %58 = tpu.concatenate %56, %57 in 1 : vector<16x63xf32>, vector<16x1xf32> -> vector<16x64xf32>
    %c5 = arith.constant 5 : index
    %c0_40 = arith.constant 0 : index
    %c0_41 = arith.constant 0 : index
    %59 = vector.load %arg2[%c5, %c0_40, %c0_41] : memref<9x1x64xf32, #tpu.memory_space<vmem>>, vector<1x1x64xf32>
    %60 = vector.shape_cast %59 : vector<1x1x64xf32> to vector<1x64xf32>
    %61 = vector.broadcast %60 : vector<1x64xf32> to vector<16x64xf32>
    %62 = arith.mulf %58, %61 : vector<16x64xf32>
    %c5_42 = arith.constant 5 : index
    %c0_43 = arith.constant 0 : index
    %c0_44 = arith.constant 0 : index
    %63 = vector.load %arg5[%c5_42, %c0_43, %c0_44] : memref<9x16x16xf32, #tpu.memory_space<vmem>>, vector<1x16x16xf32>
    %64 = vector.shape_cast %63 : vector<1x16x16xf32> to vector<16x16xf32>
    %cst_45 = arith.constant dense<0.000000e+00> : vector<16x64xf32>
    %65 = tpu.matmul %64, %62, %cst_45 {dimension_numbers = #tpu.dot_dimension_numbers<[1], [0], [0], [1], [0, 0, 1, 1], [], []>} : vector<16x16xf32>, vector<16x64xf32>, vector<16x64xf32> -> vector<16x64xf32>
    %66 = arith.addf %55, %65 : vector<16x64xf32>
    %67 = vector.extract_strided_slice %8 {offsets = [0, 7], sizes = [16, 57], strides = [1, 1]} : vector<16x64xf32> to vector<16x57xf32>
    %cst_46 = arith.constant 0.000000e+00 : f32
    %68 = vector.broadcast %cst_46 : f32 to vector<16x7xf32>
    %69 = tpu.concatenate %67, %68 in 1 : vector<16x57xf32>, vector<16x7xf32> -> vector<16x64xf32>
    %c6 = arith.constant 6 : index
    %c0_47 = arith.constant 0 : index
    %c0_48 = arith.constant 0 : index
    %70 = vector.load %arg2[%c6, %c0_47, %c0_48] : memref<9x1x64xf32, #tpu.memory_space<vmem>>, vector<1x1x64xf32>
    %71 = vector.shape_cast %70 : vector<1x1x64xf32> to vector<1x64xf32>
    %72 = vector.broadcast %71 : vector<1x64xf32> to vector<16x64xf32>
    %73 = arith.mulf %69, %72 : vector<16x64xf32>
    %c6_49 = arith.constant 6 : index
    %c0_50 = arith.constant 0 : index
    %c0_51 = arith.constant 0 : index
    %74 = vector.load %arg5[%c6_49, %c0_50, %c0_51] : memref<9x16x16xf32, #tpu.memory_space<vmem>>, vector<1x16x16xf32>
    %75 = vector.shape_cast %74 : vector<1x16x16xf32> to vector<16x16xf32>
    %cst_52 = arith.constant dense<0.000000e+00> : vector<16x64xf32>
    %76 = tpu.matmul %75, %73, %cst_52 {dimension_numbers = #tpu.dot_dimension_numbers<[1], [0], [0], [1], [0, 0, 1, 1], [], []>} : vector<16x16xf32>, vector<16x64xf32>, vector<16x64xf32> -> vector<16x64xf32>
    %77 = arith.addf %66, %76 : vector<16x64xf32>
    %78 = vector.extract_strided_slice %8 {offsets = [0, 8], sizes = [16, 56], strides = [1, 1]} : vector<16x64xf32> to vector<16x56xf32>
    %cst_53 = arith.constant 0.000000e+00 : f32
    %79 = vector.broadcast %cst_53 : f32 to vector<16x8xf32>
    %80 = tpu.concatenate %78, %79 in 1 : vector<16x56xf32>, vector<16x8xf32> -> vector<16x64xf32>
    %c7 = arith.constant 7 : index
    %c0_54 = arith.constant 0 : index
    %c0_55 = arith.constant 0 : index
    %81 = vector.load %arg2[%c7, %c0_54, %c0_55] : memref<9x1x64xf32, #tpu.memory_space<vmem>>, vector<1x1x64xf32>
    %82 = vector.shape_cast %81 : vector<1x1x64xf32> to vector<1x64xf32>
    %83 = vector.broadcast %82 : vector<1x64xf32> to vector<16x64xf32>
    %84 = arith.mulf %80, %83 : vector<16x64xf32>
    %c7_56 = arith.constant 7 : index
    %c0_57 = arith.constant 0 : index
    %c0_58 = arith.constant 0 : index
    %85 = vector.load %arg5[%c7_56, %c0_57, %c0_58] : memref<9x16x16xf32, #tpu.memory_space<vmem>>, vector<1x16x16xf32>
    %86 = vector.shape_cast %85 : vector<1x16x16xf32> to vector<16x16xf32>
    %cst_59 = arith.constant dense<0.000000e+00> : vector<16x64xf32>
    %87 = tpu.matmul %86, %84, %cst_59 {dimension_numbers = #tpu.dot_dimension_numbers<[1], [0], [0], [1], [0, 0, 1, 1], [], []>} : vector<16x16xf32>, vector<16x64xf32>, vector<16x64xf32> -> vector<16x64xf32>
    %88 = arith.addf %77, %87 : vector<16x64xf32>
    %89 = vector.extract_strided_slice %8 {offsets = [0, 9], sizes = [16, 55], strides = [1, 1]} : vector<16x64xf32> to vector<16x55xf32>
    %cst_60 = arith.constant 0.000000e+00 : f32
    %90 = vector.broadcast %cst_60 : f32 to vector<16x9xf32>
    %91 = tpu.concatenate %89, %90 in 1 : vector<16x55xf32>, vector<16x9xf32> -> vector<16x64xf32>
    %c8 = arith.constant 8 : index
    %c0_61 = arith.constant 0 : index
    %c0_62 = arith.constant 0 : index
    %92 = vector.load %arg2[%c8, %c0_61, %c0_62] : memref<9x1x64xf32, #tpu.memory_space<vmem>>, vector<1x1x64xf32>
    %93 = vector.shape_cast %92 : vector<1x1x64xf32> to vector<1x64xf32>
    %94 = vector.broadcast %93 : vector<1x64xf32> to vector<16x64xf32>
    %95 = arith.mulf %91, %94 : vector<16x64xf32>
    %c8_63 = arith.constant 8 : index
    %c0_64 = arith.constant 0 : index
    %c0_65 = arith.constant 0 : index
    %96 = vector.load %arg5[%c8_63, %c0_64, %c0_65] : memref<9x16x16xf32, #tpu.memory_space<vmem>>, vector<1x16x16xf32>
    %97 = vector.shape_cast %96 : vector<1x16x16xf32> to vector<16x16xf32>
    %cst_66 = arith.constant dense<0.000000e+00> : vector<16x64xf32>
    %98 = tpu.matmul %97, %95, %cst_66 {dimension_numbers = #tpu.dot_dimension_numbers<[1], [0], [0], [1], [0, 0, 1, 1], [], []>} : vector<16x16xf32>, vector<16x64xf32>, vector<16x64xf32> -> vector<16x64xf32>
    %99 = arith.addf %88, %98 : vector<16x64xf32>
    %c0_67 = arith.constant 0 : index
    %c0_68 = arith.constant 0 : index
    %100 = vector.load %arg6[%c0_67, %c0_68] : memref<16x1xf32, #tpu.memory_space<vmem>>, vector<16x1xf32>
    %101 = vector.broadcast %100 : vector<16x1xf32> to vector<16x64xf32>
    %102 = arith.addf %99, %101 : vector<16x64xf32>
    %cst_69 = arith.constant 0.000000e+00 : f32
    %103 = vector.broadcast %cst_69 : f32 to vector<16x64xf32>
    %104 = arith.maximumf %102, %103 : vector<16x64xf32>
    %c0_70 = arith.constant 0 : index
    %c0_71 = arith.constant 0 : index
    %105 = vector.load %arg7[%c0_70, %c0_71] : memref<32x16xf32, #tpu.memory_space<vmem>>, vector<32x16xf32>
    %cst_72 = arith.constant dense<0.000000e+00> : vector<32x64xf32>
    %106 = tpu.matmul %105, %104, %cst_72 {dimension_numbers = #tpu.dot_dimension_numbers<[1], [0], [0], [1], [0, 0, 1, 1], [], []>} : vector<32x16xf32>, vector<16x64xf32>, vector<32x64xf32> -> vector<32x64xf32>
    %c0_73 = arith.constant 0 : index
    %c0_74 = arith.constant 0 : index
    %107 = vector.load %arg8[%c0_73, %c0_74] : memref<32x1xf32, #tpu.memory_space<vmem>>, vector<32x1xf32>
    %108 = vector.broadcast %107 : vector<32x1xf32> to vector<32x64xf32>
    %109 = arith.addf %106, %108 : vector<32x64xf32>
    %c0_75 = arith.constant 0 : index
    %c0_76 = arith.constant 0 : index
    %110 = vector.load %arg9[%c0_75, %c0_76] : memref<32x1xf32, #tpu.memory_space<vmem>>, vector<32x1xf32>
    %111 = vector.broadcast %110 : vector<32x1xf32> to vector<32x64xf32>
    %112 = arith.mulf %111, %1 : vector<32x64xf32>
    %113 = arith.addf %109, %112 : vector<32x64xf32>
    %cst_77 = arith.constant 0.000000e+00 : f32
    %114 = vector.broadcast %cst_77 : f32 to vector<32x64xf32>
    %115 = arith.maximumf %113, %114 : vector<32x64xf32>
    %c0_78 = arith.constant 0 : index
    %c0_79 = arith.constant 0 : index
    %c0_80 = arith.constant 0 : index
    %116 = vector.load %arg10[%c0_78, %c0_79, %c0_80] : memref<1x32x64xf32, #tpu.memory_space<vmem>>, vector<1x32x64xf32>
    %117 = vector.shape_cast %116 : vector<1x32x64xf32> to vector<32x64xf32>
    %118 = vector.shape_cast %115 : vector<32x64xf32> to vector<1x32x64xf32>
    tpu.vector_store %arg10[%c0_78, %c0_79, %c0_80], %118 {strides = array<i32>} : memref<1x32x64xf32, #tpu.memory_space<vmem>>, vector<1x32x64xf32>,
    return
  }
  func.func @transform_0(%arg0: i32) -> (i32, i32, i32) {
    %c0_i32 = arith.constant 0 : i32
    %c0_i32_0 = arith.constant 0 : i32
    %c0_i32_1 = arith.constant 0 : i32
    return %arg0, %c0_i32, %c0_i32_0 : i32, i32, i32
  }
  func.func @transform_1(%arg0: i32) -> (i32, i32, i32) {
    %c0_i32 = arith.constant 0 : i32
    %c0_i32_0 = arith.constant 0 : i32
    %c0_i32_1 = arith.constant 0 : i32
    %c0_i32_2 = arith.constant 0 : i32
    return %c0_i32, %c0_i32_0, %c0_i32_1 : i32, i32, i32
  }
  func.func @transform_2(%arg0: i32) -> (i32, i32) {
    %c0_i32 = arith.constant 0 : i32
    %c0_i32_0 = arith.constant 0 : i32
    %c0_i32_1 = arith.constant 0 : i32
    return %c0_i32, %c0_i32_0 : i32, i32
  }
  func.func @transform_3(%arg0: i32) -> (i32, i32) {
    %c0_i32 = arith.constant 0 : i32
    %c0_i32_0 = arith.constant 0 : i32
    %c0_i32_1 = arith.constant 0 : i32
    return %c0_i32, %c0_i32_0 : i32, i32
  }
  func.func @transform_4(%arg0: i32) -> (i32, i32, i32) {
    %c0_i32 = arith.constant 0 : i32
    %c0_i32_0 = arith.constant 0 : i32
    %c0_i32_1 = arith.constant 0 : i32
    %c0_i32_2 = arith.constant 0 : i32
    return %c0_i32, %c0_i32_0, %c0_i32_1 : i32, i32, i32
  }
  func.func @transform_5(%arg0: i32) -> (i32, i32) {
    %c0_i32 = arith.constant 0 : i32
    %c0_i32_0 = arith.constant 0 : i32
    %c0_i32_1 = arith.constant 0 : i32
    return %c0_i32, %c0_i32_0 : i32, i32
  }
  func.func @transform_6(%arg0: i32) -> (i32, i32) {
    %c0_i32 = arith.constant 0 : i32
    %c0_i32_0 = arith.constant 0 : i32
    %c0_i32_1 = arith.constant 0 : i32
    return %c0_i32, %c0_i32_0 : i32, i32
  }
  func.func @transform_7(%arg0: i32) -> (i32, i32) {
    %c0_i32 = arith.constant 0 : i32
    %c0_i32_0 = arith.constant 0 : i32
    %c0_i32_1 = arith.constant 0 : i32
    return %c0_i32, %c0_i32_0 : i32, i32
  }
  func.func @transform_8(%arg0: i32) -> (i32, i32) {
    %c0_i32 = arith.constant 0 : i32
    %c0_i32_0 = arith.constant 0 : i32
    %c0_i32_1 = arith.constant 0 : i32
    return %c0_i32, %c0_i32_0 : i32, i32
  }
  func.func @transform_9(%arg0: i32) -> (i32, i32, i32) {
    %c0_i32 = arith.constant 0 : i32
    %c0_i32_0 = arith.constant 0 : i32
    %c0_i32_1 = arith.constant 0 : i32
    return %arg0, %c0_i32, %c0_i32_0 : i32, i32, i32
  }
}

module attributes {stable_mosaic.version = 11 : i64} {
  func.func @_bottleneck_kernel(%arg0: i32, %arg1: memref<1x32x16xf32, #tpu.memory_space<vmem>>, %arg2: memref<9x1x16xf32, #tpu.memory_space<vmem>>, %arg3: memref<16x32xf32, #tpu.memory_space<vmem>>, %arg4: memref<16x1xf32, #tpu.memory_space<vmem>>, %arg5: memref<9x16x16xf32, #tpu.memory_space<vmem>>, %arg6: memref<16x1xf32, #tpu.memory_space<vmem>>, %arg7: memref<32x16xf32, #tpu.memory_space<vmem>>, %arg8: memref<32x1xf32, #tpu.memory_space<vmem>>, %arg9: memref<32x1xf32, #tpu.memory_space<vmem>>, %arg10: memref<1x32x16xf32, #tpu.memory_space<vmem>>) attributes {dimension_semantics = [#tpu.dimension_semantics<parallel>], iteration_bounds = array<i64: 2>, scalar_prefetch = 0 : i64, scratch_operands = 0 : i64, tpu.core_type = #tpu.core_type<tc>, window_params = [{transform_indices = @transform_0, window_bounds = array<i64: 1, 32, 16>}, {pipeline_mode = #tpu.pipeline_mode<synchronous>, transform_indices = @transform_1, window_bounds = array<i64: 9, 1, 16>}, {pipeline_mode = #tpu.pipeline_mode<synchronous>, transform_indices = @transform_2, window_bounds = array<i64: 16, 32>}, {pipeline_mode = #tpu.pipeline_mode<synchronous>, transform_indices = @transform_3, window_bounds = array<i64: 16, 1>}, {pipeline_mode = #tpu.pipeline_mode<synchronous>, transform_indices = @transform_4, window_bounds = array<i64: 9, 16, 16>}, {pipeline_mode = #tpu.pipeline_mode<synchronous>, transform_indices = @transform_5, window_bounds = array<i64: 16, 1>}, {pipeline_mode = #tpu.pipeline_mode<synchronous>, transform_indices = @transform_6, window_bounds = array<i64: 32, 16>}, {pipeline_mode = #tpu.pipeline_mode<synchronous>, transform_indices = @transform_7, window_bounds = array<i64: 32, 1>}, {pipeline_mode = #tpu.pipeline_mode<synchronous>, transform_indices = @transform_8, window_bounds = array<i64: 32, 1>}, {transform_indices = @transform_9, window_bounds = array<i64: 1, 32, 16>}]} {
    %c0 = arith.constant 0 : index
    %c0_0 = arith.constant 0 : index
    %c0_1 = arith.constant 0 : index
    %0 = vector.load %arg1[%c0, %c0_0, %c0_1] : memref<1x32x16xf32, #tpu.memory_space<vmem>>, vector<1x32x16xf32>
    %1 = vector.shape_cast %0 : vector<1x32x16xf32> to vector<32x16xf32>
    %c0_2 = arith.constant 0 : index
    %c0_3 = arith.constant 0 : index
    %2 = vector.load %arg3[%c0_2, %c0_3] : memref<16x32xf32, #tpu.memory_space<vmem>>, vector<16x32xf32>
    %cst = arith.constant dense<0.000000e+00> : vector<16x16xf32>
    %3 = tpu.matmul %2, %1, %cst {dimension_numbers = #tpu.dot_dimension_numbers<[1], [0], [0], [1], [0, 0, 1, 1], [], []>} : vector<16x32xf32>, vector<32x16xf32>, vector<16x16xf32> -> vector<16x16xf32>
    %c0_4 = arith.constant 0 : index
    %c0_5 = arith.constant 0 : index
    %4 = vector.load %arg4[%c0_4, %c0_5] : memref<16x1xf32, #tpu.memory_space<vmem>>, vector<16x1xf32>
    %5 = vector.broadcast %4 : vector<16x1xf32> to vector<16x16xf32>
    %6 = arith.addf %3, %5 : vector<16x16xf32>
    %cst_6 = arith.constant 0.000000e+00 : f32
    %7 = vector.broadcast %cst_6 : f32 to vector<16x16xf32>
    %8 = arith.maximumf %6, %7 : vector<16x16xf32>
    %cst_7 = arith.constant 0.000000e+00 : f32
    %9 = vector.broadcast %cst_7 : f32 to vector<16x5xf32>
    %10 = vector.extract_strided_slice %8 {offsets = [0, 0], sizes = [16, 11], strides = [1, 1]} : vector<16x16xf32> to vector<16x11xf32>
    %11 = tpu.concatenate %9, %10 in 1 : vector<16x5xf32>, vector<16x11xf32> -> vector<16x16xf32>
    %c0_8 = arith.constant 0 : index
    %c0_9 = arith.constant 0 : index
    %c0_10 = arith.constant 0 : index
    %12 = vector.load %arg2[%c0_8, %c0_9, %c0_10] : memref<9x1x16xf32, #tpu.memory_space<vmem>>, vector<1x1x16xf32>
    %13 = vector.shape_cast %12 : vector<1x1x16xf32> to vector<1x16xf32>
    %14 = vector.broadcast %13 : vector<1x16xf32> to vector<16x16xf32>
    %15 = arith.mulf %11, %14 : vector<16x16xf32>
    %c0_11 = arith.constant 0 : index
    %c0_12 = arith.constant 0 : index
    %c0_13 = arith.constant 0 : index
    %16 = vector.load %arg5[%c0_11, %c0_12, %c0_13] : memref<9x16x16xf32, #tpu.memory_space<vmem>>, vector<1x16x16xf32>
    %17 = vector.shape_cast %16 : vector<1x16x16xf32> to vector<16x16xf32>
    %cst_14 = arith.constant dense<0.000000e+00> : vector<16x16xf32>
    %18 = tpu.matmul %17, %15, %cst_14 {dimension_numbers = #tpu.dot_dimension_numbers<[1], [0], [0], [1], [0, 0, 1, 1], [], []>} : vector<16x16xf32>, vector<16x16xf32>, vector<16x16xf32> -> vector<16x16xf32>
    %cst_15 = arith.constant 0.000000e+00 : f32
    %19 = vector.broadcast %cst_15 : f32 to vector<16x4xf32>
    %20 = vector.extract_strided_slice %8 {offsets = [0, 0], sizes = [16, 12], strides = [1, 1]} : vector<16x16xf32> to vector<16x12xf32>
    %21 = tpu.concatenate %19, %20 in 1 : vector<16x4xf32>, vector<16x12xf32> -> vector<16x16xf32>
    %c1 = arith.constant 1 : index
    %c0_16 = arith.constant 0 : index
    %c0_17 = arith.constant 0 : index
    %22 = vector.load %arg2[%c1, %c0_16, %c0_17] : memref<9x1x16xf32, #tpu.memory_space<vmem>>, vector<1x1x16xf32>
    %23 = vector.shape_cast %22 : vector<1x1x16xf32> to vector<1x16xf32>
    %24 = vector.broadcast %23 : vector<1x16xf32> to vector<16x16xf32>
    %25 = arith.mulf %21, %24 : vector<16x16xf32>
    %c1_18 = arith.constant 1 : index
    %c0_19 = arith.constant 0 : index
    %c0_20 = arith.constant 0 : index
    %26 = vector.load %arg5[%c1_18, %c0_19, %c0_20] : memref<9x16x16xf32, #tpu.memory_space<vmem>>, vector<1x16x16xf32>
    %27 = vector.shape_cast %26 : vector<1x16x16xf32> to vector<16x16xf32>
    %cst_21 = arith.constant dense<0.000000e+00> : vector<16x16xf32>
    %28 = tpu.matmul %27, %25, %cst_21 {dimension_numbers = #tpu.dot_dimension_numbers<[1], [0], [0], [1], [0, 0, 1, 1], [], []>} : vector<16x16xf32>, vector<16x16xf32>, vector<16x16xf32> -> vector<16x16xf32>
    %29 = arith.addf %18, %28 : vector<16x16xf32>
    %cst_22 = arith.constant 0.000000e+00 : f32
    %30 = vector.broadcast %cst_22 : f32 to vector<16x3xf32>
    %31 = vector.extract_strided_slice %8 {offsets = [0, 0], sizes = [16, 13], strides = [1, 1]} : vector<16x16xf32> to vector<16x13xf32>
    %32 = tpu.concatenate %30, %31 in 1 : vector<16x3xf32>, vector<16x13xf32> -> vector<16x16xf32>
    %c2 = arith.constant 2 : index
    %c0_23 = arith.constant 0 : index
    %c0_24 = arith.constant 0 : index
    %33 = vector.load %arg2[%c2, %c0_23, %c0_24] : memref<9x1x16xf32, #tpu.memory_space<vmem>>, vector<1x1x16xf32>
    %34 = vector.shape_cast %33 : vector<1x1x16xf32> to vector<1x16xf32>
    %35 = vector.broadcast %34 : vector<1x16xf32> to vector<16x16xf32>
    %36 = arith.mulf %32, %35 : vector<16x16xf32>
    %c2_25 = arith.constant 2 : index
    %c0_26 = arith.constant 0 : index
    %c0_27 = arith.constant 0 : index
    %37 = vector.load %arg5[%c2_25, %c0_26, %c0_27] : memref<9x16x16xf32, #tpu.memory_space<vmem>>, vector<1x16x16xf32>
    %38 = vector.shape_cast %37 : vector<1x16x16xf32> to vector<16x16xf32>
    %cst_28 = arith.constant dense<0.000000e+00> : vector<16x16xf32>
    %39 = tpu.matmul %38, %36, %cst_28 {dimension_numbers = #tpu.dot_dimension_numbers<[1], [0], [0], [1], [0, 0, 1, 1], [], []>} : vector<16x16xf32>, vector<16x16xf32>, vector<16x16xf32> -> vector<16x16xf32>
    %40 = arith.addf %29, %39 : vector<16x16xf32>
    %cst_29 = arith.constant 0.000000e+00 : f32
    %41 = vector.broadcast %cst_29 : f32 to vector<16x1xf32>
    %42 = vector.extract_strided_slice %8 {offsets = [0, 0], sizes = [16, 15], strides = [1, 1]} : vector<16x16xf32> to vector<16x15xf32>
    %43 = tpu.concatenate %41, %42 in 1 : vector<16x1xf32>, vector<16x15xf32> -> vector<16x16xf32>
    %c3 = arith.constant 3 : index
    %c0_30 = arith.constant 0 : index
    %c0_31 = arith.constant 0 : index
    %44 = vector.load %arg2[%c3, %c0_30, %c0_31] : memref<9x1x16xf32, #tpu.memory_space<vmem>>, vector<1x1x16xf32>
    %45 = vector.shape_cast %44 : vector<1x1x16xf32> to vector<1x16xf32>
    %46 = vector.broadcast %45 : vector<1x16xf32> to vector<16x16xf32>
    %47 = arith.mulf %43, %46 : vector<16x16xf32>
    %c3_32 = arith.constant 3 : index
    %c0_33 = arith.constant 0 : index
    %c0_34 = arith.constant 0 : index
    %48 = vector.load %arg5[%c3_32, %c0_33, %c0_34] : memref<9x16x16xf32, #tpu.memory_space<vmem>>, vector<1x16x16xf32>
    %49 = vector.shape_cast %48 : vector<1x16x16xf32> to vector<16x16xf32>
    %cst_35 = arith.constant dense<0.000000e+00> : vector<16x16xf32>
    %50 = tpu.matmul %49, %47, %cst_35 {dimension_numbers = #tpu.dot_dimension_numbers<[1], [0], [0], [1], [0, 0, 1, 1], [], []>} : vector<16x16xf32>, vector<16x16xf32>, vector<16x16xf32> -> vector<16x16xf32>
    %51 = arith.addf %40, %50 : vector<16x16xf32>
    %c4 = arith.constant 4 : index
    %c0_36 = arith.constant 0 : index
    %c0_37 = arith.constant 0 : index
    %52 = vector.load %arg5[%c4, %c0_36, %c0_37] : memref<9x16x16xf32, #tpu.memory_space<vmem>>, vector<1x16x16xf32>
    %53 = vector.shape_cast %52 : vector<1x16x16xf32> to vector<16x16xf32>
    %cst_38 = arith.constant dense<0.000000e+00> : vector<16x16xf32>
    %54 = tpu.matmul %53, %8, %cst_38 {dimension_numbers = #tpu.dot_dimension_numbers<[1], [0], [0], [1], [0, 0, 1, 1], [], []>} : vector<16x16xf32>, vector<16x16xf32>, vector<16x16xf32> -> vector<16x16xf32>
    %55 = arith.addf %51, %54 : vector<16x16xf32>
    %56 = vector.extract_strided_slice %8 {offsets = [0, 1], sizes = [16, 15], strides = [1, 1]} : vector<16x16xf32> to vector<16x15xf32>
    %cst_39 = arith.constant 0.000000e+00 : f32
    %57 = vector.broadcast %cst_39 : f32 to vector<16x1xf32>
    %58 = tpu.concatenate %56, %57 in 1 : vector<16x15xf32>, vector<16x1xf32> -> vector<16x16xf32>
    %c5 = arith.constant 5 : index
    %c0_40 = arith.constant 0 : index
    %c0_41 = arith.constant 0 : index
    %59 = vector.load %arg2[%c5, %c0_40, %c0_41] : memref<9x1x16xf32, #tpu.memory_space<vmem>>, vector<1x1x16xf32>
    %60 = vector.shape_cast %59 : vector<1x1x16xf32> to vector<1x16xf32>
    %61 = vector.broadcast %60 : vector<1x16xf32> to vector<16x16xf32>
    %62 = arith.mulf %58, %61 : vector<16x16xf32>
    %c5_42 = arith.constant 5 : index
    %c0_43 = arith.constant 0 : index
    %c0_44 = arith.constant 0 : index
    %63 = vector.load %arg5[%c5_42, %c0_43, %c0_44] : memref<9x16x16xf32, #tpu.memory_space<vmem>>, vector<1x16x16xf32>
    %64 = vector.shape_cast %63 : vector<1x16x16xf32> to vector<16x16xf32>
    %cst_45 = arith.constant dense<0.000000e+00> : vector<16x16xf32>
    %65 = tpu.matmul %64, %62, %cst_45 {dimension_numbers = #tpu.dot_dimension_numbers<[1], [0], [0], [1], [0, 0, 1, 1], [], []>} : vector<16x16xf32>, vector<16x16xf32>, vector<16x16xf32> -> vector<16x16xf32>
    %66 = arith.addf %55, %65 : vector<16x16xf32>
    %67 = vector.extract_strided_slice %8 {offsets = [0, 3], sizes = [16, 13], strides = [1, 1]} : vector<16x16xf32> to vector<16x13xf32>
    %cst_46 = arith.constant 0.000000e+00 : f32
    %68 = vector.broadcast %cst_46 : f32 to vector<16x3xf32>
    %69 = tpu.concatenate %67, %68 in 1 : vector<16x13xf32>, vector<16x3xf32> -> vector<16x16xf32>
    %c6 = arith.constant 6 : index
    %c0_47 = arith.constant 0 : index
    %c0_48 = arith.constant 0 : index
    %70 = vector.load %arg2[%c6, %c0_47, %c0_48] : memref<9x1x16xf32, #tpu.memory_space<vmem>>, vector<1x1x16xf32>
    %71 = vector.shape_cast %70 : vector<1x1x16xf32> to vector<1x16xf32>
    %72 = vector.broadcast %71 : vector<1x16xf32> to vector<16x16xf32>
    %73 = arith.mulf %69, %72 : vector<16x16xf32>
    %c6_49 = arith.constant 6 : index
    %c0_50 = arith.constant 0 : index
    %c0_51 = arith.constant 0 : index
    %74 = vector.load %arg5[%c6_49, %c0_50, %c0_51] : memref<9x16x16xf32, #tpu.memory_space<vmem>>, vector<1x16x16xf32>
    %75 = vector.shape_cast %74 : vector<1x16x16xf32> to vector<16x16xf32>
    %cst_52 = arith.constant dense<0.000000e+00> : vector<16x16xf32>
    %76 = tpu.matmul %75, %73, %cst_52 {dimension_numbers = #tpu.dot_dimension_numbers<[1], [0], [0], [1], [0, 0, 1, 1], [], []>} : vector<16x16xf32>, vector<16x16xf32>, vector<16x16xf32> -> vector<16x16xf32>
    %77 = arith.addf %66, %76 : vector<16x16xf32>
    %78 = vector.extract_strided_slice %8 {offsets = [0, 4], sizes = [16, 12], strides = [1, 1]} : vector<16x16xf32> to vector<16x12xf32>
    %cst_53 = arith.constant 0.000000e+00 : f32
    %79 = vector.broadcast %cst_53 : f32 to vector<16x4xf32>
    %80 = tpu.concatenate %78, %79 in 1 : vector<16x12xf32>, vector<16x4xf32> -> vector<16x16xf32>
    %c7 = arith.constant 7 : index
    %c0_54 = arith.constant 0 : index
    %c0_55 = arith.constant 0 : index
    %81 = vector.load %arg2[%c7, %c0_54, %c0_55] : memref<9x1x16xf32, #tpu.memory_space<vmem>>, vector<1x1x16xf32>
    %82 = vector.shape_cast %81 : vector<1x1x16xf32> to vector<1x16xf32>
    %83 = vector.broadcast %82 : vector<1x16xf32> to vector<16x16xf32>
    %84 = arith.mulf %80, %83 : vector<16x16xf32>
    %c7_56 = arith.constant 7 : index
    %c0_57 = arith.constant 0 : index
    %c0_58 = arith.constant 0 : index
    %85 = vector.load %arg5[%c7_56, %c0_57, %c0_58] : memref<9x16x16xf32, #tpu.memory_space<vmem>>, vector<1x16x16xf32>
    %86 = vector.shape_cast %85 : vector<1x16x16xf32> to vector<16x16xf32>
    %cst_59 = arith.constant dense<0.000000e+00> : vector<16x16xf32>
    %87 = tpu.matmul %86, %84, %cst_59 {dimension_numbers = #tpu.dot_dimension_numbers<[1], [0], [0], [1], [0, 0, 1, 1], [], []>} : vector<16x16xf32>, vector<16x16xf32>, vector<16x16xf32> -> vector<16x16xf32>
    %88 = arith.addf %77, %87 : vector<16x16xf32>
    %89 = vector.extract_strided_slice %8 {offsets = [0, 5], sizes = [16, 11], strides = [1, 1]} : vector<16x16xf32> to vector<16x11xf32>
    %cst_60 = arith.constant 0.000000e+00 : f32
    %90 = vector.broadcast %cst_60 : f32 to vector<16x5xf32>
    %91 = tpu.concatenate %89, %90 in 1 : vector<16x11xf32>, vector<16x5xf32> -> vector<16x16xf32>
    %c8 = arith.constant 8 : index
    %c0_61 = arith.constant 0 : index
    %c0_62 = arith.constant 0 : index
    %92 = vector.load %arg2[%c8, %c0_61, %c0_62] : memref<9x1x16xf32, #tpu.memory_space<vmem>>, vector<1x1x16xf32>
    %93 = vector.shape_cast %92 : vector<1x1x16xf32> to vector<1x16xf32>
    %94 = vector.broadcast %93 : vector<1x16xf32> to vector<16x16xf32>
    %95 = arith.mulf %91, %94 : vector<16x16xf32>
    %c8_63 = arith.constant 8 : index
    %c0_64 = arith.constant 0 : index
    %c0_65 = arith.constant 0 : index
    %96 = vector.load %arg5[%c8_63, %c0_64, %c0_65] : memref<9x16x16xf32, #tpu.memory_space<vmem>>, vector<1x16x16xf32>
    %97 = vector.shape_cast %96 : vector<1x16x16xf32> to vector<16x16xf32>
    %cst_66 = arith.constant dense<0.000000e+00> : vector<16x16xf32>
    %98 = tpu.matmul %97, %95, %cst_66 {dimension_numbers = #tpu.dot_dimension_numbers<[1], [0], [0], [1], [0, 0, 1, 1], [], []>} : vector<16x16xf32>, vector<16x16xf32>, vector<16x16xf32> -> vector<16x16xf32>
    %99 = arith.addf %88, %98 : vector<16x16xf32>
    %c0_67 = arith.constant 0 : index
    %c0_68 = arith.constant 0 : index
    %100 = vector.load %arg6[%c0_67, %c0_68] : memref<16x1xf32, #tpu.memory_space<vmem>>, vector<16x1xf32>
    %101 = vector.broadcast %100 : vector<16x1xf32> to vector<16x16xf32>
    %102 = arith.addf %99, %101 : vector<16x16xf32>
    %cst_69 = arith.constant 0.000000e+00 : f32
    %103 = vector.broadcast %cst_69 : f32 to vector<16x16xf32>
    %104 = arith.maximumf %102, %103 : vector<16x16xf32>
    %c0_70 = arith.constant 0 : index
    %c0_71 = arith.constant 0 : index
    %105 = vector.load %arg7[%c0_70, %c0_71] : memref<32x16xf32, #tpu.memory_space<vmem>>, vector<32x16xf32>
    %cst_72 = arith.constant dense<0.000000e+00> : vector<32x16xf32>
    %106 = tpu.matmul %105, %104, %cst_72 {dimension_numbers = #tpu.dot_dimension_numbers<[1], [0], [0], [1], [0, 0, 1, 1], [], []>} : vector<32x16xf32>, vector<16x16xf32>, vector<32x16xf32> -> vector<32x16xf32>
    %c0_73 = arith.constant 0 : index
    %c0_74 = arith.constant 0 : index
    %107 = vector.load %arg8[%c0_73, %c0_74] : memref<32x1xf32, #tpu.memory_space<vmem>>, vector<32x1xf32>
    %108 = vector.broadcast %107 : vector<32x1xf32> to vector<32x16xf32>
    %109 = arith.addf %106, %108 : vector<32x16xf32>
    %c0_75 = arith.constant 0 : index
    %c0_76 = arith.constant 0 : index
    %110 = vector.load %arg9[%c0_75, %c0_76] : memref<32x1xf32, #tpu.memory_space<vmem>>, vector<32x1xf32>
    %111 = vector.broadcast %110 : vector<32x1xf32> to vector<32x16xf32>
    %112 = arith.mulf %111, %1 : vector<32x16xf32>
    %113 = arith.addf %109, %112 : vector<32x16xf32>
    %cst_77 = arith.constant 0.000000e+00 : f32
    %114 = vector.broadcast %cst_77 : f32 to vector<32x16xf32>
    %115 = arith.maximumf %113, %114 : vector<32x16xf32>
    %c0_78 = arith.constant 0 : index
    %c0_79 = arith.constant 0 : index
    %c0_80 = arith.constant 0 : index
    %116 = vector.load %arg10[%c0_78, %c0_79, %c0_80] : memref<1x32x16xf32, #tpu.memory_space<vmem>>, vector<1x32x16xf32>
    %117 = vector.shape_cast %116 : vector<1x32x16xf32> to vector<32x16xf32>
    %118 = vector.shape_cast %115 : vector<32x16xf32> to vector<1x32x16xf32>
    tpu.vector_store %arg10[%c0_78, %c0_79, %c0_80], %118 {strides = array<i32>} : memref<1x32x16xf32, #tpu.memory_space<vmem>>, vector<1x32x16xf32>,
    return
  }
  func.func @transform_0(%arg0: i32) -> (i32, i32, i32) {
    %c0_i32 = arith.constant 0 : i32
    %c0_i32_0 = arith.constant 0 : i32
    %c0_i32_1 = arith.constant 0 : i32
    return %arg0, %c0_i32, %c0_i32_0 : i32, i32, i32
  }
  func.func @transform_1(%arg0: i32) -> (i32, i32, i32) {
    %c0_i32 = arith.constant 0 : i32
    %c0_i32_0 = arith.constant 0 : i32
    %c0_i32_1 = arith.constant 0 : i32
    %c0_i32_2 = arith.constant 0 : i32
    return %c0_i32, %c0_i32_0, %c0_i32_1 : i32, i32, i32
  }
  func.func @transform_2(%arg0: i32) -> (i32, i32) {
    %c0_i32 = arith.constant 0 : i32
    %c0_i32_0 = arith.constant 0 : i32
    %c0_i32_1 = arith.constant 0 : i32
    return %c0_i32, %c0_i32_0 : i32, i32
  }
  func.func @transform_3(%arg0: i32) -> (i32, i32) {
    %c0_i32 = arith.constant 0 : i32
    %c0_i32_0 = arith.constant 0 : i32
    %c0_i32_1 = arith.constant 0 : i32
    return %c0_i32, %c0_i32_0 : i32, i32
  }
  func.func @transform_4(%arg0: i32) -> (i32, i32, i32) {
    %c0_i32 = arith.constant 0 : i32
    %c0_i32_0 = arith.constant 0 : i32
    %c0_i32_1 = arith.constant 0 : i32
    %c0_i32_2 = arith.constant 0 : i32
    return %c0_i32, %c0_i32_0, %c0_i32_1 : i32, i32, i32
  }
  func.func @transform_5(%arg0: i32) -> (i32, i32) {
    %c0_i32 = arith.constant 0 : i32
    %c0_i32_0 = arith.constant 0 : i32
    %c0_i32_1 = arith.constant 0 : i32
    return %c0_i32, %c0_i32_0 : i32, i32
  }
  func.func @transform_6(%arg0: i32) -> (i32, i32) {
    %c0_i32 = arith.constant 0 : i32
    %c0_i32_0 = arith.constant 0 : i32
    %c0_i32_1 = arith.constant 0 : i32
    return %c0_i32, %c0_i32_0 : i32, i32
  }
  func.func @transform_7(%arg0: i32) -> (i32, i32) {
    %c0_i32 = arith.constant 0 : i32
    %c0_i32_0 = arith.constant 0 : i32
    %c0_i32_1 = arith.constant 0 : i32
    return %c0_i32, %c0_i32_0 : i32, i32
  }
  func.func @transform_8(%arg0: i32) -> (i32, i32) {
    %c0_i32 = arith.constant 0 : i32
    %c0_i32_0 = arith.constant 0 : i32
    %c0_i32_1 = arith.constant 0 : i32
    return %c0_i32, %c0_i32_0 : i32, i32
  }
  func.func @transform_9(%arg0: i32) -> (i32, i32, i32) {
    %c0_i32 = arith.constant 0 : i32
    %c0_i32_0 = arith.constant 0 : i32
    %c0_i32_1 = arith.constant 0 : i32
    return %arg0, %c0_i32, %c0_i32_0 : i32, i32, i32
  }
}

module attributes {stable_mosaic.version = 11 : i64} {
  func.func @_bottleneck_kernel(%arg0: i32, %arg1: memref<1x32x4xf32, #tpu.memory_space<vmem>>, %arg2: memref<9x1x4xf32, #tpu.memory_space<vmem>>, %arg3: memref<16x32xf32, #tpu.memory_space<vmem>>, %arg4: memref<16x1xf32, #tpu.memory_space<vmem>>, %arg5: memref<9x16x16xf32, #tpu.memory_space<vmem>>, %arg6: memref<16x1xf32, #tpu.memory_space<vmem>>, %arg7: memref<32x16xf32, #tpu.memory_space<vmem>>, %arg8: memref<32x1xf32, #tpu.memory_space<vmem>>, %arg9: memref<32x1xf32, #tpu.memory_space<vmem>>, %arg10: memref<1x32x4xf32, #tpu.memory_space<vmem>>) attributes {dimension_semantics = [#tpu.dimension_semantics<parallel>], iteration_bounds = array<i64: 2>, scalar_prefetch = 0 : i64, scratch_operands = 0 : i64, tpu.core_type = #tpu.core_type<tc>, window_params = [{transform_indices = @transform_0, window_bounds = array<i64: 1, 32, 4>}, {pipeline_mode = #tpu.pipeline_mode<synchronous>, transform_indices = @transform_1, window_bounds = array<i64: 9, 1, 4>}, {pipeline_mode = #tpu.pipeline_mode<synchronous>, transform_indices = @transform_2, window_bounds = array<i64: 16, 32>}, {pipeline_mode = #tpu.pipeline_mode<synchronous>, transform_indices = @transform_3, window_bounds = array<i64: 16, 1>}, {pipeline_mode = #tpu.pipeline_mode<synchronous>, transform_indices = @transform_4, window_bounds = array<i64: 9, 16, 16>}, {pipeline_mode = #tpu.pipeline_mode<synchronous>, transform_indices = @transform_5, window_bounds = array<i64: 16, 1>}, {pipeline_mode = #tpu.pipeline_mode<synchronous>, transform_indices = @transform_6, window_bounds = array<i64: 32, 16>}, {pipeline_mode = #tpu.pipeline_mode<synchronous>, transform_indices = @transform_7, window_bounds = array<i64: 32, 1>}, {pipeline_mode = #tpu.pipeline_mode<synchronous>, transform_indices = @transform_8, window_bounds = array<i64: 32, 1>}, {transform_indices = @transform_9, window_bounds = array<i64: 1, 32, 4>}]} {
    %c0 = arith.constant 0 : index
    %c0_0 = arith.constant 0 : index
    %c0_1 = arith.constant 0 : index
    %0 = vector.load %arg1[%c0, %c0_0, %c0_1] : memref<1x32x4xf32, #tpu.memory_space<vmem>>, vector<1x32x4xf32>
    %1 = vector.shape_cast %0 : vector<1x32x4xf32> to vector<32x4xf32>
    %c0_2 = arith.constant 0 : index
    %c0_3 = arith.constant 0 : index
    %2 = vector.load %arg3[%c0_2, %c0_3] : memref<16x32xf32, #tpu.memory_space<vmem>>, vector<16x32xf32>
    %cst = arith.constant dense<0.000000e+00> : vector<16x4xf32>
    %3 = tpu.matmul %2, %1, %cst {dimension_numbers = #tpu.dot_dimension_numbers<[1], [0], [0], [1], [0, 0, 1, 1], [], []>} : vector<16x32xf32>, vector<32x4xf32>, vector<16x4xf32> -> vector<16x4xf32>
    %c0_4 = arith.constant 0 : index
    %c0_5 = arith.constant 0 : index
    %4 = vector.load %arg4[%c0_4, %c0_5] : memref<16x1xf32, #tpu.memory_space<vmem>>, vector<16x1xf32>
    %5 = vector.broadcast %4 : vector<16x1xf32> to vector<16x4xf32>
    %6 = arith.addf %3, %5 : vector<16x4xf32>
    %cst_6 = arith.constant 0.000000e+00 : f32
    %7 = vector.broadcast %cst_6 : f32 to vector<16x4xf32>
    %8 = arith.maximumf %6, %7 : vector<16x4xf32>
    %cst_7 = arith.constant 0.000000e+00 : f32
    %9 = vector.broadcast %cst_7 : f32 to vector<16x3xf32>
    %10 = vector.extract_strided_slice %8 {offsets = [0, 0], sizes = [16, 1], strides = [1, 1]} : vector<16x4xf32> to vector<16x1xf32>
    %11 = tpu.concatenate %9, %10 in 1 : vector<16x3xf32>, vector<16x1xf32> -> vector<16x4xf32>
    %c0_8 = arith.constant 0 : index
    %c0_9 = arith.constant 0 : index
    %c0_10 = arith.constant 0 : index
    %12 = vector.load %arg2[%c0_8, %c0_9, %c0_10] : memref<9x1x4xf32, #tpu.memory_space<vmem>>, vector<1x1x4xf32>
    %13 = vector.shape_cast %12 : vector<1x1x4xf32> to vector<1x4xf32>
    %14 = vector.broadcast %13 : vector<1x4xf32> to vector<16x4xf32>
    %15 = arith.mulf %11, %14 : vector<16x4xf32>
    %c0_11 = arith.constant 0 : index
    %c0_12 = arith.constant 0 : index
    %c0_13 = arith.constant 0 : index
    %16 = vector.load %arg5[%c0_11, %c0_12, %c0_13] : memref<9x16x16xf32, #tpu.memory_space<vmem>>, vector<1x16x16xf32>
    %17 = vector.shape_cast %16 : vector<1x16x16xf32> to vector<16x16xf32>
    %cst_14 = arith.constant dense<0.000000e+00> : vector<16x4xf32>
    %18 = tpu.matmul %17, %15, %cst_14 {dimension_numbers = #tpu.dot_dimension_numbers<[1], [0], [0], [1], [0, 0, 1, 1], [], []>} : vector<16x16xf32>, vector<16x4xf32>, vector<16x4xf32> -> vector<16x4xf32>
    %cst_15 = arith.constant 0.000000e+00 : f32
    %19 = vector.broadcast %cst_15 : f32 to vector<16x2xf32>
    %20 = vector.extract_strided_slice %8 {offsets = [0, 0], sizes = [16, 2], strides = [1, 1]} : vector<16x4xf32> to vector<16x2xf32>
    %21 = tpu.concatenate %19, %20 in 1 : vector<16x2xf32>, vector<16x2xf32> -> vector<16x4xf32>
    %c1 = arith.constant 1 : index
    %c0_16 = arith.constant 0 : index
    %c0_17 = arith.constant 0 : index
    %22 = vector.load %arg2[%c1, %c0_16, %c0_17] : memref<9x1x4xf32, #tpu.memory_space<vmem>>, vector<1x1x4xf32>
    %23 = vector.shape_cast %22 : vector<1x1x4xf32> to vector<1x4xf32>
    %24 = vector.broadcast %23 : vector<1x4xf32> to vector<16x4xf32>
    %25 = arith.mulf %21, %24 : vector<16x4xf32>
    %c1_18 = arith.constant 1 : index
    %c0_19 = arith.constant 0 : index
    %c0_20 = arith.constant 0 : index
    %26 = vector.load %arg5[%c1_18, %c0_19, %c0_20] : memref<9x16x16xf32, #tpu.memory_space<vmem>>, vector<1x16x16xf32>
    %27 = vector.shape_cast %26 : vector<1x16x16xf32> to vector<16x16xf32>
    %cst_21 = arith.constant dense<0.000000e+00> : vector<16x4xf32>
    %28 = tpu.matmul %27, %25, %cst_21 {dimension_numbers = #tpu.dot_dimension_numbers<[1], [0], [0], [1], [0, 0, 1, 1], [], []>} : vector<16x16xf32>, vector<16x4xf32>, vector<16x4xf32> -> vector<16x4xf32>
    %29 = arith.addf %18, %28 : vector<16x4xf32>
    %cst_22 = arith.constant 0.000000e+00 : f32
    %30 = vector.broadcast %cst_22 : f32 to vector<16x1xf32>
    %31 = vector.extract_strided_slice %8 {offsets = [0, 0], sizes = [16, 3], strides = [1, 1]} : vector<16x4xf32> to vector<16x3xf32>
    %32 = tpu.concatenate %30, %31 in 1 : vector<16x1xf32>, vector<16x3xf32> -> vector<16x4xf32>
    %c2 = arith.constant 2 : index
    %c0_23 = arith.constant 0 : index
    %c0_24 = arith.constant 0 : index
    %33 = vector.load %arg2[%c2, %c0_23, %c0_24] : memref<9x1x4xf32, #tpu.memory_space<vmem>>, vector<1x1x4xf32>
    %34 = vector.shape_cast %33 : vector<1x1x4xf32> to vector<1x4xf32>
    %35 = vector.broadcast %34 : vector<1x4xf32> to vector<16x4xf32>
    %36 = arith.mulf %32, %35 : vector<16x4xf32>
    %c2_25 = arith.constant 2 : index
    %c0_26 = arith.constant 0 : index
    %c0_27 = arith.constant 0 : index
    %37 = vector.load %arg5[%c2_25, %c0_26, %c0_27] : memref<9x16x16xf32, #tpu.memory_space<vmem>>, vector<1x16x16xf32>
    %38 = vector.shape_cast %37 : vector<1x16x16xf32> to vector<16x16xf32>
    %cst_28 = arith.constant dense<0.000000e+00> : vector<16x4xf32>
    %39 = tpu.matmul %38, %36, %cst_28 {dimension_numbers = #tpu.dot_dimension_numbers<[1], [0], [0], [1], [0, 0, 1, 1], [], []>} : vector<16x16xf32>, vector<16x4xf32>, vector<16x4xf32> -> vector<16x4xf32>
    %40 = arith.addf %29, %39 : vector<16x4xf32>
    %cst_29 = arith.constant 0.000000e+00 : f32
    %41 = vector.broadcast %cst_29 : f32 to vector<16x1xf32>
    %42 = vector.extract_strided_slice %8 {offsets = [0, 0], sizes = [16, 3], strides = [1, 1]} : vector<16x4xf32> to vector<16x3xf32>
    %43 = tpu.concatenate %41, %42 in 1 : vector<16x1xf32>, vector<16x3xf32> -> vector<16x4xf32>
    %c3 = arith.constant 3 : index
    %c0_30 = arith.constant 0 : index
    %c0_31 = arith.constant 0 : index
    %44 = vector.load %arg2[%c3, %c0_30, %c0_31] : memref<9x1x4xf32, #tpu.memory_space<vmem>>, vector<1x1x4xf32>
    %45 = vector.shape_cast %44 : vector<1x1x4xf32> to vector<1x4xf32>
    %46 = vector.broadcast %45 : vector<1x4xf32> to vector<16x4xf32>
    %47 = arith.mulf %43, %46 : vector<16x4xf32>
    %c3_32 = arith.constant 3 : index
    %c0_33 = arith.constant 0 : index
    %c0_34 = arith.constant 0 : index
    %48 = vector.load %arg5[%c3_32, %c0_33, %c0_34] : memref<9x16x16xf32, #tpu.memory_space<vmem>>, vector<1x16x16xf32>
    %49 = vector.shape_cast %48 : vector<1x16x16xf32> to vector<16x16xf32>
    %cst_35 = arith.constant dense<0.000000e+00> : vector<16x4xf32>
    %50 = tpu.matmul %49, %47, %cst_35 {dimension_numbers = #tpu.dot_dimension_numbers<[1], [0], [0], [1], [0, 0, 1, 1], [], []>} : vector<16x16xf32>, vector<16x4xf32>, vector<16x4xf32> -> vector<16x4xf32>
    %51 = arith.addf %40, %50 : vector<16x4xf32>
    %c4 = arith.constant 4 : index
    %c0_36 = arith.constant 0 : index
    %c0_37 = arith.constant 0 : index
    %52 = vector.load %arg5[%c4, %c0_36, %c0_37] : memref<9x16x16xf32, #tpu.memory_space<vmem>>, vector<1x16x16xf32>
    %53 = vector.shape_cast %52 : vector<1x16x16xf32> to vector<16x16xf32>
    %cst_38 = arith.constant dense<0.000000e+00> : vector<16x4xf32>
    %54 = tpu.matmul %53, %8, %cst_38 {dimension_numbers = #tpu.dot_dimension_numbers<[1], [0], [0], [1], [0, 0, 1, 1], [], []>} : vector<16x16xf32>, vector<16x4xf32>, vector<16x4xf32> -> vector<16x4xf32>
    %55 = arith.addf %51, %54 : vector<16x4xf32>
    %56 = vector.extract_strided_slice %8 {offsets = [0, 1], sizes = [16, 3], strides = [1, 1]} : vector<16x4xf32> to vector<16x3xf32>
    %cst_39 = arith.constant 0.000000e+00 : f32
    %57 = vector.broadcast %cst_39 : f32 to vector<16x1xf32>
    %58 = tpu.concatenate %56, %57 in 1 : vector<16x3xf32>, vector<16x1xf32> -> vector<16x4xf32>
    %c5 = arith.constant 5 : index
    %c0_40 = arith.constant 0 : index
    %c0_41 = arith.constant 0 : index
    %59 = vector.load %arg2[%c5, %c0_40, %c0_41] : memref<9x1x4xf32, #tpu.memory_space<vmem>>, vector<1x1x4xf32>
    %60 = vector.shape_cast %59 : vector<1x1x4xf32> to vector<1x4xf32>
    %61 = vector.broadcast %60 : vector<1x4xf32> to vector<16x4xf32>
    %62 = arith.mulf %58, %61 : vector<16x4xf32>
    %c5_42 = arith.constant 5 : index
    %c0_43 = arith.constant 0 : index
    %c0_44 = arith.constant 0 : index
    %63 = vector.load %arg5[%c5_42, %c0_43, %c0_44] : memref<9x16x16xf32, #tpu.memory_space<vmem>>, vector<1x16x16xf32>
    %64 = vector.shape_cast %63 : vector<1x16x16xf32> to vector<16x16xf32>
    %cst_45 = arith.constant dense<0.000000e+00> : vector<16x4xf32>
    %65 = tpu.matmul %64, %62, %cst_45 {dimension_numbers = #tpu.dot_dimension_numbers<[1], [0], [0], [1], [0, 0, 1, 1], [], []>} : vector<16x16xf32>, vector<16x4xf32>, vector<16x4xf32> -> vector<16x4xf32>
    %66 = arith.addf %55, %65 : vector<16x4xf32>
    %67 = vector.extract_strided_slice %8 {offsets = [0, 1], sizes = [16, 3], strides = [1, 1]} : vector<16x4xf32> to vector<16x3xf32>
    %cst_46 = arith.constant 0.000000e+00 : f32
    %68 = vector.broadcast %cst_46 : f32 to vector<16x1xf32>
    %69 = tpu.concatenate %67, %68 in 1 : vector<16x3xf32>, vector<16x1xf32> -> vector<16x4xf32>
    %c6 = arith.constant 6 : index
    %c0_47 = arith.constant 0 : index
    %c0_48 = arith.constant 0 : index
    %70 = vector.load %arg2[%c6, %c0_47, %c0_48] : memref<9x1x4xf32, #tpu.memory_space<vmem>>, vector<1x1x4xf32>
    %71 = vector.shape_cast %70 : vector<1x1x4xf32> to vector<1x4xf32>
    %72 = vector.broadcast %71 : vector<1x4xf32> to vector<16x4xf32>
    %73 = arith.mulf %69, %72 : vector<16x4xf32>
    %c6_49 = arith.constant 6 : index
    %c0_50 = arith.constant 0 : index
    %c0_51 = arith.constant 0 : index
    %74 = vector.load %arg5[%c6_49, %c0_50, %c0_51] : memref<9x16x16xf32, #tpu.memory_space<vmem>>, vector<1x16x16xf32>
    %75 = vector.shape_cast %74 : vector<1x16x16xf32> to vector<16x16xf32>
    %cst_52 = arith.constant dense<0.000000e+00> : vector<16x4xf32>
    %76 = tpu.matmul %75, %73, %cst_52 {dimension_numbers = #tpu.dot_dimension_numbers<[1], [0], [0], [1], [0, 0, 1, 1], [], []>} : vector<16x16xf32>, vector<16x4xf32>, vector<16x4xf32> -> vector<16x4xf32>
    %77 = arith.addf %66, %76 : vector<16x4xf32>
    %78 = vector.extract_strided_slice %8 {offsets = [0, 2], sizes = [16, 2], strides = [1, 1]} : vector<16x4xf32> to vector<16x2xf32>
    %cst_53 = arith.constant 0.000000e+00 : f32
    %79 = vector.broadcast %cst_53 : f32 to vector<16x2xf32>
    %80 = tpu.concatenate %78, %79 in 1 : vector<16x2xf32>, vector<16x2xf32> -> vector<16x4xf32>
    %c7 = arith.constant 7 : index
    %c0_54 = arith.constant 0 : index
    %c0_55 = arith.constant 0 : index
    %81 = vector.load %arg2[%c7, %c0_54, %c0_55] : memref<9x1x4xf32, #tpu.memory_space<vmem>>, vector<1x1x4xf32>
    %82 = vector.shape_cast %81 : vector<1x1x4xf32> to vector<1x4xf32>
    %83 = vector.broadcast %82 : vector<1x4xf32> to vector<16x4xf32>
    %84 = arith.mulf %80, %83 : vector<16x4xf32>
    %c7_56 = arith.constant 7 : index
    %c0_57 = arith.constant 0 : index
    %c0_58 = arith.constant 0 : index
    %85 = vector.load %arg5[%c7_56, %c0_57, %c0_58] : memref<9x16x16xf32, #tpu.memory_space<vmem>>, vector<1x16x16xf32>
    %86 = vector.shape_cast %85 : vector<1x16x16xf32> to vector<16x16xf32>
    %cst_59 = arith.constant dense<0.000000e+00> : vector<16x4xf32>
    %87 = tpu.matmul %86, %84, %cst_59 {dimension_numbers = #tpu.dot_dimension_numbers<[1], [0], [0], [1], [0, 0, 1, 1], [], []>} : vector<16x16xf32>, vector<16x4xf32>, vector<16x4xf32> -> vector<16x4xf32>
    %88 = arith.addf %77, %87 : vector<16x4xf32>
    %89 = vector.extract_strided_slice %8 {offsets = [0, 3], sizes = [16, 1], strides = [1, 1]} : vector<16x4xf32> to vector<16x1xf32>
    %cst_60 = arith.constant 0.000000e+00 : f32
    %90 = vector.broadcast %cst_60 : f32 to vector<16x3xf32>
    %91 = tpu.concatenate %89, %90 in 1 : vector<16x1xf32>, vector<16x3xf32> -> vector<16x4xf32>
    %c8 = arith.constant 8 : index
    %c0_61 = arith.constant 0 : index
    %c0_62 = arith.constant 0 : index
    %92 = vector.load %arg2[%c8, %c0_61, %c0_62] : memref<9x1x4xf32, #tpu.memory_space<vmem>>, vector<1x1x4xf32>
    %93 = vector.shape_cast %92 : vector<1x1x4xf32> to vector<1x4xf32>
    %94 = vector.broadcast %93 : vector<1x4xf32> to vector<16x4xf32>
    %95 = arith.mulf %91, %94 : vector<16x4xf32>
    %c8_63 = arith.constant 8 : index
    %c0_64 = arith.constant 0 : index
    %c0_65 = arith.constant 0 : index
    %96 = vector.load %arg5[%c8_63, %c0_64, %c0_65] : memref<9x16x16xf32, #tpu.memory_space<vmem>>, vector<1x16x16xf32>
    %97 = vector.shape_cast %96 : vector<1x16x16xf32> to vector<16x16xf32>
    %cst_66 = arith.constant dense<0.000000e+00> : vector<16x4xf32>
    %98 = tpu.matmul %97, %95, %cst_66 {dimension_numbers = #tpu.dot_dimension_numbers<[1], [0], [0], [1], [0, 0, 1, 1], [], []>} : vector<16x16xf32>, vector<16x4xf32>, vector<16x4xf32> -> vector<16x4xf32>
    %99 = arith.addf %88, %98 : vector<16x4xf32>
    %c0_67 = arith.constant 0 : index
    %c0_68 = arith.constant 0 : index
    %100 = vector.load %arg6[%c0_67, %c0_68] : memref<16x1xf32, #tpu.memory_space<vmem>>, vector<16x1xf32>
    %101 = vector.broadcast %100 : vector<16x1xf32> to vector<16x4xf32>
    %102 = arith.addf %99, %101 : vector<16x4xf32>
    %cst_69 = arith.constant 0.000000e+00 : f32
    %103 = vector.broadcast %cst_69 : f32 to vector<16x4xf32>
    %104 = arith.maximumf %102, %103 : vector<16x4xf32>
    %c0_70 = arith.constant 0 : index
    %c0_71 = arith.constant 0 : index
    %105 = vector.load %arg7[%c0_70, %c0_71] : memref<32x16xf32, #tpu.memory_space<vmem>>, vector<32x16xf32>
    %cst_72 = arith.constant dense<0.000000e+00> : vector<32x4xf32>
    %106 = tpu.matmul %105, %104, %cst_72 {dimension_numbers = #tpu.dot_dimension_numbers<[1], [0], [0], [1], [0, 0, 1, 1], [], []>} : vector<32x16xf32>, vector<16x4xf32>, vector<32x4xf32> -> vector<32x4xf32>
    %c0_73 = arith.constant 0 : index
    %c0_74 = arith.constant 0 : index
    %107 = vector.load %arg8[%c0_73, %c0_74] : memref<32x1xf32, #tpu.memory_space<vmem>>, vector<32x1xf32>
    %108 = vector.broadcast %107 : vector<32x1xf32> to vector<32x4xf32>
    %109 = arith.addf %106, %108 : vector<32x4xf32>
    %c0_75 = arith.constant 0 : index
    %c0_76 = arith.constant 0 : index
    %110 = vector.load %arg9[%c0_75, %c0_76] : memref<32x1xf32, #tpu.memory_space<vmem>>, vector<32x1xf32>
    %111 = vector.broadcast %110 : vector<32x1xf32> to vector<32x4xf32>
    %112 = arith.mulf %111, %1 : vector<32x4xf32>
    %113 = arith.addf %109, %112 : vector<32x4xf32>
    %cst_77 = arith.constant 0.000000e+00 : f32
    %114 = vector.broadcast %cst_77 : f32 to vector<32x4xf32>
    %115 = arith.maximumf %113, %114 : vector<32x4xf32>
    %c0_78 = arith.constant 0 : index
    %c0_79 = arith.constant 0 : index
    %c0_80 = arith.constant 0 : index
    %116 = vector.load %arg10[%c0_78, %c0_79, %c0_80] : memref<1x32x4xf32, #tpu.memory_space<vmem>>, vector<1x32x4xf32>
    %117 = vector.shape_cast %116 : vector<1x32x4xf32> to vector<32x4xf32>
    %118 = vector.shape_cast %115 : vector<32x4xf32> to vector<1x32x4xf32>
    tpu.vector_store %arg10[%c0_78, %c0_79, %c0_80], %118 {strides = array<i32>} : memref<1x32x4xf32, #tpu.memory_space<vmem>>, vector<1x32x4xf32>,
    return
  }
  func.func @transform_0(%arg0: i32) -> (i32, i32, i32) {
    %c0_i32 = arith.constant 0 : i32
    %c0_i32_0 = arith.constant 0 : i32
    %c0_i32_1 = arith.constant 0 : i32
    return %arg0, %c0_i32, %c0_i32_0 : i32, i32, i32
  }
  func.func @transform_1(%arg0: i32) -> (i32, i32, i32) {
    %c0_i32 = arith.constant 0 : i32
    %c0_i32_0 = arith.constant 0 : i32
    %c0_i32_1 = arith.constant 0 : i32
    %c0_i32_2 = arith.constant 0 : i32
    return %c0_i32, %c0_i32_0, %c0_i32_1 : i32, i32, i32
  }
  func.func @transform_2(%arg0: i32) -> (i32, i32) {
    %c0_i32 = arith.constant 0 : i32
    %c0_i32_0 = arith.constant 0 : i32
    %c0_i32_1 = arith.constant 0 : i32
    return %c0_i32, %c0_i32_0 : i32, i32
  }
  func.func @transform_3(%arg0: i32) -> (i32, i32) {
    %c0_i32 = arith.constant 0 : i32
    %c0_i32_0 = arith.constant 0 : i32
    %c0_i32_1 = arith.constant 0 : i32
    return %c0_i32, %c0_i32_0 : i32, i32
  }
  func.func @transform_4(%arg0: i32) -> (i32, i32, i32) {
    %c0_i32 = arith.constant 0 : i32
    %c0_i32_0 = arith.constant 0 : i32
    %c0_i32_1 = arith.constant 0 : i32
    %c0_i32_2 = arith.constant 0 : i32
    return %c0_i32, %c0_i32_0, %c0_i32_1 : i32, i32, i32
  }
  func.func @transform_5(%arg0: i32) -> (i32, i32) {
    %c0_i32 = arith.constant 0 : i32
    %c0_i32_0 = arith.constant 0 : i32
    %c0_i32_1 = arith.constant 0 : i32
    return %c0_i32, %c0_i32_0 : i32, i32
  }
  func.func @transform_6(%arg0: i32) -> (i32, i32) {
    %c0_i32 = arith.constant 0 : i32
    %c0_i32_0 = arith.constant 0 : i32
    %c0_i32_1 = arith.constant 0 : i32
    return %c0_i32, %c0_i32_0 : i32, i32
  }
  func.func @transform_7(%arg0: i32) -> (i32, i32) {
    %c0_i32 = arith.constant 0 : i32
    %c0_i32_0 = arith.constant 0 : i32
    %c0_i32_1 = arith.constant 0 : i32
    return %c0_i32, %c0_i32_0 : i32, i32
  }
  func.func @transform_8(%arg0: i32) -> (i32, i32) {
    %c0_i32 = arith.constant 0 : i32
    %c0_i32_0 = arith.constant 0 : i32
    %c0_i32_1 = arith.constant 0 : i32
    return %c0_i32, %c0_i32_0 : i32, i32
  }
  func.func @transform_9(%arg0: i32) -> (i32, i32, i32) {
    %c0_i32 = arith.constant 0 : i32
    %c0_i32_0 = arith.constant 0 : i32
    %c0_i32_1 = arith.constant 0 : i32
    return %arg0, %c0_i32, %c0_i32_0 : i32, i32, i32
  }
}

module attributes {stable_mosaic.version = 11 : i64} {
  func.func @_bottleneck_kernel(%arg0: i32, %arg1: memref<1x32x1xf32, #tpu.memory_space<vmem>>, %arg2: memref<9x1x1xf32, #tpu.memory_space<vmem>>, %arg3: memref<16x32xf32, #tpu.memory_space<vmem>>, %arg4: memref<16x1xf32, #tpu.memory_space<vmem>>, %arg5: memref<9x16x16xf32, #tpu.memory_space<vmem>>, %arg6: memref<16x1xf32, #tpu.memory_space<vmem>>, %arg7: memref<32x16xf32, #tpu.memory_space<vmem>>, %arg8: memref<32x1xf32, #tpu.memory_space<vmem>>, %arg9: memref<32x1xf32, #tpu.memory_space<vmem>>, %arg10: memref<1x32x1xf32, #tpu.memory_space<vmem>>) attributes {dimension_semantics = [#tpu.dimension_semantics<parallel>], iteration_bounds = array<i64: 2>, scalar_prefetch = 0 : i64, scratch_operands = 0 : i64, tpu.core_type = #tpu.core_type<tc>, window_params = [{transform_indices = @transform_0, window_bounds = array<i64: 1, 32, 1>}, {pipeline_mode = #tpu.pipeline_mode<synchronous>, transform_indices = @transform_1, window_bounds = array<i64: 9, 1, 1>}, {pipeline_mode = #tpu.pipeline_mode<synchronous>, transform_indices = @transform_2, window_bounds = array<i64: 16, 32>}, {pipeline_mode = #tpu.pipeline_mode<synchronous>, transform_indices = @transform_3, window_bounds = array<i64: 16, 1>}, {pipeline_mode = #tpu.pipeline_mode<synchronous>, transform_indices = @transform_4, window_bounds = array<i64: 9, 16, 16>}, {pipeline_mode = #tpu.pipeline_mode<synchronous>, transform_indices = @transform_5, window_bounds = array<i64: 16, 1>}, {pipeline_mode = #tpu.pipeline_mode<synchronous>, transform_indices = @transform_6, window_bounds = array<i64: 32, 16>}, {pipeline_mode = #tpu.pipeline_mode<synchronous>, transform_indices = @transform_7, window_bounds = array<i64: 32, 1>}, {pipeline_mode = #tpu.pipeline_mode<synchronous>, transform_indices = @transform_8, window_bounds = array<i64: 32, 1>}, {transform_indices = @transform_9, window_bounds = array<i64: 1, 32, 1>}]} {
    %c0 = arith.constant 0 : index
    %c0_0 = arith.constant 0 : index
    %c0_1 = arith.constant 0 : index
    %0 = vector.load %arg1[%c0, %c0_0, %c0_1] : memref<1x32x1xf32, #tpu.memory_space<vmem>>, vector<1x32x1xf32>
    %1 = vector.shape_cast %0 : vector<1x32x1xf32> to vector<32x1xf32>
    %c0_2 = arith.constant 0 : index
    %c0_3 = arith.constant 0 : index
    %2 = vector.load %arg3[%c0_2, %c0_3] : memref<16x32xf32, #tpu.memory_space<vmem>>, vector<16x32xf32>
    %cst = arith.constant dense<0.000000e+00> : vector<16x1xf32>
    %3 = tpu.matmul %2, %1, %cst {dimension_numbers = #tpu.dot_dimension_numbers<[1], [0], [0], [1], [0, 0, 1, 1], [], []>} : vector<16x32xf32>, vector<32x1xf32>, vector<16x1xf32> -> vector<16x1xf32>
    %c0_4 = arith.constant 0 : index
    %c0_5 = arith.constant 0 : index
    %4 = vector.load %arg4[%c0_4, %c0_5] : memref<16x1xf32, #tpu.memory_space<vmem>>, vector<16x1xf32>
    %5 = arith.addf %3, %4 : vector<16x1xf32>
    %cst_6 = arith.constant 0.000000e+00 : f32
    %6 = vector.broadcast %cst_6 : f32 to vector<16x1xf32>
    %7 = arith.maximumf %5, %6 : vector<16x1xf32>
    %c4 = arith.constant 4 : index
    %c0_7 = arith.constant 0 : index
    %c0_8 = arith.constant 0 : index
    %8 = vector.load %arg5[%c4, %c0_7, %c0_8] : memref<9x16x16xf32, #tpu.memory_space<vmem>>, vector<1x16x16xf32>
    %9 = vector.shape_cast %8 : vector<1x16x16xf32> to vector<16x16xf32>
    %cst_9 = arith.constant dense<0.000000e+00> : vector<16x1xf32>
    %10 = tpu.matmul %9, %7, %cst_9 {dimension_numbers = #tpu.dot_dimension_numbers<[1], [0], [0], [1], [0, 0, 1, 1], [], []>} : vector<16x16xf32>, vector<16x1xf32>, vector<16x1xf32> -> vector<16x1xf32>
    %c0_10 = arith.constant 0 : index
    %c0_11 = arith.constant 0 : index
    %11 = vector.load %arg6[%c0_10, %c0_11] : memref<16x1xf32, #tpu.memory_space<vmem>>, vector<16x1xf32>
    %12 = arith.addf %10, %11 : vector<16x1xf32>
    %cst_12 = arith.constant 0.000000e+00 : f32
    %13 = vector.broadcast %cst_12 : f32 to vector<16x1xf32>
    %14 = arith.maximumf %12, %13 : vector<16x1xf32>
    %c0_13 = arith.constant 0 : index
    %c0_14 = arith.constant 0 : index
    %15 = vector.load %arg7[%c0_13, %c0_14] : memref<32x16xf32, #tpu.memory_space<vmem>>, vector<32x16xf32>
    %cst_15 = arith.constant dense<0.000000e+00> : vector<32x1xf32>
    %16 = tpu.matmul %15, %14, %cst_15 {dimension_numbers = #tpu.dot_dimension_numbers<[1], [0], [0], [1], [0, 0, 1, 1], [], []>} : vector<32x16xf32>, vector<16x1xf32>, vector<32x1xf32> -> vector<32x1xf32>
    %c0_16 = arith.constant 0 : index
    %c0_17 = arith.constant 0 : index
    %17 = vector.load %arg8[%c0_16, %c0_17] : memref<32x1xf32, #tpu.memory_space<vmem>>, vector<32x1xf32>
    %18 = arith.addf %16, %17 : vector<32x1xf32>
    %c0_18 = arith.constant 0 : index
    %c0_19 = arith.constant 0 : index
    %19 = vector.load %arg9[%c0_18, %c0_19] : memref<32x1xf32, #tpu.memory_space<vmem>>, vector<32x1xf32>
    %20 = arith.mulf %19, %1 : vector<32x1xf32>
    %21 = arith.addf %18, %20 : vector<32x1xf32>
    %cst_20 = arith.constant 0.000000e+00 : f32
    %22 = vector.broadcast %cst_20 : f32 to vector<32x1xf32>
    %23 = arith.maximumf %21, %22 : vector<32x1xf32>
    %c0_21 = arith.constant 0 : index
    %c0_22 = arith.constant 0 : index
    %c0_23 = arith.constant 0 : index
    %24 = vector.load %arg10[%c0_21, %c0_22, %c0_23] : memref<1x32x1xf32, #tpu.memory_space<vmem>>, vector<1x32x1xf32>
    %25 = vector.shape_cast %24 : vector<1x32x1xf32> to vector<32x1xf32>
    %26 = vector.shape_cast %23 : vector<32x1xf32> to vector<1x32x1xf32>
    tpu.vector_store %arg10[%c0_21, %c0_22, %c0_23], %26 {strides = array<i32>} : memref<1x32x1xf32, #tpu.memory_space<vmem>>, vector<1x32x1xf32>,
    return
  }
  func.func @transform_0(%arg0: i32) -> (i32, i32, i32) {
    %c0_i32 = arith.constant 0 : i32
    %c0_i32_0 = arith.constant 0 : i32
    %c0_i32_1 = arith.constant 0 : i32
    return %arg0, %c0_i32, %c0_i32_0 : i32, i32, i32
  }
  func.func @transform_1(%arg0: i32) -> (i32, i32, i32) {
    %c0_i32 = arith.constant 0 : i32
    %c0_i32_0 = arith.constant 0 : i32
    %c0_i32_1 = arith.constant 0 : i32
    %c0_i32_2 = arith.constant 0 : i32
    return %c0_i32, %c0_i32_0, %c0_i32_1 : i32, i32, i32
  }
  func.func @transform_2(%arg0: i32) -> (i32, i32) {
    %c0_i32 = arith.constant 0 : i32
    %c0_i32_0 = arith.constant 0 : i32
    %c0_i32_1 = arith.constant 0 : i32
    return %c0_i32, %c0_i32_0 : i32, i32
  }
  func.func @transform_3(%arg0: i32) -> (i32, i32) {
    %c0_i32 = arith.constant 0 : i32
    %c0_i32_0 = arith.constant 0 : i32
    %c0_i32_1 = arith.constant 0 : i32
    return %c0_i32, %c0_i32_0 : i32, i32
  }
  func.func @transform_4(%arg0: i32) -> (i32, i32, i32) {
    %c0_i32 = arith.constant 0 : i32
    %c0_i32_0 = arith.constant 0 : i32
    %c0_i32_1 = arith.constant 0 : i32
    %c0_i32_2 = arith.constant 0 : i32
    return %c0_i32, %c0_i32_0, %c0_i32_1 : i32, i32, i32
  }
  func.func @transform_5(%arg0: i32) -> (i32, i32) {
    %c0_i32 = arith.constant 0 : i32
    %c0_i32_0 = arith.constant 0 : i32
    %c0_i32_1 = arith.constant 0 : i32
    return %c0_i32, %c0_i32_0 : i32, i32
  }
  func.func @transform_6(%arg0: i32) -> (i32, i32) {
    %c0_i32 = arith.constant 0 : i32
    %c0_i32_0 = arith.constant 0 : i32
    %c0_i32_1 = arith.constant 0 : i32
    return %c0_i32, %c0_i32_0 : i32, i32
  }
  func.func @transform_7(%arg0: i32) -> (i32, i32) {
    %c0_i32 = arith.constant 0 : i32
    %c0_i32_0 = arith.constant 0 : i32
    %c0_i32_1 = arith.constant 0 : i32
    return %c0_i32, %c0_i32_0 : i32, i32
  }
  func.func @transform_8(%arg0: i32) -> (i32, i32) {
    %c0_i32 = arith.constant 0 : i32
    %c0_i32_0 = arith.constant 0 : i32
    %c0_i32_1 = arith.constant 0 : i32
    return %c0_i32, %c0_i32_0 : i32, i32
  }
  func.func @transform_9(%arg0: i32) -> (i32, i32, i32) {
    %c0_i32 = arith.constant 0 : i32
    %c0_i32_0 = arith.constant 0 : i32
    %c0_i32_1 = arith.constant 0 : i32
    return %arg0, %c0_i32, %c0_i32_0 : i32, i32, i32
  }
}

module attributes {stable_mosaic.version = 11 : i64} {
  func.func @_bottleneck_kernel(%arg0: i32, %arg1: memref<1x32x256xf32, #tpu.memory_space<vmem>>, %arg2: memref<9x1x256xf32, #tpu.memory_space<vmem>>, %arg3: memref<16x32xf32, #tpu.memory_space<vmem>>, %arg4: memref<16x1xf32, #tpu.memory_space<vmem>>, %arg5: memref<9x16x16xf32, #tpu.memory_space<vmem>>, %arg6: memref<16x1xf32, #tpu.memory_space<vmem>>, %arg7: memref<32x16xf32, #tpu.memory_space<vmem>>, %arg8: memref<32x1xf32, #tpu.memory_space<vmem>>, %arg9: memref<32x1xf32, #tpu.memory_space<vmem>>, %arg10: memref<1x32x256xf32, #tpu.memory_space<vmem>>) attributes {dimension_semantics = [#tpu.dimension_semantics<parallel>], iteration_bounds = array<i64: 2>, scalar_prefetch = 0 : i64, scratch_operands = 0 : i64, tpu.core_type = #tpu.core_type<tc>, window_params = [{transform_indices = @transform_0, window_bounds = array<i64: 1, 32, 256>}, {pipeline_mode = #tpu.pipeline_mode<synchronous>, transform_indices = @transform_1, window_bounds = array<i64: 9, 1, 256>}, {pipeline_mode = #tpu.pipeline_mode<synchronous>, transform_indices = @transform_2, window_bounds = array<i64: 16, 32>}, {pipeline_mode = #tpu.pipeline_mode<synchronous>, transform_indices = @transform_3, window_bounds = array<i64: 16, 1>}, {pipeline_mode = #tpu.pipeline_mode<synchronous>, transform_indices = @transform_4, window_bounds = array<i64: 9, 16, 16>}, {pipeline_mode = #tpu.pipeline_mode<synchronous>, transform_indices = @transform_5, window_bounds = array<i64: 16, 1>}, {pipeline_mode = #tpu.pipeline_mode<synchronous>, transform_indices = @transform_6, window_bounds = array<i64: 32, 16>}, {pipeline_mode = #tpu.pipeline_mode<synchronous>, transform_indices = @transform_7, window_bounds = array<i64: 32, 1>}, {pipeline_mode = #tpu.pipeline_mode<synchronous>, transform_indices = @transform_8, window_bounds = array<i64: 32, 1>}, {transform_indices = @transform_9, window_bounds = array<i64: 1, 32, 256>}]} {
    %c0 = arith.constant 0 : index
    %c0_0 = arith.constant 0 : index
    %c0_1 = arith.constant 0 : index
    %0 = vector.load %arg1[%c0, %c0_0, %c0_1] : memref<1x32x256xf32, #tpu.memory_space<vmem>>, vector<1x32x256xf32>
    %1 = vector.shape_cast %0 : vector<1x32x256xf32> to vector<32x256xf32>
    %c0_2 = arith.constant 0 : index
    %c0_3 = arith.constant 0 : index
    %2 = vector.load %arg3[%c0_2, %c0_3] : memref<16x32xf32, #tpu.memory_space<vmem>>, vector<16x32xf32>
    %cst = arith.constant dense<0.000000e+00> : vector<16x256xf32>
    %3 = tpu.matmul %2, %1, %cst {dimension_numbers = #tpu.dot_dimension_numbers<[1], [0], [0], [1], [0, 0, 1, 1], [], []>} : vector<16x32xf32>, vector<32x256xf32>, vector<16x256xf32> -> vector<16x256xf32>
    %c0_4 = arith.constant 0 : index
    %c0_5 = arith.constant 0 : index
    %4 = vector.load %arg4[%c0_4, %c0_5] : memref<16x1xf32, #tpu.memory_space<vmem>>, vector<16x1xf32>
    %5 = vector.broadcast %4 : vector<16x1xf32> to vector<16x256xf32>
    %6 = arith.addf %3, %5 : vector<16x256xf32>
    %cst_6 = arith.constant 0.000000e+00 : f32
    %7 = vector.broadcast %cst_6 : f32 to vector<16x256xf32>
    %8 = arith.maximumf %6, %7 : vector<16x256xf32>
    %cst_7 = arith.constant 0.000000e+00 : f32
    %9 = vector.broadcast %cst_7 : f32 to vector<16x17xf32>
    %10 = vector.extract_strided_slice %8 {offsets = [0, 0], sizes = [16, 239], strides = [1, 1]} : vector<16x256xf32> to vector<16x239xf32>
    %11 = tpu.concatenate %9, %10 in 1 : vector<16x17xf32>, vector<16x239xf32> -> vector<16x256xf32>
    %c0_8 = arith.constant 0 : index
    %c0_9 = arith.constant 0 : index
    %c0_10 = arith.constant 0 : index
    %12 = vector.load %arg2[%c0_8, %c0_9, %c0_10] : memref<9x1x256xf32, #tpu.memory_space<vmem>>, vector<1x1x256xf32>
    %13 = vector.shape_cast %12 : vector<1x1x256xf32> to vector<1x256xf32>
    %14 = vector.broadcast %13 : vector<1x256xf32> to vector<16x256xf32>
    %15 = arith.mulf %11, %14 : vector<16x256xf32>
    %c0_11 = arith.constant 0 : index
    %c0_12 = arith.constant 0 : index
    %c0_13 = arith.constant 0 : index
    %16 = vector.load %arg5[%c0_11, %c0_12, %c0_13] : memref<9x16x16xf32, #tpu.memory_space<vmem>>, vector<1x16x16xf32>
    %17 = vector.shape_cast %16 : vector<1x16x16xf32> to vector<16x16xf32>
    %cst_14 = arith.constant dense<0.000000e+00> : vector<16x256xf32>
    %18 = tpu.matmul %17, %15, %cst_14 {dimension_numbers = #tpu.dot_dimension_numbers<[1], [0], [0], [1], [0, 0, 1, 1], [], []>} : vector<16x16xf32>, vector<16x256xf32>, vector<16x256xf32> -> vector<16x256xf32>
    %cst_15 = arith.constant 0.000000e+00 : f32
    %19 = vector.broadcast %cst_15 : f32 to vector<16x16xf32>
    %20 = vector.extract_strided_slice %8 {offsets = [0, 0], sizes = [16, 240], strides = [1, 1]} : vector<16x256xf32> to vector<16x240xf32>
    %21 = tpu.concatenate %19, %20 in 1 : vector<16x16xf32>, vector<16x240xf32> -> vector<16x256xf32>
    %c1 = arith.constant 1 : index
    %c0_16 = arith.constant 0 : index
    %c0_17 = arith.constant 0 : index
    %22 = vector.load %arg2[%c1, %c0_16, %c0_17] : memref<9x1x256xf32, #tpu.memory_space<vmem>>, vector<1x1x256xf32>
    %23 = vector.shape_cast %22 : vector<1x1x256xf32> to vector<1x256xf32>
    %24 = vector.broadcast %23 : vector<1x256xf32> to vector<16x256xf32>
    %25 = arith.mulf %21, %24 : vector<16x256xf32>
    %c1_18 = arith.constant 1 : index
    %c0_19 = arith.constant 0 : index
    %c0_20 = arith.constant 0 : index
    %26 = vector.load %arg5[%c1_18, %c0_19, %c0_20] : memref<9x16x16xf32, #tpu.memory_space<vmem>>, vector<1x16x16xf32>
    %27 = vector.shape_cast %26 : vector<1x16x16xf32> to vector<16x16xf32>
    %cst_21 = arith.constant dense<0.000000e+00> : vector<16x256xf32>
    %28 = tpu.matmul %27, %25, %cst_21 {dimension_numbers = #tpu.dot_dimension_numbers<[1], [0], [0], [1], [0, 0, 1, 1], [], []>} : vector<16x16xf32>, vector<16x256xf32>, vector<16x256xf32> -> vector<16x256xf32>
    %29 = arith.addf %18, %28 : vector<16x256xf32>
    %cst_22 = arith.constant 0.000000e+00 : f32
    %30 = vector.broadcast %cst_22 : f32 to vector<16x15xf32>
    %31 = vector.extract_strided_slice %8 {offsets = [0, 0], sizes = [16, 241], strides = [1, 1]} : vector<16x256xf32> to vector<16x241xf32>
    %32 = tpu.concatenate %30, %31 in 1 : vector<16x15xf32>, vector<16x241xf32> -> vector<16x256xf32>
    %c2 = arith.constant 2 : index
    %c0_23 = arith.constant 0 : index
    %c0_24 = arith.constant 0 : index
    %33 = vector.load %arg2[%c2, %c0_23, %c0_24] : memref<9x1x256xf32, #tpu.memory_space<vmem>>, vector<1x1x256xf32>
    %34 = vector.shape_cast %33 : vector<1x1x256xf32> to vector<1x256xf32>
    %35 = vector.broadcast %34 : vector<1x256xf32> to vector<16x256xf32>
    %36 = arith.mulf %32, %35 : vector<16x256xf32>
    %c2_25 = arith.constant 2 : index
    %c0_26 = arith.constant 0 : index
    %c0_27 = arith.constant 0 : index
    %37 = vector.load %arg5[%c2_25, %c0_26, %c0_27] : memref<9x16x16xf32, #tpu.memory_space<vmem>>, vector<1x16x16xf32>
    %38 = vector.shape_cast %37 : vector<1x16x16xf32> to vector<16x16xf32>
    %cst_28 = arith.constant dense<0.000000e+00> : vector<16x256xf32>
    %39 = tpu.matmul %38, %36, %cst_28 {dimension_numbers = #tpu.dot_dimension_numbers<[1], [0], [0], [1], [0, 0, 1, 1], [], []>} : vector<16x16xf32>, vector<16x256xf32>, vector<16x256xf32> -> vector<16x256xf32>
    %40 = arith.addf %29, %39 : vector<16x256xf32>
    %cst_29 = arith.constant 0.000000e+00 : f32
    %41 = vector.broadcast %cst_29 : f32 to vector<16x1xf32>
    %42 = vector.extract_strided_slice %8 {offsets = [0, 0], sizes = [16, 255], strides = [1, 1]} : vector<16x256xf32> to vector<16x255xf32>
    %43 = tpu.concatenate %41, %42 in 1 : vector<16x1xf32>, vector<16x255xf32> -> vector<16x256xf32>
    %c3 = arith.constant 3 : index
    %c0_30 = arith.constant 0 : index
    %c0_31 = arith.constant 0 : index
    %44 = vector.load %arg2[%c3, %c0_30, %c0_31] : memref<9x1x256xf32, #tpu.memory_space<vmem>>, vector<1x1x256xf32>
    %45 = vector.shape_cast %44 : vector<1x1x256xf32> to vector<1x256xf32>
    %46 = vector.broadcast %45 : vector<1x256xf32> to vector<16x256xf32>
    %47 = arith.mulf %43, %46 : vector<16x256xf32>
    %c3_32 = arith.constant 3 : index
    %c0_33 = arith.constant 0 : index
    %c0_34 = arith.constant 0 : index
    %48 = vector.load %arg5[%c3_32, %c0_33, %c0_34] : memref<9x16x16xf32, #tpu.memory_space<vmem>>, vector<1x16x16xf32>
    %49 = vector.shape_cast %48 : vector<1x16x16xf32> to vector<16x16xf32>
    %cst_35 = arith.constant dense<0.000000e+00> : vector<16x256xf32>
    %50 = tpu.matmul %49, %47, %cst_35 {dimension_numbers = #tpu.dot_dimension_numbers<[1], [0], [0], [1], [0, 0, 1, 1], [], []>} : vector<16x16xf32>, vector<16x256xf32>, vector<16x256xf32> -> vector<16x256xf32>
    %51 = arith.addf %40, %50 : vector<16x256xf32>
    %c4 = arith.constant 4 : index
    %c0_36 = arith.constant 0 : index
    %c0_37 = arith.constant 0 : index
    %52 = vector.load %arg5[%c4, %c0_36, %c0_37] : memref<9x16x16xf32, #tpu.memory_space<vmem>>, vector<1x16x16xf32>
    %53 = vector.shape_cast %52 : vector<1x16x16xf32> to vector<16x16xf32>
    %cst_38 = arith.constant dense<0.000000e+00> : vector<16x256xf32>
    %54 = tpu.matmul %53, %8, %cst_38 {dimension_numbers = #tpu.dot_dimension_numbers<[1], [0], [0], [1], [0, 0, 1, 1], [], []>} : vector<16x16xf32>, vector<16x256xf32>, vector<16x256xf32> -> vector<16x256xf32>
    %55 = arith.addf %51, %54 : vector<16x256xf32>
    %56 = vector.extract_strided_slice %8 {offsets = [0, 1], sizes = [16, 255], strides = [1, 1]} : vector<16x256xf32> to vector<16x255xf32>
    %cst_39 = arith.constant 0.000000e+00 : f32
    %57 = vector.broadcast %cst_39 : f32 to vector<16x1xf32>
    %58 = tpu.concatenate %56, %57 in 1 : vector<16x255xf32>, vector<16x1xf32> -> vector<16x256xf32>
    %c5 = arith.constant 5 : index
    %c0_40 = arith.constant 0 : index
    %c0_41 = arith.constant 0 : index
    %59 = vector.load %arg2[%c5, %c0_40, %c0_41] : memref<9x1x256xf32, #tpu.memory_space<vmem>>, vector<1x1x256xf32>
    %60 = vector.shape_cast %59 : vector<1x1x256xf32> to vector<1x256xf32>
    %61 = vector.broadcast %60 : vector<1x256xf32> to vector<16x256xf32>
    %62 = arith.mulf %58, %61 : vector<16x256xf32>
    %c5_42 = arith.constant 5 : index
    %c0_43 = arith.constant 0 : index
    %c0_44 = arith.constant 0 : index
    %63 = vector.load %arg5[%c5_42, %c0_43, %c0_44] : memref<9x16x16xf32, #tpu.memory_space<vmem>>, vector<1x16x16xf32>
    %64 = vector.shape_cast %63 : vector<1x16x16xf32> to vector<16x16xf32>
    %cst_45 = arith.constant dense<0.000000e+00> : vector<16x256xf32>
    %65 = tpu.matmul %64, %62, %cst_45 {dimension_numbers = #tpu.dot_dimension_numbers<[1], [0], [0], [1], [0, 0, 1, 1], [], []>} : vector<16x16xf32>, vector<16x256xf32>, vector<16x256xf32> -> vector<16x256xf32>
    %66 = arith.addf %55, %65 : vector<16x256xf32>
    %67 = vector.extract_strided_slice %8 {offsets = [0, 15], sizes = [16, 241], strides = [1, 1]} : vector<16x256xf32> to vector<16x241xf32>
    %cst_46 = arith.constant 0.000000e+00 : f32
    %68 = vector.broadcast %cst_46 : f32 to vector<16x15xf32>
    %69 = tpu.concatenate %67, %68 in 1 : vector<16x241xf32>, vector<16x15xf32> -> vector<16x256xf32>
    %c6 = arith.constant 6 : index
    %c0_47 = arith.constant 0 : index
    %c0_48 = arith.constant 0 : index
    %70 = vector.load %arg2[%c6, %c0_47, %c0_48] : memref<9x1x256xf32, #tpu.memory_space<vmem>>, vector<1x1x256xf32>
    %71 = vector.shape_cast %70 : vector<1x1x256xf32> to vector<1x256xf32>
    %72 = vector.broadcast %71 : vector<1x256xf32> to vector<16x256xf32>
    %73 = arith.mulf %69, %72 : vector<16x256xf32>
    %c6_49 = arith.constant 6 : index
    %c0_50 = arith.constant 0 : index
    %c0_51 = arith.constant 0 : index
    %74 = vector.load %arg5[%c6_49, %c0_50, %c0_51] : memref<9x16x16xf32, #tpu.memory_space<vmem>>, vector<1x16x16xf32>
    %75 = vector.shape_cast %74 : vector<1x16x16xf32> to vector<16x16xf32>
    %cst_52 = arith.constant dense<0.000000e+00> : vector<16x256xf32>
    %76 = tpu.matmul %75, %73, %cst_52 {dimension_numbers = #tpu.dot_dimension_numbers<[1], [0], [0], [1], [0, 0, 1, 1], [], []>} : vector<16x16xf32>, vector<16x256xf32>, vector<16x256xf32> -> vector<16x256xf32>
    %77 = arith.addf %66, %76 : vector<16x256xf32>
    %78 = vector.extract_strided_slice %8 {offsets = [0, 16], sizes = [16, 240], strides = [1, 1]} : vector<16x256xf32> to vector<16x240xf32>
    %cst_53 = arith.constant 0.000000e+00 : f32
    %79 = vector.broadcast %cst_53 : f32 to vector<16x16xf32>
    %80 = tpu.concatenate %78, %79 in 1 : vector<16x240xf32>, vector<16x16xf32> -> vector<16x256xf32>
    %c7 = arith.constant 7 : index
    %c0_54 = arith.constant 0 : index
    %c0_55 = arith.constant 0 : index
    %81 = vector.load %arg2[%c7, %c0_54, %c0_55] : memref<9x1x256xf32, #tpu.memory_space<vmem>>, vector<1x1x256xf32>
    %82 = vector.shape_cast %81 : vector<1x1x256xf32> to vector<1x256xf32>
    %83 = vector.broadcast %82 : vector<1x256xf32> to vector<16x256xf32>
    %84 = arith.mulf %80, %83 : vector<16x256xf32>
    %c7_56 = arith.constant 7 : index
    %c0_57 = arith.constant 0 : index
    %c0_58 = arith.constant 0 : index
    %85 = vector.load %arg5[%c7_56, %c0_57, %c0_58] : memref<9x16x16xf32, #tpu.memory_space<vmem>>, vector<1x16x16xf32>
    %86 = vector.shape_cast %85 : vector<1x16x16xf32> to vector<16x16xf32>
    %cst_59 = arith.constant dense<0.000000e+00> : vector<16x256xf32>
    %87 = tpu.matmul %86, %84, %cst_59 {dimension_numbers = #tpu.dot_dimension_numbers<[1], [0], [0], [1], [0, 0, 1, 1], [], []>} : vector<16x16xf32>, vector<16x256xf32>, vector<16x256xf32> -> vector<16x256xf32>
    %88 = arith.addf %77, %87 : vector<16x256xf32>
    %89 = vector.extract_strided_slice %8 {offsets = [0, 17], sizes = [16, 239], strides = [1, 1]} : vector<16x256xf32> to vector<16x239xf32>
    %cst_60 = arith.constant 0.000000e+00 : f32
    %90 = vector.broadcast %cst_60 : f32 to vector<16x17xf32>
    %91 = tpu.concatenate %89, %90 in 1 : vector<16x239xf32>, vector<16x17xf32> -> vector<16x256xf32>
    %c8 = arith.constant 8 : index
    %c0_61 = arith.constant 0 : index
    %c0_62 = arith.constant 0 : index
    %92 = vector.load %arg2[%c8, %c0_61, %c0_62] : memref<9x1x256xf32, #tpu.memory_space<vmem>>, vector<1x1x256xf32>
    %93 = vector.shape_cast %92 : vector<1x1x256xf32> to vector<1x256xf32>
    %94 = vector.broadcast %93 : vector<1x256xf32> to vector<16x256xf32>
    %95 = arith.mulf %91, %94 : vector<16x256xf32>
    %c8_63 = arith.constant 8 : index
    %c0_64 = arith.constant 0 : index
    %c0_65 = arith.constant 0 : index
    %96 = vector.load %arg5[%c8_63, %c0_64, %c0_65] : memref<9x16x16xf32, #tpu.memory_space<vmem>>, vector<1x16x16xf32>
    %97 = vector.shape_cast %96 : vector<1x16x16xf32> to vector<16x16xf32>
    %cst_66 = arith.constant dense<0.000000e+00> : vector<16x256xf32>
    %98 = tpu.matmul %97, %95, %cst_66 {dimension_numbers = #tpu.dot_dimension_numbers<[1], [0], [0], [1], [0, 0, 1, 1], [], []>} : vector<16x16xf32>, vector<16x256xf32>, vector<16x256xf32> -> vector<16x256xf32>
    %99 = arith.addf %88, %98 : vector<16x256xf32>
    %c0_67 = arith.constant 0 : index
    %c0_68 = arith.constant 0 : index
    %100 = vector.load %arg6[%c0_67, %c0_68] : memref<16x1xf32, #tpu.memory_space<vmem>>, vector<16x1xf32>
    %101 = vector.broadcast %100 : vector<16x1xf32> to vector<16x256xf32>
    %102 = arith.addf %99, %101 : vector<16x256xf32>
    %cst_69 = arith.constant 0.000000e+00 : f32
    %103 = vector.broadcast %cst_69 : f32 to vector<16x256xf32>
    %104 = arith.maximumf %102, %103 : vector<16x256xf32>
    %c0_70 = arith.constant 0 : index
    %c0_71 = arith.constant 0 : index
    %105 = vector.load %arg7[%c0_70, %c0_71] : memref<32x16xf32, #tpu.memory_space<vmem>>, vector<32x16xf32>
    %cst_72 = arith.constant dense<0.000000e+00> : vector<32x256xf32>
    %106 = tpu.matmul %105, %104, %cst_72 {dimension_numbers = #tpu.dot_dimension_numbers<[1], [0], [0], [1], [0, 0, 1, 1], [], []>} : vector<32x16xf32>, vector<16x256xf32>, vector<32x256xf32> -> vector<32x256xf32>
    %c0_73 = arith.constant 0 : index
    %c0_74 = arith.constant 0 : index
    %107 = vector.load %arg8[%c0_73, %c0_74] : memref<32x1xf32, #tpu.memory_space<vmem>>, vector<32x1xf32>
    %108 = vector.broadcast %107 : vector<32x1xf32> to vector<32x256xf32>
    %109 = arith.addf %106, %108 : vector<32x256xf32>
    %c0_75 = arith.constant 0 : index
    %c0_76 = arith.constant 0 : index
    %110 = vector.load %arg9[%c0_75, %c0_76] : memref<32x1xf32, #tpu.memory_space<vmem>>, vector<32x1xf32>
    %111 = vector.broadcast %110 : vector<32x1xf32> to vector<32x256xf32>
    %112 = arith.mulf %111, %1 : vector<32x256xf32>
    %113 = arith.addf %109, %112 : vector<32x256xf32>
    %cst_77 = arith.constant 0.000000e+00 : f32
    %114 = vector.broadcast %cst_77 : f32 to vector<32x256xf32>
    %115 = arith.maximumf %113, %114 : vector<32x256xf32>
    %c0_78 = arith.constant 0 : index
    %c0_79 = arith.constant 0 : index
    %c0_80 = arith.constant 0 : index
    %116 = vector.load %arg10[%c0_78, %c0_79, %c0_80] : memref<1x32x256xf32, #tpu.memory_space<vmem>>, vector<1x32x256xf32>
    %117 = vector.shape_cast %116 : vector<1x32x256xf32> to vector<32x256xf32>
    %118 = vector.shape_cast %115 : vector<32x256xf32> to vector<1x32x256xf32>
    tpu.vector_store %arg10[%c0_78, %c0_79, %c0_80], %118 {strides = array<i32>} : memref<1x32x256xf32, #tpu.memory_space<vmem>>, vector<1x32x256xf32>,
    return
  }
  func.func @transform_0(%arg0: i32) -> (i32, i32, i32) {
    %c0_i32 = arith.constant 0 : i32
    %c0_i32_0 = arith.constant 0 : i32
    %c0_i32_1 = arith.constant 0 : i32
    return %arg0, %c0_i32, %c0_i32_0 : i32, i32, i32
  }
  func.func @transform_1(%arg0: i32) -> (i32, i32, i32) {
    %c0_i32 = arith.constant 0 : i32
    %c0_i32_0 = arith.constant 0 : i32
    %c0_i32_1 = arith.constant 0 : i32
    %c0_i32_2 = arith.constant 0 : i32
    return %c0_i32, %c0_i32_0, %c0_i32_1 : i32, i32, i32
  }
  func.func @transform_2(%arg0: i32) -> (i32, i32) {
    %c0_i32 = arith.constant 0 : i32
    %c0_i32_0 = arith.constant 0 : i32
    %c0_i32_1 = arith.constant 0 : i32
    return %c0_i32, %c0_i32_0 : i32, i32
  }
  func.func @transform_3(%arg0: i32) -> (i32, i32) {
    %c0_i32 = arith.constant 0 : i32
    %c0_i32_0 = arith.constant 0 : i32
    %c0_i32_1 = arith.constant 0 : i32
    return %c0_i32, %c0_i32_0 : i32, i32
  }
  func.func @transform_4(%arg0: i32) -> (i32, i32, i32) {
    %c0_i32 = arith.constant 0 : i32
    %c0_i32_0 = arith.constant 0 : i32
    %c0_i32_1 = arith.constant 0 : i32
    %c0_i32_2 = arith.constant 0 : i32
    return %c0_i32, %c0_i32_0, %c0_i32_1 : i32, i32, i32
  }
  func.func @transform_5(%arg0: i32) -> (i32, i32) {
    %c0_i32 = arith.constant 0 : i32
    %c0_i32_0 = arith.constant 0 : i32
    %c0_i32_1 = arith.constant 0 : i32
    return %c0_i32, %c0_i32_0 : i32, i32
  }
  func.func @transform_6(%arg0: i32) -> (i32, i32) {
    %c0_i32 = arith.constant 0 : i32
    %c0_i32_0 = arith.constant 0 : i32
    %c0_i32_1 = arith.constant 0 : i32
    return %c0_i32, %c0_i32_0 : i32, i32
  }
  func.func @transform_7(%arg0: i32) -> (i32, i32) {
    %c0_i32 = arith.constant 0 : i32
    %c0_i32_0 = arith.constant 0 : i32
    %c0_i32_1 = arith.constant 0 : i32
    return %c0_i32, %c0_i32_0 : i32, i32
  }
  func.func @transform_8(%arg0: i32) -> (i32, i32) {
    %c0_i32 = arith.constant 0 : i32
    %c0_i32_0 = arith.constant 0 : i32
    %c0_i32_1 = arith.constant 0 : i32
    return %c0_i32, %c0_i32_0 : i32, i32
  }
  func.func @transform_9(%arg0: i32) -> (i32, i32, i32) {
    %c0_i32 = arith.constant 0 : i32
    %c0_i32_0 = arith.constant 0 : i32
    %c0_i32_1 = arith.constant 0 : i32
    return %arg0, %c0_i32, %c0_i32_0 : i32, i32, i32
  }
}

module attributes {stable_mosaic.version = 11 : i64} {
  func.func @_head_kernel(%arg0: i32, %arg1: memref<1x32x256xf32, #tpu.memory_space<vmem>>, %arg2: memref<16x32xf32, #tpu.memory_space<vmem>>, %arg3: memref<16x1xf32, #tpu.memory_space<vmem>>, %arg4: memref<32x32xf32, #tpu.memory_space<vmem>>, %arg5: memref<32x16xf32, #tpu.memory_space<vmem>>, %arg6: memref<32x1xf32, #tpu.memory_space<vmem>>, %arg7: memref<1x16x256xf32, #tpu.memory_space<vmem>>, %arg8: memref<1x32x256xf32, #tpu.memory_space<vmem>>) attributes {dimension_semantics = [#tpu.dimension_semantics<parallel>], iteration_bounds = array<i64: 2>, scalar_prefetch = 0 : i64, scratch_operands = 0 : i64, tpu.core_type = #tpu.core_type<tc>, window_params = [{transform_indices = @transform_0, window_bounds = array<i64: 1, 32, 256>}, {pipeline_mode = #tpu.pipeline_mode<synchronous>, transform_indices = @transform_1, window_bounds = array<i64: 16, 32>}, {pipeline_mode = #tpu.pipeline_mode<synchronous>, transform_indices = @transform_2, window_bounds = array<i64: 16, 1>}, {pipeline_mode = #tpu.pipeline_mode<synchronous>, transform_indices = @transform_3, window_bounds = array<i64: 32, 32>}, {pipeline_mode = #tpu.pipeline_mode<synchronous>, transform_indices = @transform_4, window_bounds = array<i64: 32, 16>}, {pipeline_mode = #tpu.pipeline_mode<synchronous>, transform_indices = @transform_5, window_bounds = array<i64: 32, 1>}, {transform_indices = @transform_6, window_bounds = array<i64: 1, 16, 256>}, {transform_indices = @transform_7, window_bounds = array<i64: 1, 32, 256>}]} {
    %c0 = arith.constant 0 : index
    %c0_0 = arith.constant 0 : index
    %c0_1 = arith.constant 0 : index
    %0 = vector.load %arg1[%c0, %c0_0, %c0_1] : memref<1x32x256xf32, #tpu.memory_space<vmem>>, vector<1x32x256xf32>
    %1 = vector.shape_cast %0 : vector<1x32x256xf32> to vector<32x256xf32>
    %c0_2 = arith.constant 0 : index
    %c0_3 = arith.constant 0 : index
    %2 = vector.load %arg2[%c0_2, %c0_3] : memref<16x32xf32, #tpu.memory_space<vmem>>, vector<16x32xf32>
    %cst = arith.constant dense<0.000000e+00> : vector<16x256xf32>
    %3 = tpu.matmul %2, %1, %cst {dimension_numbers = #tpu.dot_dimension_numbers<[1], [0], [0], [1], [0, 0, 1, 1], [], []>} : vector<16x32xf32>, vector<32x256xf32>, vector<16x256xf32> -> vector<16x256xf32>
    %c0_4 = arith.constant 0 : index
    %c0_5 = arith.constant 0 : index
    %4 = vector.load %arg3[%c0_4, %c0_5] : memref<16x1xf32, #tpu.memory_space<vmem>>, vector<16x1xf32>
    %5 = vector.broadcast %4 : vector<16x1xf32> to vector<16x256xf32>
    %6 = arith.addf %3, %5 : vector<16x256xf32>
    %7 = arith.negf %6 : vector<16x256xf32>
    %8 = math.exp %7 : vector<16x256xf32>
    %cst_6 = arith.constant 1.000000e+00 : f32
    %9 = vector.broadcast %cst_6 : f32 to vector<16x256xf32>
    %10 = arith.addf %9, %8 : vector<16x256xf32>
    %11 = arith.divf %9, %10 : vector<16x256xf32>
    %c0_7 = arith.constant 0 : index
    %c0_8 = arith.constant 0 : index
    %12 = vector.load %arg4[%c0_7, %c0_8] : memref<32x32xf32, #tpu.memory_space<vmem>>, vector<32x32xf32>
    %cst_9 = arith.constant dense<0.000000e+00> : vector<32x256xf32>
    %13 = tpu.matmul %12, %1, %cst_9 {dimension_numbers = #tpu.dot_dimension_numbers<[1], [0], [0], [1], [0, 0, 1, 1], [], []>} : vector<32x32xf32>, vector<32x256xf32>, vector<32x256xf32> -> vector<32x256xf32>
    %c0_10 = arith.constant 0 : index
    %c0_11 = arith.constant 0 : index
    %14 = vector.load %arg5[%c0_10, %c0_11] : memref<32x16xf32, #tpu.memory_space<vmem>>, vector<32x16xf32>
    %cst_12 = arith.constant dense<0.000000e+00> : vector<32x256xf32>
    %15 = tpu.matmul %14, %11, %cst_12 {dimension_numbers = #tpu.dot_dimension_numbers<[1], [0], [0], [1], [0, 0, 1, 1], [], []>} : vector<32x16xf32>, vector<16x256xf32>, vector<32x256xf32> -> vector<32x256xf32>
    %16 = arith.addf %13, %15 : vector<32x256xf32>
    %c0_13 = arith.constant 0 : index
    %c0_14 = arith.constant 0 : index
    %17 = vector.load %arg6[%c0_13, %c0_14] : memref<32x1xf32, #tpu.memory_space<vmem>>, vector<32x1xf32>
    %18 = vector.broadcast %17 : vector<32x1xf32> to vector<32x256xf32>
    %19 = arith.addf %16, %18 : vector<32x256xf32>
    %cst_15 = arith.constant 0.000000e+00 : f32
    %20 = vector.broadcast %cst_15 : f32 to vector<32x256xf32>
    %21 = arith.maximumf %19, %20 : vector<32x256xf32>
    %c0_16 = arith.constant 0 : index
    %c0_17 = arith.constant 0 : index
    %c0_18 = arith.constant 0 : index
    %22 = vector.load %arg7[%c0_16, %c0_17, %c0_18] : memref<1x16x256xf32, #tpu.memory_space<vmem>>, vector<1x16x256xf32>
    %23 = vector.shape_cast %22 : vector<1x16x256xf32> to vector<16x256xf32>
    %24 = vector.shape_cast %11 : vector<16x256xf32> to vector<1x16x256xf32>
    tpu.vector_store %arg7[%c0_16, %c0_17, %c0_18], %24 {strides = array<i32>} : memref<1x16x256xf32, #tpu.memory_space<vmem>>, vector<1x16x256xf32>,
    %c0_19 = arith.constant 0 : index
    %c0_20 = arith.constant 0 : index
    %c0_21 = arith.constant 0 : index
    %25 = vector.load %arg8[%c0_19, %c0_20, %c0_21] : memref<1x32x256xf32, #tpu.memory_space<vmem>>, vector<1x32x256xf32>
    %26 = vector.shape_cast %25 : vector<1x32x256xf32> to vector<32x256xf32>
    %27 = vector.shape_cast %21 : vector<32x256xf32> to vector<1x32x256xf32>
    tpu.vector_store %arg8[%c0_19, %c0_20, %c0_21], %27 {strides = array<i32>} : memref<1x32x256xf32, #tpu.memory_space<vmem>>, vector<1x32x256xf32>,
    return
  }
  func.func @transform_0(%arg0: i32) -> (i32, i32, i32) {
    %c0_i32 = arith.constant 0 : i32
    %c0_i32_0 = arith.constant 0 : i32
    %c0_i32_1 = arith.constant 0 : i32
    return %arg0, %c0_i32, %c0_i32_0 : i32, i32, i32
  }
  func.func @transform_1(%arg0: i32) -> (i32, i32) {
    %c0_i32 = arith.constant 0 : i32
    %c0_i32_0 = arith.constant 0 : i32
    %c0_i32_1 = arith.constant 0 : i32
    return %c0_i32, %c0_i32_0 : i32, i32
  }
  func.func @transform_2(%arg0: i32) -> (i32, i32) {
    %c0_i32 = arith.constant 0 : i32
    %c0_i32_0 = arith.constant 0 : i32
    %c0_i32_1 = arith.constant 0 : i32
    return %c0_i32, %c0_i32_0 : i32, i32
  }
  func.func @transform_3(%arg0: i32) -> (i32, i32) {
    %c0_i32 = arith.constant 0 : i32
    %c0_i32_0 = arith.constant 0 : i32
    %c0_i32_1 = arith.constant 0 : i32
    return %c0_i32, %c0_i32_0 : i32, i32
  }
  func.func @transform_4(%arg0: i32) -> (i32, i32) {
    %c0_i32 = arith.constant 0 : i32
    %c0_i32_0 = arith.constant 0 : i32
    %c0_i32_1 = arith.constant 0 : i32
    return %c0_i32, %c0_i32_0 : i32, i32
  }
  func.func @transform_5(%arg0: i32) -> (i32, i32) {
    %c0_i32 = arith.constant 0 : i32
    %c0_i32_0 = arith.constant 0 : i32
    %c0_i32_1 = arith.constant 0 : i32
    return %c0_i32, %c0_i32_0 : i32, i32
  }
  func.func @transform_6(%arg0: i32) -> (i32, i32, i32) {
    %c0_i32 = arith.constant 0 : i32
    %c0_i32_0 = arith.constant 0 : i32
    %c0_i32_1 = arith.constant 0 : i32
    return %arg0, %c0_i32, %c0_i32_0 : i32, i32, i32
  }
  func.func @transform_7(%arg0: i32) -> (i32, i32, i32) {
    %c0_i32 = arith.constant 0 : i32
    %c0_i32_0 = arith.constant 0 : i32
    %c0_i32_1 = arith.constant 0 : i32
    return %arg0, %c0_i32, %c0_i32_0 : i32, i32, i32
  }
}

</mosaic_0001>

<llo_original>
// kernel: hand2d_to_3d_forward.35
$region0: #{hand2d_to_3d_forward.35}
  #allocation0 [shape = 'u32[]', space=smem, size = 0x4, offset = 0x4, fixed_abs, tag = 'smem constant byte address 0x4 - core index']
  #allocation1 [shape = 'u32[144,128]{1,0:T(1,128)}', space=vmem, size = 0x12000, scoped, tag = 'internal scratch']
  %s0 = inlined_call_operand.vmem [shape: f32[2,32,4], index: 0, kind: input, shape index: {}]
  %s1 = inlined_call_operand.vmem [shape: f32[9,1,4], index: 1, kind: input, shape index: {}]
  %s2 = inlined_call_operand.vmem [shape: f32[16,32], index: 2, kind: input, shape index: {}]
  %s3 = inlined_call_operand.vmem [shape: f32[16,1], index: 3, kind: input, shape index: {}]
  %s4 = inlined_call_operand.vmem [shape: f32[9,16,16], index: 4, kind: input, shape index: {}]
  %s5 = inlined_call_operand.vmem [shape: f32[16,1], index: 5, kind: input, shape index: {}]
  %s6 = inlined_call_operand.vmem [shape: f32[32,16], index: 6, kind: input, shape index: {}]
  %s7 = inlined_call_operand.vmem [shape: f32[32,1], index: 7, kind: input, shape index: {}]
  %s8 = inlined_call_operand.vmem [shape: f32[32,1], index: 8, kind: input, shape index: {}]
  %s9 = inlined_call_operand.vmem [shape: f32[2,32,4], index: 9, kind: output, shape index: {}]
  %s10 = sld [smem:[#allocation0]]
  $region69: #{hand2d_to_3d_forward.35} parent=0
    _
  %s12 = ssub.s32 1, %s10
  %s13 = scalar_select 0, %s12, %s10
  loop: start=0, step=1, limit=4
  $region2: #{hand2d_to_3d_forward.35} parent=0 // loop_pre_header
    _
  $region3: #{hand2d_to_3d_forward.35} parent=0 // loop_header
    %s15 = sphi 0, %s19
    %p16 = scmp.ge.s32.totalorder %s15, 4
    %s25 = sphi 0, %s27
    %s28 = sphi 0, %s25
    %s29 = sphi 0, %s28
    %s45 = sphi 0, %s29
    %s49 = sphi 0, %s49
    %s51 = sphi 0, %s49
    %s52 = sphi 0, %s51
    %s66 = sphi 0, %s52
    %s70 = sphi 0, %s70
    %s72 = sphi 0, %s70
    %s73 = sphi 0, %s72
    %s87 = sphi 0, %s73
    %s91 = sphi 0, %s91
    %s93 = sphi 0, %s91
    %s94 = sphi 0, %s93
    %s108 = sphi 0, %s94
    %s112 = sphi 0, %s112
    %s114 = sphi 0, %s112
    %s115 = sphi 0, %s114
    %s129 = sphi 0, %s115
    %s133 = sphi 0, %s133
    %s135 = sphi 0, %s133
    %s136 = sphi 0, %s135
    %s150 = sphi 0, %s136
    %s154 = sphi 0, %s154
    %s156 = sphi 0, %s154
    %s157 = sphi 0, %s156
    %s171 = sphi 0, %s157
    %s175 = sphi 0, %s175
    %s177 = sphi 0, %s175
    %s178 = sphi 0, %s177
    %s192 = sphi 0, %s178
    %s196 = sphi 0, %s196
    %s198 = sphi 0, %s196
    %s199 = sphi 0, %s198
    %s213 = sphi 0, %s199
    %s219 = sphi 0, %s221
    %s222 = sphi 0, %s219
    %s223 = sphi 0, %s222
    %s239 = sphi 0, %s223
  $region4: #{hand2d_to_3d_forward.35} parent=0 // loop_header_branch
    %18 = sbr.rel (%p16) target = $region8
  $region5: #{hand2d_to_3d_forward.35} parent=0 // loop_body
    %s20 = ssub.s32 %s15, 1
    %s21 = ssub.s32 %s15, 2
    %s22 = sadd.s32 %s15, 1
    %s23 = ssub.s32 %s15, %s22
    %p24 = scmp.eq.s32.totalorder %s23, 0
    %s26 = sadd.s32 %s25, 1
    %s27 = scalar_select %p24, %s25, %s26
    %p30 = pneg %p24
    %p31 = scmp.eq.s32.totalorder %s15, 1
    %p32 = por %p30, %p31
    %p33 = scmp.ne.s32.totalorder %s25, %s28
    %p34 = scmp.eq.s32.totalorder %s15, 0
    %p35 = por %p33, %p34
    %p36 = scmp.ne.s32.totalorder %s25, %s28
    %p37 = scmp.eq.s32.totalorder %s20, 1
    %p38 = por %p36, %p37
    %p39 = scmp.ne.s32.totalorder %s28, %s29
    %p40 = scmp.eq.s32.totalorder %s20, 0
    %p41 = por %p39, %p40
    %p42 = scmp.ne.s32.totalorder %s28, %s29
    %p43 = scmp.eq.s32.totalorder %s21, 1
    %p44 = por %p42, %p43
    %p46 = scmp.ne.s32.totalorder %s29, %s45
    %p47 = scmp.eq.s32.totalorder %s21, 0
    %p48 = por %p46, %p47
    %s50 = sadd.s32 %s49, 1
    %p53 = scmp.eq.s32.totalorder %s15, 1
    %p54 = scmp.ne.s32.totalorder %s49, %s51
    %p55 = scmp.eq.s32.totalorder %s15, 0
    %p56 = por %p54, %p55
    %p57 = scmp.ne.s32.totalorder %s49, %s51
    %p58 = scmp.eq.s32.totalorder %s20, 1
    %p59 = por %p57, %p58
    %p60 = scmp.ne.s32.totalorder %s51, %s52
    %p61 = scmp.eq.s32.totalorder %s20, 0
    %p62 = por %p60, %p61
    %p63 = scmp.ne.s32.totalorder %s51, %s52
    %p64 = scmp.eq.s32.totalorder %s21, 1
    %p65 = por %p63, %p64
    %p67 = scmp.ne.s32.totalorder %s52, %s66
    %p68 = scmp.eq.s32.totalorder %s21, 0
    %p69 = por %p67, %p68
    %s71 = sadd.s32 %s70, 1
    %p74 = scmp.eq.s32.totalorder %s15, 1
    %p75 = scmp.ne.s32.totalorder %s70, %s72
    %p76 = scmp.eq.s32.totalorder %s15, 0
    %p77 = por %p75, %p76
    %p78 = scmp.ne.s32.totalorder %s70, %s72
    %p79 = scmp.eq.s32.totalorder %s20, 1
    %p80 = por %p78, %p79
    %p81 = scmp.ne.s32.totalorder %s72, %s73
    %p82 = scmp.eq.s32.totalorder %s20, 0
    %p83 = por %p81, %p82
    %p84 = scmp.ne.s32.totalorder %s72, %s73
    %p85 = scmp.eq.s32.totalorder %s21, 1
    %p86 = por %p84, %p85
    %p88 = scmp.ne.s32.totalorder %s73, %s87
    %p89 = scmp.eq.s32.totalorder %s21, 0
    %p90 = por %p88, %p89
    %s92 = sadd.s32 %s91, 1
    %p95 = scmp.eq.s32.totalorder %s15, 1
    %p96 = scmp.ne.s32.totalorder %s91, %s93
    %p97 = scmp.eq.s32.totalorder %s15, 0
    %p98 = por %p96, %p97
    %p99 = scmp.ne.s32.totalorder %s91, %s93
    %p100 = scmp.eq.s32.totalorder %s20, 1
    %p101 = por %p99, %p100
    %p102 = scmp.ne.s32.totalorder %s93, %s94
    %p103 = scmp.eq.s32.totalorder %s20, 0
    %p104 = por %p102, %p103
    %p105 = scmp.ne.s32.totalorder %s93, %s94
    %p106 = scmp.eq.s32.totalorder %s21, 1
    %p107 = por %p105, %p106
    %p109 = scmp.ne.s32.totalorder %s94, %s108
    %p110 = scmp.eq.s32.totalorder %s21, 0
    %p111 = por %p109, %p110
    %s113 = sadd.s32 %s112, 1
    %p116 = scmp.eq.s32.totalorder %s15, 1
    %p117 = scmp.ne.s32.totalorder %s112, %s114
    %p118 = scmp.eq.s32.totalorder %s15, 0
    %p119 = por %p117, %p118
    %p120 = scmp.ne.s32.totalorder %s112, %s114
    %p121 = scmp.eq.s32.totalorder %s20, 1
    %p122 = por %p120, %p121
    %p123 = scmp.ne.s32.totalorder %s114, %s115
    %p124 = scmp.eq.s32.totalorder %s20, 0
    %p125 = por %p123, %p124
    %p126 = scmp.ne.s32.totalorder %s114, %s115
    %p127 = scmp.eq.s32.totalorder %s21, 1
    %p128 = por %p126, %p127
    %p130 = scmp.ne.s32.totalorder %s115, %s129
    %p131 = scmp.eq.s32.totalorder %s21, 0
    %p132 = por %p130, %p131
    %s134 = sadd.s32 %s133, 1
    %p137 = scmp.eq.s32.totalorder %s15, 1
    %p138 = scmp.ne.s32.totalorder %s133, %s135
    %p139 = scmp.eq.s32.totalorder %s15, 0
    %p140 = por %p138, %p139
    %p141 = scmp.ne.s32.totalorder %s133, %s135
    %p142 = scmp.eq.s32.totalorder %s20, 1
    %p143 = por %p141, %p142
    %p144 = scmp.ne.s32.totalorder %s135, %s136
    %p145 = scmp.eq.s32.totalorder %s20, 0
    %p146 = por %p144, %p145
    %p147 = scmp.ne.s32.totalorder %s135, %s136
    %p148 = scmp.eq.s32.totalorder %s21, 1
    %p149 = por %p147, %p148
    %p151 = scmp.ne.s32.totalorder %s136, %s150
    %p152 = scmp.eq.s32.totalorder %s21, 0
    %p153 = por %p151, %p152
    %s155 = sadd.s32 %s154, 1
    %p158 = scmp.eq.s32.totalorder %s15, 1
    %p159 = scmp.ne.s32.totalorder %s154, %s156
    %p160 = scmp.eq.s32.totalorder %s15, 0
    %p161 = por %p159, %p160
    %p162 = scmp.ne.s32.totalorder %s154, %s156
    %p163 = scmp.eq.s32.totalorder %s20, 1
    %p164 = por %p162, %p163
    %p165 = scmp.ne.s32.totalorder %s156, %s157
    %p166 = scmp.eq.s32.totalorder %s20, 0
    %p167 = por %p165, %p166
    %p168 = scmp.ne.s32.totalorder %s156, %s157
    %p169 = scmp.eq.s32.totalorder %s21, 1
    %p170 = por %p168, %p169
    %p172 = scmp.ne.s32.totalorder %s157, %s171
    %p173 = scmp.eq.s32.totalorder %s21, 0
    %p174 = por %p172, %p173
    %s176 = sadd.s32 %s175, 1
    %p179 = scmp.eq.s32.totalorder %s15, 1
    %p180 = scmp.ne.s32.totalorder %s175, %s177
    %p181 = scmp.eq.s32.totalorder %s15, 0
    %p182 = por %p180, %p181
    %p183 = scmp.ne.s32.totalorder %s175, %s177
    %p184 = scmp.eq.s32.totalorder %s20, 1
    %p185 = por %p183, %p184
    %p186 = scmp.ne.s32.totalorder %s177, %s178
    %p187 = scmp.eq.s32.totalorder %s20, 0
    %p188 = por %p186, %p187
    %p189 = scmp.ne.s32.totalorder %s177, %s178
    %p190 = scmp.eq.s32.totalorder %s21, 1
    %p191 = por %p189, %p190
    %p193 = scmp.ne.s32.totalorder %s178, %s192
    %p194 = scmp.eq.s32.totalorder %s21, 0
    %p195 = por %p193, %p194
    %s197 = sadd.s32 %s196, 1
    %p200 = scmp.eq.s32.totalorder %s15, 1
    %p201 = scmp.ne.s32.totalorder %s196, %s198
    %p202 = scmp.eq.s32.totalorder %s15, 0
    %p203 = por %p201, %p202
    %p204 = scmp.ne.s32.totalorder %s196, %s198
    %p205 = scmp.eq.s32.totalorder %s20, 1
    %p206 = por %p204, %p205
    %p207 = scmp.ne.s32.totalorder %s198, %s199
    %p208 = scmp.eq.s32.totalorder %s20, 0
    %p209 = por %p207, %p208
    %p210 = scmp.ne.s32.totalorder %s198, %s199
    %p211 = scmp.eq.s32.totalorder %s21, 1
    %p212 = por %p210, %p211
    %p214 = scmp.ne.s32.totalorder %s199, %s213
    %p215 = scmp.eq.s32.totalorder %s21, 0
    %p216 = por %p214, %p215
    %s217 = ssub.s32 %s15, %s22
    %p218 = scmp.eq.s32.totalorder %s217, 0
    %s220 = sadd.s32 %s219, 1
    %s221 = scalar_select %p218, %s219, %s220
    %p224 = pneg %p218
    %p225 = scmp.eq.s32.totalorder %s15, 1
    %p226 = por %p224, %p225
    %p227 = scmp.ne.s32.totalorder %s219, %s222
    %p228 = scmp.eq.s32.totalorder %s15, 0
    %p229 = por %p227, %p228
    %p230 = scmp.ne.s32.totalorder %s219, %s222
    %p231 = scmp.eq.s32.totalorder %s20, 1
    %p232 = por %p230, %p231
    %p233 = scmp.ne.s32.totalorder %s222, %s223
    %p234 = scmp.eq.s32.totalorder %s20, 0
    %p235 = por %p233, %p234
    %p236 = scmp.ne.s32.totalorder %s222, %s223
    %p237 = scmp.eq.s32.totalorder %s21, 1
    %p238 = por %p236, %p237
    %p240 = scmp.ne.s32.totalorder %s223, %s239
    %p241 = scmp.eq.s32.totalorder %s21, 0
    %p242 = por %p240, %p241
    %p243 = scmp.le.s32.totalorder 1, %s15
    %p244 = scmp.lt.s32.totalorder %s15, 3
    %p245 = pnand %p243, %p244
    %p246 = pneg %p245
    // Predicated region
    $region9: #{hand2d_to_3d_forward.35} parent=5 // pred_check
      _
    $region10: #{hand2d_to_3d_forward.35} parent=5 // pred_check_branch
      %248 = sbr.rel (%p245) target = $region12
    $region11: #{hand2d_to_3d_forward.35} parent=5 // pred_region
      %s249 = ssub.s32 %s15, 1
      // Predicated region
      $region13: #{hand2d_to_3d_forward.35} parent=11 // pred_check
        %p250 = pneg %p62
      $region14: #{hand2d_to_3d_forward.35} parent=11 // pred_check_branch
        %252 = sbr.rel (%p250) target = $region16
      $region15: #{hand2d_to_3d_forward.35} parent=11 // pred_region
        _
      $region16: #{hand2d_to_3d_forward.35} parent=11 // pred_fallthru
        _
      // Predicated region
      $region17: #{hand2d_to_3d_forward.35} parent=11 // pred_check
        %p253 = pneg %p83
      $region18: #{hand2d_to_3d_forward.35} parent=11 // pred_check_branch
        %255 = sbr.rel (%p253) target = $region20
      $region19: #{hand2d_to_3d_forward.35} parent=11 // pred_region
        _
      $region20: #{hand2d_to_3d_forward.35} parent=11 // pred_fallthru
        _
      // Predicated region
      $region21: #{hand2d_to_3d_forward.35} parent=11 // pred_check
        %p256 = pneg %p104
      $region22: #{hand2d_to_3d_forward.35} parent=11 // pred_check_branch
        %258 = sbr.rel (%p256) target = $region24
      $region23: #{hand2d_to_3d_forward.35} parent=11 // pred_region
        _
      $region24: #{hand2d_to_3d_forward.35} parent=11 // pred_fallthru
        _
      // Predicated region
      $region25: #{hand2d_to_3d_forward.35} parent=11 // pred_check
        %p259 = pneg %p125
      $region26: #{hand2d_to_3d_forward.35} parent=11 // pred_check_branch
        %261 = sbr.rel (%p259) target = $region28
      $region27: #{hand2d_to_3d_forward.35} parent=11 // pred_region
        _
      $region28: #{hand2d_to_3d_forward.35} parent=11 // pred_fallthru
        _
      // Predicated region
      $region29: #{hand2d_to_3d_forward.35} parent=11 // pred_check
        %p262 = pneg %p146
      $region30: #{hand2d_to_3d_forward.35} parent=11 // pred_check_branch
        %264 = sbr.rel (%p262) target = $region32
      $region31: #{hand2d_to_3d_forward.35} parent=11 // pred_region
        _
      $region32: #{hand2d_to_3d_forward.35} parent=11 // pred_fallthru
        _
      // Predicated region
      $region33: #{hand2d_to_3d_forward.35} parent=11 // pred_check
        %p265 = pneg %p167
      $region34: #{hand2d_to_3d_forward.35} parent=11 // pred_check_branch
        %267 = sbr.rel (%p265) target = $region36
      $region35: #{hand2d_to_3d_forward.35} parent=11 // pred_region
        _
      $region36: #{hand2d_to_3d_forward.35} parent=11 // pred_fallthru
        _
      // Predicated region
      $region37: #{hand2d_to_3d_forward.35} parent=11 // pred_check
        %p268 = pneg %p188
      $region38: #{hand2d_to_3d_forward.35} parent=11 // pred_check_branch
        %270 = sbr.rel (%p268) target = $region40
      $region39: #{hand2d_to_3d_forward.35} parent=11 // pred_region
        _
      $region40: #{hand2d_to_3d_forward.35} parent=11 // pred_fallthru
        _
      // Predicated region
      $region41: #{hand2d_to_3d_forward.35} parent=11 // pred_check
        %p271 = pneg %p209
      $region42: #{hand2d_to_3d_forward.35} parent=11 // pred_check_branch
        %273 = sbr.rel (%p271) target = $region44
      $region43: #{hand2d_to_3d_forward.35} parent=11 // pred_region
        _
      $region44: #{hand2d_to_3d_forward.35} parent=11 // pred_fallthru
        _
    $region12: #{hand2d_to_3d_forward.35} parent=5 // pred_fallthru
      _
    %p274 = scmp.lt.s32.totalorder %s15, 2
    // Predicated region
    $region45: #{hand2d_to_3d_forward.35} parent=5 // pred_check
      %p275 = pneg %p274
    $region46: #{hand2d_to_3d_forward.35} parent=5 // pred_check_branch
      %277 = sbr.rel (%p275) target = $region48
    $region47: #{hand2d_to_3d_forward.35} parent=5 // pred_region
      // Predicated region
      $region49: #{hand2d_to_3d_forward.35} parent=47 // pred_check
        %p278 = pneg %p35
      $region50: #{hand2d_to_3d_forward.35} parent=47 // pred_check_branch
        %280 = sbr.rel (%p278) target = $region52
      $region51: #{hand2d_to_3d_forward.35} parent=47 // pred_region
        %p281 = scmp.lt.s32.totalorder %s15, 1
        %s282 = scalar_select %p281, %s15, 1
        %s283 = smul.addr %s282, 4
        %s284 = smul.addr %s283, 8
        %s285 = scalar_lea.vmem %s0, %s284
      $region52: #{hand2d_to_3d_forward.35} parent=47 // pred_fallthru
        _
    $region48: #{hand2d_to_3d_forward.35} parent=5 // pred_fallthru
      _
    %p286 = scmp.le.s32.totalorder 1, %s15
    %p287 = scmp.lt.s32.totalorder %s15, 3
    %p288 = pnand %p286, %p287
    %p289 = pneg %p288
    // Predicated region
    $region53: #{hand2d_to_3d_forward.35} parent=5 // pred_check
      _
    $region54: #{hand2d_to_3d_forward.35} parent=5 // pred_check_branch
      %291 = sbr.rel (%p288) target = $region56
    $region55: #{hand2d_to_3d_forward.35} parent=5 // pred_region
      %s292 = ssub.s32 %s15, 1
      %p293 = scmp.lt.s32.totalorder %s20, 1
      %s294 = scalar_select %p293, %s20, 1
      %s295 = smul.addr %s294, 4
      %s296 = smul.addr %s295, 8
      %s297 = scalar_lea.vmem %s0, %s296
      %p298 = pneg %p41
      %p299 = pneg %p38
      %p300 = pneg %p62
      %p301 = pneg %p59
      %p302 = pneg %p83
      %p303 = pneg %p80
      %p304 = pneg %p104
      %p305 = pneg %p101
      %p306 = pneg %p125
      %p307 = pneg %p122
      %p308 = pneg %p146
      %p309 = pneg %p143
      %p310 = pneg %p167
      %p311 = pneg %p164
      %p312 = pneg %p188
      %p313 = pneg %p185
      %p314 = pneg %p209
      %p315 = pneg %p206
      %p316 = pneg %p235
      %p317 = pneg %p232
      %p318 = scmp.lt.s32.totalorder %s20, 1
      %s319 = scalar_select %p318, %s20, 1
      %s320 = smul.addr %s319, 4
      %s321 = smul.addr %s320, 8
      %s322 = scalar_lea.vmem %s9, %s321
      %p323 = scmp.lt.s32.totalorder %s20, 1
      %s324 = scalar_select %p323, %s20, 1
      %s325 = smul.addr %s324, 4
      %s326 = smul.addr %s325, 8
      %s327 = scalar_lea.vmem %s0, %s326
      %p328 = scmp.lt.s32.totalorder %s20, 1
      %s329 = scalar_select %p328, %s20, 1
      %s330 = smul.addr %s329, 4
      %s331 = smul.addr %s330, 8
      %s332 = scalar_lea.vmem %s9, %s331
      %v333 = vld [vmem:[%s327] sm:$0xff]
      %v334 = vld [vmem:[%s327 + $0x8] sm:$0xff]
      %v335 = vld [vmem:[%s327 + $0x10] sm:$0xff]
      %v336 = vld [vmem:[%s327 + $0x18] sm:$0xff]
      %v337 = vld [vmem:[%s2] sm:$0xff]
      %v338 = vld [vmem:[%s2 + $0x8] sm:$0xff]
      %v339 = vld [vmem:[%s3] sm:$0xff]
      %v340 = vld [vmem:[%s3 + $0x8] sm:$0xff]
      %342 = vset.pattern.permute.xlu0 0
      %343 = vperm.xlu0 %342, %v339
      %v344 = vpop.permute.xlu0 %343
      %347 = vset.pattern.permute.xlu0 0
      %348 = vperm.xlu0 %347, %v340
      %v349 = vpop.permute.xlu0 %348
      %vm351 = vcmask 261120
      %v353 = vsel %vm351, %v337, 0
      %v356 = vsel %vm351, %v338, 0
      %358 = vmatprep.subr.mxu0 0.0
      %359 = vmatpush1.msra.mxu0 %v333
      %360 = vmatprep.subr.mxu0 0.0
      %361 = vmatpush1.msra.mxu0 %v334
      %362 = vmatprep.subr.mxu0 0.0
      %363 = vmatpush1.msra.mxu0 %v335
      %364 = vmatprep.subr.mxu0 0.0
      %365 = vmatpush1.msra.mxu0 %v336
      %366 = vmatprep.subr.mxu0 0.0
      %367 = vmatpush1.msra.mxu0 0.0
      %368 = vmatprep.subr.mxu0 0.0
      %369 = vmatpush1.msra.mxu0 0.0
      %370 = vmatprep.subr.mxu0 0.0
      %371 = vmatpush1.msra.mxu0 0.0
      %372 = vmatprep.subr.mxu0 0.0
      %373 = vmatpush1.msra.mxu0 0.0
      %374 = vmatprep.subr.mxu0 0.0
      %375 = vmatpush1.msra.mxu0 0.0
      %376 = vmatprep.subr.mxu0 0.0
      %377 = vmatpush1.msra.mxu0 0.0
      %378 = vmatprep.subr.mxu0 0.0
      %379 = vmatpush1.msra.mxu0 0.0
      %380 = vmatprep.subr.mxu0 0.0
      %381 = vmatpush1.msra.mxu0 0.0
      %382 = vmatprep.subr.mxu0 0.0
      %383 = vmatpush1.msra.mxu0 0.0
      %384 = vmatprep.subr.mxu0 0.0
      %385 = vmatpush1.msra.mxu0 0.0
      %386 = vmatprep.subr.mxu0 0.0
      %387 = vmatpush1.msra.mxu0 0.0
      %388 = vmatprep.subr.mxu0 0.0
      %389 = vmatpush1.msra.mxu0 0.0
      %390 = vmatprep.subr.mxu0 0.0
      %391 = vmatpush1.msra.mxu0 0.0
      %392 = vmatprep.subr.mxu0 0.0
      %393 = vmatpush1.msra.mxu0 0.0
      %394 = vmatprep.subr.mxu0 0.0
      %395 = vmatpush1.msra.mxu0 0.0
      %396 = vmatprep.subr.mxu0 0.0
      %397 = vmatpush1.msra.mxu0 0.0
      %398 = vmatprep.subr.mxu0 0.0
      %399 = vmatpush1.msra.mxu0 0.0
      %400 = vmatprep.subr.mxu0 0.0
      %401 = vmatpush1.msra.mxu0 0.0
      %402 = vmatprep.subr.mxu0 0.0
      %403 = vmatpush1.msra.mxu0 0.0
      %404 = vmatprep.subr.mxu0 0.0
      %405 = vmatpush1.msra.mxu0 0.0
      %406 = vmatprep.subr.mxu0 0.0
      %407 = vmatpush1.msra.mxu0 0.0
      %408 = vmatprep.subr.mxu0 0.0
      %409 = vmatpush1.msra.mxu0 0.0
      %410 = vmatprep.subr.mxu0 0.0
      %411 = vmatpush1.msra.mxu0 0.0
      %412 = vmatprep.subr.mxu0 0.0
      %413 = vmatpush1.msra.mxu0 0.0
      %414 = vmatprep.subr.mxu0 0.0
      %415 = vmatpush1.msra.mxu0 0.0
      %416 = vmatprep.subr.mxu0 0.0
      %417 = vmatpush1.msra.mxu0 0.0
      %418 = vmatprep.subr.mxu0 0.0
      %419 = vmatpush1.msra.mxu0 0.0
      %420 = vmatprep.subr.mxu0 0.0
      %421 = vmatpush1.msra.mxu0 0.0
      %422 = vmatprep.mubr.f32.mxu0 0.0
      %423 = vmatmul.mubr.f32.gmra.mrb[0].mxu0 %v353
      %v424 = vpop.f32.mrb[0].mxu0
      %v425 = vadd.f32 %v344, %v424
      %v426 = vpop.f32.mrb[0].mxu0
      %427 = vmatprep.mubr.f32.mxu0 0.0
      %428 = vmatmul.mubr.f32.gmra.mrb[0].mxu0 %v356
      %v429 = vpop.f32.mrb[0].mxu0
      %v430 = vadd.f32 %v349, %v429
      %v431 = vpop.f32.mrb[0].mxu0
      %432 = vdwg.mxu0
      %v433 = vmax.f32 %v425, 0.0
      %v434 = vmax.f32 %v430, 0.0
      %437 = vrot.lane.b32.xlu0 %v433, 3
      %v438 = vpop.permute.xlu0 %437
      %439 = vrot.lane.b32.xlu0 %v434, 3
      %v440 = vpop.permute.xlu0 %439
      %vm443 = vcmask 23552
      %v444 = vsel %vm443, 0.0, %v438
      %v445 = vsel %vm443, 0.0, %v440
      %v446 = vld [vmem:[%s1] sm:$0x1]
      %v448 = vlaneseq
      %v449 = vshrl.u32 %v448, 7
      %v450 = vsub.s32 0, %v449
      %v451 = vrot.slane %v446, %v450
      %v453 = vmul.f32 %v444, %v451
      %v454 = vmul.f32 %v445, %v451
      %v455 = vld [vmem:[%s4] sm:$0xff]
      %v456 = vld [vmem:[%s4 + $0x8] sm:$0xff]
      %457 = vrot.lane.b32.xlu0 %v433, 2
      %v458 = vpop.permute.xlu0 %457
      %459 = vrot.lane.b32.xlu0 %v434, 2
      %v460 = vpop.permute.xlu0 %459
      %vm463 = vcmask 15360
      %v464 = vsel %vm463, 0.0, %v458
      %v465 = vsel %vm463, 0.0, %v460
      %s466 = scalar_lea.vmem %s1, 1
      %v467 = vld [vmem:[%s466] sm:$0x1]
      %v469 = vlaneseq
      %v470 = vshrl.u32 %v469, 7
      %v471 = vsub.s32 0, %v470
      %v472 = vrot.slane %v467, %v471
      %v474 = vmul.f32 %v464, %v472
      %v475 = vmul.f32 %v465, %v472
      %s476 = scalar_lea.vmem %s4, 16
      %v477 = vld [vmem:[%s476] sm:$0xff]
      %v478 = vld [vmem:[%s476 + $0x8] sm:$0xff]
      %vm479 = vcmask 130048
      %v481 = vsel %vm479, %v477, 0
      %v484 = vsel %vm479, %v478, 0
      %486 = vmatprep.subr.mxu0 0.0
      %487 = vmatpush1.msra.mxu0 %v474
      %488 = vmatprep.subr.mxu0 0.0
      %489 = vmatpush1.msra.mxu0 %v475
      %490 = vmatprep.subr.mxu0 0.0
      %491 = vmatpush1.msra.mxu0 0.0
      %492 = vmatprep.subr.mxu0 0.0
      %493 = vmatpush1.msra.mxu0 0.0
      %494 = vmatprep.subr.mxu0 0.0
      %495 = vmatpush1.msra.mxu0 0.0
      %496 = vmatprep.subr.mxu0 0.0
      %497 = vmatpush1.msra.mxu0 0.0
      %498 = vmatprep.subr.mxu0 0.0
      %499 = vmatpush1.msra.mxu0 0.0
      %500 = vmatprep.subr.mxu0 0.0
      %501 = vmatpush1.msra.mxu0 0.0
      %502 = vmatprep.subr.mxu0 0.0
      %503 = vmatpush1.msra.mxu0 0.0
      %504 = vmatprep.subr.mxu0 0.0
      %505 = vmatpush1.msra.mxu0 0.0
      %506 = vmatprep.subr.mxu0 0.0
      %507 = vmatpush1.msra.mxu0 0.0
      %508 = vmatprep.subr.mxu0 0.0
      %509 = vmatpush1.msra.mxu0 0.0
      %510 = vmatprep.subr.mxu0 0.0
      %511 = vmatpush1.msra.mxu0 0.0
      %512 = vmatprep.subr.mxu0 0.0
      %513 = vmatpush1.msra.mxu0 0.0
      %514 = vmatprep.subr.mxu0 0.0
      %515 = vmatpush1.msra.mxu0 0.0
      %516 = vmatprep.subr.mxu0 0.0
      %517 = vmatpush1.msra.mxu0 0.0
      %518 = vmatprep.subr.mxu0 0.0
      %519 = vmatpush1.msra.mxu0 0.0
      %520 = vmatprep.subr.mxu0 0.0
      %521 = vmatpush1.msra.mxu0 0.0
      %522 = vmatprep.subr.mxu0 0.0
      %523 = vmatpush1.msra.mxu0 0.0
      %524 = vmatprep.subr.mxu0 0.0
      %525 = vmatpush1.msra.mxu0 0.0
      %526 = vmatprep.subr.mxu0 0.0
      %527 = vmatpush1.msra.mxu0 0.0
      %528 = vmatprep.subr.mxu0 0.0
      %529 = vmatpush1.msra.mxu0 0.0
      %530 = vmatprep.subr.mxu0 0.0
      %531 = vmatpush1.msra.mxu0 0.0
      %532 = vmatprep.subr.mxu0 0.0
      %533 = vmatpush1.msra.mxu0 0.0
      %534 = vmatprep.subr.mxu0 0.0
      %535 = vmatpush1.msra.mxu0 0.0
      %536 = vmatprep.subr.mxu0 0.0
      %537 = vmatpush1.msra.mxu0 0.0
      %538 = vmatprep.subr.mxu0 0.0
      %539 = vmatpush1.msra.mxu0 0.0
      %540 = vmatprep.subr.mxu0 0.0
      %541 = vmatpush1.msra.mxu0 0.0
      %542 = vmatprep.subr.mxu0 0.0
      %543 = vmatpush1.msra.mxu0 0.0
      %544 = vmatprep.subr.mxu0 0.0
      %545 = vmatpush1.msra.mxu0 0.0
      %546 = vmatprep.subr.mxu0 0.0
      %547 = vmatpush1.msra.mxu0 0.0
      %548 = vmatprep.subr.mxu0 0.0
      %549 = vmatpush1.msra.mxu0 0.0
      %550 = vmatprep.mubr.f32.mxu0 0.0
      %551 = vmatmul.mubr.f32.gmra.mrb[0].mxu0 %v481
      %v552 = vpop.f32.mrb[0].mxu0
      %v553 = vadd.f32 0.0, %v552
      %v554 = vpop.f32.mrb[0].mxu0
      %555 = vmatprep.mubr.f32.mxu0 0.0
      %556 = vmatmul.mubr.f32.gmra.mrb[0].mxu0 %v484
      %v557 = vpop.f32.mrb[0].mxu0
      %v558 = vadd.f32 0.0, %v557
      %v559 = vpop.f32.mrb[0].mxu0
      %560 = vdwg.mxu0
      %v562 = vsel %vm479, %v455, 0
      %v565 = vsel %vm479, %v456, 0
      %567 = vmatprep.subr.mxu0 0.0
      %568 = vmatpush1.msra.mxu0 %v453
      %569 = vmatprep.subr.mxu0 0.0
      %570 = vmatpush1.msra.mxu0 %v454
      %571 = vmatprep.subr.mxu0 0.0
      %572 = vmatpush1.msra.mxu0 0.0
      %573 = vmatprep.subr.mxu0 0.0
      %574 = vmatpush1.msra.mxu0 0.0
      %575 = vmatprep.subr.mxu0 0.0
      %576 = vmatpush1.msra.mxu0 0.0
      %577 = vmatprep.subr.mxu0 0.0
      %578 = vmatpush1.msra.mxu0 0.0
      %579 = vmatprep.subr.mxu0 0.0
      %580 = vmatpush1.msra.mxu0 0.0
      %581 = vmatprep.subr.mxu0 0.0
      %582 = vmatpush1.msra.mxu0 0.0
      %583 = vmatprep.subr.mxu0 0.0
      %584 = vmatpush1.msra.mxu0 0.0
      %585 = vmatprep.subr.mxu0 0.0
      %586 = vmatpush1.msra.mxu0 0.0
      %587 = vmatprep.subr.mxu0 0.0
      %588 = vmatpush1.msra.mxu0 0.0
      %589 = vmatprep.subr.mxu0 0.0
      %590 = vmatpush1.msra.mxu0 0.0
      %591 = vmatprep.subr.mxu0 0.0
      %592 = vmatpush1.msra.mxu0 0.0
      %593 = vmatprep.subr.mxu0 0.0
      %594 = vmatpush1.msra.mxu0 0.0
      %595 = vmatprep.subr.mxu0 0.0
      %596 = vmatpush1.msra.mxu0 0.0
      %597 = vmatprep.subr.mxu0 0.0
      %598 = vmatpush1.msra.mxu0 0.0
      %599 = vmatprep.subr.mxu0 0.0
      %600 = vmatpush1.msra.mxu0 0.0
      %601 = vmatprep.subr.mxu0 0.0
      %602 = vmatpush1.msra.mxu0 0.0
      %603 = vmatprep.subr.mxu0 0.0
      %604 = vmatpush1.msra.mxu0 0.0
      %605 = vmatprep.subr.mxu0 0.0
      %606 = vmatpush1.msra.mxu0 0.0
      %607 = vmatprep.subr.mxu0 0.0
      %608 = vmatpush1.msra.mxu0 0.0
      %609 = vmatprep.subr.mxu0 0.0
      %610 = vmatpush1.msra.mxu0 0.0
      %611 = vmatprep.subr.mxu0 0.0
      %612 = vmatpush1.msra.mxu0 0.0
      %613 = vmatprep.subr.mxu0 0.0
      %614 = vmatpush1.msra.mxu0 0.0
      %615 = vmatprep.subr.mxu0 0.0
      %616 = vmatpush1.msra.mxu0 0.0
      %617 = vmatprep.subr.mxu0 0.0
      %618 = vmatpush1.msra.mxu0 0.0
      %619 = vmatprep.subr.mxu0 0.0
      %620 = vmatpush1.msra.mxu0 0.0
      %621 = vmatprep.subr.mxu0 0.0
      %622 = vmatpush1.msra.mxu0 0.0
      %623 = vmatprep.subr.mxu0 0.0
      %624 = vmatpush1.msra.mxu0 0.0
      %625 = vmatprep.subr.mxu0 0.0
      %626 = vmatpush1.msra.mxu0 0.0
      %627 = vmatprep.subr.mxu0 0.0
      %628 = vmatpush1.msra.mxu0 0.0
      %629 = vmatprep.subr.mxu0 0.0
      %630 = vmatpush1.msra.mxu0 0.0
      %631 = vmatprep.mubr.f32.mxu0 0.0
      %632 = vmatmul.mubr.f32.gmra.mrb[0].mxu0 %v562
      %v633 = vpop.f32.mrb[0].mxu0
      %v634 = vadd.f32 %v553, %v633
      %v635 = vpop.f32.mrb[0].mxu0
      %636 = vmatprep.mubr.f32.mxu0 0.0
      %637 = vmatmul.mubr.f32.gmra.mrb[0].mxu0 %v565
      %v638 = vpop.f32.mrb[0].mxu0
      %v639 = vadd.f32 %v558, %v638
      %v640 = vpop.f32.mrb[0].mxu0
      %641 = vdwg.mxu0
      %642 = vrot.lane.b32.xlu0 %v433, 1
      %v643 = vpop.permute.xlu0 %642
      %644 = vrot.lane.b32.xlu0 %v434, 1
      %v645 = vpop.permute.xlu0 %644
      %vm648 = vcmask 7168
      %v649 = vsel %vm648, 0.0, %v643
      %v650 = vsel %vm648, 0.0, %v645
      %s651 = scalar_lea.vmem %s1, 2
      %v652 = vld [vmem:[%s651] sm:$0x1]
      %v654 = vlaneseq
      %v655 = vshrl.u32 %v654, 7
      %v656 = vsub.s32 0, %v655
      %v657 = vrot.slane %v652, %v656
      %v659 = vmul.f32 %v649, %v657
      %v660 = vmul.f32 %v650, %v657
      %s661 = scalar_lea.vmem %s4, 32
      %v662 = vld [vmem:[%s661] sm:$0xff]
      %v663 = vld [vmem:[%s661 + $0x8] sm:$0xff]
      %v665 = vsel %vm479, %v662, 0
      %v668 = vsel %vm479, %v663, 0
      %670 = vmatprep.subr.mxu0 0.0
      %671 = vmatpush1.msra.mxu0 %v659
      %672 = vmatprep.subr.mxu0 0.0
      %673 = vmatpush1.msra.mxu0 %v660
      %674 = vmatprep.subr.mxu0 0.0
      %675 = vmatpush1.msra.mxu0 0.0
      %676 = vmatprep.subr.mxu0 0.0
      %677 = vmatpush1.msra.mxu0 0.0
      %678 = vmatprep.subr.mxu0 0.0
      %679 = vmatpush1.msra.mxu0 0.0
      %680 = vmatprep.subr.mxu0 0.0
      %681 = vmatpush1.msra.mxu0 0.0
      %682 = vmatprep.subr.mxu0 0.0
      %683 = vmatpush1.msra.mxu0 0.0
      %684 = vmatprep.subr.mxu0 0.0
      %685 = vmatpush1.msra.mxu0 0.0
      %686 = vmatprep.subr.mxu0 0.0
      %687 = vmatpush1.msra.mxu0 0.0
      %688 = vmatprep.subr.mxu0 0.0
      %689 = vmatpush1.msra.mxu0 0.0
      %690 = vmatprep.subr.mxu0 0.0
      %691 = vmatpush1.msra.mxu0 0.0
      %692 = vmatprep.subr.mxu0 0.0
      %693 = vmatpush1.msra.mxu0 0.0
      %694 = vmatprep.subr.mxu0 0.0
      %695 = vmatpush1.msra.mxu0 0.0
      %696 = vmatprep.subr.mxu0 0.0
      %697 = vmatpush1.msra.mxu0 0.0
      %698 = vmatprep.subr.mxu0 0.0
      %699 = vmatpush1.msra.mxu0 0.0
      %700 = vmatprep.subr.mxu0 0.0
      %701 = vmatpush1.msra.mxu0 0.0
      %702 = vmatprep.subr.mxu0 0.0
      %703 = vmatpush1.msra.mxu0 0.0
      %704 = vmatprep.subr.mxu0 0.0
      %705 = vmatpush1.msra.mxu0 0.0
      %706 = vmatprep.subr.mxu0 0.0
      %707 = vmatpush1.msra.mxu0 0.0
      %708 = vmatprep.subr.mxu0 0.0
      %709 = vmatpush1.msra.mxu0 0.0
      %710 = vmatprep.subr.mxu0 0.0
      %711 = vmatpush1.msra.mxu0 0.0
      %712 = vmatprep.subr.mxu0 0.0
      %713 = vmatpush1.msra.mxu0 0.0
      %714 = vmatprep.subr.mxu0 0.0
      %715 = vmatpush1.msra.mxu0 0.0
      %716 = vmatprep.subr.mxu0 0.0
      %717 = vmatpush1.msra.mxu0 0.0
      %718 = vmatprep.subr.mxu0 0.0
      %719 = vmatpush1.msra.mxu0 0.0
      %720 = vmatprep.subr.mxu0 0.0
      %721 = vmatpush1.msra.mxu0 0.0
      %722 = vmatprep.subr.mxu0 0.0
      %723 = vmatpush1.msra.mxu0 0.0
      %724 = vmatprep.subr.mxu0 0.0
      %725 = vmatpush1.msra.mxu0 0.0
      %726 = vmatprep.subr.mxu0 0.0
      %727 = vmatpush1.msra.mxu0 0.0
      %728 = vmatprep.subr.mxu0 0.0
      %729 = vmatpush1.msra.mxu0 0.0
      %730 = vmatprep.subr.mxu0 0.0
      %731 = vmatpush1.msra.mxu0 0.0
      %732 = vmatprep.subr.mxu0 0.0
      %733 = vmatpush1.msra.mxu0 0.0
      %734 = vmatprep.mubr.f32.mxu0 0.0
      %735 = vmatmul.mubr.f32.gmra.mrb[0].mxu0 %v665
      %v736 = vpop.f32.mrb[0].mxu0
      %v737 = vadd.f32 0.0, %v736
      %v738 = vpop.f32.mrb[0].mxu0
      %739 = vmatprep.mubr.f32.mxu0 0.0
      %740 = vmatmul.mubr.f32.gmra.mrb[0].mxu0 %v668
      %v741 = vpop.f32.mrb[0].mxu0
      %v742 = vadd.f32 0.0, %v741
      %v743 = vpop.f32.mrb[0].mxu0
      %744 = vdwg.mxu0
      %v745 = vadd.f32 %v634, %v737
      %v746 = vadd.f32 %v639, %v742
      %s747 = scalar_lea.vmem %s1, 3
      %v748 = vld [vmem:[%s747] sm:$0x1]
      %v750 = vlaneseq
      %v751 = vshrl.u32 %v750, 7
      %v752 = vsub.s32 0, %v751
      %v753 = vrot.slane %v748, %v752
      %v755 = vmul.f32 %v649, %v753
      %v756 = vmul.f32 %v650, %v753
      %s757 = scalar_lea.vmem %s4, 48
      %v758 = vld [vmem:[%s757] sm:$0xff]
      %v759 = vld [vmem:[%s757 + $0x8] sm:$0xff]
      %v761 = vsel %vm479, %v758, 0
      %v764 = vsel %vm479, %v759, 0
      %766 = vmatprep.subr.mxu0 0.0
      %767 = vmatpush1.msra.mxu0 %v755
      %768 = vmatprep.subr.mxu0 0.0
      %769 = vmatpush1.msra.mxu0 %v756
      %770 = vmatprep.subr.mxu0 0.0
      %771 = vmatpush1.msra.mxu0 0.0
      %772 = vmatprep.subr.mxu0 0.0
      %773 = vmatpush1.msra.mxu0 0.0
      %774 = vmatprep.subr.mxu0 0.0
      %775 = vmatpush1.msra.mxu0 0.0
      %776 = vmatprep.subr.mxu0 0.0
      %777 = vmatpush1.msra.mxu0 0.0
      %778 = vmatprep.subr.mxu0 0.0
      %779 = vmatpush1.msra.mxu0 0.0
      %780 = vmatprep.subr.mxu0 0.0
      %781 = vmatpush1.msra.mxu0 0.0
      %782 = vmatprep.subr.mxu0 0.0
      %783 = vmatpush1.msra.mxu0 0.0
      %784 = vmatprep.subr.mxu0 0.0
      %785 = vmatpush1.msra.mxu0 0.0
      %786 = vmatprep.subr.mxu0 0.0
      %787 = vmatpush1.msra.mxu0 0.0
      %788 = vmatprep.subr.mxu0 0.0
      %789 = vmatpush1.msra.mxu0 0.0
      %790 = vmatprep.subr.mxu0 0.0
      %791 = vmatpush1.msra.mxu0 0.0
      %792 = vmatprep.subr.mxu0 0.0
      %793 = vmatpush1.msra.mxu0 0.0
      %794 = vmatprep.subr.mxu0 0.0
      %795 = vmatpush1.msra.mxu0 0.0
      %796 = vmatprep.subr.mxu0 0.0
      %797 = vmatpush1.msra.mxu0 0.0
      %798 = vmatprep.subr.mxu0 0.0
      %799 = vmatpush1.msra.mxu0 0.0
      %800 = vmatprep.subr.mxu0 0.0
      %801 = vmatpush1.msra.mxu0 0.0
      %802 = vmatprep.subr.mxu0 0.0
      %803 = vmatpush1.msra.mxu0 0.0
      %804 = vmatprep.subr.mxu0 0.0
      %805 = vmatpush1.msra.mxu0 0.0
      %806 = vmatprep.subr.mxu0 0.0
      %807 = vmatpush1.msra.mxu0 0.0
      %808 = vmatprep.subr.mxu0 0.0
      %809 = vmatpush1.msra.mxu0 0.0
      %810 = vmatprep.subr.mxu0 0.0
      %811 = vmatpush1.msra.mxu0 0.0
      %812 = vmatprep.subr.mxu0 0.0
      %813 = vmatpush1.msra.mxu0 0.0
      %814 = vmatprep.subr.mxu0 0.0
      %815 = vmatpush1.msra.mxu0 0.0
      %816 = vmatprep.subr.mxu0 0.0
      %817 = vmatpush1.msra.mxu0 0.0
      %818 = vmatprep.subr.mxu0 0.0
      %819 = vmatpush1.msra.mxu0 0.0
      %820 = vmatprep.subr.mxu0 0.0
      %821 = vmatpush1.msra.mxu0 0.0
      %822 = vmatprep.subr.mxu0 0.0
      %823 = vmatpush1.msra.mxu0 0.0
      %824 = vmatprep.subr.mxu0 0.0
      %825 = vmatpush1.msra.mxu0 0.0
      %826 = vmatprep.subr.mxu0 0.0
      %827 = vmatpush1.msra.mxu0 0.0
      %828 = vmatprep.subr.mxu0 0.0
      %829 = vmatpush1.msra.mxu0 0.0
      %830 = vmatprep.mubr.f32.mxu0 0.0
      %831 = vmatmul.mubr.f32.gmra.mrb[0].mxu0 %v761
      %v832 = vpop.f32.mrb[0].mxu0
      %v833 = vadd.f32 0.0, %v832
      %v834 = vpop.f32.mrb[0].mxu0
      %835 = vmatprep.mubr.f32.mxu0 0.0
      %836 = vmatmul.mubr.f32.gmra.mrb[0].mxu0 %v764
      %v837 = vpop.f32.mrb[0].mxu0
      %v838 = vadd.f32 0.0, %v837
      %v839 = vpop.f32.mrb[0].mxu0
      %840 = vdwg.mxu0
      %v841 = vadd.f32 %v745, %v833
      %v842 = vadd.f32 %v746, %v838
      %s843 = scalar_lea.vmem %s4, 64
      %v844 = vld [vmem:[%s843] sm:$0xff]
      %v845 = vld [vmem:[%s843 + $0x8] sm:$0xff]
      %v847 = vsel %vm479, %v844, 0
      %v850 = vsel %vm479, %v845, 0
      %852 = vmatprep.subr.mxu0 0.0
      %853 = vmatpush1.msra.mxu0 %v433
      %854 = vmatprep.subr.mxu0 0.0
      %855 = vmatpush1.msra.mxu0 %v434
      %856 = vmatprep.subr.mxu0 0.0
      %857 = vmatpush1.msra.mxu0 0.0
      %858 = vmatprep.subr.mxu0 0.0
      %859 = vmatpush1.msra.mxu0 0.0
      %860 = vmatprep.subr.mxu0 0.0
      %861 = vmatpush1.msra.mxu0 0.0
      %862 = vmatprep.subr.mxu0 0.0
      %863 = vmatpush1.msra.mxu0 0.0
      %864 = vmatprep.subr.mxu0 0.0
      %865 = vmatpush1.msra.mxu0 0.0
      %866 = vmatprep.subr.mxu0 0.0
      %867 = vmatpush1.msra.mxu0 0.0
      %868 = vmatprep.subr.mxu0 0.0
      %869 = vmatpush1.msra.mxu0 0.0
      %870 = vmatprep.subr.mxu0 0.0
      %871 = vmatpush1.msra.mxu0 0.0
      %872 = vmatprep.subr.mxu0 0.0
      %873 = vmatpush1.msra.mxu0 0.0
      %874 = vmatprep.subr.mxu0 0.0
      %875 = vmatpush1.msra.mxu0 0.0
      %876 = vmatprep.subr.mxu0 0.0
      %877 = vmatpush1.msra.mxu0 0.0
      %878 = vmatprep.subr.mxu0 0.0
      %879 = vmatpush1.msra.mxu0 0.0
      %880 = vmatprep.subr.mxu0 0.0
      %881 = vmatpush1.msra.mxu0 0.0
      %882 = vmatprep.subr.mxu0 0.0
      %883 = vmatpush1.msra.mxu0 0.0
      %884 = vmatprep.subr.mxu0 0.0
      %885 = vmatpush1.msra.mxu0 0.0
      %886 = vmatprep.subr.mxu0 0.0
      %887 = vmatpush1.msra.mxu0 0.0
      %888 = vmatprep.subr.mxu0 0.0
      %889 = vmatpush1.msra.mxu0 0.0
      %890 = vmatprep.subr.mxu0 0.0
      %891 = vmatpush1.msra.mxu0 0.0
      %892 = vmatprep.subr.mxu0 0.0
      %893 = vmatpush1.msra.mxu0 0.0
      %894 = vmatprep.subr.mxu0 0.0
      %895 = vmatpush1.msra.mxu0 0.0
      %896 = vmatprep.subr.mxu0 0.0
      %897 = vmatpush1.msra.mxu0 0.0
      %898 = vmatprep.subr.mxu0 0.0
      %899 = vmatpush1.msra.mxu0 0.0
      %900 = vmatprep.subr.mxu0 0.0
      %901 = vmatpush1.msra.mxu0 0.0
      %902 = vmatprep.subr.mxu0 0.0
      %903 = vmatpush1.msra.mxu0 0.0
      %904 = vmatprep.subr.mxu0 0.0
      %905 = vmatpush1.msra.mxu0 0.0
      %906 = vmatprep.subr.mxu0 0.0
      %907 = vmatpush1.msra.mxu0 0.0
      %908 = vmatprep.subr.mxu0 0.0
      %909 = vmatpush1.msra.mxu0 0.0
      %910 = vmatprep.subr.mxu0 0.0
      %911 = vmatpush1.msra.mxu0 0.0
      %912 = vmatprep.subr.mxu0 0.0
      %913 = vmatpush1.msra.mxu0 0.0
      %914 = vmatprep.subr.mxu0 0.0
      %915 = vmatpush1.msra.mxu0 0.0
      %916 = vmatprep.mubr.f32.mxu0 0.0
      %917 = vmatmul.mubr.f32.gmra.mrb[0].mxu0 %v847
      %v918 = vpop.f32.mrb[0].mxu0
      %v919 = vadd.f32 0.0, %v918
      %v920 = vpop.f32.mrb[0].mxu0
      %921 = vmatprep.mubr.f32.mxu0 0.0
      %922 = vmatmul.mubr.f32.gmra.mrb[0].mxu0 %v850
      %v923 = vpop.f32.mrb[0].mxu0
      %v924 = vadd.f32 0.0, %v923
      %v925 = vpop.f32.mrb[0].mxu0
      %926 = vdwg.mxu0
      %v927 = vadd.f32 %v841, %v919
      %v928 = vadd.f32 %v842, %v924
      %929 = vrot.lane.b32.xlu0 %v433, 127
      %v930 = vpop.permute.xlu0 %929
      %931 = vrot.lane.b32.xlu0 %v434, 127
      %v932 = vpop.permute.xlu0 %931
      %v935 = vsel %vm443, %v930, 0.0
      %v936 = vsel %vm443, %v932, 0.0
      %s937 = scalar_lea.vmem %s1, 5
      %v938 = vld [vmem:[%s937] sm:$0x1]
      %v940 = vlaneseq
      %v941 = vshrl.u32 %v940, 7
      %v942 = vsub.s32 0, %v941
      %v943 = vrot.slane %v938, %v942
      %v945 = vmul.f32 %v935, %v943
      %v946 = vmul.f32 %v936, %v943
      %s947 = scalar_lea.vmem %s4, 80
      %v948 = vld [vmem:[%s947] sm:$0xff]
      %v949 = vld [vmem:[%s947 + $0x8] sm:$0xff]
      %v951 = vsel %vm479, %v948, 0
      %v954 = vsel %vm479, %v949, 0
      %956 = vmatprep.subr.mxu0 0.0
      %957 = vmatpush1.msra.mxu0 %v945
      %958 = vmatprep.subr.mxu0 0.0
      %959 = vmatpush1.msra.mxu0 %v946
      %960 = vmatprep.subr.mxu0 0.0
      %961 = vmatpush1.msra.mxu0 0.0
      %962 = vmatprep.subr.mxu0 0.0
      %963 = vmatpush1.msra.mxu0 0.0
      %964 = vmatprep.subr.mxu0 0.0
      %965 = vmatpush1.msra.mxu0 0.0
      %966 = vmatprep.subr.mxu0 0.0
      %967 = vmatpush1.msra.mxu0 0.0
      %968 = vmatprep.subr.mxu0 0.0
      %969 = vmatpush1.msra.mxu0 0.0
      %970 = vmatprep.subr.mxu0 0.0
      %971 = vmatpush1.msra.mxu0 0.0
      %972 = vmatprep.subr.mxu0 0.0
      %973 = vmatpush1.msra.mxu0 0.0
      %974 = vmatprep.subr.mxu0 0.0
      %975 = vmatpush1.msra.mxu0 0.0
      %976 = vmatprep.subr.mxu0 0.0
      %977 = vmatpush1.msra.mxu0 0.0
      %978 = vmatprep.subr.mxu0 0.0
      %979 = vmatpush1.msra.mxu0 0.0
      %980 = vmatprep.subr.mxu0 0.0
      %981 = vmatpush1.msra.mxu0 0.0
      %982 = vmatprep.subr.mxu0 0.0
      %983 = vmatpush1.msra.mxu0 0.0
      %984 = vmatprep.subr.mxu0 0.0
      %985 = vmatpush1.msra.mxu0 0.0
      %986 = vmatprep.subr.mxu0 0.0
      %987 = vmatpush1.msra.mxu0 0.0
      %988 = vmatprep.subr.mxu0 0.0
      %989 = vmatpush1.msra.mxu0 0.0
      %990 = vmatprep.subr.mxu0 0.0
      %991 = vmatpush1.msra.mxu0 0.0
      %992 = vmatprep.subr.mxu0 0.0
      %993 = vmatpush1.msra.mxu0 0.0
      %994 = vmatprep.subr.mxu0 0.0
      %995 = vmatpush1.msra.mxu0 0.0
      %996 = vmatprep.subr.mxu0 0.0
      %997 = vmatpush1.msra.mxu0 0.0
      %998 = vmatprep.subr.mxu0 0.0
      %999 = vmatpush1.msra.mxu0 0.0
      %1000 = vmatprep.subr.mxu0 0.0
      %1001 = vmatpush1.msra.mxu0 0.0
      %1002 = vmatprep.subr.mxu0 0.0
      %1003 = vmatpush1.msra.mxu0 0.0
      %1004 = vmatprep.subr.mxu0 0.0
      %1005 = vmatpush1.msra.mxu0 0.0
      %1006 = vmatprep.subr.mxu0 0.0
      %1007 = vmatpush1.msra.mxu0 0.0
      %1008 = vmatprep.subr.mxu0 0.0
      %1009 = vmatpush1.msra.mxu0 0.0
      %1010 = vmatprep.subr.mxu0 0.0
      %1011 = vmatpush1.msra.mxu0 0.0
      %1012 = vmatprep.subr.mxu0 0.0
      %1013 = vmatpush1.msra.mxu0 0.0
      %1014 = vmatprep.subr.mxu0 0.0
      %1015 = vmatpush1.msra.mxu0 0.0
      %1016 = vmatprep.subr.mxu0 0.0
      %1017 = vmatpush1.msra.mxu0 0.0
      %1018 = vmatprep.subr.mxu0 0.0
      %1019 = vmatpush1.msra.mxu0 0.0
      %1020 = vmatprep.mubr.f32.mxu0 0.0
      %1021 = vmatmul.mubr.f32.gmra.mrb[0].mxu0 %v951
      %v1022 = vpop.f32.mrb[0].mxu0
      %v1023 = vadd.f32 0.0, %v1022
      %v1024 = vpop.f32.mrb[0].mxu0
      %1025 = vmatprep.mubr.f32.mxu0 0.0
      %1026 = vmatmul.mubr.f32.gmra.mrb[0].mxu0 %v954
      %v1027 = vpop.f32.mrb[0].mxu0
      %v1028 = vadd.f32 0.0, %v1027
      %v1029 = vpop.f32.mrb[0].mxu0
      %1030 = vdwg.mxu0
      %v1031 = vadd.f32 %v927, %v1023
      %v1032 = vadd.f32 %v928, %v1028
      %s1033 = scalar_lea.vmem %s1, 6
      %v1034 = vld [vmem:[%s1033] sm:$0x1]
      %v1036 = vlaneseq
      %v1037 = vshrl.u32 %v1036, 7
      %v1038 = vsub.s32 0, %v1037
      %v1039 = vrot.slane %v1034, %v1038
      %v1041 = vmul.f32 %v935, %v1039
      %v1042 = vmul.f32 %v936, %v1039
      %s1043 = scalar_lea.vmem %s4, 96
      %v1044 = vld [vmem:[%s1043] sm:$0xff]
      %v1045 = vld [vmem:[%s1043 + $0x8] sm:$0xff]
      %v1047 = vsel %vm479, %v1044, 0
      %v1050 = vsel %vm479, %v1045, 0
      %1052 = vmatprep.subr.mxu0 0.0
      %1053 = vmatpush1.msra.mxu0 %v1041
      %1054 = vmatprep.subr.mxu0 0.0
      %1055 = vmatpush1.msra.mxu0 %v1042
      %1056 = vmatprep.subr.mxu0 0.0
      %1057 = vmatpush1.msra.mxu0 0.0
      %1058 = vmatprep.subr.mxu0 0.0
      %1059 = vmatpush1.msra.mxu0 0.0
      %1060 = vmatprep.subr.mxu0 0.0
      %1061 = vmatpush1.msra.mxu0 0.0
      %1062 = vmatprep.subr.mxu0 0.0
      %1063 = vmatpush1.msra.mxu0 0.0
      %1064 = vmatprep.subr.mxu0 0.0
      %1065 = vmatpush1.msra.mxu0 0.0
      %1066 = vmatprep.subr.mxu0 0.0
      %1067 = vmatpush1.msra.mxu0 0.0
      %1068 = vmatprep.subr.mxu0 0.0
      %1069 = vmatpush1.msra.mxu0 0.0
      %1070 = vmatprep.subr.mxu0 0.0
      %1071 = vmatpush1.msra.mxu0 0.0
      %1072 = vmatprep.subr.mxu0 0.0
      %1073 = vmatpush1.msra.mxu0 0.0
      %1074 = vmatprep.subr.mxu0 0.0
      %1075 = vmatpush1.msra.mxu0 0.0
      %1076 = vmatprep.subr.mxu0 0.0
      %1077 = vmatpush1.msra.mxu0 0.0
      %1078 = vmatprep.subr.mxu0 0.0
      %1079 = vmatpush1.msra.mxu0 0.0
      %1080 = vmatprep.subr.mxu0 0.0
      %1081 = vmatpush1.msra.mxu0 0.0
      %1082 = vmatprep.subr.mxu0 0.0
      %1083 = vmatpush1.msra.mxu0 0.0
      %1084 = vmatprep.subr.mxu0 0.0
      %1085 = vmatpush1.msra.mxu0 0.0
      %1086 = vmatprep.subr.mxu0 0.0
      %1087 = vmatpush1.msra.mxu0 0.0
      %1088 = vmatprep.subr.mxu0 0.0
      %1089 = vmatpush1.msra.mxu0 0.0
      %1090 = vmatprep.subr.mxu0 0.0
      %1091 = vmatpush1.msra.mxu0 0.0
      %1092 = vmatprep.subr.mxu0 0.0
      %1093 = vmatpush1.msra.mxu0 0.0
      %1094 = vmatprep.subr.mxu0 0.0
      %1095 = vmatpush1.msra.mxu0 0.0
      %1096 = vmatprep.subr.mxu0 0.0
      %1097 = vmatpush1.msra.mxu0 0.0
      %1098 = vmatprep.subr.mxu0 0.0
      %1099 = vmatpush1.msra.mxu0 0.0
      %1100 = vmatprep.subr.mxu0 0.0
      %1101 = vmatpush1.msra.mxu0 0.0
      %1102 = vmatprep.subr.mxu0 0.0
      %1103 = vmatpush1.msra.mxu0 0.0
      %1104 = vmatprep.subr.mxu0 0.0
      %1105 = vmatpush1.msra.mxu0 0.0
      %1106 = vmatprep.subr.mxu0 0.0
      %1107 = vmatpush1.msra.mxu0 0.0
      %1108 = vmatprep.subr.mxu0 0.0
      %1109 = vmatpush1.msra.mxu0 0.0
      %1110 = vmatprep.subr.mxu0 0.0
      %1111 = vmatpush1.msra.mxu0 0.0
      %1112 = vmatprep.subr.mxu0 0.0
      %1113 = vmatpush1.msra.mxu0 0.0
      %1114 = vmatprep.subr.mxu0 0.0
      %1115 = vmatpush1.msra.mxu0 0.0
      %1116 = vmatprep.mubr.f32.mxu0 0.0
      %1117 = vmatmul.mubr.f32.gmra.mrb[0].mxu0 %v1047
      %v1118 = vpop.f32.mrb[0].mxu0
      %v1119 = vadd.f32 0.0, %v1118
      %v1120 = vpop.f32.mrb[0].mxu0
      %1121 = vmatprep.mubr.f32.mxu0 0.0
      %1122 = vmatmul.mubr.f32.gmra.mrb[0].mxu0 %v1050
      %v1123 = vpop.f32.mrb[0].mxu0
      %v1124 = vadd.f32 0.0, %v1123
      %v1125 = vpop.f32.mrb[0].mxu0
      %1126 = vdwg.mxu0
      %v1127 = vadd.f32 %v1031, %v1119
      %v1128 = vadd.f32 %v1032, %v1124
      %1129 = vrot.lane.b32.xlu0 %v433, 126
      %v1130 = vpop.permute.xlu0 %1129
      %1131 = vrot.lane.b32.xlu0 %v434, 126
      %v1132 = vpop.permute.xlu0 %1131
      %v1135 = vsel %vm463, %v1130, 0.0
      %v1136 = vsel %vm463, %v1132, 0.0
      %s1137 = scalar_lea.vmem %s1, 7
      %v1138 = vld [vmem:[%s1137] sm:$0x1]
      %v1140 = vlaneseq
      %v1141 = vshrl.u32 %v1140, 7
      %v1142 = vsub.s32 0, %v1141
      %v1143 = vrot.slane %v1138, %v1142
      %v1145 = vmul.f32 %v1135, %v1143
      %v1146 = vmul.f32 %v1136, %v1143
      %s1147 = scalar_lea.vmem %s4, 112
      %v1148 = vld [vmem:[%s1147] sm:$0xff]
      %v1149 = vld [vmem:[%s1147 + $0x8] sm:$0xff]
      %v1151 = vsel %vm479, %v1148, 0
      %v1154 = vsel %vm479, %v1149, 0
      %1156 = vmatprep.subr.mxu0 0.0
      %1157 = vmatpush1.msra.mxu0 %v1145
      %1158 = vmatprep.subr.mxu0 0.0
      %1159 = vmatpush1.msra.mxu0 %v1146
      %1160 = vmatprep.subr.mxu0 0.0
      %1161 = vmatpush1.msra.mxu0 0.0
      %1162 = vmatprep.subr.mxu0 0.0
      %1163 = vmatpush1.msra.mxu0 0.0
      %1164 = vmatprep.subr.mxu0 0.0
      %1165 = vmatpush1.msra.mxu0 0.0
      %1166 = vmatprep.subr.mxu0 0.0
      %1167 = vmatpush1.msra.mxu0 0.0
      %1168 = vmatprep.subr.mxu0 0.0
      %1169 = vmatpush1.msra.mxu0 0.0
      %1170 = vmatprep.subr.mxu0 0.0
      %1171 = vmatpush1.msra.mxu0 0.0
      %1172 = vmatprep.subr.mxu0 0.0
      %1173 = vmatpush1.msra.mxu0 0.0
      %1174 = vmatprep.subr.mxu0 0.0
      %1175 = vmatpush1.msra.mxu0 0.0
      %1176 = vmatprep.subr.mxu0 0.0
      %1177 = vmatpush1.msra.mxu0 0.0
      %1178 = vmatprep.subr.mxu0 0.0
      %1179 = vmatpush1.msra.mxu0 0.0
      %1180 = vmatprep.subr.mxu0 0.0
      %1181 = vmatpush1.msra.mxu0 0.0
      %1182 = vmatprep.subr.mxu0 0.0
      %1183 = vmatpush1.msra.mxu0 0.0
      %1184 = vmatprep.subr.mxu0 0.0
      %1185 = vmatpush1.msra.mxu0 0.0
      %1186 = vmatprep.subr.mxu0 0.0
      %1187 = vmatpush1.msra.mxu0 0.0
      %1188 = vmatprep.subr.mxu0 0.0
      %1189 = vmatpush1.msra.mxu0 0.0
      %1190 = vmatprep.subr.mxu0 0.0
      %1191 = vmatpush1.msra.mxu0 0.0
      %1192 = vmatprep.subr.mxu0 0.0
      %1193 = vmatpush1.msra.mxu0 0.0
      %1194 = vmatprep.subr.mxu0 0.0
      %1195 = vmatpush1.msra.mxu0 0.0
      %1196 = vmatprep.subr.mxu0 0.0
      %1197 = vmatpush1.msra.mxu0 0.0
      %1198 = vmatprep.subr.mxu0 0.0
      %1199 = vmatpush1.msra.mxu0 0.0
      %1200 = vmatprep.subr.mxu0 0.0
      %1201 = vmatpush1.msra.mxu0 0.0
      %1202 = vmatprep.subr.mxu0 0.0
      %1203 = vmatpush1.msra.mxu0 0.0
      %1204 = vmatprep.subr.mxu0 0.0
      %1205 = vmatpush1.msra.mxu0 0.0
      %1206 = vmatprep.subr.mxu0 0.0
      %1207 = vmatpush1.msra.mxu0 0.0
      %1208 = vmatprep.subr.mxu0 0.0
      %1209 = vmatpush1.msra.mxu0 0.0
      %1210 = vmatprep.subr.mxu0 0.0
      %1211 = vmatpush1.msra.mxu0 0.0
      %1212 = vmatprep.subr.mxu0 0.0
      %1213 = vmatpush1.msra.mxu0 0.0
      %1214 = vmatprep.subr.mxu0 0.0
      %1215 = vmatpush1.msra.mxu0 0.0
      %1216 = vmatprep.subr.mxu0 0.0
      %1217 = vmatpush1.msra.mxu0 0.0
      %1218 = vmatprep.subr.mxu0 0.0
      %1219 = vmatpush1.msra.mxu0 0.0
      %1220 = vmatprep.mubr.f32.mxu0 0.0
      %1221 = vmatmul.mubr.f32.gmra.mrb[0].mxu0 %v1151
      %v1222 = vpop.f32.mrb[0].mxu0
      %v1223 = vadd.f32 0.0, %v1222
      %v1224 = vpop.f32.mrb[0].mxu0
      %1225 = vmatprep.mubr.f32.mxu0 0.0
      %1226 = vmatmul.mubr.f32.gmra.mrb[0].mxu0 %v1154
      %v1227 = vpop.f32.mrb[0].mxu0
      %v1228 = vadd.f32 0.0, %v1227
      %v1229 = vpop.f32.mrb[0].mxu0
      %1230 = vdwg.mxu0
      %v1231 = vadd.f32 %v1127, %v1223
      %v1232 = vadd.f32 %v1128, %v1228
      %1233 = vrot.lane.b32.xlu0 %v433, 125
      %v1234 = vpop.permute.xlu0 %1233
      %1235 = vrot.lane.b32.xlu0 %v434, 125
      %v1236 = vpop.permute.xlu0 %1235
      %v1239 = vsel %vm648, %v1234, 0.0
      %v1240 = vsel %vm648, %v1236, 0.0
      %s1241 = scalar_lea.vmem %s1, 8
      %v1242 = vld [vmem:[%s1241] sm:$0x1]
      %v1244 = vlaneseq
      %v1245 = vshrl.u32 %v1244, 7
      %v1246 = vsub.s32 0, %v1245
      %v1247 = vrot.slane %v1242, %v1246
      %v1249 = vmul.f32 %v1239, %v1247
      %v1250 = vmul.f32 %v1240, %v1247
      %s1251 = scalar_lea.vmem %s4, 128
      %v1252 = vld [vmem:[%s1251] sm:$0xff]
      %v1253 = vld [vmem:[%s1251 + $0x8] sm:$0xff]
      %v1255 = vsel %vm479, %v1252, 0
      %v1258 = vsel %vm479, %v1253, 0
      %1260 = vmatprep.subr.mxu0 0.0
      %1261 = vmatpush1.msra.mxu0 %v1249
      %1262 = vmatprep.subr.mxu0 0.0
      %1263 = vmatpush1.msra.mxu0 %v1250
      %1264 = vmatprep.subr.mxu0 0.0
      %1265 = vmatpush1.msra.mxu0 0.0
      %1266 = vmatprep.subr.mxu0 0.0
      %1267 = vmatpush1.msra.mxu0 0.0
      %1268 = vmatprep.subr.mxu0 0.0
      %1269 = vmatpush1.msra.mxu0 0.0
      %1270 = vmatprep.subr.mxu0 0.0
      %1271 = vmatpush1.msra.mxu0 0.0
      %1272 = vmatprep.subr.mxu0 0.0
      %1273 = vmatpush1.msra.mxu0 0.0
      %1274 = vmatprep.subr.mxu0 0.0
      %1275 = vmatpush1.msra.mxu0 0.0
      %1276 = vmatprep.subr.mxu0 0.0
      %1277 = vmatpush1.msra.mxu0 0.0
      %1278 = vmatprep.subr.mxu0 0.0
      %1279 = vmatpush1.msra.mxu0 0.0
      %1280 = vmatprep.subr.mxu0 0.0
      %1281 = vmatpush1.msra.mxu0 0.0
      %1282 = vmatprep.subr.mxu0 0.0
      %1283 = vmatpush1.msra.mxu0 0.0
      %1284 = vmatprep.subr.mxu0 0.0
      %1285 = vmatpush1.msra.mxu0 0.0
      %1286 = vmatprep.subr.mxu0 0.0
      %1287 = vmatpush1.msra.mxu0 0.0
      %1288 = vmatprep.subr.mxu0 0.0
      %1289 = vmatpush1.msra.mxu0 0.0
      %1290 = vmatprep.subr.mxu0 0.0
      %1291 = vmatpush1.msra.mxu0 0.0
      %1292 = vmatprep.subr.mxu0 0.0
      %1293 = vmatpush1.msra.mxu0 0.0
      %1294 = vmatprep.subr.mxu0 0.0
      %1295 = vmatpush1.msra.mxu0 0.0
      %1296 = vmatprep.subr.mxu0 0.0
      %1297 = vmatpush1.msra.mxu0 0.0
      %1298 = vmatprep.subr.mxu0 0.0
      %1299 = vmatpush1.msra.mxu0 0.0
      %1300 = vmatprep.subr.mxu0 0.0
      %1301 = vmatpush1.msra.mxu0 0.0
      %1302 = vmatprep.subr.mxu0 0.0
      %1303 = vmatpush1.msra.mxu0 0.0
      %1304 = vmatprep.subr.mxu0 0.0
      %1305 = vmatpush1.msra.mxu0 0.0
      %1306 = vmatprep.subr.mxu0 0.0
      %1307 = vmatpush1.msra.mxu0 0.0
      %1308 = vmatprep.subr.mxu0 0.0
      %1309 = vmatpush1.msra.mxu0 0.0
      %1310 = vmatprep.subr.mxu0 0.0
      %1311 = vmatpush1.msra.mxu0 0.0
      %1312 = vmatprep.subr.mxu0 0.0
      %1313 = vmatpush1.msra.mxu0 0.0
      %1314 = vmatprep.subr.mxu0 0.0
      %1315 = vmatpush1.msra.mxu0 0.0
      %1316 = vmatprep.subr.mxu0 0.0
      %1317 = vmatpush1.msra.mxu0 0.0
      %1318 = vmatprep.subr.mxu0 0.0
      %1319 = vmatpush1.msra.mxu0 0.0
      %1320 = vmatprep.subr.mxu0 0.0
      %1321 = vmatpush1.msra.mxu0 0.0
      %1322 = vmatprep.subr.mxu0 0.0
      %1323 = vmatpush1.msra.mxu0 0.0
      %1324 = vmatprep.mubr.f32.mxu0 0.0
      %1325 = vmatmul.mubr.f32.gmra.mrb[0].mxu0 %v1255
      %v1326 = vpop.f32.mrb[0].mxu0
      %v1327 = vadd.f32 0.0, %v1326
      %v1328 = vpop.f32.mrb[0].mxu0
      %1329 = vmatprep.mubr.f32.mxu0 0.0
      %1330 = vmatmul.mubr.f32.gmra.mrb[0].mxu0 %v1258
      %v1331 = vpop.f32.mrb[0].mxu0
      %v1332 = vadd.f32 0.0, %v1331
      %v1333 = vpop.f32.mrb[0].mxu0
      %1334 = vdwg.mxu0
      %v1335 = vadd.f32 %v1231, %v1327
      %v1336 = vadd.f32 %v1232, %v1332
      %v1337 = vld [vmem:[%s5] sm:$0xff]
      %v1338 = vld [vmem:[%s5 + $0x8] sm:$0xff]
      %1340 = vset.pattern.permute.xlu0 0
      %1341 = vperm.xlu0 %1340, %v1337
      %v1342 = vpop.permute.xlu0 %1341
      %1345 = vset.pattern.permute.xlu0 0
      %1346 = vperm.xlu0 %1345, %v1338
      %v1347 = vpop.permute.xlu0 %1346
      %v1349 = vadd.f32 %v1335, %v1342
      %v1350 = vadd.f32 %v1336, %v1347
      %v1351 = vmax.f32 %v1349, 0.0
      %v1352 = vmax.f32 %v1350, 0.0
      %v1353 = vld [vmem:[%s6] sm:$0xff]
      %v1354 = vld [vmem:[%s6 + $0x8] sm:$0xff]
      %v1355 = vld [vmem:[%s6 + $0x10] sm:$0xff]
      %v1356 = vld [vmem:[%s6 + $0x18] sm:$0xff]
      %v1357 = vld [vmem:[%s7] sm:$0xff]
      %v1358 = vld [vmem:[%s7 + $0x8] sm:$0xff]
      %v1359 = vld [vmem:[%s7 + $0x10] sm:$0xff]
      %v1360 = vld [vmem:[%s7 + $0x18] sm:$0xff]
      %1362 = vset.pattern.permute.xlu0 0
      %1363 = vperm.xlu0 %1362, %v1357
      %v1364 = vpop.permute.xlu0 %1363
      %1367 = vset.pattern.permute.xlu0 0
      %1368 = vperm.xlu0 %1367, %v1358
      %v1369 = vpop.permute.xlu0 %1368
      %1372 = vset.pattern.permute.xlu0 0
      %1373 = vperm.xlu0 %1372, %v1359
      %v1374 = vpop.permute.xlu0 %1373
      %1377 = vset.pattern.permute.xlu0 0
      %1378 = vperm.xlu0 %1377, %v1360
      %v1379 = vpop.permute.xlu0 %1378
      %v1382 = vsel %vm479, %v1353, 0
      %v1385 = vsel %vm479, %v1354, 0
      %v1388 = vsel %vm479, %v1355, 0
      %v1391 = vsel %vm479, %v1356, 0
      %1393 = vmatprep.subr.mxu0 0.0
      %1394 = vmatpush1.msra.mxu0 %v1351
      %1395 = vmatprep.subr.mxu0 0.0
      %1396 = vmatpush1.msra.mxu0 %v1352
      %1397 = vmatprep.subr.mxu0 0.0
      %1398 = vmatpush1.msra.mxu0 0.0
      %1399 = vmatprep.subr.mxu0 0.0
      %1400 = vmatpush1.msra.mxu0 0.0
      %1401 = vmatprep.subr.mxu0 0.0
      %1402 = vmatpush1.msra.mxu0 0.0
      %1403 = vmatprep.subr.mxu0 0.0
      %1404 = vmatpush1.msra.mxu0 0.0
      %1405 = vmatprep.subr.mxu0 0.0
      %1406 = vmatpush1.msra.mxu0 0.0
      %1407 = vmatprep.subr.mxu0 0.0
      %1408 = vmatpush1.msra.mxu0 0.0
      %1409 = vmatprep.subr.mxu0 0.0
      %1410 = vmatpush1.msra.mxu0 0.0
      %1411 = vmatprep.subr.mxu0 0.0
      %1412 = vmatpush1.msra.mxu0 0.0
      %1413 = vmatprep.subr.mxu0 0.0
      %1414 = vmatpush1.msra.mxu0 0.0
      %1415 = vmatprep.subr.mxu0 0.0
      %1416 = vmatpush1.msra.mxu0 0.0
      %1417 = vmatprep.subr.mxu0 0.0
      %1418 = vmatpush1.msra.mxu0 0.0
      %1419 = vmatprep.subr.mxu0 0.0
      %1420 = vmatpush1.msra.mxu0 0.0
      %1421 = vmatprep.subr.mxu0 0.0
      %1422 = vmatpush1.msra.mxu0 0.0
      %1423 = vmatprep.subr.mxu0 0.0
      %1424 = vmatpush1.msra.mxu0 0.0
      %1425 = vmatprep.subr.mxu0 0.0
      %1426 = vmatpush1.msra.mxu0 0.0
      %1427 = vmatprep.subr.mxu0 0.0
      %1428 = vmatpush1.msra.mxu0 0.0
      %1429 = vmatprep.subr.mxu0 0.0
      %1430 = vmatpush1.msra.mxu0 0.0
      %1431 = vmatprep.subr.mxu0 0.0
      %1432 = vmatpush1.msra.mxu0 0.0
      %1433 = vmatprep.subr.mxu0 0.0
      %1434 = vmatpush1.msra.mxu0 0.0
      %1435 = vmatprep.subr.mxu0 0.0
      %1436 = vmatpush1.msra.mxu0 0.0
      %1437 = vmatprep.subr.mxu0 0.0
      %1438 = vmatpush1.msra.mxu0 0.0
      %1439 = vmatprep.subr.mxu0 0.0
      %1440 = vmatpush1.msra.mxu0 0.0
      %1441 = vmatprep.subr.mxu0 0.0
      %1442 = vmatpush1.msra.mxu0 0.0
      %1443 = vmatprep.subr.mxu0 0.0
      %1444 = vmatpush1.msra.mxu0 0.0
      %1445 = vmatprep.subr.mxu0 0.0
      %1446 = vmatpush1.msra.mxu0 0.0
      %1447 = vmatprep.subr.mxu0 0.0
      %1448 = vmatpush1.msra.mxu0 0.0
      %1449 = vmatprep.subr.mxu0 0.0
      %1450 = vmatpush1.msra.mxu0 0.0
      %1451 = vmatprep.subr.mxu0 0.0
      %1452 = vmatpush1.msra.mxu0 0.0
      %1453 = vmatprep.subr.mxu0 0.0
      %1454 = vmatpush1.msra.mxu0 0.0
      %1455 = vmatprep.subr.mxu0 0.0
      %1456 = vmatpush1.msra.mxu0 0.0
      %1457 = vmatprep.mubr.f32.mxu0 0.0
      %1458 = vmatmul.mubr.f32.gmra.mrb[0].mxu0 %v1382
      %v1459 = vpop.f32.mrb[0].mxu0
      %v1460 = vadd.f32 %v1364, %v1459
      %v1461 = vpop.f32.mrb[0].mxu0
      %1462 = vmatprep.mubr.f32.mxu0 0.0
      %1463 = vmatmul.mubr.f32.gmra.mrb[0].mxu0 %v1385
      %v1464 = vpop.f32.mrb[0].mxu0
      %v1465 = vadd.f32 %v1369, %v1464
      %v1466 = vpop.f32.mrb[0].mxu0
      %1467 = vmatprep.mubr.f32.mxu0 0.0
      %1468 = vmatmul.mubr.f32.gmra.mrb[0].mxu0 %v1388
      %v1469 = vpop.f32.mrb[0].mxu0
      %v1470 = vadd.f32 %v1374, %v1469
      %v1471 = vpop.f32.mrb[0].mxu0
      %1472 = vmatprep.mubr.f32.mxu0 0.0
      %1473 = vmatmul.mubr.f32.gmra.mrb[0].mxu0 %v1391
      %v1474 = vpop.f32.mrb[0].mxu0
      %v1475 = vadd.f32 %v1379, %v1474
      %v1476 = vpop.f32.mrb[0].mxu0
      %1477 = vdwg.mxu0
      %v1478 = vld [vmem:[%s8] sm:$0xff]
      %v1479 = vld [vmem:[%s8 + $0x8] sm:$0xff]
      %v1480 = vld [vmem:[%s8 + $0x10] sm:$0xff]
      %v1481 = vld [vmem:[%s8 + $0x18] sm:$0xff]
      %1483 = vset.pattern.permute.xlu0 0
      %1484 = vperm.xlu0 %1483, %v1478
      %v1485 = vpop.permute.xlu0 %1484
      %1488 = vset.pattern.permute.xlu0 0
      %1489 = vperm.xlu0 %1488, %v1479
      %v1490 = vpop.permute.xlu0 %1489
      %1493 = vset.pattern.permute.xlu0 0
      %1494 = vperm.xlu0 %1493, %v1480
      %v1495 = vpop.permute.xlu0 %1494
      %1498 = vset.pattern.permute.xlu0 0
      %1499 = vperm.xlu0 %1498, %v1481
      %v1500 = vpop.permute.xlu0 %1499
      %v1502 = vmul.f32 %v1485, %v333
      %v1503 = vmul.f32 %v1490, %v334
      %v1504 = vmul.f32 %v1495, %v335
      %v1505 = vmul.f32 %v1500, %v336
      %v1506 = vadd.f32 %v1460, %v1502
      %v1507 = vadd.f32 %v1465, %v1503
      %v1508 = vadd.f32 %v1470, %v1504
      %v1509 = vadd.f32 %v1475, %v1505
      %v1510 = vmax.f32 %v1506, 0.0
      %v1511 = vmax.f32 %v1507, 0.0
      %v1512 = vmax.f32 %v1508, 0.0
      %v1513 = vmax.f32 %v1509, 0.0
      %vm1514 = vcmask 31744
      %1515 = vst.msk [vmem:[%s332] sm:$0xff] %vm1514, %v1510
      %1516 = vst.msk [vmem:[%s332 + $0x8] sm:$0xff] %vm1514, %v1511
      %1517 = vst.msk [vmem:[%s332 + $0x10] sm:$0xff] %vm1514, %v1512
      %1518 = vst.msk [vmem:[%s332 + $0x18] sm:$0xff] %vm1514, %v1513
      %p1519 = scmp.lt.s32.totalorder %s20, 1
      %s1520 = scalar_select %p1519, %s20, 1
      %s1521 = smul.addr %s1520, 4
      %s1522 = smul.addr %s1521, 8
      %s1523 = scalar_lea.vmem %s9, %s1522
      // Predicated region
      $region57: #{hand2d_to_3d_forward.35} parent=55 // pred_check
        %p1524 = pneg %p232
      $region58: #{hand2d_to_3d_forward.35} parent=55 // pred_check_branch
        %1526 = sbr.rel (%p1524) target = $region60
      $region59: #{hand2d_to_3d_forward.35} parent=55 // pred_region
        _
      $region60: #{hand2d_to_3d_forward.35} parent=55 // pred_fallthru
        _
    $region56: #{hand2d_to_3d_forward.35} parent=5 // pred_fallthru
      _
    %p1527 = scmp.le.s32.totalorder 2, %s15
    // Predicated region
    $region61: #{hand2d_to_3d_forward.35} parent=5 // pred_check
      %p1528 = pneg %p1527
    $region62: #{hand2d_to_3d_forward.35} parent=5 // pred_check_branch
      %1530 = sbr.rel (%p1528) target = $region64
    $region63: #{hand2d_to_3d_forward.35} parent=5 // pred_region
      %s1531 = ssub.s32 %s15, 2
      // Predicated region
      $region65: #{hand2d_to_3d_forward.35} parent=63 // pred_check
        %p1532 = pneg %p238
      $region66: #{hand2d_to_3d_forward.35} parent=63 // pred_check_branch
        %1534 = sbr.rel (%p1532) target = $region68
      $region67: #{hand2d_to_3d_forward.35} parent=63 // pred_region
        %p1535 = scmp.lt.s32.totalorder %s21, 1
        %s1536 = scalar_select %p1535, %s21, 1
        %s1537 = smul.addr %s1536, 4
        %s1538 = smul.addr %s1537, 8
        %s1539 = scalar_lea.vmem %s9, %s1538
      $region68: #{hand2d_to_3d_forward.35} parent=63 // pred_fallthru
        _
    $region64: #{hand2d_to_3d_forward.35} parent=5 // pred_fallthru
      _
  $region6: #{hand2d_to_3d_forward.35} parent=0 // loop_footer
    %s19 = sadd.s32 1, %s15
  $region7: #{hand2d_to_3d_forward.35} parent=0 // loop_footer_branch
    %14 = sbr.rel target = $region3
  $region8: #{hand2d_to_3d_forward.35} parent=0 // loop_exit
    _

// kernel: hand2d_to_3d_forward.33
$region0: #{hand2d_to_3d_forward.33}
  #allocation0 [shape = 'u32[]', space=smem, size = 0x4, offset = 0x4, fixed_abs, tag = 'smem constant byte address 0x4 - core index']
  #allocation1 [shape = 'u32[144,128]{1,0:T(1,128)}', space=vmem, size = 0x12000, scoped, tag = 'internal scratch']
  %s0 = inlined_call_operand.vmem [shape: f32[2,32,16], index: 0, kind: input, shape index: {}]
  %s1 = inlined_call_operand.vmem [shape: f32[9,1,16], index: 1, kind: input, shape index: {}]
  %s2 = inlined_call_operand.vmem [shape: f32[16,32], index: 2, kind: input, shape index: {}]
  %s3 = inlined_call_operand.vmem [shape: f32[16,1], index: 3, kind: input, shape index: {}]
  %s4 = inlined_call_operand.vmem [shape: f32[9,16,16], index: 4, kind: input, shape index: {}]
  %s5 = inlined_call_operand.vmem [shape: f32[16,1], index: 5, kind: input, shape index: {}]
  %s6 = inlined_call_operand.vmem [shape: f32[32,16], index: 6, kind: input, shape index: {}]
  %s7 = inlined_call_operand.vmem [shape: f32[32,1], index: 7, kind: input, shape index: {}]
  %s8 = inlined_call_operand.vmem [shape: f32[32,1], index: 8, kind: input, shape index: {}]
  %s9 = inlined_call_operand.vmem [shape: f32[2,32,16], index: 9, kind: output, shape index: {}]
  %s10 = sld [smem:[#allocation0]]
  $region69: #{hand2d_to_3d_forward.33} parent=0
    _
  %s12 = ssub.s32 1, %s10
  %s13 = scalar_select 0, %s12, %s10
  loop: start=0, step=1, limit=4
  $region2: #{hand2d_to_3d_forward.33} parent=0 // loop_pre_header
    _
  $region3: #{hand2d_to_3d_forward.33} parent=0 // loop_header
    %s15 = sphi 0, %s19
    %p16 = scmp.ge.s32.totalorder %s15, 4
    %s25 = sphi 0, %s27
    %s28 = sphi 0, %s25
    %s29 = sphi 0, %s28
    %s45 = sphi 0, %s29
    %s49 = sphi 0, %s49
    %s51 = sphi 0, %s49
    %s52 = sphi 0, %s51
    %s66 = sphi 0, %s52
    %s70 = sphi 0, %s70
    %s72 = sphi 0, %s70
    %s73 = sphi 0, %s72
    %s87 = sphi 0, %s73
    %s91 = sphi 0, %s91
    %s93 = sphi 0, %s91
    %s94 = sphi 0, %s93
    %s108 = sphi 0, %s94
    %s112 = sphi 0, %s112
    %s114 = sphi 0, %s112
    %s115 = sphi 0, %s114
    %s129 = sphi 0, %s115
    %s133 = sphi 0, %s133
    %s135 = sphi 0, %s133
    %s136 = sphi 0, %s135
    %s150 = sphi 0, %s136
    %s154 = sphi 0, %s154
    %s156 = sphi 0, %s154
    %s157 = sphi 0, %s156
    %s171 = sphi 0, %s157
    %s175 = sphi 0, %s175
    %s177 = sphi 0, %s175
    %s178 = sphi 0, %s177
    %s192 = sphi 0, %s178
    %s196 = sphi 0, %s196
    %s198 = sphi 0, %s196
    %s199 = sphi 0, %s198
    %s213 = sphi 0, %s199
    %s219 = sphi 0, %s221
    %s222 = sphi 0, %s219
    %s223 = sphi 0, %s222
    %s239 = sphi 0, %s223
  $region4: #{hand2d_to_3d_forward.33} parent=0 // loop_header_branch
    %18 = sbr.rel (%p16) target = $region8
  $region5: #{hand2d_to_3d_forward.33} parent=0 // loop_body
    %s20 = ssub.s32 %s15, 1
    %s21 = ssub.s32 %s15, 2
    %s22 = sadd.s32 %s15, 1
    %s23 = ssub.s32 %s15, %s22
    %p24 = scmp.eq.s32.totalorder %s23, 0
    %s26 = sadd.s32 %s25, 1
    %s27 = scalar_select %p24, %s25, %s26
    %p30 = pneg %p24
    %p31 = scmp.eq.s32.totalorder %s15, 1
    %p32 = por %p30, %p31
    %p33 = scmp.ne.s32.totalorder %s25, %s28
    %p34 = scmp.eq.s32.totalorder %s15, 0
    %p35 = por %p33, %p34
    %p36 = scmp.ne.s32.totalorder %s25, %s28
    %p37 = scmp.eq.s32.totalorder %s20, 1
    %p38 = por %p36, %p37
    %p39 = scmp.ne.s32.totalorder %s28, %s29
    %p40 = scmp.eq.s32.totalorder %s20, 0
    %p41 = por %p39, %p40
    %p42 = scmp.ne.s32.totalorder %s28, %s29
    %p43 = scmp.eq.s32.totalorder %s21, 1
    %p44 = por %p42, %p43
    %p46 = scmp.ne.s32.totalorder %s29, %s45
    %p47 = scmp.eq.s32.totalorder %s21, 0
    %p48 = por %p46, %p47
    %s50 = sadd.s32 %s49, 1
    %p53 = scmp.eq.s32.totalorder %s15, 1
    %p54 = scmp.ne.s32.totalorder %s49, %s51
    %p55 = scmp.eq.s32.totalorder %s15, 0
    %p56 = por %p54, %p55
    %p57 = scmp.ne.s32.totalorder %s49, %s51
    %p58 = scmp.eq.s32.totalorder %s20, 1
    %p59 = por %p57, %p58
    %p60 = scmp.ne.s32.totalorder %s51, %s52
    %p61 = scmp.eq.s32.totalorder %s20, 0
    %p62 = por %p60, %p61
    %p63 = scmp.ne.s32.totalorder %s51, %s52
    %p64 = scmp.eq.s32.totalorder %s21, 1
    %p65 = por %p63, %p64
    %p67 = scmp.ne.s32.totalorder %s52, %s66
    %p68 = scmp.eq.s32.totalorder %s21, 0
    %p69 = por %p67, %p68
    %s71 = sadd.s32 %s70, 1
    %p74 = scmp.eq.s32.totalorder %s15, 1
    %p75 = scmp.ne.s32.totalorder %s70, %s72
    %p76 = scmp.eq.s32.totalorder %s15, 0
    %p77 = por %p75, %p76
    %p78 = scmp.ne.s32.totalorder %s70, %s72
    %p79 = scmp.eq.s32.totalorder %s20, 1
    %p80 = por %p78, %p79
    %p81 = scmp.ne.s32.totalorder %s72, %s73
    %p82 = scmp.eq.s32.totalorder %s20, 0
    %p83 = por %p81, %p82
    %p84 = scmp.ne.s32.totalorder %s72, %s73
    %p85 = scmp.eq.s32.totalorder %s21, 1
    %p86 = por %p84, %p85
    %p88 = scmp.ne.s32.totalorder %s73, %s87
    %p89 = scmp.eq.s32.totalorder %s21, 0
    %p90 = por %p88, %p89
    %s92 = sadd.s32 %s91, 1
    %p95 = scmp.eq.s32.totalorder %s15, 1
    %p96 = scmp.ne.s32.totalorder %s91, %s93
    %p97 = scmp.eq.s32.totalorder %s15, 0
    %p98 = por %p96, %p97
    %p99 = scmp.ne.s32.totalorder %s91, %s93
    %p100 = scmp.eq.s32.totalorder %s20, 1
    %p101 = por %p99, %p100
    %p102 = scmp.ne.s32.totalorder %s93, %s94
    %p103 = scmp.eq.s32.totalorder %s20, 0
    %p104 = por %p102, %p103
    %p105 = scmp.ne.s32.totalorder %s93, %s94
    %p106 = scmp.eq.s32.totalorder %s21, 1
    %p107 = por %p105, %p106
    %p109 = scmp.ne.s32.totalorder %s94, %s108
    %p110 = scmp.eq.s32.totalorder %s21, 0
    %p111 = por %p109, %p110
    %s113 = sadd.s32 %s112, 1
    %p116 = scmp.eq.s32.totalorder %s15, 1
    %p117 = scmp.ne.s32.totalorder %s112, %s114
    %p118 = scmp.eq.s32.totalorder %s15, 0
    %p119 = por %p117, %p118
    %p120 = scmp.ne.s32.totalorder %s112, %s114
    %p121 = scmp.eq.s32.totalorder %s20, 1
    %p122 = por %p120, %p121
    %p123 = scmp.ne.s32.totalorder %s114, %s115
    %p124 = scmp.eq.s32.totalorder %s20, 0
    %p125 = por %p123, %p124
    %p126 = scmp.ne.s32.totalorder %s114, %s115
    %p127 = scmp.eq.s32.totalorder %s21, 1
    %p128 = por %p126, %p127
    %p130 = scmp.ne.s32.totalorder %s115, %s129
    %p131 = scmp.eq.s32.totalorder %s21, 0
    %p132 = por %p130, %p131
    %s134 = sadd.s32 %s133, 1
    %p137 = scmp.eq.s32.totalorder %s15, 1
    %p138 = scmp.ne.s32.totalorder %s133, %s135
    %p139 = scmp.eq.s32.totalorder %s15, 0
    %p140 = por %p138, %p139
    %p141 = scmp.ne.s32.totalorder %s133, %s135
    %p142 = scmp.eq.s32.totalorder %s20, 1
    %p143 = por %p141, %p142
    %p144 = scmp.ne.s32.totalorder %s135, %s136
    %p145 = scmp.eq.s32.totalorder %s20, 0
    %p146 = por %p144, %p145
    %p147 = scmp.ne.s32.totalorder %s135, %s136
    %p148 = scmp.eq.s32.totalorder %s21, 1
    %p149 = por %p147, %p148
    %p151 = scmp.ne.s32.totalorder %s136, %s150
    %p152 = scmp.eq.s32.totalorder %s21, 0
    %p153 = por %p151, %p152
    %s155 = sadd.s32 %s154, 1
    %p158 = scmp.eq.s32.totalorder %s15, 1
    %p159 = scmp.ne.s32.totalorder %s154, %s156
    %p160 = scmp.eq.s32.totalorder %s15, 0
    %p161 = por %p159, %p160
    %p162 = scmp.ne.s32.totalorder %s154, %s156
    %p163 = scmp.eq.s32.totalorder %s20, 1
    %p164 = por %p162, %p163
    %p165 = scmp.ne.s32.totalorder %s156, %s157
    %p166 = scmp.eq.s32.totalorder %s20, 0
    %p167 = por %p165, %p166
    %p168 = scmp.ne.s32.totalorder %s156, %s157
    %p169 = scmp.eq.s32.totalorder %s21, 1
    %p170 = por %p168, %p169
    %p172 = scmp.ne.s32.totalorder %s157, %s171
    %p173 = scmp.eq.s32.totalorder %s21, 0
    %p174 = por %p172, %p173
    %s176 = sadd.s32 %s175, 1
    %p179 = scmp.eq.s32.totalorder %s15, 1
    %p180 = scmp.ne.s32.totalorder %s175, %s177
    %p181 = scmp.eq.s32.totalorder %s15, 0
    %p182 = por %p180, %p181
    %p183 = scmp.ne.s32.totalorder %s175, %s177
    %p184 = scmp.eq.s32.totalorder %s20, 1
    %p185 = por %p183, %p184
    %p186 = scmp.ne.s32.totalorder %s177, %s178
    %p187 = scmp.eq.s32.totalorder %s20, 0
    %p188 = por %p186, %p187
    %p189 = scmp.ne.s32.totalorder %s177, %s178
    %p190 = scmp.eq.s32.totalorder %s21, 1
    %p191 = por %p189, %p190
    %p193 = scmp.ne.s32.totalorder %s178, %s192
    %p194 = scmp.eq.s32.totalorder %s21, 0
    %p195 = por %p193, %p194
    %s197 = sadd.s32 %s196, 1
    %p200 = scmp.eq.s32.totalorder %s15, 1
    %p201 = scmp.ne.s32.totalorder %s196, %s198
    %p202 = scmp.eq.s32.totalorder %s15, 0
    %p203 = por %p201, %p202
    %p204 = scmp.ne.s32.totalorder %s196, %s198
    %p205 = scmp.eq.s32.totalorder %s20, 1
    %p206 = por %p204, %p205
    %p207 = scmp.ne.s32.totalorder %s198, %s199
    %p208 = scmp.eq.s32.totalorder %s20, 0
    %p209 = por %p207, %p208
    %p210 = scmp.ne.s32.totalorder %s198, %s199
    %p211 = scmp.eq.s32.totalorder %s21, 1
    %p212 = por %p210, %p211
    %p214 = scmp.ne.s32.totalorder %s199, %s213
    %p215 = scmp.eq.s32.totalorder %s21, 0
    %p216 = por %p214, %p215
    %s217 = ssub.s32 %s15, %s22
    %p218 = scmp.eq.s32.totalorder %s217, 0
    %s220 = sadd.s32 %s219, 1
    %s221 = scalar_select %p218, %s219, %s220
    %p224 = pneg %p218
    %p225 = scmp.eq.s32.totalorder %s15, 1
    %p226 = por %p224, %p225
    %p227 = scmp.ne.s32.totalorder %s219, %s222
    %p228 = scmp.eq.s32.totalorder %s15, 0
    %p229 = por %p227, %p228
    %p230 = scmp.ne.s32.totalorder %s219, %s222
    %p231 = scmp.eq.s32.totalorder %s20, 1
    %p232 = por %p230, %p231
    %p233 = scmp.ne.s32.totalorder %s222, %s223
    %p234 = scmp.eq.s32.totalorder %s20, 0
    %p235 = por %p233, %p234
    %p236 = scmp.ne.s32.totalorder %s222, %s223
    %p237 = scmp.eq.s32.totalorder %s21, 1
    %p238 = por %p236, %p237
    %p240 = scmp.ne.s32.totalorder %s223, %s239
    %p241 = scmp.eq.s32.totalorder %s21, 0
    %p242 = por %p240, %p241
    %p243 = scmp.le.s32.totalorder 1, %s15
    %p244 = scmp.lt.s32.totalorder %s15, 3
    %p245 = pnand %p243, %p244
    %p246 = pneg %p245
    // Predicated region
    $region9: #{hand2d_to_3d_forward.33} parent=5 // pred_check
      _
    $region10: #{hand2d_to_3d_forward.33} parent=5 // pred_check_branch
      %248 = sbr.rel (%p245) target = $region12
    $region11: #{hand2d_to_3d_forward.33} parent=5 // pred_region
      %s249 = ssub.s32 %s15, 1
      // Predicated region
      $region13: #{hand2d_to_3d_forward.33} parent=11 // pred_check
        %p250 = pneg %p62
      $region14: #{hand2d_to_3d_forward.33} parent=11 // pred_check_branch
        %252 = sbr.rel (%p250) target = $region16
      $region15: #{hand2d_to_3d_forward.33} parent=11 // pred_region
        _
      $region16: #{hand2d_to_3d_forward.33} parent=11 // pred_fallthru
        _
      // Predicated region
      $region17: #{hand2d_to_3d_forward.33} parent=11 // pred_check
        %p253 = pneg %p83
      $region18: #{hand2d_to_3d_forward.33} parent=11 // pred_check_branch
        %255 = sbr.rel (%p253) target = $region20
      $region19: #{hand2d_to_3d_forward.33} parent=11 // pred_region
        _
      $region20: #{hand2d_to_3d_forward.33} parent=11 // pred_fallthru
        _
      // Predicated region
      $region21: #{hand2d_to_3d_forward.33} parent=11 // pred_check
        %p256 = pneg %p104
      $region22: #{hand2d_to_3d_forward.33} parent=11 // pred_check_branch
        %258 = sbr.rel (%p256) target = $region24
      $region23: #{hand2d_to_3d_forward.33} parent=11 // pred_region
        _
      $region24: #{hand2d_to_3d_forward.33} parent=11 // pred_fallthru
        _
      // Predicated region
      $region25: #{hand2d_to_3d_forward.33} parent=11 // pred_check
        %p259 = pneg %p125
      $region26: #{hand2d_to_3d_forward.33} parent=11 // pred_check_branch
        %261 = sbr.rel (%p259) target = $region28
      $region27: #{hand2d_to_3d_forward.33} parent=11 // pred_region
        _
      $region28: #{hand2d_to_3d_forward.33} parent=11 // pred_fallthru
        _
      // Predicated region
      $region29: #{hand2d_to_3d_forward.33} parent=11 // pred_check
        %p262 = pneg %p146
      $region30: #{hand2d_to_3d_forward.33} parent=11 // pred_check_branch
        %264 = sbr.rel (%p262) target = $region32
      $region31: #{hand2d_to_3d_forward.33} parent=11 // pred_region
        _
      $region32: #{hand2d_to_3d_forward.33} parent=11 // pred_fallthru
        _
      // Predicated region
      $region33: #{hand2d_to_3d_forward.33} parent=11 // pred_check
        %p265 = pneg %p167
      $region34: #{hand2d_to_3d_forward.33} parent=11 // pred_check_branch
        %267 = sbr.rel (%p265) target = $region36
      $region35: #{hand2d_to_3d_forward.33} parent=11 // pred_region
        _
      $region36: #{hand2d_to_3d_forward.33} parent=11 // pred_fallthru
        _
      // Predicated region
      $region37: #{hand2d_to_3d_forward.33} parent=11 // pred_check
        %p268 = pneg %p188
      $region38: #{hand2d_to_3d_forward.33} parent=11 // pred_check_branch
        %270 = sbr.rel (%p268) target = $region40
      $region39: #{hand2d_to_3d_forward.33} parent=11 // pred_region
        _
      $region40: #{hand2d_to_3d_forward.33} parent=11 // pred_fallthru
        _
      // Predicated region
      $region41: #{hand2d_to_3d_forward.33} parent=11 // pred_check
        %p271 = pneg %p209
      $region42: #{hand2d_to_3d_forward.33} parent=11 // pred_check_branch
        %273 = sbr.rel (%p271) target = $region44
      $region43: #{hand2d_to_3d_forward.33} parent=11 // pred_region
        _
      $region44: #{hand2d_to_3d_forward.33} parent=11 // pred_fallthru
        _
    $region12: #{hand2d_to_3d_forward.33} parent=5 // pred_fallthru
      _
    %p274 = scmp.lt.s32.totalorder %s15, 2
    // Predicated region
    $region45: #{hand2d_to_3d_forward.33} parent=5 // pred_check
      %p275 = pneg %p274
    $region46: #{hand2d_to_3d_forward.33} parent=5 // pred_check_branch
      %277 = sbr.rel (%p275) target = $region48
    $region47: #{hand2d_to_3d_forward.33} parent=5 // pred_region
      // Predicated region
      $region49: #{hand2d_to_3d_forward.33} parent=47 // pred_check
        %p278 = pneg %p35
      $region50: #{hand2d_to_3d_forward.33} parent=47 // pred_check_branch
        %280 = sbr.rel (%p278) target = $region52
      $region51: #{hand2d_to_3d_forward.33} parent=47 // pred_region
        %p281 = scmp.lt.s32.totalorder %s15, 1
        %s282 = scalar_select %p281, %s15, 1
        %s283 = smul.addr %s282, 4
        %s284 = smul.addr %s283, 8
        %s285 = scalar_lea.vmem %s0, %s284
      $region52: #{hand2d_to_3d_forward.33} parent=47 // pred_fallthru
        _
    $region48: #{hand2d_to_3d_forward.33} parent=5 // pred_fallthru
      _
    %p286 = scmp.le.s32.totalorder 1, %s15
    %p287 = scmp.lt.s32.totalorder %s15, 3
    %p288 = pnand %p286, %p287
    %p289 = pneg %p288
    // Predicated region
    $region53: #{hand2d_to_3d_forward.33} parent=5 // pred_check
      _
    $region54: #{hand2d_to_3d_forward.33} parent=5 // pred_check_branch
      %291 = sbr.rel (%p288) target = $region56
    $region55: #{hand2d_to_3d_forward.33} parent=5 // pred_region
      %s292 = ssub.s32 %s15, 1
      %p293 = scmp.lt.s32.totalorder %s20, 1
      %s294 = scalar_select %p293, %s20, 1
      %s295 = smul.addr %s294, 4
      %s296 = smul.addr %s295, 8
      %s297 = scalar_lea.vmem %s0, %s296
      %p298 = pneg %p41
      %p299 = pneg %p38
      %p300 = pneg %p62
      %p301 = pneg %p59
      %p302 = pneg %p83
      %p303 = pneg %p80
      %p304 = pneg %p104
      %p305 = pneg %p101
      %p306 = pneg %p125
      %p307 = pneg %p122
      %p308 = pneg %p146
      %p309 = pneg %p143
      %p310 = pneg %p167
      %p311 = pneg %p164
      %p312 = pneg %p188
      %p313 = pneg %p185
      %p314 = pneg %p209
      %p315 = pneg %p206
      %p316 = pneg %p235
      %p317 = pneg %p232
      %p318 = scmp.lt.s32.totalorder %s20, 1
      %s319 = scalar_select %p318, %s20, 1
      %s320 = smul.addr %s319, 4
      %s321 = smul.addr %s320, 8
      %s322 = scalar_lea.vmem %s9, %s321
      %p323 = scmp.lt.s32.totalorder %s20, 1
      %s324 = scalar_select %p323, %s20, 1
      %s325 = smul.addr %s324, 4
      %s326 = smul.addr %s325, 8
      %s327 = scalar_lea.vmem %s0, %s326
      %p328 = scmp.lt.s32.totalorder %s20, 1
      %s329 = scalar_select %p328, %s20, 1
      %s330 = smul.addr %s329, 4
      %s331 = smul.addr %s330, 8
      %s332 = scalar_lea.vmem %s9, %s331
      %v333 = vld [vmem:[%s327] sm:$0xff]
      %v334 = vld [vmem:[%s327 + $0x8] sm:$0xff]
      %v335 = vld [vmem:[%s327 + $0x10] sm:$0xff]
      %v336 = vld [vmem:[%s327 + $0x18] sm:$0xff]
      %v337 = vld [vmem:[%s2] sm:$0xff]
      %v338 = vld [vmem:[%s2 + $0x8] sm:$0xff]
      %v339 = vld [vmem:[%s3] sm:$0xff]
      %v340 = vld [vmem:[%s3 + $0x8] sm:$0xff]
      %342 = vset.pattern.permute.xlu0 0
      %343 = vperm.xlu0 %342, %v339
      %v344 = vpop.permute.xlu0 %343
      %347 = vset.pattern.permute.xlu0 0
      %348 = vperm.xlu0 %347, %v340
      %v349 = vpop.permute.xlu0 %348
      %vm351 = vcmask 261120
      %v353 = vsel %vm351, %v337, 0
      %v356 = vsel %vm351, %v338, 0
      %358 = vmatprep.subr.mxu0 0.0
      %359 = vmatpush1.msra.mxu0 %v333
      %360 = vmatprep.subr.mxu0 0.0
      %361 = vmatpush1.msra.mxu0 %v334
      %362 = vmatprep.subr.mxu0 0.0
      %363 = vmatpush1.msra.mxu0 %v335
      %364 = vmatprep.subr.mxu0 0.0
      %365 = vmatpush1.msra.mxu0 %v336
      %366 = vmatprep.subr.mxu0 0.0
      %367 = vmatpush1.msra.mxu0 0.0
      %368 = vmatprep.subr.mxu0 0.0
      %369 = vmatpush1.msra.mxu0 0.0
      %370 = vmatprep.subr.mxu0 0.0
      %371 = vmatpush1.msra.mxu0 0.0
      %372 = vmatprep.subr.mxu0 0.0
      %373 = vmatpush1.msra.mxu0 0.0
      %374 = vmatprep.subr.mxu0 0.0
      %375 = vmatpush1.msra.mxu0 0.0
      %376 = vmatprep.subr.mxu0 0.0
      %377 = vmatpush1.msra.mxu0 0.0
      %378 = vmatprep.subr.mxu0 0.0
      %379 = vmatpush1.msra.mxu0 0.0
      %380 = vmatprep.subr.mxu0 0.0
      %381 = vmatpush1.msra.mxu0 0.0
      %382 = vmatprep.subr.mxu0 0.0
      %383 = vmatpush1.msra.mxu0 0.0
      %384 = vmatprep.subr.mxu0 0.0
      %385 = vmatpush1.msra.mxu0 0.0
      %386 = vmatprep.subr.mxu0 0.0
      %387 = vmatpush1.msra.mxu0 0.0
      %388 = vmatprep.subr.mxu0 0.0
      %389 = vmatpush1.msra.mxu0 0.0
      %390 = vmatprep.subr.mxu0 0.0
      %391 = vmatpush1.msra.mxu0 0.0
      %392 = vmatprep.subr.mxu0 0.0
      %393 = vmatpush1.msra.mxu0 0.0
      %394 = vmatprep.subr.mxu0 0.0
      %395 = vmatpush1.msra.mxu0 0.0
      %396 = vmatprep.subr.mxu0 0.0
      %397 = vmatpush1.msra.mxu0 0.0
      %398 = vmatprep.subr.mxu0 0.0
      %399 = vmatpush1.msra.mxu0 0.0
      %400 = vmatprep.subr.mxu0 0.0
      %401 = vmatpush1.msra.mxu0 0.0
      %402 = vmatprep.subr.mxu0 0.0
      %403 = vmatpush1.msra.mxu0 0.0
      %404 = vmatprep.subr.mxu0 0.0
      %405 = vmatpush1.msra.mxu0 0.0
      %406 = vmatprep.subr.mxu0 0.0
      %407 = vmatpush1.msra.mxu0 0.0
      %408 = vmatprep.subr.mxu0 0.0
      %409 = vmatpush1.msra.mxu0 0.0
      %410 = vmatprep.subr.mxu0 0.0
      %411 = vmatpush1.msra.mxu0 0.0
      %412 = vmatprep.subr.mxu0 0.0
      %413 = vmatpush1.msra.mxu0 0.0
      %414 = vmatprep.subr.mxu0 0.0
      %415 = vmatpush1.msra.mxu0 0.0
      %416 = vmatprep.subr.mxu0 0.0
      %417 = vmatpush1.msra.mxu0 0.0
      %418 = vmatprep.subr.mxu0 0.0
      %419 = vmatpush1.msra.mxu0 0.0
      %420 = vmatprep.subr.mxu0 0.0
      %421 = vmatpush1.msra.mxu0 0.0
      %422 = vmatprep.mubr.f32.mxu0 0.0
      %423 = vmatmul.mubr.f32.gmra.mrb[0].mxu0 %v353
      %v424 = vpop.f32.mrb[0].mxu0
      %v425 = vadd.f32 %v344, %v424
      %v426 = vpop.f32.mrb[0].mxu0
      %427 = vmatprep.mubr.f32.mxu0 0.0
      %428 = vmatmul.mubr.f32.gmra.mrb[0].mxu0 %v356
      %v429 = vpop.f32.mrb[0].mxu0
      %v430 = vadd.f32 %v349, %v429
      %v431 = vpop.f32.mrb[0].mxu0
      %432 = vdwg.mxu0
      %v433 = vmax.f32 %v425, 0.0
      %v434 = vmax.f32 %v430, 0.0
      %437 = vrot.lane.b32.xlu0 %v433, 5
      %v438 = vpop.permute.xlu0 %437
      %439 = vrot.lane.b32.xlu0 %v434, 5
      %v440 = vpop.permute.xlu0 %439
      %vm443 = vcmask 39936
      %v444 = vsel %vm443, 0.0, %v438
      %v445 = vsel %vm443, 0.0, %v440
      %v446 = vld [vmem:[%s1] sm:$0x1]
      %v448 = vlaneseq
      %v449 = vshrl.u32 %v448, 7
      %v450 = vsub.s32 0, %v449
      %v451 = vrot.slane %v446, %v450
      %v453 = vmul.f32 %v444, %v451
      %v454 = vmul.f32 %v445, %v451
      %v455 = vld [vmem:[%s4] sm:$0xff]
      %v456 = vld [vmem:[%s4 + $0x8] sm:$0xff]
      %457 = vrot.lane.b32.xlu0 %v433, 4
      %v458 = vpop.permute.xlu0 %457
      %459 = vrot.lane.b32.xlu0 %v434, 4
      %v460 = vpop.permute.xlu0 %459
      %vm463 = vcmask 31744
      %v464 = vsel %vm463, 0.0, %v458
      %v465 = vsel %vm463, 0.0, %v460
      %s466 = scalar_lea.vmem %s1, 1
      %v467 = vld [vmem:[%s466] sm:$0x1]
      %v469 = vlaneseq
      %v470 = vshrl.u32 %v469, 7
      %v471 = vsub.s32 0, %v470
      %v472 = vrot.slane %v467, %v471
      %v474 = vmul.f32 %v464, %v472
      %v475 = vmul.f32 %v465, %v472
      %s476 = scalar_lea.vmem %s4, 16
      %v477 = vld [vmem:[%s476] sm:$0xff]
      %v478 = vld [vmem:[%s476 + $0x8] sm:$0xff]
      %vm479 = vcmask 130048
      %v481 = vsel %vm479, %v477, 0
      %v484 = vsel %vm479, %v478, 0
      %486 = vmatprep.subr.mxu0 0.0
      %487 = vmatpush1.msra.mxu0 %v474
      %488 = vmatprep.subr.mxu0 0.0
      %489 = vmatpush1.msra.mxu0 %v475
      %490 = vmatprep.subr.mxu0 0.0
      %491 = vmatpush1.msra.mxu0 0.0
      %492 = vmatprep.subr.mxu0 0.0
      %493 = vmatpush1.msra.mxu0 0.0
      %494 = vmatprep.subr.mxu0 0.0
      %495 = vmatpush1.msra.mxu0 0.0
      %496 = vmatprep.subr.mxu0 0.0
      %497 = vmatpush1.msra.mxu0 0.0
      %498 = vmatprep.subr.mxu0 0.0
      %499 = vmatpush1.msra.mxu0 0.0
      %500 = vmatprep.subr.mxu0 0.0
      %501 = vmatpush1.msra.mxu0 0.0
      %502 = vmatprep.subr.mxu0 0.0
      %503 = vmatpush1.msra.mxu0 0.0
      %504 = vmatprep.subr.mxu0 0.0
      %505 = vmatpush1.msra.mxu0 0.0
      %506 = vmatprep.subr.mxu0 0.0
      %507 = vmatpush1.msra.mxu0 0.0
      %508 = vmatprep.subr.mxu0 0.0
      %509 = vmatpush1.msra.mxu0 0.0
      %510 = vmatprep.subr.mxu0 0.0
      %511 = vmatpush1.msra.mxu0 0.0
      %512 = vmatprep.subr.mxu0 0.0
      %513 = vmatpush1.msra.mxu0 0.0
      %514 = vmatprep.subr.mxu0 0.0
      %515 = vmatpush1.msra.mxu0 0.0
      %516 = vmatprep.subr.mxu0 0.0
      %517 = vmatpush1.msra.mxu0 0.0
      %518 = vmatprep.subr.mxu0 0.0
      %519 = vmatpush1.msra.mxu0 0.0
      %520 = vmatprep.subr.mxu0 0.0
      %521 = vmatpush1.msra.mxu0 0.0
      %522 = vmatprep.subr.mxu0 0.0
      %523 = vmatpush1.msra.mxu0 0.0
      %524 = vmatprep.subr.mxu0 0.0
      %525 = vmatpush1.msra.mxu0 0.0
      %526 = vmatprep.subr.mxu0 0.0
      %527 = vmatpush1.msra.mxu0 0.0
      %528 = vmatprep.subr.mxu0 0.0
      %529 = vmatpush1.msra.mxu0 0.0
      %530 = vmatprep.subr.mxu0 0.0
      %531 = vmatpush1.msra.mxu0 0.0
      %532 = vmatprep.subr.mxu0 0.0
      %533 = vmatpush1.msra.mxu0 0.0
      %534 = vmatprep.subr.mxu0 0.0
      %535 = vmatpush1.msra.mxu0 0.0
      %536 = vmatprep.subr.mxu0 0.0
      %537 = vmatpush1.msra.mxu0 0.0
      %538 = vmatprep.subr.mxu0 0.0
      %539 = vmatpush1.msra.mxu0 0.0
      %540 = vmatprep.subr.mxu0 0.0
      %541 = vmatpush1.msra.mxu0 0.0
      %542 = vmatprep.subr.mxu0 0.0
      %543 = vmatpush1.msra.mxu0 0.0
      %544 = vmatprep.subr.mxu0 0.0
      %545 = vmatpush1.msra.mxu0 0.0
      %546 = vmatprep.subr.mxu0 0.0
      %547 = vmatpush1.msra.mxu0 0.0
      %548 = vmatprep.subr.mxu0 0.0
      %549 = vmatpush1.msra.mxu0 0.0
      %550 = vmatprep.mubr.f32.mxu0 0.0
      %551 = vmatmul.mubr.f32.gmra.mrb[0].mxu0 %v481
      %v552 = vpop.f32.mrb[0].mxu0
      %v553 = vadd.f32 0.0, %v552
      %v554 = vpop.f32.mrb[0].mxu0
      %555 = vmatprep.mubr.f32.mxu0 0.0
      %556 = vmatmul.mubr.f32.gmra.mrb[0].mxu0 %v484
      %v557 = vpop.f32.mrb[0].mxu0
      %v558 = vadd.f32 0.0, %v557
      %v559 = vpop.f32.mrb[0].mxu0
      %560 = vdwg.mxu0
      %v562 = vsel %vm479, %v455, 0
      %v565 = vsel %vm479, %v456, 0
      %567 = vmatprep.subr.mxu0 0.0
      %568 = vmatpush1.msra.mxu0 %v453
      %569 = vmatprep.subr.mxu0 0.0
      %570 = vmatpush1.msra.mxu0 %v454
      %571 = vmatprep.subr.mxu0 0.0
      %572 = vmatpush1.msra.mxu0 0.0
      %573 = vmatprep.subr.mxu0 0.0
      %574 = vmatpush1.msra.mxu0 0.0
      %575 = vmatprep.subr.mxu0 0.0
      %576 = vmatpush1.msra.mxu0 0.0
      %577 = vmatprep.subr.mxu0 0.0
      %578 = vmatpush1.msra.mxu0 0.0
      %579 = vmatprep.subr.mxu0 0.0
      %580 = vmatpush1.msra.mxu0 0.0
      %581 = vmatprep.subr.mxu0 0.0
      %582 = vmatpush1.msra.mxu0 0.0
      %583 = vmatprep.subr.mxu0 0.0
      %584 = vmatpush1.msra.mxu0 0.0
      %585 = vmatprep.subr.mxu0 0.0
      %586 = vmatpush1.msra.mxu0 0.0
      %587 = vmatprep.subr.mxu0 0.0
      %588 = vmatpush1.msra.mxu0 0.0
      %589 = vmatprep.subr.mxu0 0.0
      %590 = vmatpush1.msra.mxu0 0.0
      %591 = vmatprep.subr.mxu0 0.0
      %592 = vmatpush1.msra.mxu0 0.0
      %593 = vmatprep.subr.mxu0 0.0
      %594 = vmatpush1.msra.mxu0 0.0
      %595 = vmatprep.subr.mxu0 0.0
      %596 = vmatpush1.msra.mxu0 0.0
      %597 = vmatprep.subr.mxu0 0.0
      %598 = vmatpush1.msra.mxu0 0.0
      %599 = vmatprep.subr.mxu0 0.0
      %600 = vmatpush1.msra.mxu0 0.0
      %601 = vmatprep.subr.mxu0 0.0
      %602 = vmatpush1.msra.mxu0 0.0
      %603 = vmatprep.subr.mxu0 0.0
      %604 = vmatpush1.msra.mxu0 0.0
      %605 = vmatprep.subr.mxu0 0.0
      %606 = vmatpush1.msra.mxu0 0.0
      %607 = vmatprep.subr.mxu0 0.0
      %608 = vmatpush1.msra.mxu0 0.0
      %609 = vmatprep.subr.mxu0 0.0
      %610 = vmatpush1.msra.mxu0 0.0
      %611 = vmatprep.subr.mxu0 0.0
      %612 = vmatpush1.msra.mxu0 0.0
      %613 = vmatprep.subr.mxu0 0.0
      %614 = vmatpush1.msra.mxu0 0.0
      %615 = vmatprep.subr.mxu0 0.0
      %616 = vmatpush1.msra.mxu0 0.0
      %617 = vmatprep.subr.mxu0 0.0
      %618 = vmatpush1.msra.mxu0 0.0
      %619 = vmatprep.subr.mxu0 0.0
      %620 = vmatpush1.msra.mxu0 0.0
      %621 = vmatprep.subr.mxu0 0.0
      %622 = vmatpush1.msra.mxu0 0.0
      %623 = vmatprep.subr.mxu0 0.0
      %624 = vmatpush1.msra.mxu0 0.0
      %625 = vmatprep.subr.mxu0 0.0
      %626 = vmatpush1.msra.mxu0 0.0
      %627 = vmatprep.subr.mxu0 0.0
      %628 = vmatpush1.msra.mxu0 0.0
      %629 = vmatprep.subr.mxu0 0.0
      %630 = vmatpush1.msra.mxu0 0.0
      %631 = vmatprep.mubr.f32.mxu0 0.0
      %632 = vmatmul.mubr.f32.gmra.mrb[0].mxu0 %v562
      %v633 = vpop.f32.mrb[0].mxu0
      %v634 = vadd.f32 %v553, %v633
      %v635 = vpop.f32.mrb[0].mxu0
      %636 = vmatprep.mubr.f32.mxu0 0.0
      %637 = vmatmul.mubr.f32.gmra.mrb[0].mxu0 %v565
      %v638 = vpop.f32.mrb[0].mxu0
      %v639 = vadd.f32 %v558, %v638
      %v640 = vpop.f32.mrb[0].mxu0
      %641 = vdwg.mxu0
      %642 = vrot.lane.b32.xlu0 %v433, 3
      %v643 = vpop.permute.xlu0 %642
      %644 = vrot.lane.b32.xlu0 %v434, 3
      %v645 = vpop.permute.xlu0 %644
      %vm648 = vcmask 23552
      %v649 = vsel %vm648, 0.0, %v643
      %v650 = vsel %vm648, 0.0, %v645
      %s651 = scalar_lea.vmem %s1, 2
      %v652 = vld [vmem:[%s651] sm:$0x1]
      %v654 = vlaneseq
      %v655 = vshrl.u32 %v654, 7
      %v656 = vsub.s32 0, %v655
      %v657 = vrot.slane %v652, %v656
      %v659 = vmul.f32 %v649, %v657
      %v660 = vmul.f32 %v650, %v657
      %s661 = scalar_lea.vmem %s4, 32
      %v662 = vld [vmem:[%s661] sm:$0xff]
      %v663 = vld [vmem:[%s661 + $0x8] sm:$0xff]
      %v665 = vsel %vm479, %v662, 0
      %v668 = vsel %vm479, %v663, 0
      %670 = vmatprep.subr.mxu0 0.0
      %671 = vmatpush1.msra.mxu0 %v659
      %672 = vmatprep.subr.mxu0 0.0
      %673 = vmatpush1.msra.mxu0 %v660
      %674 = vmatprep.subr.mxu0 0.0
      %675 = vmatpush1.msra.mxu0 0.0
      %676 = vmatprep.subr.mxu0 0.0
      %677 = vmatpush1.msra.mxu0 0.0
      %678 = vmatprep.subr.mxu0 0.0
      %679 = vmatpush1.msra.mxu0 0.0
      %680 = vmatprep.subr.mxu0 0.0
      %681 = vmatpush1.msra.mxu0 0.0
      %682 = vmatprep.subr.mxu0 0.0
      %683 = vmatpush1.msra.mxu0 0.0
      %684 = vmatprep.subr.mxu0 0.0
      %685 = vmatpush1.msra.mxu0 0.0
      %686 = vmatprep.subr.mxu0 0.0
      %687 = vmatpush1.msra.mxu0 0.0
      %688 = vmatprep.subr.mxu0 0.0
      %689 = vmatpush1.msra.mxu0 0.0
      %690 = vmatprep.subr.mxu0 0.0
      %691 = vmatpush1.msra.mxu0 0.0
      %692 = vmatprep.subr.mxu0 0.0
      %693 = vmatpush1.msra.mxu0 0.0
      %694 = vmatprep.subr.mxu0 0.0
      %695 = vmatpush1.msra.mxu0 0.0
      %696 = vmatprep.subr.mxu0 0.0
      %697 = vmatpush1.msra.mxu0 0.0
      %698 = vmatprep.subr.mxu0 0.0
      %699 = vmatpush1.msra.mxu0 0.0
      %700 = vmatprep.subr.mxu0 0.0
      %701 = vmatpush1.msra.mxu0 0.0
      %702 = vmatprep.subr.mxu0 0.0
      %703 = vmatpush1.msra.mxu0 0.0
      %704 = vmatprep.subr.mxu0 0.0
      %705 = vmatpush1.msra.mxu0 0.0
      %706 = vmatprep.subr.mxu0 0.0
      %707 = vmatpush1.msra.mxu0 0.0
      %708 = vmatprep.subr.mxu0 0.0
      %709 = vmatpush1.msra.mxu0 0.0
      %710 = vmatprep.subr.mxu0 0.0
      %711 = vmatpush1.msra.mxu0 0.0
      %712 = vmatprep.subr.mxu0 0.0
      %713 = vmatpush1.msra.mxu0 0.0
      %714 = vmatprep.subr.mxu0 0.0
      %715 = vmatpush1.msra.mxu0 0.0
      %716 = vmatprep.subr.mxu0 0.0
      %717 = vmatpush1.msra.mxu0 0.0
      %718 = vmatprep.subr.mxu0 0.0
      %719 = vmatpush1.msra.mxu0 0.0
      %720 = vmatprep.subr.mxu0 0.0
      %721 = vmatpush1.msra.mxu0 0.0
      %722 = vmatprep.subr.mxu0 0.0
      %723 = vmatpush1.msra.mxu0 0.0
      %724 = vmatprep.subr.mxu0 0.0
      %725 = vmatpush1.msra.mxu0 0.0
      %726 = vmatprep.subr.mxu0 0.0
      %727 = vmatpush1.msra.mxu0 0.0
      %728 = vmatprep.subr.mxu0 0.0
      %729 = vmatpush1.msra.mxu0 0.0
      %730 = vmatprep.subr.mxu0 0.0
      %731 = vmatpush1.msra.mxu0 0.0
      %732 = vmatprep.subr.mxu0 0.0
      %733 = vmatpush1.msra.mxu0 0.0
      %734 = vmatprep.mubr.f32.mxu0 0.0
      %735 = vmatmul.mubr.f32.gmra.mrb[0].mxu0 %v665
      %v736 = vpop.f32.mrb[0].mxu0
      %v737 = vadd.f32 0.0, %v736
      %v738 = vpop.f32.mrb[0].mxu0
      %739 = vmatprep.mubr.f32.mxu0 0.0
      %740 = vmatmul.mubr.f32.gmra.mrb[0].mxu0 %v668
      %v741 = vpop.f32.mrb[0].mxu0
      %v742 = vadd.f32 0.0, %v741
      %v743 = vpop.f32.mrb[0].mxu0
      %744 = vdwg.mxu0
      %v745 = vadd.f32 %v634, %v737
      %v746 = vadd.f32 %v639, %v742
      %747 = vrot.lane.b32.xlu0 %v433, 1
      %v748 = vpop.permute.xlu0 %747
      %749 = vrot.lane.b32.xlu0 %v434, 1
      %v750 = vpop.permute.xlu0 %749
      %vm753 = vcmask 7168
      %v754 = vsel %vm753, 0.0, %v748
      %v755 = vsel %vm753, 0.0, %v750
      %s756 = scalar_lea.vmem %s1, 3
      %v757 = vld [vmem:[%s756] sm:$0x1]
      %v759 = vlaneseq
      %v760 = vshrl.u32 %v759, 7
      %v761 = vsub.s32 0, %v760
      %v762 = vrot.slane %v757, %v761
      %v764 = vmul.f32 %v754, %v762
      %v765 = vmul.f32 %v755, %v762
      %s766 = scalar_lea.vmem %s4, 48
      %v767 = vld [vmem:[%s766] sm:$0xff]
      %v768 = vld [vmem:[%s766 + $0x8] sm:$0xff]
      %v770 = vsel %vm479, %v767, 0
      %v773 = vsel %vm479, %v768, 0
      %775 = vmatprep.subr.mxu0 0.0
      %776 = vmatpush1.msra.mxu0 %v764
      %777 = vmatprep.subr.mxu0 0.0
      %778 = vmatpush1.msra.mxu0 %v765
      %779 = vmatprep.subr.mxu0 0.0
      %780 = vmatpush1.msra.mxu0 0.0
      %781 = vmatprep.subr.mxu0 0.0
      %782 = vmatpush1.msra.mxu0 0.0
      %783 = vmatprep.subr.mxu0 0.0
      %784 = vmatpush1.msra.mxu0 0.0
      %785 = vmatprep.subr.mxu0 0.0
      %786 = vmatpush1.msra.mxu0 0.0
      %787 = vmatprep.subr.mxu0 0.0
      %788 = vmatpush1.msra.mxu0 0.0
      %789 = vmatprep.subr.mxu0 0.0
      %790 = vmatpush1.msra.mxu0 0.0
      %791 = vmatprep.subr.mxu0 0.0
      %792 = vmatpush1.msra.mxu0 0.0
      %793 = vmatprep.subr.mxu0 0.0
      %794 = vmatpush1.msra.mxu0 0.0
      %795 = vmatprep.subr.mxu0 0.0
      %796 = vmatpush1.msra.mxu0 0.0
      %797 = vmatprep.subr.mxu0 0.0
      %798 = vmatpush1.msra.mxu0 0.0
      %799 = vmatprep.subr.mxu0 0.0
      %800 = vmatpush1.msra.mxu0 0.0
      %801 = vmatprep.subr.mxu0 0.0
      %802 = vmatpush1.msra.mxu0 0.0
      %803 = vmatprep.subr.mxu0 0.0
      %804 = vmatpush1.msra.mxu0 0.0
      %805 = vmatprep.subr.mxu0 0.0
      %806 = vmatpush1.msra.mxu0 0.0
      %807 = vmatprep.subr.mxu0 0.0
      %808 = vmatpush1.msra.mxu0 0.0
      %809 = vmatprep.subr.mxu0 0.0
      %810 = vmatpush1.msra.mxu0 0.0
      %811 = vmatprep.subr.mxu0 0.0
      %812 = vmatpush1.msra.mxu0 0.0
      %813 = vmatprep.subr.mxu0 0.0
      %814 = vmatpush1.msra.mxu0 0.0
      %815 = vmatprep.subr.mxu0 0.0
      %816 = vmatpush1.msra.mxu0 0.0
      %817 = vmatprep.subr.mxu0 0.0
      %818 = vmatpush1.msra.mxu0 0.0
      %819 = vmatprep.subr.mxu0 0.0
      %820 = vmatpush1.msra.mxu0 0.0
      %821 = vmatprep.subr.mxu0 0.0
      %822 = vmatpush1.msra.mxu0 0.0
      %823 = vmatprep.subr.mxu0 0.0
      %824 = vmatpush1.msra.mxu0 0.0
      %825 = vmatprep.subr.mxu0 0.0
      %826 = vmatpush1.msra.mxu0 0.0
      %827 = vmatprep.subr.mxu0 0.0
      %828 = vmatpush1.msra.mxu0 0.0
      %829 = vmatprep.subr.mxu0 0.0
      %830 = vmatpush1.msra.mxu0 0.0
      %831 = vmatprep.subr.mxu0 0.0
      %832 = vmatpush1.msra.mxu0 0.0
      %833 = vmatprep.subr.mxu0 0.0
      %834 = vmatpush1.msra.mxu0 0.0
      %835 = vmatprep.subr.mxu0 0.0
      %836 = vmatpush1.msra.mxu0 0.0
      %837 = vmatprep.subr.mxu0 0.0
      %838 = vmatpush1.msra.mxu0 0.0
      %839 = vmatprep.mubr.f32.mxu0 0.0
      %840 = vmatmul.mubr.f32.gmra.mrb[0].mxu0 %v770
      %v841 = vpop.f32.mrb[0].mxu0
      %v842 = vadd.f32 0.0, %v841
      %v843 = vpop.f32.mrb[0].mxu0
      %844 = vmatprep.mubr.f32.mxu0 0.0
      %845 = vmatmul.mubr.f32.gmra.mrb[0].mxu0 %v773
      %v846 = vpop.f32.mrb[0].mxu0
      %v847 = vadd.f32 0.0, %v846
      %v848 = vpop.f32.mrb[0].mxu0
      %849 = vdwg.mxu0
      %v850 = vadd.f32 %v745, %v842
      %v851 = vadd.f32 %v746, %v847
      %s852 = scalar_lea.vmem %s4, 64
      %v853 = vld [vmem:[%s852] sm:$0xff]
      %v854 = vld [vmem:[%s852 + $0x8] sm:$0xff]
      %v856 = vsel %vm479, %v853, 0
      %v859 = vsel %vm479, %v854, 0
      %861 = vmatprep.subr.mxu0 0.0
      %862 = vmatpush1.msra.mxu0 %v433
      %863 = vmatprep.subr.mxu0 0.0
      %864 = vmatpush1.msra.mxu0 %v434
      %865 = vmatprep.subr.mxu0 0.0
      %866 = vmatpush1.msra.mxu0 0.0
      %867 = vmatprep.subr.mxu0 0.0
      %868 = vmatpush1.msra.mxu0 0.0
      %869 = vmatprep.subr.mxu0 0.0
      %870 = vmatpush1.msra.mxu0 0.0
      %871 = vmatprep.subr.mxu0 0.0
      %872 = vmatpush1.msra.mxu0 0.0
      %873 = vmatprep.subr.mxu0 0.0
      %874 = vmatpush1.msra.mxu0 0.0
      %875 = vmatprep.subr.mxu0 0.0
      %876 = vmatpush1.msra.mxu0 0.0
      %877 = vmatprep.subr.mxu0 0.0
      %878 = vmatpush1.msra.mxu0 0.0
      %879 = vmatprep.subr.mxu0 0.0
      %880 = vmatpush1.msra.mxu0 0.0
      %881 = vmatprep.subr.mxu0 0.0
      %882 = vmatpush1.msra.mxu0 0.0
      %883 = vmatprep.subr.mxu0 0.0
      %884 = vmatpush1.msra.mxu0 0.0
      %885 = vmatprep.subr.mxu0 0.0
      %886 = vmatpush1.msra.mxu0 0.0
      %887 = vmatprep.subr.mxu0 0.0
      %888 = vmatpush1.msra.mxu0 0.0
      %889 = vmatprep.subr.mxu0 0.0
      %890 = vmatpush1.msra.mxu0 0.0
      %891 = vmatprep.subr.mxu0 0.0
      %892 = vmatpush1.msra.mxu0 0.0
      %893 = vmatprep.subr.mxu0 0.0
      %894 = vmatpush1.msra.mxu0 0.0
      %895 = vmatprep.subr.mxu0 0.0
      %896 = vmatpush1.msra.mxu0 0.0
      %897 = vmatprep.subr.mxu0 0.0
      %898 = vmatpush1.msra.mxu0 0.0
      %899 = vmatprep.subr.mxu0 0.0
      %900 = vmatpush1.msra.mxu0 0.0
      %901 = vmatprep.subr.mxu0 0.0
      %902 = vmatpush1.msra.mxu0 0.0
      %903 = vmatprep.subr.mxu0 0.0
      %904 = vmatpush1.msra.mxu0 0.0
      %905 = vmatprep.subr.mxu0 0.0
      %906 = vmatpush1.msra.mxu0 0.0
      %907 = vmatprep.subr.mxu0 0.0
      %908 = vmatpush1.msra.mxu0 0.0
      %909 = vmatprep.subr.mxu0 0.0
      %910 = vmatpush1.msra.mxu0 0.0
      %911 = vmatprep.subr.mxu0 0.0
      %912 = vmatpush1.msra.mxu0 0.0
      %913 = vmatprep.subr.mxu0 0.0
      %914 = vmatpush1.msra.mxu0 0.0
      %915 = vmatprep.subr.mxu0 0.0
      %916 = vmatpush1.msra.mxu0 0.0
      %917 = vmatprep.subr.mxu0 0.0
      %918 = vmatpush1.msra.mxu0 0.0
      %919 = vmatprep.subr.mxu0 0.0
      %920 = vmatpush1.msra.mxu0 0.0
      %921 = vmatprep.subr.mxu0 0.0
      %922 = vmatpush1.msra.mxu0 0.0
      %923 = vmatprep.subr.mxu0 0.0
      %924 = vmatpush1.msra.mxu0 0.0
      %925 = vmatprep.mubr.f32.mxu0 0.0
      %926 = vmatmul.mubr.f32.gmra.mrb[0].mxu0 %v856
      %v927 = vpop.f32.mrb[0].mxu0
      %v928 = vadd.f32 0.0, %v927
      %v929 = vpop.f32.mrb[0].mxu0
      %930 = vmatprep.mubr.f32.mxu0 0.0
      %931 = vmatmul.mubr.f32.gmra.mrb[0].mxu0 %v859
      %v932 = vpop.f32.mrb[0].mxu0
      %v933 = vadd.f32 0.0, %v932
      %v934 = vpop.f32.mrb[0].mxu0
      %935 = vdwg.mxu0
      %v936 = vadd.f32 %v850, %v928
      %v937 = vadd.f32 %v851, %v933
      %938 = vrot.lane.b32.xlu0 %v433, 127
      %v939 = vpop.permute.xlu0 %938
      %940 = vrot.lane.b32.xlu0 %v434, 127
      %v941 = vpop.permute.xlu0 %940
      %vm944 = vcmask 121856
      %v945 = vsel %vm944, %v939, 0.0
      %v946 = vsel %vm944, %v941, 0.0
      %s947 = scalar_lea.vmem %s1, 5
      %v948 = vld [vmem:[%s947] sm:$0x1]
      %v950 = vlaneseq
      %v951 = vshrl.u32 %v950, 7
      %v952 = vsub.s32 0, %v951
      %v953 = vrot.slane %v948, %v952
      %v955 = vmul.f32 %v945, %v953
      %v956 = vmul.f32 %v946, %v953
      %s957 = scalar_lea.vmem %s4, 80
      %v958 = vld [vmem:[%s957] sm:$0xff]
      %v959 = vld [vmem:[%s957 + $0x8] sm:$0xff]
      %v961 = vsel %vm479, %v958, 0
      %v964 = vsel %vm479, %v959, 0
      %966 = vmatprep.subr.mxu0 0.0
      %967 = vmatpush1.msra.mxu0 %v955
      %968 = vmatprep.subr.mxu0 0.0
      %969 = vmatpush1.msra.mxu0 %v956
      %970 = vmatprep.subr.mxu0 0.0
      %971 = vmatpush1.msra.mxu0 0.0
      %972 = vmatprep.subr.mxu0 0.0
      %973 = vmatpush1.msra.mxu0 0.0
      %974 = vmatprep.subr.mxu0 0.0
      %975 = vmatpush1.msra.mxu0 0.0
      %976 = vmatprep.subr.mxu0 0.0
      %977 = vmatpush1.msra.mxu0 0.0
      %978 = vmatprep.subr.mxu0 0.0
      %979 = vmatpush1.msra.mxu0 0.0
      %980 = vmatprep.subr.mxu0 0.0
      %981 = vmatpush1.msra.mxu0 0.0
      %982 = vmatprep.subr.mxu0 0.0
      %983 = vmatpush1.msra.mxu0 0.0
      %984 = vmatprep.subr.mxu0 0.0
      %985 = vmatpush1.msra.mxu0 0.0
      %986 = vmatprep.subr.mxu0 0.0
      %987 = vmatpush1.msra.mxu0 0.0
      %988 = vmatprep.subr.mxu0 0.0
      %989 = vmatpush1.msra.mxu0 0.0
      %990 = vmatprep.subr.mxu0 0.0
      %991 = vmatpush1.msra.mxu0 0.0
      %992 = vmatprep.subr.mxu0 0.0
      %993 = vmatpush1.msra.mxu0 0.0
      %994 = vmatprep.subr.mxu0 0.0
      %995 = vmatpush1.msra.mxu0 0.0
      %996 = vmatprep.subr.mxu0 0.0
      %997 = vmatpush1.msra.mxu0 0.0
      %998 = vmatprep.subr.mxu0 0.0
      %999 = vmatpush1.msra.mxu0 0.0
      %1000 = vmatprep.subr.mxu0 0.0
      %1001 = vmatpush1.msra.mxu0 0.0
      %1002 = vmatprep.subr.mxu0 0.0
      %1003 = vmatpush1.msra.mxu0 0.0
      %1004 = vmatprep.subr.mxu0 0.0
      %1005 = vmatpush1.msra.mxu0 0.0
      %1006 = vmatprep.subr.mxu0 0.0
      %1007 = vmatpush1.msra.mxu0 0.0
      %1008 = vmatprep.subr.mxu0 0.0
      %1009 = vmatpush1.msra.mxu0 0.0
      %1010 = vmatprep.subr.mxu0 0.0
      %1011 = vmatpush1.msra.mxu0 0.0
      %1012 = vmatprep.subr.mxu0 0.0
      %1013 = vmatpush1.msra.mxu0 0.0
      %1014 = vmatprep.subr.mxu0 0.0
      %1015 = vmatpush1.msra.mxu0 0.0
      %1016 = vmatprep.subr.mxu0 0.0
      %1017 = vmatpush1.msra.mxu0 0.0
      %1018 = vmatprep.subr.mxu0 0.0
      %1019 = vmatpush1.msra.mxu0 0.0
      %1020 = vmatprep.subr.mxu0 0.0
      %1021 = vmatpush1.msra.mxu0 0.0
      %1022 = vmatprep.subr.mxu0 0.0
      %1023 = vmatpush1.msra.mxu0 0.0
      %1024 = vmatprep.subr.mxu0 0.0
      %1025 = vmatpush1.msra.mxu0 0.0
      %1026 = vmatprep.subr.mxu0 0.0
      %1027 = vmatpush1.msra.mxu0 0.0
      %1028 = vmatprep.subr.mxu0 0.0
      %1029 = vmatpush1.msra.mxu0 0.0
      %1030 = vmatprep.mubr.f32.mxu0 0.0
      %1031 = vmatmul.mubr.f32.gmra.mrb[0].mxu0 %v961
      %v1032 = vpop.f32.mrb[0].mxu0
      %v1033 = vadd.f32 0.0, %v1032
      %v1034 = vpop.f32.mrb[0].mxu0
      %1035 = vmatprep.mubr.f32.mxu0 0.0
      %1036 = vmatmul.mubr.f32.gmra.mrb[0].mxu0 %v964
      %v1037 = vpop.f32.mrb[0].mxu0
      %v1038 = vadd.f32 0.0, %v1037
      %v1039 = vpop.f32.mrb[0].mxu0
      %1040 = vdwg.mxu0
      %v1041 = vadd.f32 %v936, %v1033
      %v1042 = vadd.f32 %v937, %v1038
      %1043 = vrot.lane.b32.xlu0 %v433, 125
      %v1044 = vpop.permute.xlu0 %1043
      %1045 = vrot.lane.b32.xlu0 %v434, 125
      %v1046 = vpop.permute.xlu0 %1045
      %vm1049 = vcmask 105472
      %v1050 = vsel %vm1049, %v1044, 0.0
      %v1051 = vsel %vm1049, %v1046, 0.0
      %s1052 = scalar_lea.vmem %s1, 6
      %v1053 = vld [vmem:[%s1052] sm:$0x1]
      %v1055 = vlaneseq
      %v1056 = vshrl.u32 %v1055, 7
      %v1057 = vsub.s32 0, %v1056
      %v1058 = vrot.slane %v1053, %v1057
      %v1060 = vmul.f32 %v1050, %v1058
      %v1061 = vmul.f32 %v1051, %v1058
      %s1062 = scalar_lea.vmem %s4, 96
      %v1063 = vld [vmem:[%s1062] sm:$0xff]
      %v1064 = vld [vmem:[%s1062 + $0x8] sm:$0xff]
      %v1066 = vsel %vm479, %v1063, 0
      %v1069 = vsel %vm479, %v1064, 0
      %1071 = vmatprep.subr.mxu0 0.0
      %1072 = vmatpush1.msra.mxu0 %v1060
      %1073 = vmatprep.subr.mxu0 0.0
      %1074 = vmatpush1.msra.mxu0 %v1061
      %1075 = vmatprep.subr.mxu0 0.0
      %1076 = vmatpush1.msra.mxu0 0.0
      %1077 = vmatprep.subr.mxu0 0.0
      %1078 = vmatpush1.msra.mxu0 0.0
      %1079 = vmatprep.subr.mxu0 0.0
      %1080 = vmatpush1.msra.mxu0 0.0
      %1081 = vmatprep.subr.mxu0 0.0
      %1082 = vmatpush1.msra.mxu0 0.0
      %1083 = vmatprep.subr.mxu0 0.0
      %1084 = vmatpush1.msra.mxu0 0.0
      %1085 = vmatprep.subr.mxu0 0.0
      %1086 = vmatpush1.msra.mxu0 0.0
      %1087 = vmatprep.subr.mxu0 0.0
      %1088 = vmatpush1.msra.mxu0 0.0
      %1089 = vmatprep.subr.mxu0 0.0
      %1090 = vmatpush1.msra.mxu0 0.0
      %1091 = vmatprep.subr.mxu0 0.0
      %1092 = vmatpush1.msra.mxu0 0.0
      %1093 = vmatprep.subr.mxu0 0.0
      %1094 = vmatpush1.msra.mxu0 0.0
      %1095 = vmatprep.subr.mxu0 0.0
      %1096 = vmatpush1.msra.mxu0 0.0
      %1097 = vmatprep.subr.mxu0 0.0
      %1098 = vmatpush1.msra.mxu0 0.0
      %1099 = vmatprep.subr.mxu0 0.0
      %1100 = vmatpush1.msra.mxu0 0.0
      %1101 = vmatprep.subr.mxu0 0.0
      %1102 = vmatpush1.msra.mxu0 0.0
      %1103 = vmatprep.subr.mxu0 0.0
      %1104 = vmatpush1.msra.mxu0 0.0
      %1105 = vmatprep.subr.mxu0 0.0
      %1106 = vmatpush1.msra.mxu0 0.0
      %1107 = vmatprep.subr.mxu0 0.0
      %1108 = vmatpush1.msra.mxu0 0.0
      %1109 = vmatprep.subr.mxu0 0.0
      %1110 = vmatpush1.msra.mxu0 0.0
      %1111 = vmatprep.subr.mxu0 0.0
      %1112 = vmatpush1.msra.mxu0 0.0
      %1113 = vmatprep.subr.mxu0 0.0
      %1114 = vmatpush1.msra.mxu0 0.0
      %1115 = vmatprep.subr.mxu0 0.0
      %1116 = vmatpush1.msra.mxu0 0.0
      %1117 = vmatprep.subr.mxu0 0.0
      %1118 = vmatpush1.msra.mxu0 0.0
      %1119 = vmatprep.subr.mxu0 0.0
      %1120 = vmatpush1.msra.mxu0 0.0
      %1121 = vmatprep.subr.mxu0 0.0
      %1122 = vmatpush1.msra.mxu0 0.0
      %1123 = vmatprep.subr.mxu0 0.0
      %1124 = vmatpush1.msra.mxu0 0.0
      %1125 = vmatprep.subr.mxu0 0.0
      %1126 = vmatpush1.msra.mxu0 0.0
      %1127 = vmatprep.subr.mxu0 0.0
      %1128 = vmatpush1.msra.mxu0 0.0
      %1129 = vmatprep.subr.mxu0 0.0
      %1130 = vmatpush1.msra.mxu0 0.0
      %1131 = vmatprep.subr.mxu0 0.0
      %1132 = vmatpush1.msra.mxu0 0.0
      %1133 = vmatprep.subr.mxu0 0.0
      %1134 = vmatpush1.msra.mxu0 0.0
      %1135 = vmatprep.mubr.f32.mxu0 0.0
      %1136 = vmatmul.mubr.f32.gmra.mrb[0].mxu0 %v1066
      %v1137 = vpop.f32.mrb[0].mxu0
      %v1138 = vadd.f32 0.0, %v1137
      %v1139 = vpop.f32.mrb[0].mxu0
      %1140 = vmatprep.mubr.f32.mxu0 0.0
      %1141 = vmatmul.mubr.f32.gmra.mrb[0].mxu0 %v1069
      %v1142 = vpop.f32.mrb[0].mxu0
      %v1143 = vadd.f32 0.0, %v1142
      %v1144 = vpop.f32.mrb[0].mxu0
      %1145 = vdwg.mxu0
      %v1146 = vadd.f32 %v1041, %v1138
      %v1147 = vadd.f32 %v1042, %v1143
      %1148 = vrot.lane.b32.xlu0 %v433, 124
      %v1149 = vpop.permute.xlu0 %1148
      %1150 = vrot.lane.b32.xlu0 %v434, 124
      %v1151 = vpop.permute.xlu0 %1150
      %vm1154 = vcmask 97280
      %v1155 = vsel %vm1154, %v1149, 0.0
      %v1156 = vsel %vm1154, %v1151, 0.0
      %s1157 = scalar_lea.vmem %s1, 7
      %v1158 = vld [vmem:[%s1157] sm:$0x1]
      %v1160 = vlaneseq
      %v1161 = vshrl.u32 %v1160, 7
      %v1162 = vsub.s32 0, %v1161
      %v1163 = vrot.slane %v1158, %v1162
      %v1165 = vmul.f32 %v1155, %v1163
      %v1166 = vmul.f32 %v1156, %v1163
      %s1167 = scalar_lea.vmem %s4, 112
      %v1168 = vld [vmem:[%s1167] sm:$0xff]
      %v1169 = vld [vmem:[%s1167 + $0x8] sm:$0xff]
      %v1171 = vsel %vm479, %v1168, 0
      %v1174 = vsel %vm479, %v1169, 0
      %1176 = vmatprep.subr.mxu0 0.0
      %1177 = vmatpush1.msra.mxu0 %v1165
      %1178 = vmatprep.subr.mxu0 0.0
      %1179 = vmatpush1.msra.mxu0 %v1166
      %1180 = vmatprep.subr.mxu0 0.0
      %1181 = vmatpush1.msra.mxu0 0.0
      %1182 = vmatprep.subr.mxu0 0.0
      %1183 = vmatpush1.msra.mxu0 0.0
      %1184 = vmatprep.subr.mxu0 0.0
      %1185 = vmatpush1.msra.mxu0 0.0
      %1186 = vmatprep.subr.mxu0 0.0
      %1187 = vmatpush1.msra.mxu0 0.0
      %1188 = vmatprep.subr.mxu0 0.0
      %1189 = vmatpush1.msra.mxu0 0.0
      %1190 = vmatprep.subr.mxu0 0.0
      %1191 = vmatpush1.msra.mxu0 0.0
      %1192 = vmatprep.subr.mxu0 0.0
      %1193 = vmatpush1.msra.mxu0 0.0
      %1194 = vmatprep.subr.mxu0 0.0
      %1195 = vmatpush1.msra.mxu0 0.0
      %1196 = vmatprep.subr.mxu0 0.0
      %1197 = vmatpush1.msra.mxu0 0.0
      %1198 = vmatprep.subr.mxu0 0.0
      %1199 = vmatpush1.msra.mxu0 0.0
      %1200 = vmatprep.subr.mxu0 0.0
      %1201 = vmatpush1.msra.mxu0 0.0
      %1202 = vmatprep.subr.mxu0 0.0
      %1203 = vmatpush1.msra.mxu0 0.0
      %1204 = vmatprep.subr.mxu0 0.0
      %1205 = vmatpush1.msra.mxu0 0.0
      %1206 = vmatprep.subr.mxu0 0.0
      %1207 = vmatpush1.msra.mxu0 0.0
      %1208 = vmatprep.subr.mxu0 0.0
      %1209 = vmatpush1.msra.mxu0 0.0
      %1210 = vmatprep.subr.mxu0 0.0
      %1211 = vmatpush1.msra.mxu0 0.0
      %1212 = vmatprep.subr.mxu0 0.0
      %1213 = vmatpush1.msra.mxu0 0.0
      %1214 = vmatprep.subr.mxu0 0.0
      %1215 = vmatpush1.msra.mxu0 0.0
      %1216 = vmatprep.subr.mxu0 0.0
      %1217 = vmatpush1.msra.mxu0 0.0
      %1218 = vmatprep.subr.mxu0 0.0
      %1219 = vmatpush1.msra.mxu0 0.0
      %1220 = vmatprep.subr.mxu0 0.0
      %1221 = vmatpush1.msra.mxu0 0.0
      %1222 = vmatprep.subr.mxu0 0.0
      %1223 = vmatpush1.msra.mxu0 0.0
      %1224 = vmatprep.subr.mxu0 0.0
      %1225 = vmatpush1.msra.mxu0 0.0
      %1226 = vmatprep.subr.mxu0 0.0
      %1227 = vmatpush1.msra.mxu0 0.0
      %1228 = vmatprep.subr.mxu0 0.0
      %1229 = vmatpush1.msra.mxu0 0.0
      %1230 = vmatprep.subr.mxu0 0.0
      %1231 = vmatpush1.msra.mxu0 0.0
      %1232 = vmatprep.subr.mxu0 0.0
      %1233 = vmatpush1.msra.mxu0 0.0
      %1234 = vmatprep.subr.mxu0 0.0
      %1235 = vmatpush1.msra.mxu0 0.0
      %1236 = vmatprep.subr.mxu0 0.0
      %1237 = vmatpush1.msra.mxu0 0.0
      %1238 = vmatprep.subr.mxu0 0.0
      %1239 = vmatpush1.msra.mxu0 0.0
      %1240 = vmatprep.mubr.f32.mxu0 0.0
      %1241 = vmatmul.mubr.f32.gmra.mrb[0].mxu0 %v1171
      %v1242 = vpop.f32.mrb[0].mxu0
      %v1243 = vadd.f32 0.0, %v1242
      %v1244 = vpop.f32.mrb[0].mxu0
      %1245 = vmatprep.mubr.f32.mxu0 0.0
      %1246 = vmatmul.mubr.f32.gmra.mrb[0].mxu0 %v1174
      %v1247 = vpop.f32.mrb[0].mxu0
      %v1248 = vadd.f32 0.0, %v1247
      %v1249 = vpop.f32.mrb[0].mxu0
      %1250 = vdwg.mxu0
      %v1251 = vadd.f32 %v1146, %v1243
      %v1252 = vadd.f32 %v1147, %v1248
      %1253 = vrot.lane.b32.xlu0 %v433, 123
      %v1254 = vpop.permute.xlu0 %1253
      %1255 = vrot.lane.b32.xlu0 %v434, 123
      %v1256 = vpop.permute.xlu0 %1255
      %vm1259 = vcmask 89088
      %v1260 = vsel %vm1259, %v1254, 0.0
      %v1261 = vsel %vm1259, %v1256, 0.0
      %s1262 = scalar_lea.vmem %s1, 8
      %v1263 = vld [vmem:[%s1262] sm:$0x1]
      %v1265 = vlaneseq
      %v1266 = vshrl.u32 %v1265, 7
      %v1267 = vsub.s32 0, %v1266
      %v1268 = vrot.slane %v1263, %v1267
      %v1270 = vmul.f32 %v1260, %v1268
      %v1271 = vmul.f32 %v1261, %v1268
      %s1272 = scalar_lea.vmem %s4, 128
      %v1273 = vld [vmem:[%s1272] sm:$0xff]
      %v1274 = vld [vmem:[%s1272 + $0x8] sm:$0xff]
      %v1276 = vsel %vm479, %v1273, 0
      %v1279 = vsel %vm479, %v1274, 0
      %1281 = vmatprep.subr.mxu0 0.0
      %1282 = vmatpush1.msra.mxu0 %v1270
      %1283 = vmatprep.subr.mxu0 0.0
      %1284 = vmatpush1.msra.mxu0 %v1271
      %1285 = vmatprep.subr.mxu0 0.0
      %1286 = vmatpush1.msra.mxu0 0.0
      %1287 = vmatprep.subr.mxu0 0.0
      %1288 = vmatpush1.msra.mxu0 0.0
      %1289 = vmatprep.subr.mxu0 0.0
      %1290 = vmatpush1.msra.mxu0 0.0
      %1291 = vmatprep.subr.mxu0 0.0
      %1292 = vmatpush1.msra.mxu0 0.0
      %1293 = vmatprep.subr.mxu0 0.0
      %1294 = vmatpush1.msra.mxu0 0.0
      %1295 = vmatprep.subr.mxu0 0.0
      %1296 = vmatpush1.msra.mxu0 0.0
      %1297 = vmatprep.subr.mxu0 0.0
      %1298 = vmatpush1.msra.mxu0 0.0
      %1299 = vmatprep.subr.mxu0 0.0
      %1300 = vmatpush1.msra.mxu0 0.0
      %1301 = vmatprep.subr.mxu0 0.0
      %1302 = vmatpush1.msra.mxu0 0.0
      %1303 = vmatprep.subr.mxu0 0.0
      %1304 = vmatpush1.msra.mxu0 0.0
      %1305 = vmatprep.subr.mxu0 0.0
      %1306 = vmatpush1.msra.mxu0 0.0
      %1307 = vmatprep.subr.mxu0 0.0
      %1308 = vmatpush1.msra.mxu0 0.0
      %1309 = vmatprep.subr.mxu0 0.0
      %1310 = vmatpush1.msra.mxu0 0.0
      %1311 = vmatprep.subr.mxu0 0.0
      %1312 = vmatpush1.msra.mxu0 0.0
      %1313 = vmatprep.subr.mxu0 0.0
      %1314 = vmatpush1.msra.mxu0 0.0
      %1315 = vmatprep.subr.mxu0 0.0
      %1316 = vmatpush1.msra.mxu0 0.0
      %1317 = vmatprep.subr.mxu0 0.0
      %1318 = vmatpush1.msra.mxu0 0.0
      %1319 = vmatprep.subr.mxu0 0.0
      %1320 = vmatpush1.msra.mxu0 0.0
      %1321 = vmatprep.subr.mxu0 0.0
      %1322 = vmatpush1.msra.mxu0 0.0
      %1323 = vmatprep.subr.mxu0 0.0
      %1324 = vmatpush1.msra.mxu0 0.0
      %1325 = vmatprep.subr.mxu0 0.0
      %1326 = vmatpush1.msra.mxu0 0.0
      %1327 = vmatprep.subr.mxu0 0.0
      %1328 = vmatpush1.msra.mxu0 0.0
      %1329 = vmatprep.subr.mxu0 0.0
      %1330 = vmatpush1.msra.mxu0 0.0
      %1331 = vmatprep.subr.mxu0 0.0
      %1332 = vmatpush1.msra.mxu0 0.0
      %1333 = vmatprep.subr.mxu0 0.0
      %1334 = vmatpush1.msra.mxu0 0.0
      %1335 = vmatprep.subr.mxu0 0.0
      %1336 = vmatpush1.msra.mxu0 0.0
      %1337 = vmatprep.subr.mxu0 0.0
      %1338 = vmatpush1.msra.mxu0 0.0
      %1339 = vmatprep.subr.mxu0 0.0
      %1340 = vmatpush1.msra.mxu0 0.0
      %1341 = vmatprep.subr.mxu0 0.0
      %1342 = vmatpush1.msra.mxu0 0.0
      %1343 = vmatprep.subr.mxu0 0.0
      %1344 = vmatpush1.msra.mxu0 0.0
      %1345 = vmatprep.mubr.f32.mxu0 0.0
      %1346 = vmatmul.mubr.f32.gmra.mrb[0].mxu0 %v1276
      %v1347 = vpop.f32.mrb[0].mxu0
      %v1348 = vadd.f32 0.0, %v1347
      %v1349 = vpop.f32.mrb[0].mxu0
      %1350 = vmatprep.mubr.f32.mxu0 0.0
      %1351 = vmatmul.mubr.f32.gmra.mrb[0].mxu0 %v1279
      %v1352 = vpop.f32.mrb[0].mxu0
      %v1353 = vadd.f32 0.0, %v1352
      %v1354 = vpop.f32.mrb[0].mxu0
      %1355 = vdwg.mxu0
      %v1356 = vadd.f32 %v1251, %v1348
      %v1357 = vadd.f32 %v1252, %v1353
      %v1358 = vld [vmem:[%s5] sm:$0xff]
      %v1359 = vld [vmem:[%s5 + $0x8] sm:$0xff]
      %1361 = vset.pattern.permute.xlu0 0
      %1362 = vperm.xlu0 %1361, %v1358
      %v1363 = vpop.permute.xlu0 %1362
      %1366 = vset.pattern.permute.xlu0 0
      %1367 = vperm.xlu0 %1366, %v1359
      %v1368 = vpop.permute.xlu0 %1367
      %v1370 = vadd.f32 %v1356, %v1363
      %v1371 = vadd.f32 %v1357, %v1368
      %v1372 = vmax.f32 %v1370, 0.0
      %v1373 = vmax.f32 %v1371, 0.0
      %v1374 = vld [vmem:[%s6] sm:$0xff]
      %v1375 = vld [vmem:[%s6 + $0x8] sm:$0xff]
      %v1376 = vld [vmem:[%s6 + $0x10] sm:$0xff]
      %v1377 = vld [vmem:[%s6 + $0x18] sm:$0xff]
      %v1378 = vld [vmem:[%s7] sm:$0xff]
      %v1379 = vld [vmem:[%s7 + $0x8] sm:$0xff]
      %v1380 = vld [vmem:[%s7 + $0x10] sm:$0xff]
      %v1381 = vld [vmem:[%s7 + $0x18] sm:$0xff]
      %1383 = vset.pattern.permute.xlu0 0
      %1384 = vperm.xlu0 %1383, %v1378
      %v1385 = vpop.permute.xlu0 %1384
      %1388 = vset.pattern.permute.xlu0 0
      %1389 = vperm.xlu0 %1388, %v1379
      %v1390 = vpop.permute.xlu0 %1389
      %1393 = vset.pattern.permute.xlu0 0
      %1394 = vperm.xlu0 %1393, %v1380
      %v1395 = vpop.permute.xlu0 %1394
      %1398 = vset.pattern.permute.xlu0 0
      %1399 = vperm.xlu0 %1398, %v1381
      %v1400 = vpop.permute.xlu0 %1399
      %v1403 = vsel %vm479, %v1374, 0
      %v1406 = vsel %vm479, %v1375, 0
      %v1409 = vsel %vm479, %v1376, 0
      %v1412 = vsel %vm479, %v1377, 0
      %1414 = vmatprep.subr.mxu0 0.0
      %1415 = vmatpush1.msra.mxu0 %v1372
      %1416 = vmatprep.subr.mxu0 0.0
      %1417 = vmatpush1.msra.mxu0 %v1373
      %1418 = vmatprep.subr.mxu0 0.0
      %1419 = vmatpush1.msra.mxu0 0.0
      %1420 = vmatprep.subr.mxu0 0.0
      %1421 = vmatpush1.msra.mxu0 0.0
      %1422 = vmatprep.subr.mxu0 0.0
      %1423 = vmatpush1.msra.mxu0 0.0
      %1424 = vmatprep.subr.mxu0 0.0
      %1425 = vmatpush1.msra.mxu0 0.0
      %1426 = vmatprep.subr.mxu0 0.0
      %1427 = vmatpush1.msra.mxu0 0.0
      %1428 = vmatprep.subr.mxu0 0.0
      %1429 = vmatpush1.msra.mxu0 0.0
      %1430 = vmatprep.subr.mxu0 0.0
      %1431 = vmatpush1.msra.mxu0 0.0
      %1432 = vmatprep.subr.mxu0 0.0
      %1433 = vmatpush1.msra.mxu0 0.0
      %1434 = vmatprep.subr.mxu0 0.0
      %1435 = vmatpush1.msra.mxu0 0.0
      %1436 = vmatprep.subr.mxu0 0.0
      %1437 = vmatpush1.msra.mxu0 0.0
      %1438 = vmatprep.subr.mxu0 0.0
      %1439 = vmatpush1.msra.mxu0 0.0
      %1440 = vmatprep.subr.mxu0 0.0
      %1441 = vmatpush1.msra.mxu0 0.0
      %1442 = vmatprep.subr.mxu0 0.0
      %1443 = vmatpush1.msra.mxu0 0.0
      %1444 = vmatprep.subr.mxu0 0.0
      %1445 = vmatpush1.msra.mxu0 0.0
      %1446 = vmatprep.subr.mxu0 0.0
      %1447 = vmatpush1.msra.mxu0 0.0
      %1448 = vmatprep.subr.mxu0 0.0
      %1449 = vmatpush1.msra.mxu0 0.0
      %1450 = vmatprep.subr.mxu0 0.0
      %1451 = vmatpush1.msra.mxu0 0.0
      %1452 = vmatprep.subr.mxu0 0.0
      %1453 = vmatpush1.msra.mxu0 0.0
      %1454 = vmatprep.subr.mxu0 0.0
      %1455 = vmatpush1.msra.mxu0 0.0
      %1456 = vmatprep.subr.mxu0 0.0
      %1457 = vmatpush1.msra.mxu0 0.0
      %1458 = vmatprep.subr.mxu0 0.0
      %1459 = vmatpush1.msra.mxu0 0.0
      %1460 = vmatprep.subr.mxu0 0.0
      %1461 = vmatpush1.msra.mxu0 0.0
      %1462 = vmatprep.subr.mxu0 0.0
      %1463 = vmatpush1.msra.mxu0 0.0
      %1464 = vmatprep.subr.mxu0 0.0
      %1465 = vmatpush1.msra.mxu0 0.0
      %1466 = vmatprep.subr.mxu0 0.0
      %1467 = vmatpush1.msra.mxu0 0.0
      %1468 = vmatprep.subr.mxu0 0.0
      %1469 = vmatpush1.msra.mxu0 0.0
      %1470 = vmatprep.subr.mxu0 0.0
      %1471 = vmatpush1.msra.mxu0 0.0
      %1472 = vmatprep.subr.mxu0 0.0
      %1473 = vmatpush1.msra.mxu0 0.0
      %1474 = vmatprep.subr.mxu0 0.0
      %1475 = vmatpush1.msra.mxu0 0.0
      %1476 = vmatprep.subr.mxu0 0.0
      %1477 = vmatpush1.msra.mxu0 0.0
      %1478 = vmatprep.mubr.f32.mxu0 0.0
      %1479 = vmatmul.mubr.f32.gmra.mrb[0].mxu0 %v1403
      %v1480 = vpop.f32.mrb[0].mxu0
      %v1481 = vadd.f32 %v1385, %v1480
      %v1482 = vpop.f32.mrb[0].mxu0
      %1483 = vmatprep.mubr.f32.mxu0 0.0
      %1484 = vmatmul.mubr.f32.gmra.mrb[0].mxu0 %v1406
      %v1485 = vpop.f32.mrb[0].mxu0
      %v1486 = vadd.f32 %v1390, %v1485
      %v1487 = vpop.f32.mrb[0].mxu0
      %1488 = vmatprep.mubr.f32.mxu0 0.0
      %1489 = vmatmul.mubr.f32.gmra.mrb[0].mxu0 %v1409
      %v1490 = vpop.f32.mrb[0].mxu0
      %v1491 = vadd.f32 %v1395, %v1490
      %v1492 = vpop.f32.mrb[0].mxu0
      %1493 = vmatprep.mubr.f32.mxu0 0.0
      %1494 = vmatmul.mubr.f32.gmra.mrb[0].mxu0 %v1412
      %v1495 = vpop.f32.mrb[0].mxu0
      %v1496 = vadd.f32 %v1400, %v1495
      %v1497 = vpop.f32.mrb[0].mxu0
      %1498 = vdwg.mxu0
      %v1499 = vld [vmem:[%s8] sm:$0xff]
      %v1500 = vld [vmem:[%s8 + $0x8] sm:$0xff]
      %v1501 = vld [vmem:[%s8 + $0x10] sm:$0xff]
      %v1502 = vld [vmem:[%s8 + $0x18] sm:$0xff]
      %1504 = vset.pattern.permute.xlu0 0
      %1505 = vperm.xlu0 %1504, %v1499
      %v1506 = vpop.permute.xlu0 %1505
      %1509 = vset.pattern.permute.xlu0 0
      %1510 = vperm.xlu0 %1509, %v1500
      %v1511 = vpop.permute.xlu0 %1510
      %1514 = vset.pattern.permute.xlu0 0
      %1515 = vperm.xlu0 %1514, %v1501
      %v1516 = vpop.permute.xlu0 %1515
      %1519 = vset.pattern.permute.xlu0 0
      %1520 = vperm.xlu0 %1519, %v1502
      %v1521 = vpop.permute.xlu0 %1520
      %v1523 = vmul.f32 %v1506, %v333
      %v1524 = vmul.f32 %v1511, %v334
      %v1525 = vmul.f32 %v1516, %v335
      %v1526 = vmul.f32 %v1521, %v336
      %v1527 = vadd.f32 %v1481, %v1523
      %v1528 = vadd.f32 %v1486, %v1524
      %v1529 = vadd.f32 %v1491, %v1525
      %v1530 = vadd.f32 %v1496, %v1526
      %v1531 = vmax.f32 %v1527, 0.0
      %v1532 = vmax.f32 %v1528, 0.0
      %v1533 = vmax.f32 %v1529, 0.0
      %v1534 = vmax.f32 %v1530, 0.0
      %1535 = vst.msk [vmem:[%s332] sm:$0xff] %vm479, %v1531
      %1536 = vst.msk [vmem:[%s332 + $0x8] sm:$0xff] %vm479, %v1532
      %1537 = vst.msk [vmem:[%s332 + $0x10] sm:$0xff] %vm479, %v1533
      %1538 = vst.msk [vmem:[%s332 + $0x18] sm:$0xff] %vm479, %v1534
      %p1539 = scmp.lt.s32.totalorder %s20, 1
      %s1540 = scalar_select %p1539, %s20, 1
      %s1541 = smul.addr %s1540, 4
      %s1542 = smul.addr %s1541, 8
      %s1543 = scalar_lea.vmem %s9, %s1542
      // Predicated region
      $region57: #{hand2d_to_3d_forward.33} parent=55 // pred_check
        %p1544 = pneg %p232
      $region58: #{hand2d_to_3d_forward.33} parent=55 // pred_check_branch
        %1546 = sbr.rel (%p1544) target = $region60
      $region59: #{hand2d_to_3d_forward.33} parent=55 // pred_region
        _
      $region60: #{hand2d_to_3d_forward.33} parent=55 // pred_fallthru
        _
    $region56: #{hand2d_to_3d_forward.33} parent=5 // pred_fallthru
      _
    %p1547 = scmp.le.s32.totalorder 2, %s15
    // Predicated region
    $region61: #{hand2d_to_3d_forward.33} parent=5 // pred_check
      %p1548 = pneg %p1547
    $region62: #{hand2d_to_3d_forward.33} parent=5 // pred_check_branch
      %1550 = sbr.rel (%p1548) target = $region64
    $region63: #{hand2d_to_3d_forward.33} parent=5 // pred_region
      %s1551 = ssub.s32 %s15, 2
      // Predicated region
      $region65: #{hand2d_to_3d_forward.33} parent=63 // pred_check
        %p1552 = pneg %p238
      $region66: #{hand2d_to_3d_forward.33} parent=63 // pred_check_branch
        %1554 = sbr.rel (%p1552) target = $region68
      $region67: #{hand2d_to_3d_forward.33} parent=63 // pred_region
        %p1555 = scmp.lt.s32.totalorder %s21, 1
        %s1556 = scalar_select %p1555, %s21, 1
        %s1557 = smul.addr %s1556, 4
        %s1558 = smul.addr %s1557, 8
        %s1559 = scalar_lea.vmem %s9, %s1558
      $region68: #{hand2d_to_3d_forward.33} parent=63 // pred_fallthru
        _
    $region64: #{hand2d_to_3d_forward.33} parent=5 // pred_fallthru
      _
  $region6: #{hand2d_to_3d_forward.33} parent=0 // loop_footer
    %s19 = sadd.s32 1, %s15
  $region7: #{hand2d_to_3d_forward.33} parent=0 // loop_footer_branch
    %14 = sbr.rel target = $region3
  $region8: #{hand2d_to_3d_forward.33} parent=0 // loop_exit
    _

// kernel: hand2d_to_3d_forward.31
$region0: #{hand2d_to_3d_forward.31}
  #allocation0 [shape = 'u32[]', space=smem, size = 0x4, offset = 0x4, fixed_abs, tag = 'smem constant byte address 0x4 - core index']
  #allocation1 [shape = 'u32[144,128]{1,0:T(1,128)}', space=vmem, size = 0x12000, scoped, tag = 'internal scratch']
  %s0 = inlined_call_operand.vmem [shape: f32[2,32,64], index: 0, kind: input, shape index: {}]
  %s1 = inlined_call_operand.vmem [shape: f32[9,1,64], index: 1, kind: input, shape index: {}]
  %s2 = inlined_call_operand.vmem [shape: f32[16,32], index: 2, kind: input, shape index: {}]
  %s3 = inlined_call_operand.vmem [shape: f32[16,1], index: 3, kind: input, shape index: {}]
  %s4 = inlined_call_operand.vmem [shape: f32[9,16,16], index: 4, kind: input, shape index: {}]
  %s5 = inlined_call_operand.vmem [shape: f32[16,1], index: 5, kind: input, shape index: {}]
  %s6 = inlined_call_operand.vmem [shape: f32[32,16], index: 6, kind: input, shape index: {}]
  %s7 = inlined_call_operand.vmem [shape: f32[32,1], index: 7, kind: input, shape index: {}]
  %s8 = inlined_call_operand.vmem [shape: f32[32,1], index: 8, kind: input, shape index: {}]
  %s9 = inlined_call_operand.vmem [shape: f32[2,32,64], index: 9, kind: output, shape index: {}]
  %s10 = sld [smem:[#allocation0]]
  $region69: #{hand2d_to_3d_forward.31} parent=0
    _
  %s12 = ssub.s32 1, %s10
  %s13 = scalar_select 0, %s12, %s10
  loop: start=0, step=1, limit=4
  $region2: #{hand2d_to_3d_forward.31} parent=0 // loop_pre_header
    _
  $region3: #{hand2d_to_3d_forward.31} parent=0 // loop_header
    %s15 = sphi 0, %s19
    %p16 = scmp.ge.s32.totalorder %s15, 4
    %s25 = sphi 0, %s27
    %s28 = sphi 0, %s25
    %s29 = sphi 0, %s28
    %s45 = sphi 0, %s29
    %s49 = sphi 0, %s49
    %s51 = sphi 0, %s49
    %s52 = sphi 0, %s51
    %s66 = sphi 0, %s52
    %s70 = sphi 0, %s70
    %s72 = sphi 0, %s70
    %s73 = sphi 0, %s72
    %s87 = sphi 0, %s73
    %s91 = sphi 0, %s91
    %s93 = sphi 0, %s91
    %s94 = sphi 0, %s93
    %s108 = sphi 0, %s94
    %s112 = sphi 0, %s112
    %s114 = sphi 0, %s112
    %s115 = sphi 0, %s114
    %s129 = sphi 0, %s115
    %s133 = sphi 0, %s133
    %s135 = sphi 0, %s133
    %s136 = sphi 0, %s135
    %s150 = sphi 0, %s136
    %s154 = sphi 0, %s154
    %s156 = sphi 0, %s154
    %s157 = sphi 0, %s156
    %s171 = sphi 0, %s157
    %s175 = sphi 0, %s175
    %s177 = sphi 0, %s175
    %s178 = sphi 0, %s177
    %s192 = sphi 0, %s178
    %s196 = sphi 0, %s196
    %s198 = sphi 0, %s196
    %s199 = sphi 0, %s198
    %s213 = sphi 0, %s199
    %s219 = sphi 0, %s221
    %s222 = sphi 0, %s219
    %s223 = sphi 0, %s222
    %s239 = sphi 0, %s223
  $region4: #{hand2d_to_3d_forward.31} parent=0 // loop_header_branch
    %18 = sbr.rel (%p16) target = $region8
  $region5: #{hand2d_to_3d_forward.31} parent=0 // loop_body
    %s20 = ssub.s32 %s15, 1
    %s21 = ssub.s32 %s15, 2
    %s22 = sadd.s32 %s15, 1
    %s23 = ssub.s32 %s15, %s22
    %p24 = scmp.eq.s32.totalorder %s23, 0
    %s26 = sadd.s32 %s25, 1
    %s27 = scalar_select %p24, %s25, %s26
    %p30 = pneg %p24
    %p31 = scmp.eq.s32.totalorder %s15, 1
    %p32 = por %p30, %p31
    %p33 = scmp.ne.s32.totalorder %s25, %s28
    %p34 = scmp.eq.s32.totalorder %s15, 0
    %p35 = por %p33, %p34
    %p36 = scmp.ne.s32.totalorder %s25, %s28
    %p37 = scmp.eq.s32.totalorder %s20, 1
    %p38 = por %p36, %p37
    %p39 = scmp.ne.s32.totalorder %s28, %s29
    %p40 = scmp.eq.s32.totalorder %s20, 0
    %p41 = por %p39, %p40
    %p42 = scmp.ne.s32.totalorder %s28, %s29
    %p43 = scmp.eq.s32.totalorder %s21, 1
    %p44 = por %p42, %p43
    %p46 = scmp.ne.s32.totalorder %s29, %s45
    %p47 = scmp.eq.s32.totalorder %s21, 0
    %p48 = por %p46, %p47
    %s50 = sadd.s32 %s49, 1
    %p53 = scmp.eq.s32.totalorder %s15, 1
    %p54 = scmp.ne.s32.totalorder %s49, %s51
    %p55 = scmp.eq.s32.totalorder %s15, 0
    %p56 = por %p54, %p55
    %p57 = scmp.ne.s32.totalorder %s49, %s51
    %p58 = scmp.eq.s32.totalorder %s20, 1
    %p59 = por %p57, %p58
    %p60 = scmp.ne.s32.totalorder %s51, %s52
    %p61 = scmp.eq.s32.totalorder %s20, 0
    %p62 = por %p60, %p61
    %p63 = scmp.ne.s32.totalorder %s51, %s52
    %p64 = scmp.eq.s32.totalorder %s21, 1
    %p65 = por %p63, %p64
    %p67 = scmp.ne.s32.totalorder %s52, %s66
    %p68 = scmp.eq.s32.totalorder %s21, 0
    %p69 = por %p67, %p68
    %s71 = sadd.s32 %s70, 1
    %p74 = scmp.eq.s32.totalorder %s15, 1
    %p75 = scmp.ne.s32.totalorder %s70, %s72
    %p76 = scmp.eq.s32.totalorder %s15, 0
    %p77 = por %p75, %p76
    %p78 = scmp.ne.s32.totalorder %s70, %s72
    %p79 = scmp.eq.s32.totalorder %s20, 1
    %p80 = por %p78, %p79
    %p81 = scmp.ne.s32.totalorder %s72, %s73
    %p82 = scmp.eq.s32.totalorder %s20, 0
    %p83 = por %p81, %p82
    %p84 = scmp.ne.s32.totalorder %s72, %s73
    %p85 = scmp.eq.s32.totalorder %s21, 1
    %p86 = por %p84, %p85
    %p88 = scmp.ne.s32.totalorder %s73, %s87
    %p89 = scmp.eq.s32.totalorder %s21, 0
    %p90 = por %p88, %p89
    %s92 = sadd.s32 %s91, 1
    %p95 = scmp.eq.s32.totalorder %s15, 1
    %p96 = scmp.ne.s32.totalorder %s91, %s93
    %p97 = scmp.eq.s32.totalorder %s15, 0
    %p98 = por %p96, %p97
    %p99 = scmp.ne.s32.totalorder %s91, %s93
    %p100 = scmp.eq.s32.totalorder %s20, 1
    %p101 = por %p99, %p100
    %p102 = scmp.ne.s32.totalorder %s93, %s94
    %p103 = scmp.eq.s32.totalorder %s20, 0
    %p104 = por %p102, %p103
    %p105 = scmp.ne.s32.totalorder %s93, %s94
    %p106 = scmp.eq.s32.totalorder %s21, 1
    %p107 = por %p105, %p106
    %p109 = scmp.ne.s32.totalorder %s94, %s108
    %p110 = scmp.eq.s32.totalorder %s21, 0
    %p111 = por %p109, %p110
    %s113 = sadd.s32 %s112, 1
    %p116 = scmp.eq.s32.totalorder %s15, 1
    %p117 = scmp.ne.s32.totalorder %s112, %s114
    %p118 = scmp.eq.s32.totalorder %s15, 0
    %p119 = por %p117, %p118
    %p120 = scmp.ne.s32.totalorder %s112, %s114
    %p121 = scmp.eq.s32.totalorder %s20, 1
    %p122 = por %p120, %p121
    %p123 = scmp.ne.s32.totalorder %s114, %s115
    %p124 = scmp.eq.s32.totalorder %s20, 0
    %p125 = por %p123, %p124
    %p126 = scmp.ne.s32.totalorder %s114, %s115
    %p127 = scmp.eq.s32.totalorder %s21, 1
    %p128 = por %p126, %p127
    %p130 = scmp.ne.s32.totalorder %s115, %s129
    %p131 = scmp.eq.s32.totalorder %s21, 0
    %p132 = por %p130, %p131
    %s134 = sadd.s32 %s133, 1
    %p137 = scmp.eq.s32.totalorder %s15, 1
    %p138 = scmp.ne.s32.totalorder %s133, %s135
    %p139 = scmp.eq.s32.totalorder %s15, 0
    %p140 = por %p138, %p139
    %p141 = scmp.ne.s32.totalorder %s133, %s135
    %p142 = scmp.eq.s32.totalorder %s20, 1
    %p143 = por %p141, %p142
    %p144 = scmp.ne.s32.totalorder %s135, %s136
    %p145 = scmp.eq.s32.totalorder %s20, 0
    %p146 = por %p144, %p145
    %p147 = scmp.ne.s32.totalorder %s135, %s136
    %p148 = scmp.eq.s32.totalorder %s21, 1
    %p149 = por %p147, %p148
    %p151 = scmp.ne.s32.totalorder %s136, %s150
    %p152 = scmp.eq.s32.totalorder %s21, 0
    %p153 = por %p151, %p152
    %s155 = sadd.s32 %s154, 1
    %p158 = scmp.eq.s32.totalorder %s15, 1
    %p159 = scmp.ne.s32.totalorder %s154, %s156
    %p160 = scmp.eq.s32.totalorder %s15, 0
    %p161 = por %p159, %p160
    %p162 = scmp.ne.s32.totalorder %s154, %s156
    %p163 = scmp.eq.s32.totalorder %s20, 1
    %p164 = por %p162, %p163
    %p165 = scmp.ne.s32.totalorder %s156, %s157
    %p166 = scmp.eq.s32.totalorder %s20, 0
    %p167 = por %p165, %p166
    %p168 = scmp.ne.s32.totalorder %s156, %s157
    %p169 = scmp.eq.s32.totalorder %s21, 1
    %p170 = por %p168, %p169
    %p172 = scmp.ne.s32.totalorder %s157, %s171
    %p173 = scmp.eq.s32.totalorder %s21, 0
    %p174 = por %p172, %p173
    %s176 = sadd.s32 %s175, 1
    %p179 = scmp.eq.s32.totalorder %s15, 1
    %p180 = scmp.ne.s32.totalorder %s175, %s177
    %p181 = scmp.eq.s32.totalorder %s15, 0
    %p182 = por %p180, %p181
    %p183 = scmp.ne.s32.totalorder %s175, %s177
    %p184 = scmp.eq.s32.totalorder %s20, 1
    %p185 = por %p183, %p184
    %p186 = scmp.ne.s32.totalorder %s177, %s178
    %p187 = scmp.eq.s32.totalorder %s20, 0
    %p188 = por %p186, %p187
    %p189 = scmp.ne.s32.totalorder %s177, %s178
    %p190 = scmp.eq.s32.totalorder %s21, 1
    %p191 = por %p189, %p190
    %p193 = scmp.ne.s32.totalorder %s178, %s192
    %p194 = scmp.eq.s32.totalorder %s21, 0
    %p195 = por %p193, %p194
    %s197 = sadd.s32 %s196, 1
    %p200 = scmp.eq.s32.totalorder %s15, 1
    %p201 = scmp.ne.s32.totalorder %s196, %s198
    %p202 = scmp.eq.s32.totalorder %s15, 0
    %p203 = por %p201, %p202
    %p204 = scmp.ne.s32.totalorder %s196, %s198
    %p205 = scmp.eq.s32.totalorder %s20, 1
    %p206 = por %p204, %p205
    %p207 = scmp.ne.s32.totalorder %s198, %s199
    %p208 = scmp.eq.s32.totalorder %s20, 0
    %p209 = por %p207, %p208
    %p210 = scmp.ne.s32.totalorder %s198, %s199
    %p211 = scmp.eq.s32.totalorder %s21, 1
    %p212 = por %p210, %p211
    %p214 = scmp.ne.s32.totalorder %s199, %s213
    %p215 = scmp.eq.s32.totalorder %s21, 0
    %p216 = por %p214, %p215
    %s217 = ssub.s32 %s15, %s22
    %p218 = scmp.eq.s32.totalorder %s217, 0
    %s220 = sadd.s32 %s219, 1
    %s221 = scalar_select %p218, %s219, %s220
    %p224 = pneg %p218
    %p225 = scmp.eq.s32.totalorder %s15, 1
    %p226 = por %p224, %p225
    %p227 = scmp.ne.s32.totalorder %s219, %s222
    %p228 = scmp.eq.s32.totalorder %s15, 0
    %p229 = por %p227, %p228
    %p230 = scmp.ne.s32.totalorder %s219, %s222
    %p231 = scmp.eq.s32.totalorder %s20, 1
    %p232 = por %p230, %p231
    %p233 = scmp.ne.s32.totalorder %s222, %s223
    %p234 = scmp.eq.s32.totalorder %s20, 0
    %p235 = por %p233, %p234
    %p236 = scmp.ne.s32.totalorder %s222, %s223
    %p237 = scmp.eq.s32.totalorder %s21, 1
    %p238 = por %p236, %p237
    %p240 = scmp.ne.s32.totalorder %s223, %s239
    %p241 = scmp.eq.s32.totalorder %s21, 0
    %p242 = por %p240, %p241
    %p243 = scmp.le.s32.totalorder 1, %s15
    %p244 = scmp.lt.s32.totalorder %s15, 3
    %p245 = pnand %p243, %p244
    %p246 = pneg %p245
    // Predicated region
    $region9: #{hand2d_to_3d_forward.31} parent=5 // pred_check
      _
    $region10: #{hand2d_to_3d_forward.31} parent=5 // pred_check_branch
      %248 = sbr.rel (%p245) target = $region12
    $region11: #{hand2d_to_3d_forward.31} parent=5 // pred_region
      %s249 = ssub.s32 %s15, 1
      // Predicated region
      $region13: #{hand2d_to_3d_forward.31} parent=11 // pred_check
        %p250 = pneg %p62
      $region14: #{hand2d_to_3d_forward.31} parent=11 // pred_check_branch
        %252 = sbr.rel (%p250) target = $region16
      $region15: #{hand2d_to_3d_forward.31} parent=11 // pred_region
        _
      $region16: #{hand2d_to_3d_forward.31} parent=11 // pred_fallthru
        _
      // Predicated region
      $region17: #{hand2d_to_3d_forward.31} parent=11 // pred_check
        %p253 = pneg %p83
      $region18: #{hand2d_to_3d_forward.31} parent=11 // pred_check_branch
        %255 = sbr.rel (%p253) target = $region20
      $region19: #{hand2d_to_3d_forward.31} parent=11 // pred_region
        _
      $region20: #{hand2d_to_3d_forward.31} parent=11 // pred_fallthru
        _
      // Predicated region
      $region21: #{hand2d_to_3d_forward.31} parent=11 // pred_check
        %p256 = pneg %p104
      $region22: #{hand2d_to_3d_forward.31} parent=11 // pred_check_branch
        %258 = sbr.rel (%p256) target = $region24
      $region23: #{hand2d_to_3d_forward.31} parent=11 // pred_region
        _
      $region24: #{hand2d_to_3d_forward.31} parent=11 // pred_fallthru
        _
      // Predicated region
      $region25: #{hand2d_to_3d_forward.31} parent=11 // pred_check
        %p259 = pneg %p125
      $region26: #{hand2d_to_3d_forward.31} parent=11 // pred_check_branch
        %261 = sbr.rel (%p259) target = $region28
      $region27: #{hand2d_to_3d_forward.31} parent=11 // pred_region
        _
      $region28: #{hand2d_to_3d_forward.31} parent=11 // pred_fallthru
        _
      // Predicated region
      $region29: #{hand2d_to_3d_forward.31} parent=11 // pred_check
        %p262 = pneg %p146
      $region30: #{hand2d_to_3d_forward.31} parent=11 // pred_check_branch
        %264 = sbr.rel (%p262) target = $region32
      $region31: #{hand2d_to_3d_forward.31} parent=11 // pred_region
        _
      $region32: #{hand2d_to_3d_forward.31} parent=11 // pred_fallthru
        _
      // Predicated region
      $region33: #{hand2d_to_3d_forward.31} parent=11 // pred_check
        %p265 = pneg %p167
      $region34: #{hand2d_to_3d_forward.31} parent=11 // pred_check_branch
        %267 = sbr.rel (%p265) target = $region36
      $region35: #{hand2d_to_3d_forward.31} parent=11 // pred_region
        _
      $region36: #{hand2d_to_3d_forward.31} parent=11 // pred_fallthru
        _
      // Predicated region
      $region37: #{hand2d_to_3d_forward.31} parent=11 // pred_check
        %p268 = pneg %p188
      $region38: #{hand2d_to_3d_forward.31} parent=11 // pred_check_branch
        %270 = sbr.rel (%p268) target = $region40
      $region39: #{hand2d_to_3d_forward.31} parent=11 // pred_region
        _
      $region40: #{hand2d_to_3d_forward.31} parent=11 // pred_fallthru
        _
      // Predicated region
      $region41: #{hand2d_to_3d_forward.31} parent=11 // pred_check
        %p271 = pneg %p209
      $region42: #{hand2d_to_3d_forward.31} parent=11 // pred_check_branch
        %273 = sbr.rel (%p271) target = $region44
      $region43: #{hand2d_to_3d_forward.31} parent=11 // pred_region
        _
      $region44: #{hand2d_to_3d_forward.31} parent=11 // pred_fallthru
        _
    $region12: #{hand2d_to_3d_forward.31} parent=5 // pred_fallthru
      _
    %p274 = scmp.lt.s32.totalorder %s15, 2
    // Predicated region
    $region45: #{hand2d_to_3d_forward.31} parent=5 // pred_check
      %p275 = pneg %p274
    $region46: #{hand2d_to_3d_forward.31} parent=5 // pred_check_branch
      %277 = sbr.rel (%p275) target = $region48
    $region47: #{hand2d_to_3d_forward.31} parent=5 // pred_region
      // Predicated region
      $region49: #{hand2d_to_3d_forward.31} parent=47 // pred_check
        %p278 = pneg %p35
      $region50: #{hand2d_to_3d_forward.31} parent=47 // pred_check_branch
        %280 = sbr.rel (%p278) target = $region52
      $region51: #{hand2d_to_3d_forward.31} parent=47 // pred_region
        %p281 = scmp.lt.s32.totalorder %s15, 1
        %s282 = scalar_select %p281, %s15, 1
        %s283 = smul.addr %s282, 4
        %s284 = smul.addr %s283, 8
        %s285 = scalar_lea.vmem %s0, %s284
      $region52: #{hand2d_to_3d_forward.31} parent=47 // pred_fallthru
        _
    $region48: #{hand2d_to_3d_forward.31} parent=5 // pred_fallthru
      _
    %p286 = scmp.le.s32.totalorder 1, %s15
    %p287 = scmp.lt.s32.totalorder %s15, 3
    %p288 = pnand %p286, %p287
    %p289 = pneg %p288
    // Predicated region
    $region53: #{hand2d_to_3d_forward.31} parent=5 // pred_check
      _
    $region54: #{hand2d_to_3d_forward.31} parent=5 // pred_check_branch
      %291 = sbr.rel (%p288) target = $region56
    $region55: #{hand2d_to_3d_forward.31} parent=5 // pred_region
      %s292 = ssub.s32 %s15, 1
      %p293 = scmp.lt.s32.totalorder %s20, 1
      %s294 = scalar_select %p293, %s20, 1
      %s295 = smul.addr %s294, 4
      %s296 = smul.addr %s295, 8
      %s297 = scalar_lea.vmem %s0, %s296
      %p298 = pneg %p41
      %p299 = pneg %p38
      %p300 = pneg %p62
      %p301 = pneg %p59
      %p302 = pneg %p83
      %p303 = pneg %p80
      %p304 = pneg %p104
      %p305 = pneg %p101
      %p306 = pneg %p125
      %p307 = pneg %p122
      %p308 = pneg %p146
      %p309 = pneg %p143
      %p310 = pneg %p167
      %p311 = pneg %p164
      %p312 = pneg %p188
      %p313 = pneg %p185
      %p314 = pneg %p209
      %p315 = pneg %p206
      %p316 = pneg %p235
      %p317 = pneg %p232
      %p318 = scmp.lt.s32.totalorder %s20, 1
      %s319 = scalar_select %p318, %s20, 1
      %s320 = smul.addr %s319, 4
      %s321 = smul.addr %s320, 8
      %s322 = scalar_lea.vmem %s9, %s321
      %p323 = scmp.lt.s32.totalorder %s20, 1
      %s324 = scalar_select %p323, %s20, 1
      %s325 = smul.addr %s324, 4
      %s326 = smul.addr %s325, 8
      %s327 = scalar_lea.vmem %s0, %s326
      %p328 = scmp.lt.s32.totalorder %s20, 1
      %s329 = scalar_select %p328, %s20, 1
      %s330 = smul.addr %s329, 4
      %s331 = smul.addr %s330, 8
      %s332 = scalar_lea.vmem %s9, %s331
      %v333 = vld [vmem:[%s327] sm:$0xff]
      %v334 = vld [vmem:[%s327 + $0x8] sm:$0xff]
      %v335 = vld [vmem:[%s327 + $0x10] sm:$0xff]
      %v336 = vld [vmem:[%s327 + $0x18] sm:$0xff]
      %v337 = vld [vmem:[%s2] sm:$0xff]
      %v338 = vld [vmem:[%s2 + $0x8] sm:$0xff]
      %v339 = vld [vmem:[%s3] sm:$0xff]
      %v340 = vld [vmem:[%s3 + $0x8] sm:$0xff]
      %342 = vset.pattern.permute.xlu0 0
      %343 = vperm.xlu0 %342, %v339
      %v344 = vpop.permute.xlu0 %343
      %347 = vset.pattern.permute.xlu0 0
      %348 = vperm.xlu0 %347, %v340
      %v349 = vpop.permute.xlu0 %348
      %vm351 = vcmask 261120
      %v353 = vsel %vm351, %v337, 0
      %v356 = vsel %vm351, %v338, 0
      %358 = vmatprep.subr.mxu0 0.0
      %359 = vmatpush1.msra.mxu0 %v333
      %360 = vmatprep.subr.mxu0 0.0
      %361 = vmatpush1.msra.mxu0 %v334
      %362 = vmatprep.subr.mxu0 0.0
      %363 = vmatpush1.msra.mxu0 %v335
      %364 = vmatprep.subr.mxu0 0.0
      %365 = vmatpush1.msra.mxu0 %v336
      %366 = vmatprep.subr.mxu0 0.0
      %367 = vmatpush1.msra.mxu0 0.0
      %368 = vmatprep.subr.mxu0 0.0
      %369 = vmatpush1.msra.mxu0 0.0
      %370 = vmatprep.subr.mxu0 0.0
      %371 = vmatpush1.msra.mxu0 0.0
      %372 = vmatprep.subr.mxu0 0.0
      %373 = vmatpush1.msra.mxu0 0.0
      %374 = vmatprep.subr.mxu0 0.0
      %375 = vmatpush1.msra.mxu0 0.0
      %376 = vmatprep.subr.mxu0 0.0
      %377 = vmatpush1.msra.mxu0 0.0
      %378 = vmatprep.subr.mxu0 0.0
      %379 = vmatpush1.msra.mxu0 0.0
      %380 = vmatprep.subr.mxu0 0.0
      %381 = vmatpush1.msra.mxu0 0.0
      %382 = vmatprep.subr.mxu0 0.0
      %383 = vmatpush1.msra.mxu0 0.0
      %384 = vmatprep.subr.mxu0 0.0
      %385 = vmatpush1.msra.mxu0 0.0
      %386 = vmatprep.subr.mxu0 0.0
      %387 = vmatpush1.msra.mxu0 0.0
      %388 = vmatprep.subr.mxu0 0.0
      %389 = vmatpush1.msra.mxu0 0.0
      %390 = vmatprep.subr.mxu0 0.0
      %391 = vmatpush1.msra.mxu0 0.0
      %392 = vmatprep.subr.mxu0 0.0
      %393 = vmatpush1.msra.mxu0 0.0
      %394 = vmatprep.subr.mxu0 0.0
      %395 = vmatpush1.msra.mxu0 0.0
      %396 = vmatprep.subr.mxu0 0.0
      %397 = vmatpush1.msra.mxu0 0.0
      %398 = vmatprep.subr.mxu0 0.0
      %399 = vmatpush1.msra.mxu0 0.0
      %400 = vmatprep.subr.mxu0 0.0
      %401 = vmatpush1.msra.mxu0 0.0
      %402 = vmatprep.subr.mxu0 0.0
      %403 = vmatpush1.msra.mxu0 0.0
      %404 = vmatprep.subr.mxu0 0.0
      %405 = vmatpush1.msra.mxu0 0.0
      %406 = vmatprep.subr.mxu0 0.0
      %407 = vmatpush1.msra.mxu0 0.0
      %408 = vmatprep.subr.mxu0 0.0
      %409 = vmatpush1.msra.mxu0 0.0
      %410 = vmatprep.subr.mxu0 0.0
      %411 = vmatpush1.msra.mxu0 0.0
      %412 = vmatprep.subr.mxu0 0.0
      %413 = vmatpush1.msra.mxu0 0.0
      %414 = vmatprep.subr.mxu0 0.0
      %415 = vmatpush1.msra.mxu0 0.0
      %416 = vmatprep.subr.mxu0 0.0
      %417 = vmatpush1.msra.mxu0 0.0
      %418 = vmatprep.subr.mxu0 0.0
      %419 = vmatpush1.msra.mxu0 0.0
      %420 = vmatprep.subr.mxu0 0.0
      %421 = vmatpush1.msra.mxu0 0.0
      %422 = vmatprep.mubr.f32.mxu0 0.0
      %423 = vmatmul.mubr.f32.gmra.mrb[0].mxu0 %v353
      %v424 = vpop.f32.mrb[0].mxu0
      %v425 = vadd.f32 %v344, %v424
      %v426 = vpop.f32.mrb[0].mxu0
      %427 = vmatprep.mubr.f32.mxu0 0.0
      %428 = vmatmul.mubr.f32.gmra.mrb[0].mxu0 %v356
      %v429 = vpop.f32.mrb[0].mxu0
      %v430 = vadd.f32 %v349, %v429
      %v431 = vpop.f32.mrb[0].mxu0
      %432 = vdwg.mxu0
      %v433 = vmax.f32 %v425, 0.0
      %v434 = vmax.f32 %v430, 0.0
      %437 = vrot.lane.b32.xlu0 %v433, 9
      %v438 = vpop.permute.xlu0 %437
      %439 = vrot.lane.b32.xlu0 %v434, 9
      %v440 = vpop.permute.xlu0 %439
      %vm443 = vcmask 72704
      %v444 = vsel %vm443, 0.0, %v438
      %v445 = vsel %vm443, 0.0, %v440
      %v446 = vld [vmem:[%s1] sm:$0x1]
      %v448 = vlaneseq
      %v449 = vshrl.u32 %v448, 7
      %v450 = vsub.s32 0, %v449
      %v451 = vrot.slane %v446, %v450
      %v453 = vmul.f32 %v444, %v451
      %v454 = vmul.f32 %v445, %v451
      %v455 = vld [vmem:[%s4] sm:$0xff]
      %v456 = vld [vmem:[%s4 + $0x8] sm:$0xff]
      %457 = vrot.lane.b32.xlu0 %v433, 8
      %v458 = vpop.permute.xlu0 %457
      %459 = vrot.lane.b32.xlu0 %v434, 8
      %v460 = vpop.permute.xlu0 %459
      %vm463 = vcmask 64512
      %v464 = vsel %vm463, 0.0, %v458
      %v465 = vsel %vm463, 0.0, %v460
      %s466 = scalar_lea.vmem %s1, 1
      %v467 = vld [vmem:[%s466] sm:$0x1]
      %v469 = vlaneseq
      %v470 = vshrl.u32 %v469, 7
      %v471 = vsub.s32 0, %v470
      %v472 = vrot.slane %v467, %v471
      %v474 = vmul.f32 %v464, %v472
      %v475 = vmul.f32 %v465, %v472
      %s476 = scalar_lea.vmem %s4, 16
      %v477 = vld [vmem:[%s476] sm:$0xff]
      %v478 = vld [vmem:[%s476 + $0x8] sm:$0xff]
      %vm479 = vcmask 130048
      %v481 = vsel %vm479, %v477, 0
      %v484 = vsel %vm479, %v478, 0
      %486 = vmatprep.subr.mxu0 0.0
      %487 = vmatpush1.msra.mxu0 %v474
      %488 = vmatprep.subr.mxu0 0.0
      %489 = vmatpush1.msra.mxu0 %v475
      %490 = vmatprep.subr.mxu0 0.0
      %491 = vmatpush1.msra.mxu0 0.0
      %492 = vmatprep.subr.mxu0 0.0
      %493 = vmatpush1.msra.mxu0 0.0
      %494 = vmatprep.subr.mxu0 0.0
      %495 = vmatpush1.msra.mxu0 0.0
      %496 = vmatprep.subr.mxu0 0.0
      %497 = vmatpush1.msra.mxu0 0.0
      %498 = vmatprep.subr.mxu0 0.0
      %499 = vmatpush1.msra.mxu0 0.0
      %500 = vmatprep.subr.mxu0 0.0
      %501 = vmatpush1.msra.mxu0 0.0
      %502 = vmatprep.subr.mxu0 0.0
      %503 = vmatpush1.msra.mxu0 0.0
      %504 = vmatprep.subr.mxu0 0.0
      %505 = vmatpush1.msra.mxu0 0.0
      %506 = vmatprep.subr.mxu0 0.0
      %507 = vmatpush1.msra.mxu0 0.0
      %508 = vmatprep.subr.mxu0 0.0
      %509 = vmatpush1.msra.mxu0 0.0
      %510 = vmatprep.subr.mxu0 0.0
      %511 = vmatpush1.msra.mxu0 0.0
      %512 = vmatprep.subr.mxu0 0.0
      %513 = vmatpush1.msra.mxu0 0.0
      %514 = vmatprep.subr.mxu0 0.0
      %515 = vmatpush1.msra.mxu0 0.0
      %516 = vmatprep.subr.mxu0 0.0
      %517 = vmatpush1.msra.mxu0 0.0
      %518 = vmatprep.subr.mxu0 0.0
      %519 = vmatpush1.msra.mxu0 0.0
      %520 = vmatprep.subr.mxu0 0.0
      %521 = vmatpush1.msra.mxu0 0.0
      %522 = vmatprep.subr.mxu0 0.0
      %523 = vmatpush1.msra.mxu0 0.0
      %524 = vmatprep.subr.mxu0 0.0
      %525 = vmatpush1.msra.mxu0 0.0
      %526 = vmatprep.subr.mxu0 0.0
      %527 = vmatpush1.msra.mxu0 0.0
      %528 = vmatprep.subr.mxu0 0.0
      %529 = vmatpush1.msra.mxu0 0.0
      %530 = vmatprep.subr.mxu0 0.0
      %531 = vmatpush1.msra.mxu0 0.0
      %532 = vmatprep.subr.mxu0 0.0
      %533 = vmatpush1.msra.mxu0 0.0
      %534 = vmatprep.subr.mxu0 0.0
      %535 = vmatpush1.msra.mxu0 0.0
      %536 = vmatprep.subr.mxu0 0.0
      %537 = vmatpush1.msra.mxu0 0.0
      %538 = vmatprep.subr.mxu0 0.0
      %539 = vmatpush1.msra.mxu0 0.0
      %540 = vmatprep.subr.mxu0 0.0
      %541 = vmatpush1.msra.mxu0 0.0
      %542 = vmatprep.subr.mxu0 0.0
      %543 = vmatpush1.msra.mxu0 0.0
      %544 = vmatprep.subr.mxu0 0.0
      %545 = vmatpush1.msra.mxu0 0.0
      %546 = vmatprep.subr.mxu0 0.0
      %547 = vmatpush1.msra.mxu0 0.0
      %548 = vmatprep.subr.mxu0 0.0
      %549 = vmatpush1.msra.mxu0 0.0
      %550 = vmatprep.mubr.f32.mxu0 0.0
      %551 = vmatmul.mubr.f32.gmra.mrb[0].mxu0 %v481
      %v552 = vpop.f32.mrb[0].mxu0
      %v553 = vadd.f32 0.0, %v552
      %v554 = vpop.f32.mrb[0].mxu0
      %555 = vmatprep.mubr.f32.mxu0 0.0
      %556 = vmatmul.mubr.f32.gmra.mrb[0].mxu0 %v484
      %v557 = vpop.f32.mrb[0].mxu0
      %v558 = vadd.f32 0.0, %v557
      %v559 = vpop.f32.mrb[0].mxu0
      %560 = vdwg.mxu0
      %v562 = vsel %vm479, %v455, 0
      %v565 = vsel %vm479, %v456, 0
      %567 = vmatprep.subr.mxu0 0.0
      %568 = vmatpush1.msra.mxu0 %v453
      %569 = vmatprep.subr.mxu0 0.0
      %570 = vmatpush1.msra.mxu0 %v454
      %571 = vmatprep.subr.mxu0 0.0
      %572 = vmatpush1.msra.mxu0 0.0
      %573 = vmatprep.subr.mxu0 0.0
      %574 = vmatpush1.msra.mxu0 0.0
      %575 = vmatprep.subr.mxu0 0.0
      %576 = vmatpush1.msra.mxu0 0.0
      %577 = vmatprep.subr.mxu0 0.0
      %578 = vmatpush1.msra.mxu0 0.0
      %579 = vmatprep.subr.mxu0 0.0
      %580 = vmatpush1.msra.mxu0 0.0
      %581 = vmatprep.subr.mxu0 0.0
      %582 = vmatpush1.msra.mxu0 0.0
      %583 = vmatprep.subr.mxu0 0.0
      %584 = vmatpush1.msra.mxu0 0.0
      %585 = vmatprep.subr.mxu0 0.0
      %586 = vmatpush1.msra.mxu0 0.0
      %587 = vmatprep.subr.mxu0 0.0
      %588 = vmatpush1.msra.mxu0 0.0
      %589 = vmatprep.subr.mxu0 0.0
      %590 = vmatpush1.msra.mxu0 0.0
      %591 = vmatprep.subr.mxu0 0.0
      %592 = vmatpush1.msra.mxu0 0.0
      %593 = vmatprep.subr.mxu0 0.0
      %594 = vmatpush1.msra.mxu0 0.0
      %595 = vmatprep.subr.mxu0 0.0
      %596 = vmatpush1.msra.mxu0 0.0
      %597 = vmatprep.subr.mxu0 0.0
      %598 = vmatpush1.msra.mxu0 0.0
      %599 = vmatprep.subr.mxu0 0.0
      %600 = vmatpush1.msra.mxu0 0.0
      %601 = vmatprep.subr.mxu0 0.0
      %602 = vmatpush1.msra.mxu0 0.0
      %603 = vmatprep.subr.mxu0 0.0
      %604 = vmatpush1.msra.mxu0 0.0
      %605 = vmatprep.subr.mxu0 0.0
      %606 = vmatpush1.msra.mxu0 0.0
      %607 = vmatprep.subr.mxu0 0.0
      %608 = vmatpush1.msra.mxu0 0.0
      %609 = vmatprep.subr.mxu0 0.0
      %610 = vmatpush1.msra.mxu0 0.0
      %611 = vmatprep.subr.mxu0 0.0
      %612 = vmatpush1.msra.mxu0 0.0
      %613 = vmatprep.subr.mxu0 0.0
      %614 = vmatpush1.msra.mxu0 0.0
      %615 = vmatprep.subr.mxu0 0.0
      %616 = vmatpush1.msra.mxu0 0.0
      %617 = vmatprep.subr.mxu0 0.0
      %618 = vmatpush1.msra.mxu0 0.0
      %619 = vmatprep.subr.mxu0 0.0
      %620 = vmatpush1.msra.mxu0 0.0
      %621 = vmatprep.subr.mxu0 0.0
      %622 = vmatpush1.msra.mxu0 0.0
      %623 = vmatprep.subr.mxu0 0.0
      %624 = vmatpush1.msra.mxu0 0.0
      %625 = vmatprep.subr.mxu0 0.0
      %626 = vmatpush1.msra.mxu0 0.0
      %627 = vmatprep.subr.mxu0 0.0
      %628 = vmatpush1.msra.mxu0 0.0
      %629 = vmatprep.subr.mxu0 0.0
      %630 = vmatpush1.msra.mxu0 0.0
      %631 = vmatprep.mubr.f32.mxu0 0.0
      %632 = vmatmul.mubr.f32.gmra.mrb[0].mxu0 %v562
      %v633 = vpop.f32.mrb[0].mxu0
      %v634 = vadd.f32 %v553, %v633
      %v635 = vpop.f32.mrb[0].mxu0
      %636 = vmatprep.mubr.f32.mxu0 0.0
      %637 = vmatmul.mubr.f32.gmra.mrb[0].mxu0 %v565
      %v638 = vpop.f32.mrb[0].mxu0
      %v639 = vadd.f32 %v558, %v638
      %v640 = vpop.f32.mrb[0].mxu0
      %641 = vdwg.mxu0
      %642 = vrot.lane.b32.xlu0 %v433, 7
      %v643 = vpop.permute.xlu0 %642
      %644 = vrot.lane.b32.xlu0 %v434, 7
      %v645 = vpop.permute.xlu0 %644
      %vm648 = vcmask 56320
      %v649 = vsel %vm648, 0.0, %v643
      %v650 = vsel %vm648, 0.0, %v645
      %s651 = scalar_lea.vmem %s1, 2
      %v652 = vld [vmem:[%s651] sm:$0x1]
      %v654 = vlaneseq
      %v655 = vshrl.u32 %v654, 7
      %v656 = vsub.s32 0, %v655
      %v657 = vrot.slane %v652, %v656
      %v659 = vmul.f32 %v649, %v657
      %v660 = vmul.f32 %v650, %v657
      %s661 = scalar_lea.vmem %s4, 32
      %v662 = vld [vmem:[%s661] sm:$0xff]
      %v663 = vld [vmem:[%s661 + $0x8] sm:$0xff]
      %v665 = vsel %vm479, %v662, 0
      %v668 = vsel %vm479, %v663, 0
      %670 = vmatprep.subr.mxu0 0.0
      %671 = vmatpush1.msra.mxu0 %v659
      %672 = vmatprep.subr.mxu0 0.0
      %673 = vmatpush1.msra.mxu0 %v660
      %674 = vmatprep.subr.mxu0 0.0
      %675 = vmatpush1.msra.mxu0 0.0
      %676 = vmatprep.subr.mxu0 0.0
      %677 = vmatpush1.msra.mxu0 0.0
      %678 = vmatprep.subr.mxu0 0.0
      %679 = vmatpush1.msra.mxu0 0.0
      %680 = vmatprep.subr.mxu0 0.0
      %681 = vmatpush1.msra.mxu0 0.0
      %682 = vmatprep.subr.mxu0 0.0
      %683 = vmatpush1.msra.mxu0 0.0
      %684 = vmatprep.subr.mxu0 0.0
      %685 = vmatpush1.msra.mxu0 0.0
      %686 = vmatprep.subr.mxu0 0.0
      %687 = vmatpush1.msra.mxu0 0.0
      %688 = vmatprep.subr.mxu0 0.0
      %689 = vmatpush1.msra.mxu0 0.0
      %690 = vmatprep.subr.mxu0 0.0
      %691 = vmatpush1.msra.mxu0 0.0
      %692 = vmatprep.subr.mxu0 0.0
      %693 = vmatpush1.msra.mxu0 0.0
      %694 = vmatprep.subr.mxu0 0.0
      %695 = vmatpush1.msra.mxu0 0.0
      %696 = vmatprep.subr.mxu0 0.0
      %697 = vmatpush1.msra.mxu0 0.0
      %698 = vmatprep.subr.mxu0 0.0
      %699 = vmatpush1.msra.mxu0 0.0
      %700 = vmatprep.subr.mxu0 0.0
      %701 = vmatpush1.msra.mxu0 0.0
      %702 = vmatprep.subr.mxu0 0.0
      %703 = vmatpush1.msra.mxu0 0.0
      %704 = vmatprep.subr.mxu0 0.0
      %705 = vmatpush1.msra.mxu0 0.0
      %706 = vmatprep.subr.mxu0 0.0
      %707 = vmatpush1.msra.mxu0 0.0
      %708 = vmatprep.subr.mxu0 0.0
      %709 = vmatpush1.msra.mxu0 0.0
      %710 = vmatprep.subr.mxu0 0.0
      %711 = vmatpush1.msra.mxu0 0.0
      %712 = vmatprep.subr.mxu0 0.0
      %713 = vmatpush1.msra.mxu0 0.0
      %714 = vmatprep.subr.mxu0 0.0
      %715 = vmatpush1.msra.mxu0 0.0
      %716 = vmatprep.subr.mxu0 0.0
      %717 = vmatpush1.msra.mxu0 0.0
      %718 = vmatprep.subr.mxu0 0.0
      %719 = vmatpush1.msra.mxu0 0.0
      %720 = vmatprep.subr.mxu0 0.0
      %721 = vmatpush1.msra.mxu0 0.0
      %722 = vmatprep.subr.mxu0 0.0
      %723 = vmatpush1.msra.mxu0 0.0
      %724 = vmatprep.subr.mxu0 0.0
      %725 = vmatpush1.msra.mxu0 0.0
      %726 = vmatprep.subr.mxu0 0.0
      %727 = vmatpush1.msra.mxu0 0.0
      %728 = vmatprep.subr.mxu0 0.0
      %729 = vmatpush1.msra.mxu0 0.0
      %730 = vmatprep.subr.mxu0 0.0
      %731 = vmatpush1.msra.mxu0 0.0
      %732 = vmatprep.subr.mxu0 0.0
      %733 = vmatpush1.msra.mxu0 0.0
      %734 = vmatprep.mubr.f32.mxu0 0.0
      %735 = vmatmul.mubr.f32.gmra.mrb[0].mxu0 %v665
      %v736 = vpop.f32.mrb[0].mxu0
      %v737 = vadd.f32 0.0, %v736
      %v738 = vpop.f32.mrb[0].mxu0
      %739 = vmatprep.mubr.f32.mxu0 0.0
      %740 = vmatmul.mubr.f32.gmra.mrb[0].mxu0 %v668
      %v741 = vpop.f32.mrb[0].mxu0
      %v742 = vadd.f32 0.0, %v741
      %v743 = vpop.f32.mrb[0].mxu0
      %744 = vdwg.mxu0
      %v745 = vadd.f32 %v634, %v737
      %v746 = vadd.f32 %v639, %v742
      %747 = vrot.lane.b32.xlu0 %v433, 1
      %v748 = vpop.permute.xlu0 %747
      %749 = vrot.lane.b32.xlu0 %v434, 1
      %v750 = vpop.permute.xlu0 %749
      %vm753 = vcmask 7168
      %v754 = vsel %vm753, 0.0, %v748
      %v755 = vsel %vm753, 0.0, %v750
      %s756 = scalar_lea.vmem %s1, 3
      %v757 = vld [vmem:[%s756] sm:$0x1]
      %v759 = vlaneseq
      %v760 = vshrl.u32 %v759, 7
      %v761 = vsub.s32 0, %v760
      %v762 = vrot.slane %v757, %v761
      %v764 = vmul.f32 %v754, %v762
      %v765 = vmul.f32 %v755, %v762
      %s766 = scalar_lea.vmem %s4, 48
      %v767 = vld [vmem:[%s766] sm:$0xff]
      %v768 = vld [vmem:[%s766 + $0x8] sm:$0xff]
      %v770 = vsel %vm479, %v767, 0
      %v773 = vsel %vm479, %v768, 0
      %775 = vmatprep.subr.mxu0 0.0
      %776 = vmatpush1.msra.mxu0 %v764
      %777 = vmatprep.subr.mxu0 0.0
      %778 = vmatpush1.msra.mxu0 %v765
      %779 = vmatprep.subr.mxu0 0.0
      %780 = vmatpush1.msra.mxu0 0.0
      %781 = vmatprep.subr.mxu0 0.0
      %782 = vmatpush1.msra.mxu0 0.0
      %783 = vmatprep.subr.mxu0 0.0
      %784 = vmatpush1.msra.mxu0 0.0
      %785 = vmatprep.subr.mxu0 0.0
      %786 = vmatpush1.msra.mxu0 0.0
      %787 = vmatprep.subr.mxu0 0.0
      %788 = vmatpush1.msra.mxu0 0.0
      %789 = vmatprep.subr.mxu0 0.0
      %790 = vmatpush1.msra.mxu0 0.0
      %791 = vmatprep.subr.mxu0 0.0
      %792 = vmatpush1.msra.mxu0 0.0
      %793 = vmatprep.subr.mxu0 0.0
      %794 = vmatpush1.msra.mxu0 0.0
      %795 = vmatprep.subr.mxu0 0.0
      %796 = vmatpush1.msra.mxu0 0.0
      %797 = vmatprep.subr.mxu0 0.0
      %798 = vmatpush1.msra.mxu0 0.0
      %799 = vmatprep.subr.mxu0 0.0
      %800 = vmatpush1.msra.mxu0 0.0
      %801 = vmatprep.subr.mxu0 0.0
      %802 = vmatpush1.msra.mxu0 0.0
      %803 = vmatprep.subr.mxu0 0.0
      %804 = vmatpush1.msra.mxu0 0.0
      %805 = vmatprep.subr.mxu0 0.0
      %806 = vmatpush1.msra.mxu0 0.0
      %807 = vmatprep.subr.mxu0 0.0
      %808 = vmatpush1.msra.mxu0 0.0
      %809 = vmatprep.subr.mxu0 0.0
      %810 = vmatpush1.msra.mxu0 0.0
      %811 = vmatprep.subr.mxu0 0.0
      %812 = vmatpush1.msra.mxu0 0.0
      %813 = vmatprep.subr.mxu0 0.0
      %814 = vmatpush1.msra.mxu0 0.0
      %815 = vmatprep.subr.mxu0 0.0
      %816 = vmatpush1.msra.mxu0 0.0
      %817 = vmatprep.subr.mxu0 0.0
      %818 = vmatpush1.msra.mxu0 0.0
      %819 = vmatprep.subr.mxu0 0.0
      %820 = vmatpush1.msra.mxu0 0.0
      %821 = vmatprep.subr.mxu0 0.0
      %822 = vmatpush1.msra.mxu0 0.0
      %823 = vmatprep.subr.mxu0 0.0
      %824 = vmatpush1.msra.mxu0 0.0
      %825 = vmatprep.subr.mxu0 0.0
      %826 = vmatpush1.msra.mxu0 0.0
      %827 = vmatprep.subr.mxu0 0.0
      %828 = vmatpush1.msra.mxu0 0.0
      %829 = vmatprep.subr.mxu0 0.0
      %830 = vmatpush1.msra.mxu0 0.0
      %831 = vmatprep.subr.mxu0 0.0
      %832 = vmatpush1.msra.mxu0 0.0
      %833 = vmatprep.subr.mxu0 0.0
      %834 = vmatpush1.msra.mxu0 0.0
      %835 = vmatprep.subr.mxu0 0.0
      %836 = vmatpush1.msra.mxu0 0.0
      %837 = vmatprep.subr.mxu0 0.0
      %838 = vmatpush1.msra.mxu0 0.0
      %839 = vmatprep.mubr.f32.mxu0 0.0
      %840 = vmatmul.mubr.f32.gmra.mrb[0].mxu0 %v770
      %v841 = vpop.f32.mrb[0].mxu0
      %v842 = vadd.f32 0.0, %v841
      %v843 = vpop.f32.mrb[0].mxu0
      %844 = vmatprep.mubr.f32.mxu0 0.0
      %845 = vmatmul.mubr.f32.gmra.mrb[0].mxu0 %v773
      %v846 = vpop.f32.mrb[0].mxu0
      %v847 = vadd.f32 0.0, %v846
      %v848 = vpop.f32.mrb[0].mxu0
      %849 = vdwg.mxu0
      %v850 = vadd.f32 %v745, %v842
      %v851 = vadd.f32 %v746, %v847
      %s852 = scalar_lea.vmem %s4, 64
      %v853 = vld [vmem:[%s852] sm:$0xff]
      %v854 = vld [vmem:[%s852 + $0x8] sm:$0xff]
      %v856 = vsel %vm479, %v853, 0
      %v859 = vsel %vm479, %v854, 0
      %861 = vmatprep.subr.mxu0 0.0
      %862 = vmatpush1.msra.mxu0 %v433
      %863 = vmatprep.subr.mxu0 0.0
      %864 = vmatpush1.msra.mxu0 %v434
      %865 = vmatprep.subr.mxu0 0.0
      %866 = vmatpush1.msra.mxu0 0.0
      %867 = vmatprep.subr.mxu0 0.0
      %868 = vmatpush1.msra.mxu0 0.0
      %869 = vmatprep.subr.mxu0 0.0
      %870 = vmatpush1.msra.mxu0 0.0
      %871 = vmatprep.subr.mxu0 0.0
      %872 = vmatpush1.msra.mxu0 0.0
      %873 = vmatprep.subr.mxu0 0.0
      %874 = vmatpush1.msra.mxu0 0.0
      %875 = vmatprep.subr.mxu0 0.0
      %876 = vmatpush1.msra.mxu0 0.0
      %877 = vmatprep.subr.mxu0 0.0
      %878 = vmatpush1.msra.mxu0 0.0
      %879 = vmatprep.subr.mxu0 0.0
      %880 = vmatpush1.msra.mxu0 0.0
      %881 = vmatprep.subr.mxu0 0.0
      %882 = vmatpush1.msra.mxu0 0.0
      %883 = vmatprep.subr.mxu0 0.0
      %884 = vmatpush1.msra.mxu0 0.0
      %885 = vmatprep.subr.mxu0 0.0
      %886 = vmatpush1.msra.mxu0 0.0
      %887 = vmatprep.subr.mxu0 0.0
      %888 = vmatpush1.msra.mxu0 0.0
      %889 = vmatprep.subr.mxu0 0.0
      %890 = vmatpush1.msra.mxu0 0.0
      %891 = vmatprep.subr.mxu0 0.0
      %892 = vmatpush1.msra.mxu0 0.0
      %893 = vmatprep.subr.mxu0 0.0
      %894 = vmatpush1.msra.mxu0 0.0
      %895 = vmatprep.subr.mxu0 0.0
      %896 = vmatpush1.msra.mxu0 0.0
      %897 = vmatprep.subr.mxu0 0.0
      %898 = vmatpush1.msra.mxu0 0.0
      %899 = vmatprep.subr.mxu0 0.0
      %900 = vmatpush1.msra.mxu0 0.0
      %901 = vmatprep.subr.mxu0 0.0
      %902 = vmatpush1.msra.mxu0 0.0
      %903 = vmatprep.subr.mxu0 0.0
      %904 = vmatpush1.msra.mxu0 0.0
      %905 = vmatprep.subr.mxu0 0.0
      %906 = vmatpush1.msra.mxu0 0.0
      %907 = vmatprep.subr.mxu0 0.0
      %908 = vmatpush1.msra.mxu0 0.0
      %909 = vmatprep.subr.mxu0 0.0
      %910 = vmatpush1.msra.mxu0 0.0
      %911 = vmatprep.subr.mxu0 0.0
      %912 = vmatpush1.msra.mxu0 0.0
      %913 = vmatprep.subr.mxu0 0.0
      %914 = vmatpush1.msra.mxu0 0.0
      %915 = vmatprep.subr.mxu0 0.0
      %916 = vmatpush1.msra.mxu0 0.0
      %917 = vmatprep.subr.mxu0 0.0
      %918 = vmatpush1.msra.mxu0 0.0
      %919 = vmatprep.subr.mxu0 0.0
      %920 = vmatpush1.msra.mxu0 0.0
      %921 = vmatprep.subr.mxu0 0.0
      %922 = vmatpush1.msra.mxu0 0.0
      %923 = vmatprep.subr.mxu0 0.0
      %924 = vmatpush1.msra.mxu0 0.0
      %925 = vmatprep.mubr.f32.mxu0 0.0
      %926 = vmatmul.mubr.f32.gmra.mrb[0].mxu0 %v856
      %v927 = vpop.f32.mrb[0].mxu0
      %v928 = vadd.f32 0.0, %v927
      %v929 = vpop.f32.mrb[0].mxu0
      %930 = vmatprep.mubr.f32.mxu0 0.0
      %931 = vmatmul.mubr.f32.gmra.mrb[0].mxu0 %v859
      %v932 = vpop.f32.mrb[0].mxu0
      %v933 = vadd.f32 0.0, %v932
      %v934 = vpop.f32.mrb[0].mxu0
      %935 = vdwg.mxu0
      %v936 = vadd.f32 %v850, %v928
      %v937 = vadd.f32 %v851, %v933
      %938 = vrot.lane.b32.xlu0 %v433, 127
      %v939 = vpop.permute.xlu0 %938
      %940 = vrot.lane.b32.xlu0 %v434, 127
      %v941 = vpop.permute.xlu0 %940
      %vm944 = vcmask 515072
      %v945 = vsel %vm944, %v939, 0.0
      %v946 = vsel %vm944, %v941, 0.0
      %s947 = scalar_lea.vmem %s1, 5
      %v948 = vld [vmem:[%s947] sm:$0x1]
      %v950 = vlaneseq
      %v951 = vshrl.u32 %v950, 7
      %v952 = vsub.s32 0, %v951
      %v953 = vrot.slane %v948, %v952
      %v955 = vmul.f32 %v945, %v953
      %v956 = vmul.f32 %v946, %v953
      %s957 = scalar_lea.vmem %s4, 80
      %v958 = vld [vmem:[%s957] sm:$0xff]
      %v959 = vld [vmem:[%s957 + $0x8] sm:$0xff]
      %v961 = vsel %vm479, %v958, 0
      %v964 = vsel %vm479, %v959, 0
      %966 = vmatprep.subr.mxu0 0.0
      %967 = vmatpush1.msra.mxu0 %v955
      %968 = vmatprep.subr.mxu0 0.0
      %969 = vmatpush1.msra.mxu0 %v956
      %970 = vmatprep.subr.mxu0 0.0
      %971 = vmatpush1.msra.mxu0 0.0
      %972 = vmatprep.subr.mxu0 0.0
      %973 = vmatpush1.msra.mxu0 0.0
      %974 = vmatprep.subr.mxu0 0.0
      %975 = vmatpush1.msra.mxu0 0.0
      %976 = vmatprep.subr.mxu0 0.0
      %977 = vmatpush1.msra.mxu0 0.0
      %978 = vmatprep.subr.mxu0 0.0
      %979 = vmatpush1.msra.mxu0 0.0
      %980 = vmatprep.subr.mxu0 0.0
      %981 = vmatpush1.msra.mxu0 0.0
      %982 = vmatprep.subr.mxu0 0.0
      %983 = vmatpush1.msra.mxu0 0.0
      %984 = vmatprep.subr.mxu0 0.0
      %985 = vmatpush1.msra.mxu0 0.0
      %986 = vmatprep.subr.mxu0 0.0
      %987 = vmatpush1.msra.mxu0 0.0
      %988 = vmatprep.subr.mxu0 0.0
      %989 = vmatpush1.msra.mxu0 0.0
      %990 = vmatprep.subr.mxu0 0.0
      %991 = vmatpush1.msra.mxu0 0.0
      %992 = vmatprep.subr.mxu0 0.0
      %993 = vmatpush1.msra.mxu0 0.0
      %994 = vmatprep.subr.mxu0 0.0
      %995 = vmatpush1.msra.mxu0 0.0
      %996 = vmatprep.subr.mxu0 0.0
      %997 = vmatpush1.msra.mxu0 0.0
      %998 = vmatprep.subr.mxu0 0.0
      %999 = vmatpush1.msra.mxu0 0.0
      %1000 = vmatprep.subr.mxu0 0.0
      %1001 = vmatpush1.msra.mxu0 0.0
      %1002 = vmatprep.subr.mxu0 0.0
      %1003 = vmatpush1.msra.mxu0 0.0
      %1004 = vmatprep.subr.mxu0 0.0
      %1005 = vmatpush1.msra.mxu0 0.0
      %1006 = vmatprep.subr.mxu0 0.0
      %1007 = vmatpush1.msra.mxu0 0.0
      %1008 = vmatprep.subr.mxu0 0.0
      %1009 = vmatpush1.msra.mxu0 0.0
      %1010 = vmatprep.subr.mxu0 0.0
      %1011 = vmatpush1.msra.mxu0 0.0
      %1012 = vmatprep.subr.mxu0 0.0
      %1013 = vmatpush1.msra.mxu0 0.0
      %1014 = vmatprep.subr.mxu0 0.0
      %1015 = vmatpush1.msra.mxu0 0.0
      %1016 = vmatprep.subr.mxu0 0.0
      %1017 = vmatpush1.msra.mxu0 0.0
      %1018 = vmatprep.subr.mxu0 0.0
      %1019 = vmatpush1.msra.mxu0 0.0
      %1020 = vmatprep.subr.mxu0 0.0
      %1021 = vmatpush1.msra.mxu0 0.0
      %1022 = vmatprep.subr.mxu0 0.0
      %1023 = vmatpush1.msra.mxu0 0.0
      %1024 = vmatprep.subr.mxu0 0.0
      %1025 = vmatpush1.msra.mxu0 0.0
      %1026 = vmatprep.subr.mxu0 0.0
      %1027 = vmatpush1.msra.mxu0 0.0
      %1028 = vmatprep.subr.mxu0 0.0
      %1029 = vmatpush1.msra.mxu0 0.0
      %1030 = vmatprep.mubr.f32.mxu0 0.0
      %1031 = vmatmul.mubr.f32.gmra.mrb[0].mxu0 %v961
      %v1032 = vpop.f32.mrb[0].mxu0
      %v1033 = vadd.f32 0.0, %v1032
      %v1034 = vpop.f32.mrb[0].mxu0
      %1035 = vmatprep.mubr.f32.mxu0 0.0
      %1036 = vmatmul.mubr.f32.gmra.mrb[0].mxu0 %v964
      %v1037 = vpop.f32.mrb[0].mxu0
      %v1038 = vadd.f32 0.0, %v1037
      %v1039 = vpop.f32.mrb[0].mxu0
      %1040 = vdwg.mxu0
      %v1041 = vadd.f32 %v936, %v1033
      %v1042 = vadd.f32 %v937, %v1038
      %1043 = vrot.lane.b32.xlu0 %v433, 121
      %v1044 = vpop.permute.xlu0 %1043
      %1045 = vrot.lane.b32.xlu0 %v434, 121
      %v1046 = vpop.permute.xlu0 %1045
      %vm1049 = vcmask 465920
      %v1050 = vsel %vm1049, %v1044, 0.0
      %v1051 = vsel %vm1049, %v1046, 0.0
      %s1052 = scalar_lea.vmem %s1, 6
      %v1053 = vld [vmem:[%s1052] sm:$0x1]
      %v1055 = vlaneseq
      %v1056 = vshrl.u32 %v1055, 7
      %v1057 = vsub.s32 0, %v1056
      %v1058 = vrot.slane %v1053, %v1057
      %v1060 = vmul.f32 %v1050, %v1058
      %v1061 = vmul.f32 %v1051, %v1058
      %s1062 = scalar_lea.vmem %s4, 96
      %v1063 = vld [vmem:[%s1062] sm:$0xff]
      %v1064 = vld [vmem:[%s1062 + $0x8] sm:$0xff]
      %v1066 = vsel %vm479, %v1063, 0
      %v1069 = vsel %vm479, %v1064, 0
      %1071 = vmatprep.subr.mxu0 0.0
      %1072 = vmatpush1.msra.mxu0 %v1060
      %1073 = vmatprep.subr.mxu0 0.0
      %1074 = vmatpush1.msra.mxu0 %v1061
      %1075 = vmatprep.subr.mxu0 0.0
      %1076 = vmatpush1.msra.mxu0 0.0
      %1077 = vmatprep.subr.mxu0 0.0
      %1078 = vmatpush1.msra.mxu0 0.0
      %1079 = vmatprep.subr.mxu0 0.0
      %1080 = vmatpush1.msra.mxu0 0.0
      %1081 = vmatprep.subr.mxu0 0.0
      %1082 = vmatpush1.msra.mxu0 0.0
      %1083 = vmatprep.subr.mxu0 0.0
      %1084 = vmatpush1.msra.mxu0 0.0
      %1085 = vmatprep.subr.mxu0 0.0
      %1086 = vmatpush1.msra.mxu0 0.0
      %1087 = vmatprep.subr.mxu0 0.0
      %1088 = vmatpush1.msra.mxu0 0.0
      %1089 = vmatprep.subr.mxu0 0.0
      %1090 = vmatpush1.msra.mxu0 0.0
      %1091 = vmatprep.subr.mxu0 0.0
      %1092 = vmatpush1.msra.mxu0 0.0
      %1093 = vmatprep.subr.mxu0 0.0
      %1094 = vmatpush1.msra.mxu0 0.0
      %1095 = vmatprep.subr.mxu0 0.0
      %1096 = vmatpush1.msra.mxu0 0.0
      %1097 = vmatprep.subr.mxu0 0.0
      %1098 = vmatpush1.msra.mxu0 0.0
      %1099 = vmatprep.subr.mxu0 0.0
      %1100 = vmatpush1.msra.mxu0 0.0
      %1101 = vmatprep.subr.mxu0 0.0
      %1102 = vmatpush1.msra.mxu0 0.0
      %1103 = vmatprep.subr.mxu0 0.0
      %1104 = vmatpush1.msra.mxu0 0.0
      %1105 = vmatprep.subr.mxu0 0.0
      %1106 = vmatpush1.msra.mxu0 0.0
      %1107 = vmatprep.subr.mxu0 0.0
      %1108 = vmatpush1.msra.mxu0 0.0
      %1109 = vmatprep.subr.mxu0 0.0
      %1110 = vmatpush1.msra.mxu0 0.0
      %1111 = vmatprep.subr.mxu0 0.0
      %1112 = vmatpush1.msra.mxu0 0.0
      %1113 = vmatprep.subr.mxu0 0.0
      %1114 = vmatpush1.msra.mxu0 0.0
      %1115 = vmatprep.subr.mxu0 0.0
      %1116 = vmatpush1.msra.mxu0 0.0
      %1117 = vmatprep.subr.mxu0 0.0
      %1118 = vmatpush1.msra.mxu0 0.0
      %1119 = vmatprep.subr.mxu0 0.0
      %1120 = vmatpush1.msra.mxu0 0.0
      %1121 = vmatprep.subr.mxu0 0.0
      %1122 = vmatpush1.msra.mxu0 0.0
      %1123 = vmatprep.subr.mxu0 0.0
      %1124 = vmatpush1.msra.mxu0 0.0
      %1125 = vmatprep.subr.mxu0 0.0
      %1126 = vmatpush1.msra.mxu0 0.0
      %1127 = vmatprep.subr.mxu0 0.0
      %1128 = vmatpush1.msra.mxu0 0.0
      %1129 = vmatprep.subr.mxu0 0.0
      %1130 = vmatpush1.msra.mxu0 0.0
      %1131 = vmatprep.subr.mxu0 0.0
      %1132 = vmatpush1.msra.mxu0 0.0
      %1133 = vmatprep.subr.mxu0 0.0
      %1134 = vmatpush1.msra.mxu0 0.0
      %1135 = vmatprep.mubr.f32.mxu0 0.0
      %1136 = vmatmul.mubr.f32.gmra.mrb[0].mxu0 %v1066
      %v1137 = vpop.f32.mrb[0].mxu0
      %v1138 = vadd.f32 0.0, %v1137
      %v1139 = vpop.f32.mrb[0].mxu0
      %1140 = vmatprep.mubr.f32.mxu0 0.0
      %1141 = vmatmul.mubr.f32.gmra.mrb[0].mxu0 %v1069
      %v1142 = vpop.f32.mrb[0].mxu0
      %v1143 = vadd.f32 0.0, %v1142
      %v1144 = vpop.f32.mrb[0].mxu0
      %1145 = vdwg.mxu0
      %v1146 = vadd.f32 %v1041, %v1138
      %v1147 = vadd.f32 %v1042, %v1143
      %1148 = vrot.lane.b32.xlu0 %v433, 120
      %v1149 = vpop.permute.xlu0 %1148
      %1150 = vrot.lane.b32.xlu0 %v434, 120
      %v1151 = vpop.permute.xlu0 %1150
      %vm1154 = vcmask 457728
      %v1155 = vsel %vm1154, %v1149, 0.0
      %v1156 = vsel %vm1154, %v1151, 0.0
      %s1157 = scalar_lea.vmem %s1, 7
      %v1158 = vld [vmem:[%s1157] sm:$0x1]
      %v1160 = vlaneseq
      %v1161 = vshrl.u32 %v1160, 7
      %v1162 = vsub.s32 0, %v1161
      %v1163 = vrot.slane %v1158, %v1162
      %v1165 = vmul.f32 %v1155, %v1163
      %v1166 = vmul.f32 %v1156, %v1163
      %s1167 = scalar_lea.vmem %s4, 112
      %v1168 = vld [vmem:[%s1167] sm:$0xff]
      %v1169 = vld [vmem:[%s1167 + $0x8] sm:$0xff]
      %v1171 = vsel %vm479, %v1168, 0
      %v1174 = vsel %vm479, %v1169, 0
      %1176 = vmatprep.subr.mxu0 0.0
      %1177 = vmatpush1.msra.mxu0 %v1165
      %1178 = vmatprep.subr.mxu0 0.0
      %1179 = vmatpush1.msra.mxu0 %v1166
      %1180 = vmatprep.subr.mxu0 0.0
      %1181 = vmatpush1.msra.mxu0 0.0
      %1182 = vmatprep.subr.mxu0 0.0
      %1183 = vmatpush1.msra.mxu0 0.0
      %1184 = vmatprep.subr.mxu0 0.0
      %1185 = vmatpush1.msra.mxu0 0.0
      %1186 = vmatprep.subr.mxu0 0.0
      %1187 = vmatpush1.msra.mxu0 0.0
      %1188 = vmatprep.subr.mxu0 0.0
      %1189 = vmatpush1.msra.mxu0 0.0
      %1190 = vmatprep.subr.mxu0 0.0
      %1191 = vmatpush1.msra.mxu0 0.0
      %1192 = vmatprep.subr.mxu0 0.0
      %1193 = vmatpush1.msra.mxu0 0.0
      %1194 = vmatprep.subr.mxu0 0.0
      %1195 = vmatpush1.msra.mxu0 0.0
      %1196 = vmatprep.subr.mxu0 0.0
      %1197 = vmatpush1.msra.mxu0 0.0
      %1198 = vmatprep.subr.mxu0 0.0
      %1199 = vmatpush1.msra.mxu0 0.0
      %1200 = vmatprep.subr.mxu0 0.0
      %1201 = vmatpush1.msra.mxu0 0.0
      %1202 = vmatprep.subr.mxu0 0.0
      %1203 = vmatpush1.msra.mxu0 0.0
      %1204 = vmatprep.subr.mxu0 0.0
      %1205 = vmatpush1.msra.mxu0 0.0
      %1206 = vmatprep.subr.mxu0 0.0
      %1207 = vmatpush1.msra.mxu0 0.0
      %1208 = vmatprep.subr.mxu0 0.0
      %1209 = vmatpush1.msra.mxu0 0.0
      %1210 = vmatprep.subr.mxu0 0.0
      %1211 = vmatpush1.msra.mxu0 0.0
      %1212 = vmatprep.subr.mxu0 0.0
      %1213 = vmatpush1.msra.mxu0 0.0
      %1214 = vmatprep.subr.mxu0 0.0
      %1215 = vmatpush1.msra.mxu0 0.0
      %1216 = vmatprep.subr.mxu0 0.0
      %1217 = vmatpush1.msra.mxu0 0.0
      %1218 = vmatprep.subr.mxu0 0.0
      %1219 = vmatpush1.msra.mxu0 0.0
      %1220 = vmatprep.subr.mxu0 0.0
      %1221 = vmatpush1.msra.mxu0 0.0
      %1222 = vmatprep.subr.mxu0 0.0
      %1223 = vmatpush1.msra.mxu0 0.0
      %1224 = vmatprep.subr.mxu0 0.0
      %1225 = vmatpush1.msra.mxu0 0.0
      %1226 = vmatprep.subr.mxu0 0.0
      %1227 = vmatpush1.msra.mxu0 0.0
      %1228 = vmatprep.subr.mxu0 0.0
      %1229 = vmatpush1.msra.mxu0 0.0
      %1230 = vmatprep.subr.mxu0 0.0
      %1231 = vmatpush1.msra.mxu0 0.0
      %1232 = vmatprep.subr.mxu0 0.0
      %1233 = vmatpush1.msra.mxu0 0.0
      %1234 = vmatprep.subr.mxu0 0.0
      %1235 = vmatpush1.msra.mxu0 0.0
      %1236 = vmatprep.subr.mxu0 0.0
      %1237 = vmatpush1.msra.mxu0 0.0
      %1238 = vmatprep.subr.mxu0 0.0
      %1239 = vmatpush1.msra.mxu0 0.0
      %1240 = vmatprep.mubr.f32.mxu0 0.0
      %1241 = vmatmul.mubr.f32.gmra.mrb[0].mxu0 %v1171
      %v1242 = vpop.f32.mrb[0].mxu0
      %v1243 = vadd.f32 0.0, %v1242
      %v1244 = vpop.f32.mrb[0].mxu0
      %1245 = vmatprep.mubr.f32.mxu0 0.0
      %1246 = vmatmul.mubr.f32.gmra.mrb[0].mxu0 %v1174
      %v1247 = vpop.f32.mrb[0].mxu0
      %v1248 = vadd.f32 0.0, %v1247
      %v1249 = vpop.f32.mrb[0].mxu0
      %1250 = vdwg.mxu0
      %v1251 = vadd.f32 %v1146, %v1243
      %v1252 = vadd.f32 %v1147, %v1248
      %1253 = vrot.lane.b32.xlu0 %v433, 119
      %v1254 = vpop.permute.xlu0 %1253
      %1255 = vrot.lane.b32.xlu0 %v434, 119
      %v1256 = vpop.permute.xlu0 %1255
      %vm1259 = vcmask 449536
      %v1260 = vsel %vm1259, %v1254, 0.0
      %v1261 = vsel %vm1259, %v1256, 0.0
      %s1262 = scalar_lea.vmem %s1, 8
      %v1263 = vld [vmem:[%s1262] sm:$0x1]
      %v1265 = vlaneseq
      %v1266 = vshrl.u32 %v1265, 7
      %v1267 = vsub.s32 0, %v1266
      %v1268 = vrot.slane %v1263, %v1267
      %v1270 = vmul.f32 %v1260, %v1268
      %v1271 = vmul.f32 %v1261, %v1268
      %s1272 = scalar_lea.vmem %s4, 128
      %v1273 = vld [vmem:[%s1272] sm:$0xff]
      %v1274 = vld [vmem:[%s1272 + $0x8] sm:$0xff]
      %v1276 = vsel %vm479, %v1273, 0
      %v1279 = vsel %vm479, %v1274, 0
      %1281 = vmatprep.subr.mxu0 0.0
      %1282 = vmatpush1.msra.mxu0 %v1270
      %1283 = vmatprep.subr.mxu0 0.0
      %1284 = vmatpush1.msra.mxu0 %v1271
      %1285 = vmatprep.subr.mxu0 0.0
      %1286 = vmatpush1.msra.mxu0 0.0
      %1287 = vmatprep.subr.mxu0 0.0
      %1288 = vmatpush1.msra.mxu0 0.0
      %1289 = vmatprep.subr.mxu0 0.0
      %1290 = vmatpush1.msra.mxu0 0.0
      %1291 = vmatprep.subr.mxu0 0.0
      %1292 = vmatpush1.msra.mxu0 0.0
      %1293 = vmatprep.subr.mxu0 0.0
      %1294 = vmatpush1.msra.mxu0 0.0
      %1295 = vmatprep.subr.mxu0 0.0
      %1296 = vmatpush1.msra.mxu0 0.0
      %1297 = vmatprep.subr.mxu0 0.0
      %1298 = vmatpush1.msra.mxu0 0.0
      %1299 = vmatprep.subr.mxu0 0.0
      %1300 = vmatpush1.msra.mxu0 0.0
      %1301 = vmatprep.subr.mxu0 0.0
      %1302 = vmatpush1.msra.mxu0 0.0
      %1303 = vmatprep.subr.mxu0 0.0
      %1304 = vmatpush1.msra.mxu0 0.0
      %1305 = vmatprep.subr.mxu0 0.0
      %1306 = vmatpush1.msra.mxu0 0.0
      %1307 = vmatprep.subr.mxu0 0.0
      %1308 = vmatpush1.msra.mxu0 0.0
      %1309 = vmatprep.subr.mxu0 0.0
      %1310 = vmatpush1.msra.mxu0 0.0
      %1311 = vmatprep.subr.mxu0 0.0
      %1312 = vmatpush1.msra.mxu0 0.0
      %1313 = vmatprep.subr.mxu0 0.0
      %1314 = vmatpush1.msra.mxu0 0.0
      %1315 = vmatprep.subr.mxu0 0.0
      %1316 = vmatpush1.msra.mxu0 0.0
      %1317 = vmatprep.subr.mxu0 0.0
      %1318 = vmatpush1.msra.mxu0 0.0
      %1319 = vmatprep.subr.mxu0 0.0
      %1320 = vmatpush1.msra.mxu0 0.0
      %1321 = vmatprep.subr.mxu0 0.0
      %1322 = vmatpush1.msra.mxu0 0.0
      %1323 = vmatprep.subr.mxu0 0.0
      %1324 = vmatpush1.msra.mxu0 0.0
      %1325 = vmatprep.subr.mxu0 0.0
      %1326 = vmatpush1.msra.mxu0 0.0
      %1327 = vmatprep.subr.mxu0 0.0
      %1328 = vmatpush1.msra.mxu0 0.0
      %1329 = vmatprep.subr.mxu0 0.0
      %1330 = vmatpush1.msra.mxu0 0.0
      %1331 = vmatprep.subr.mxu0 0.0
      %1332 = vmatpush1.msra.mxu0 0.0
      %1333 = vmatprep.subr.mxu0 0.0
      %1334 = vmatpush1.msra.mxu0 0.0
      %1335 = vmatprep.subr.mxu0 0.0
      %1336 = vmatpush1.msra.mxu0 0.0
      %1337 = vmatprep.subr.mxu0 0.0
      %1338 = vmatpush1.msra.mxu0 0.0
      %1339 = vmatprep.subr.mxu0 0.0
      %1340 = vmatpush1.msra.mxu0 0.0
      %1341 = vmatprep.subr.mxu0 0.0
      %1342 = vmatpush1.msra.mxu0 0.0
      %1343 = vmatprep.subr.mxu0 0.0
      %1344 = vmatpush1.msra.mxu0 0.0
      %1345 = vmatprep.mubr.f32.mxu0 0.0
      %1346 = vmatmul.mubr.f32.gmra.mrb[0].mxu0 %v1276
      %v1347 = vpop.f32.mrb[0].mxu0
      %v1348 = vadd.f32 0.0, %v1347
      %v1349 = vpop.f32.mrb[0].mxu0
      %1350 = vmatprep.mubr.f32.mxu0 0.0
      %1351 = vmatmul.mubr.f32.gmra.mrb[0].mxu0 %v1279
      %v1352 = vpop.f32.mrb[0].mxu0
      %v1353 = vadd.f32 0.0, %v1352
      %v1354 = vpop.f32.mrb[0].mxu0
      %1355 = vdwg.mxu0
      %v1356 = vadd.f32 %v1251, %v1348
      %v1357 = vadd.f32 %v1252, %v1353
      %v1358 = vld [vmem:[%s5] sm:$0xff]
      %v1359 = vld [vmem:[%s5 + $0x8] sm:$0xff]
      %1361 = vset.pattern.permute.xlu0 0
      %1362 = vperm.xlu0 %1361, %v1358
      %v1363 = vpop.permute.xlu0 %1362
      %1366 = vset.pattern.permute.xlu0 0
      %1367 = vperm.xlu0 %1366, %v1359
      %v1368 = vpop.permute.xlu0 %1367
      %v1370 = vadd.f32 %v1356, %v1363
      %v1371 = vadd.f32 %v1357, %v1368
      %v1372 = vmax.f32 %v1370, 0.0
      %v1373 = vmax.f32 %v1371, 0.0
      %v1374 = vld [vmem:[%s6] sm:$0xff]
      %v1375 = vld [vmem:[%s6 + $0x8] sm:$0xff]
      %v1376 = vld [vmem:[%s6 + $0x10] sm:$0xff]
      %v1377 = vld [vmem:[%s6 + $0x18] sm:$0xff]
      %v1378 = vld [vmem:[%s7] sm:$0xff]
      %v1379 = vld [vmem:[%s7 + $0x8] sm:$0xff]
      %v1380 = vld [vmem:[%s7 + $0x10] sm:$0xff]
      %v1381 = vld [vmem:[%s7 + $0x18] sm:$0xff]
      %1383 = vset.pattern.permute.xlu0 0
      %1384 = vperm.xlu0 %1383, %v1378
      %v1385 = vpop.permute.xlu0 %1384
      %1388 = vset.pattern.permute.xlu0 0
      %1389 = vperm.xlu0 %1388, %v1379
      %v1390 = vpop.permute.xlu0 %1389
      %1393 = vset.pattern.permute.xlu0 0
      %1394 = vperm.xlu0 %1393, %v1380
      %v1395 = vpop.permute.xlu0 %1394
      %1398 = vset.pattern.permute.xlu0 0
      %1399 = vperm.xlu0 %1398, %v1381
      %v1400 = vpop.permute.xlu0 %1399
      %v1403 = vsel %vm479, %v1374, 0
      %v1406 = vsel %vm479, %v1375, 0
      %v1409 = vsel %vm479, %v1376, 0
      %v1412 = vsel %vm479, %v1377, 0
      %1414 = vmatprep.subr.mxu0 0.0
      %1415 = vmatpush1.msra.mxu0 %v1372
      %1416 = vmatprep.subr.mxu0 0.0
      %1417 = vmatpush1.msra.mxu0 %v1373
      %1418 = vmatprep.subr.mxu0 0.0
      %1419 = vmatpush1.msra.mxu0 0.0
      %1420 = vmatprep.subr.mxu0 0.0
      %1421 = vmatpush1.msra.mxu0 0.0
      %1422 = vmatprep.subr.mxu0 0.0
      %1423 = vmatpush1.msra.mxu0 0.0
      %1424 = vmatprep.subr.mxu0 0.0
      %1425 = vmatpush1.msra.mxu0 0.0
      %1426 = vmatprep.subr.mxu0 0.0
      %1427 = vmatpush1.msra.mxu0 0.0
      %1428 = vmatprep.subr.mxu0 0.0
      %1429 = vmatpush1.msra.mxu0 0.0
      %1430 = vmatprep.subr.mxu0 0.0
      %1431 = vmatpush1.msra.mxu0 0.0
      %1432 = vmatprep.subr.mxu0 0.0
      %1433 = vmatpush1.msra.mxu0 0.0
      %1434 = vmatprep.subr.mxu0 0.0
      %1435 = vmatpush1.msra.mxu0 0.0
      %1436 = vmatprep.subr.mxu0 0.0
      %1437 = vmatpush1.msra.mxu0 0.0
      %1438 = vmatprep.subr.mxu0 0.0
      %1439 = vmatpush1.msra.mxu0 0.0
      %1440 = vmatprep.subr.mxu0 0.0
      %1441 = vmatpush1.msra.mxu0 0.0
      %1442 = vmatprep.subr.mxu0 0.0
      %1443 = vmatpush1.msra.mxu0 0.0
      %1444 = vmatprep.subr.mxu0 0.0
      %1445 = vmatpush1.msra.mxu0 0.0
      %1446 = vmatprep.subr.mxu0 0.0
      %1447 = vmatpush1.msra.mxu0 0.0
      %1448 = vmatprep.subr.mxu0 0.0
      %1449 = vmatpush1.msra.mxu0 0.0
      %1450 = vmatprep.subr.mxu0 0.0
      %1451 = vmatpush1.msra.mxu0 0.0
      %1452 = vmatprep.subr.mxu0 0.0
      %1453 = vmatpush1.msra.mxu0 0.0
      %1454 = vmatprep.subr.mxu0 0.0
      %1455 = vmatpush1.msra.mxu0 0.0
      %1456 = vmatprep.subr.mxu0 0.0
      %1457 = vmatpush1.msra.mxu0 0.0
      %1458 = vmatprep.subr.mxu0 0.0
      %1459 = vmatpush1.msra.mxu0 0.0
      %1460 = vmatprep.subr.mxu0 0.0
      %1461 = vmatpush1.msra.mxu0 0.0
      %1462 = vmatprep.subr.mxu0 0.0
      %1463 = vmatpush1.msra.mxu0 0.0
      %1464 = vmatprep.subr.mxu0 0.0
      %1465 = vmatpush1.msra.mxu0 0.0
      %1466 = vmatprep.subr.mxu0 0.0
      %1467 = vmatpush1.msra.mxu0 0.0
      %1468 = vmatprep.subr.mxu0 0.0
      %1469 = vmatpush1.msra.mxu0 0.0
      %1470 = vmatprep.subr.mxu0 0.0
      %1471 = vmatpush1.msra.mxu0 0.0
      %1472 = vmatprep.subr.mxu0 0.0
      %1473 = vmatpush1.msra.mxu0 0.0
      %1474 = vmatprep.subr.mxu0 0.0
      %1475 = vmatpush1.msra.mxu0 0.0
      %1476 = vmatprep.subr.mxu0 0.0
      %1477 = vmatpush1.msra.mxu0 0.0
      %1478 = vmatprep.mubr.f32.mxu0 0.0
      %1479 = vmatmul.mubr.f32.gmra.mrb[0].mxu0 %v1403
      %v1480 = vpop.f32.mrb[0].mxu0
      %v1481 = vadd.f32 %v1385, %v1480
      %v1482 = vpop.f32.mrb[0].mxu0
      %1483 = vmatprep.mubr.f32.mxu0 0.0
      %1484 = vmatmul.mubr.f32.gmra.mrb[0].mxu0 %v1406
      %v1485 = vpop.f32.mrb[0].mxu0
      %v1486 = vadd.f32 %v1390, %v1485
      %v1487 = vpop.f32.mrb[0].mxu0
      %1488 = vmatprep.mubr.f32.mxu0 0.0
      %1489 = vmatmul.mubr.f32.gmra.mrb[0].mxu0 %v1409
      %v1490 = vpop.f32.mrb[0].mxu0
      %v1491 = vadd.f32 %v1395, %v1490
      %v1492 = vpop.f32.mrb[0].mxu0
      %1493 = vmatprep.mubr.f32.mxu0 0.0
      %1494 = vmatmul.mubr.f32.gmra.mrb[0].mxu0 %v1412
      %v1495 = vpop.f32.mrb[0].mxu0
      %v1496 = vadd.f32 %v1400, %v1495
      %v1497 = vpop.f32.mrb[0].mxu0
      %1498 = vdwg.mxu0
      %v1499 = vld [vmem:[%s8] sm:$0xff]
      %v1500 = vld [vmem:[%s8 + $0x8] sm:$0xff]
      %v1501 = vld [vmem:[%s8 + $0x10] sm:$0xff]
      %v1502 = vld [vmem:[%s8 + $0x18] sm:$0xff]
      %1504 = vset.pattern.permute.xlu0 0
      %1505 = vperm.xlu0 %1504, %v1499
      %v1506 = vpop.permute.xlu0 %1505
      %1509 = vset.pattern.permute.xlu0 0
      %1510 = vperm.xlu0 %1509, %v1500
      %v1511 = vpop.permute.xlu0 %1510
      %1514 = vset.pattern.permute.xlu0 0
      %1515 = vperm.xlu0 %1514, %v1501
      %v1516 = vpop.permute.xlu0 %1515
      %1519 = vset.pattern.permute.xlu0 0
      %1520 = vperm.xlu0 %1519, %v1502
      %v1521 = vpop.permute.xlu0 %1520
      %v1523 = vmul.f32 %v1506, %v333
      %v1524 = vmul.f32 %v1511, %v334
      %v1525 = vmul.f32 %v1516, %v335
      %v1526 = vmul.f32 %v1521, %v336
      %v1527 = vadd.f32 %v1481, %v1523
      %v1528 = vadd.f32 %v1486, %v1524
      %v1529 = vadd.f32 %v1491, %v1525
      %v1530 = vadd.f32 %v1496, %v1526
      %v1531 = vmax.f32 %v1527, 0.0
      %v1532 = vmax.f32 %v1528, 0.0
      %v1533 = vmax.f32 %v1529, 0.0
      %v1534 = vmax.f32 %v1530, 0.0
      %vm1535 = vcmask 523264
      %1536 = vst.msk [vmem:[%s332] sm:$0xff] %vm1535, %v1531
      %1537 = vst.msk [vmem:[%s332 + $0x8] sm:$0xff] %vm1535, %v1532
      %1538 = vst.msk [vmem:[%s332 + $0x10] sm:$0xff] %vm1535, %v1533
      %1539 = vst.msk [vmem:[%s332 + $0x18] sm:$0xff] %vm1535, %v1534
      %p1540 = scmp.lt.s32.totalorder %s20, 1
      %s1541 = scalar_select %p1540, %s20, 1
      %s1542 = smul.addr %s1541, 4
      %s1543 = smul.addr %s1542, 8
      %s1544 = scalar_lea.vmem %s9, %s1543
      // Predicated region
      $region57: #{hand2d_to_3d_forward.31} parent=55 // pred_check
        %p1545 = pneg %p232
      $region58: #{hand2d_to_3d_forward.31} parent=55 // pred_check_branch
        %1547 = sbr.rel (%p1545) target = $region60
      $region59: #{hand2d_to_3d_forward.31} parent=55 // pred_region
        _
      $region60: #{hand2d_to_3d_forward.31} parent=55 // pred_fallthru
        _
    $region56: #{hand2d_to_3d_forward.31} parent=5 // pred_fallthru
      _
    %p1548 = scmp.le.s32.totalorder 2, %s15
    // Predicated region
    $region61: #{hand2d_to_3d_forward.31} parent=5 // pred_check
      %p1549 = pneg %p1548
    $region62: #{hand2d_to_3d_forward.31} parent=5 // pred_check_branch
      %1551 = sbr.rel (%p1549) target = $region64
    $region63: #{hand2d_to_3d_forward.31} parent=5 // pred_region
      %s1552 = ssub.s32 %s15, 2
      // Predicated region
      $region65: #{hand2d_to_3d_forward.31} parent=63 // pred_check
        %p1553 = pneg %p238
      $region66: #{hand2d_to_3d_forward.31} parent=63 // pred_check_branch
        %1555 = sbr.rel (%p1553) target = $region68
      $region67: #{hand2d_to_3d_forward.31} parent=63 // pred_region
        %p1556 = scmp.lt.s32.totalorder %s21, 1
        %s1557 = scalar_select %p1556, %s21, 1
        %s1558 = smul.addr %s1557, 4
        %s1559 = smul.addr %s1558, 8
        %s1560 = scalar_lea.vmem %s9, %s1559
      $region68: #{hand2d_to_3d_forward.31} parent=63 // pred_fallthru
        _
    $region64: #{hand2d_to_3d_forward.31} parent=5 // pred_fallthru
      _
  $region6: #{hand2d_to_3d_forward.31} parent=0 // loop_footer
    %s19 = sadd.s32 1, %s15
  $region7: #{hand2d_to_3d_forward.31} parent=0 // loop_footer_branch
    %14 = sbr.rel target = $region3
  $region8: #{hand2d_to_3d_forward.31} parent=0 // loop_exit
    _

// kernel: hand2d_to_3d_forward.37
$region0: #{hand2d_to_3d_forward.37}
  #allocation0 [shape = 'u32[]', space=smem, size = 0x4, offset = 0x4, fixed_abs, tag = 'smem constant byte address 0x4 - core index']
  #allocation1 [shape = 'u32[144,128]{1,0:T(1,128)}', space=vmem, size = 0x12000, scoped, tag = 'internal scratch']
  %s0 = inlined_call_operand.vmem [shape: f32[2,32,1], index: 0, kind: input, shape index: {}]
  %s1 = inlined_call_operand.vmem [shape: f32[9,1,1], index: 1, kind: input, shape index: {}]
  %s2 = inlined_call_operand.vmem [shape: f32[16,32], index: 2, kind: input, shape index: {}]
  %s3 = inlined_call_operand.vmem [shape: f32[16,1], index: 3, kind: input, shape index: {}]
  %s4 = inlined_call_operand.vmem [shape: f32[9,16,16], index: 4, kind: input, shape index: {}]
  %s5 = inlined_call_operand.vmem [shape: f32[16,1], index: 5, kind: input, shape index: {}]
  %s6 = inlined_call_operand.vmem [shape: f32[32,16], index: 6, kind: input, shape index: {}]
  %s7 = inlined_call_operand.vmem [shape: f32[32,1], index: 7, kind: input, shape index: {}]
  %s8 = inlined_call_operand.vmem [shape: f32[32,1], index: 8, kind: input, shape index: {}]
  %s9 = inlined_call_operand.vmem [shape: f32[2,32,1], index: 9, kind: output, shape index: {}]
  %s10 = sld [smem:[#allocation0]]
  $region69: #{hand2d_to_3d_forward.37} parent=0
    _
  %s12 = ssub.s32 1, %s10
  %s13 = scalar_select 0, %s12, %s10
  loop: start=0, step=1, limit=4
  $region2: #{hand2d_to_3d_forward.37} parent=0 // loop_pre_header
    _
  $region3: #{hand2d_to_3d_forward.37} parent=0 // loop_header
    %s15 = sphi 0, %s19
    %p16 = scmp.ge.s32.totalorder %s15, 4
    %s25 = sphi 0, %s27
    %s28 = sphi 0, %s25
    %s29 = sphi 0, %s28
    %s45 = sphi 0, %s29
    %s49 = sphi 0, %s49
    %s51 = sphi 0, %s49
    %s52 = sphi 0, %s51
    %s66 = sphi 0, %s52
    %s70 = sphi 0, %s70
    %s72 = sphi 0, %s70
    %s73 = sphi 0, %s72
    %s87 = sphi 0, %s73
    %s91 = sphi 0, %s91
    %s93 = sphi 0, %s91
    %s94 = sphi 0, %s93
    %s108 = sphi 0, %s94
    %s112 = sphi 0, %s112
    %s114 = sphi 0, %s112
    %s115 = sphi 0, %s114
    %s129 = sphi 0, %s115
    %s133 = sphi 0, %s133
    %s135 = sphi 0, %s133
    %s136 = sphi 0, %s135
    %s150 = sphi 0, %s136
    %s154 = sphi 0, %s154
    %s156 = sphi 0, %s154
    %s157 = sphi 0, %s156
    %s171 = sphi 0, %s157
    %s175 = sphi 0, %s175
    %s177 = sphi 0, %s175
    %s178 = sphi 0, %s177
    %s192 = sphi 0, %s178
    %s196 = sphi 0, %s196
    %s198 = sphi 0, %s196
    %s199 = sphi 0, %s198
    %s213 = sphi 0, %s199
    %s219 = sphi 0, %s221
    %s222 = sphi 0, %s219
    %s223 = sphi 0, %s222
    %s239 = sphi 0, %s223
  $region4: #{hand2d_to_3d_forward.37} parent=0 // loop_header_branch
    %18 = sbr.rel (%p16) target = $region8
  $region5: #{hand2d_to_3d_forward.37} parent=0 // loop_body
    %s20 = ssub.s32 %s15, 1
    %s21 = ssub.s32 %s15, 2
    %s22 = sadd.s32 %s15, 1
    %s23 = ssub.s32 %s15, %s22
    %p24 = scmp.eq.s32.totalorder %s23, 0
    %s26 = sadd.s32 %s25, 1
    %s27 = scalar_select %p24, %s25, %s26
    %p30 = pneg %p24
    %p31 = scmp.eq.s32.totalorder %s15, 1
    %p32 = por %p30, %p31
    %p33 = scmp.ne.s32.totalorder %s25, %s28
    %p34 = scmp.eq.s32.totalorder %s15, 0
    %p35 = por %p33, %p34
    %p36 = scmp.ne.s32.totalorder %s25, %s28
    %p37 = scmp.eq.s32.totalorder %s20, 1
    %p38 = por %p36, %p37
    %p39 = scmp.ne.s32.totalorder %s28, %s29
    %p40 = scmp.eq.s32.totalorder %s20, 0
    %p41 = por %p39, %p40
    %p42 = scmp.ne.s32.totalorder %s28, %s29
    %p43 = scmp.eq.s32.totalorder %s21, 1
    %p44 = por %p42, %p43
    %p46 = scmp.ne.s32.totalorder %s29, %s45
    %p47 = scmp.eq.s32.totalorder %s21, 0
    %p48 = por %p46, %p47
    %s50 = sadd.s32 %s49, 1
    %p53 = scmp.eq.s32.totalorder %s15, 1
    %p54 = scmp.ne.s32.totalorder %s49, %s51
    %p55 = scmp.eq.s32.totalorder %s15, 0
    %p56 = por %p54, %p55
    %p57 = scmp.ne.s32.totalorder %s49, %s51
    %p58 = scmp.eq.s32.totalorder %s20, 1
    %p59 = por %p57, %p58
    %p60 = scmp.ne.s32.totalorder %s51, %s52
    %p61 = scmp.eq.s32.totalorder %s20, 0
    %p62 = por %p60, %p61
    %p63 = scmp.ne.s32.totalorder %s51, %s52
    %p64 = scmp.eq.s32.totalorder %s21, 1
    %p65 = por %p63, %p64
    %p67 = scmp.ne.s32.totalorder %s52, %s66
    %p68 = scmp.eq.s32.totalorder %s21, 0
    %p69 = por %p67, %p68
    %s71 = sadd.s32 %s70, 1
    %p74 = scmp.eq.s32.totalorder %s15, 1
    %p75 = scmp.ne.s32.totalorder %s70, %s72
    %p76 = scmp.eq.s32.totalorder %s15, 0
    %p77 = por %p75, %p76
    %p78 = scmp.ne.s32.totalorder %s70, %s72
    %p79 = scmp.eq.s32.totalorder %s20, 1
    %p80 = por %p78, %p79
    %p81 = scmp.ne.s32.totalorder %s72, %s73
    %p82 = scmp.eq.s32.totalorder %s20, 0
    %p83 = por %p81, %p82
    %p84 = scmp.ne.s32.totalorder %s72, %s73
    %p85 = scmp.eq.s32.totalorder %s21, 1
    %p86 = por %p84, %p85
    %p88 = scmp.ne.s32.totalorder %s73, %s87
    %p89 = scmp.eq.s32.totalorder %s21, 0
    %p90 = por %p88, %p89
    %s92 = sadd.s32 %s91, 1
    %p95 = scmp.eq.s32.totalorder %s15, 1
    %p96 = scmp.ne.s32.totalorder %s91, %s93
    %p97 = scmp.eq.s32.totalorder %s15, 0
    %p98 = por %p96, %p97
    %p99 = scmp.ne.s32.totalorder %s91, %s93
    %p100 = scmp.eq.s32.totalorder %s20, 1
    %p101 = por %p99, %p100
    %p102 = scmp.ne.s32.totalorder %s93, %s94
    %p103 = scmp.eq.s32.totalorder %s20, 0
    %p104 = por %p102, %p103
    %p105 = scmp.ne.s32.totalorder %s93, %s94
    %p106 = scmp.eq.s32.totalorder %s21, 1
    %p107 = por %p105, %p106
    %p109 = scmp.ne.s32.totalorder %s94, %s108
    %p110 = scmp.eq.s32.totalorder %s21, 0
    %p111 = por %p109, %p110
    %s113 = sadd.s32 %s112, 1
    %p116 = scmp.eq.s32.totalorder %s15, 1
    %p117 = scmp.ne.s32.totalorder %s112, %s114
    %p118 = scmp.eq.s32.totalorder %s15, 0
    %p119 = por %p117, %p118
    %p120 = scmp.ne.s32.totalorder %s112, %s114
    %p121 = scmp.eq.s32.totalorder %s20, 1
    %p122 = por %p120, %p121
    %p123 = scmp.ne.s32.totalorder %s114, %s115
    %p124 = scmp.eq.s32.totalorder %s20, 0
    %p125 = por %p123, %p124
    %p126 = scmp.ne.s32.totalorder %s114, %s115
    %p127 = scmp.eq.s32.totalorder %s21, 1
    %p128 = por %p126, %p127
    %p130 = scmp.ne.s32.totalorder %s115, %s129
    %p131 = scmp.eq.s32.totalorder %s21, 0
    %p132 = por %p130, %p131
    %s134 = sadd.s32 %s133, 1
    %p137 = scmp.eq.s32.totalorder %s15, 1
    %p138 = scmp.ne.s32.totalorder %s133, %s135
    %p139 = scmp.eq.s32.totalorder %s15, 0
    %p140 = por %p138, %p139
    %p141 = scmp.ne.s32.totalorder %s133, %s135
    %p142 = scmp.eq.s32.totalorder %s20, 1
    %p143 = por %p141, %p142
    %p144 = scmp.ne.s32.totalorder %s135, %s136
    %p145 = scmp.eq.s32.totalorder %s20, 0
    %p146 = por %p144, %p145
    %p147 = scmp.ne.s32.totalorder %s135, %s136
    %p148 = scmp.eq.s32.totalorder %s21, 1
    %p149 = por %p147, %p148
    %p151 = scmp.ne.s32.totalorder %s136, %s150
    %p152 = scmp.eq.s32.totalorder %s21, 0
    %p153 = por %p151, %p152
    %s155 = sadd.s32 %s154, 1
    %p158 = scmp.eq.s32.totalorder %s15, 1
    %p159 = scmp.ne.s32.totalorder %s154, %s156
    %p160 = scmp.eq.s32.totalorder %s15, 0
    %p161 = por %p159, %p160
    %p162 = scmp.ne.s32.totalorder %s154, %s156
    %p163 = scmp.eq.s32.totalorder %s20, 1
    %p164 = por %p162, %p163
    %p165 = scmp.ne.s32.totalorder %s156, %s157
    %p166 = scmp.eq.s32.totalorder %s20, 0
    %p167 = por %p165, %p166
    %p168 = scmp.ne.s32.totalorder %s156, %s157
    %p169 = scmp.eq.s32.totalorder %s21, 1
    %p170 = por %p168, %p169
    %p172 = scmp.ne.s32.totalorder %s157, %s171
    %p173 = scmp.eq.s32.totalorder %s21, 0
    %p174 = por %p172, %p173
    %s176 = sadd.s32 %s175, 1
    %p179 = scmp.eq.s32.totalorder %s15, 1
    %p180 = scmp.ne.s32.totalorder %s175, %s177
    %p181 = scmp.eq.s32.totalorder %s15, 0
    %p182 = por %p180, %p181
    %p183 = scmp.ne.s32.totalorder %s175, %s177
    %p184 = scmp.eq.s32.totalorder %s20, 1
    %p185 = por %p183, %p184
    %p186 = scmp.ne.s32.totalorder %s177, %s178
    %p187 = scmp.eq.s32.totalorder %s20, 0
    %p188 = por %p186, %p187
    %p189 = scmp.ne.s32.totalorder %s177, %s178
    %p190 = scmp.eq.s32.totalorder %s21, 1
    %p191 = por %p189, %p190
    %p193 = scmp.ne.s32.totalorder %s178, %s192
    %p194 = scmp.eq.s32.totalorder %s21, 0
    %p195 = por %p193, %p194
    %s197 = sadd.s32 %s196, 1
    %p200 = scmp.eq.s32.totalorder %s15, 1
    %p201 = scmp.ne.s32.totalorder %s196, %s198
    %p202 = scmp.eq.s32.totalorder %s15, 0
    %p203 = por %p201, %p202
    %p204 = scmp.ne.s32.totalorder %s196, %s198
    %p205 = scmp.eq.s32.totalorder %s20, 1
    %p206 = por %p204, %p205
    %p207 = scmp.ne.s32.totalorder %s198, %s199
    %p208 = scmp.eq.s32.totalorder %s20, 0
    %p209 = por %p207, %p208
    %p210 = scmp.ne.s32.totalorder %s198, %s199
    %p211 = scmp.eq.s32.totalorder %s21, 1
    %p212 = por %p210, %p211
    %p214 = scmp.ne.s32.totalorder %s199, %s213
    %p215 = scmp.eq.s32.totalorder %s21, 0
    %p216 = por %p214, %p215
    %s217 = ssub.s32 %s15, %s22
    %p218 = scmp.eq.s32.totalorder %s217, 0
    %s220 = sadd.s32 %s219, 1
    %s221 = scalar_select %p218, %s219, %s220
    %p224 = pneg %p218
    %p225 = scmp.eq.s32.totalorder %s15, 1
    %p226 = por %p224, %p225
    %p227 = scmp.ne.s32.totalorder %s219, %s222
    %p228 = scmp.eq.s32.totalorder %s15, 0
    %p229 = por %p227, %p228
    %p230 = scmp.ne.s32.totalorder %s219, %s222
    %p231 = scmp.eq.s32.totalorder %s20, 1
    %p232 = por %p230, %p231
    %p233 = scmp.ne.s32.totalorder %s222, %s223
    %p234 = scmp.eq.s32.totalorder %s20, 0
    %p235 = por %p233, %p234
    %p236 = scmp.ne.s32.totalorder %s222, %s223
    %p237 = scmp.eq.s32.totalorder %s21, 1
    %p238 = por %p236, %p237
    %p240 = scmp.ne.s32.totalorder %s223, %s239
    %p241 = scmp.eq.s32.totalorder %s21, 0
    %p242 = por %p240, %p241
    %p243 = scmp.le.s32.totalorder 1, %s15
    %p244 = scmp.lt.s32.totalorder %s15, 3
    %p245 = pnand %p243, %p244
    %p246 = pneg %p245
    // Predicated region
    $region9: #{hand2d_to_3d_forward.37} parent=5 // pred_check
      _
    $region10: #{hand2d_to_3d_forward.37} parent=5 // pred_check_branch
      %248 = sbr.rel (%p245) target = $region12
    $region11: #{hand2d_to_3d_forward.37} parent=5 // pred_region
      %s249 = ssub.s32 %s15, 1
      // Predicated region
      $region13: #{hand2d_to_3d_forward.37} parent=11 // pred_check
        %p250 = pneg %p62
      $region14: #{hand2d_to_3d_forward.37} parent=11 // pred_check_branch
        %252 = sbr.rel (%p250) target = $region16
      $region15: #{hand2d_to_3d_forward.37} parent=11 // pred_region
        _
      $region16: #{hand2d_to_3d_forward.37} parent=11 // pred_fallthru
        _
      // Predicated region
      $region17: #{hand2d_to_3d_forward.37} parent=11 // pred_check
        %p253 = pneg %p83
      $region18: #{hand2d_to_3d_forward.37} parent=11 // pred_check_branch
        %255 = sbr.rel (%p253) target = $region20
      $region19: #{hand2d_to_3d_forward.37} parent=11 // pred_region
        _
      $region20: #{hand2d_to_3d_forward.37} parent=11 // pred_fallthru
        _
      // Predicated region
      $region21: #{hand2d_to_3d_forward.37} parent=11 // pred_check
        %p256 = pneg %p104
      $region22: #{hand2d_to_3d_forward.37} parent=11 // pred_check_branch
        %258 = sbr.rel (%p256) target = $region24
      $region23: #{hand2d_to_3d_forward.37} parent=11 // pred_region
        _
      $region24: #{hand2d_to_3d_forward.37} parent=11 // pred_fallthru
        _
      // Predicated region
      $region25: #{hand2d_to_3d_forward.37} parent=11 // pred_check
        %p259 = pneg %p125
      $region26: #{hand2d_to_3d_forward.37} parent=11 // pred_check_branch
        %261 = sbr.rel (%p259) target = $region28
      $region27: #{hand2d_to_3d_forward.37} parent=11 // pred_region
        _
      $region28: #{hand2d_to_3d_forward.37} parent=11 // pred_fallthru
        _
      // Predicated region
      $region29: #{hand2d_to_3d_forward.37} parent=11 // pred_check
        %p262 = pneg %p146
      $region30: #{hand2d_to_3d_forward.37} parent=11 // pred_check_branch
        %264 = sbr.rel (%p262) target = $region32
      $region31: #{hand2d_to_3d_forward.37} parent=11 // pred_region
        _
      $region32: #{hand2d_to_3d_forward.37} parent=11 // pred_fallthru
        _
      // Predicated region
      $region33: #{hand2d_to_3d_forward.37} parent=11 // pred_check
        %p265 = pneg %p167
      $region34: #{hand2d_to_3d_forward.37} parent=11 // pred_check_branch
        %267 = sbr.rel (%p265) target = $region36
      $region35: #{hand2d_to_3d_forward.37} parent=11 // pred_region
        _
      $region36: #{hand2d_to_3d_forward.37} parent=11 // pred_fallthru
        _
      // Predicated region
      $region37: #{hand2d_to_3d_forward.37} parent=11 // pred_check
        %p268 = pneg %p188
      $region38: #{hand2d_to_3d_forward.37} parent=11 // pred_check_branch
        %270 = sbr.rel (%p268) target = $region40
      $region39: #{hand2d_to_3d_forward.37} parent=11 // pred_region
        _
      $region40: #{hand2d_to_3d_forward.37} parent=11 // pred_fallthru
        _
      // Predicated region
      $region41: #{hand2d_to_3d_forward.37} parent=11 // pred_check
        %p271 = pneg %p209
      $region42: #{hand2d_to_3d_forward.37} parent=11 // pred_check_branch
        %273 = sbr.rel (%p271) target = $region44
      $region43: #{hand2d_to_3d_forward.37} parent=11 // pred_region
        _
      $region44: #{hand2d_to_3d_forward.37} parent=11 // pred_fallthru
        _
    $region12: #{hand2d_to_3d_forward.37} parent=5 // pred_fallthru
      _
    %p274 = scmp.lt.s32.totalorder %s15, 2
    // Predicated region
    $region45: #{hand2d_to_3d_forward.37} parent=5 // pred_check
      %p275 = pneg %p274
    $region46: #{hand2d_to_3d_forward.37} parent=5 // pred_check_branch
      %277 = sbr.rel (%p275) target = $region48
    $region47: #{hand2d_to_3d_forward.37} parent=5 // pred_region
      // Predicated region
      $region49: #{hand2d_to_3d_forward.37} parent=47 // pred_check
        %p278 = pneg %p35
      $region50: #{hand2d_to_3d_forward.37} parent=47 // pred_check_branch
        %280 = sbr.rel (%p278) target = $region52
      $region51: #{hand2d_to_3d_forward.37} parent=47 // pred_region
        %p281 = scmp.lt.s32.totalorder %s15, 1
        %s282 = scalar_select %p281, %s15, 1
        %s283 = smul.addr %s282, 4
        %s284 = smul.addr %s283, 8
        %s285 = scalar_lea.vmem %s0, %s284
      $region52: #{hand2d_to_3d_forward.37} parent=47 // pred_fallthru
        _
    $region48: #{hand2d_to_3d_forward.37} parent=5 // pred_fallthru
      _
    %p286 = scmp.le.s32.totalorder 1, %s15
    %p287 = scmp.lt.s32.totalorder %s15, 3
    %p288 = pnand %p286, %p287
    %p289 = pneg %p288
    // Predicated region
    $region53: #{hand2d_to_3d_forward.37} parent=5 // pred_check
      _
    $region54: #{hand2d_to_3d_forward.37} parent=5 // pred_check_branch
      %291 = sbr.rel (%p288) target = $region56
    $region55: #{hand2d_to_3d_forward.37} parent=5 // pred_region
      %s292 = ssub.s32 %s15, 1
      %p293 = scmp.lt.s32.totalorder %s20, 1
      %s294 = scalar_select %p293, %s20, 1
      %s295 = smul.addr %s294, 4
      %s296 = smul.addr %s295, 8
      %s297 = scalar_lea.vmem %s0, %s296
      %p298 = pneg %p41
      %p299 = pneg %p38
      %p300 = pneg %p62
      %p301 = pneg %p59
      %p302 = pneg %p83
      %p303 = pneg %p80
      %p304 = pneg %p104
      %p305 = pneg %p101
      %p306 = pneg %p125
      %p307 = pneg %p122
      %p308 = pneg %p146
      %p309 = pneg %p143
      %p310 = pneg %p167
      %p311 = pneg %p164
      %p312 = pneg %p188
      %p313 = pneg %p185
      %p314 = pneg %p209
      %p315 = pneg %p206
      %p316 = pneg %p235
      %p317 = pneg %p232
      %p318 = scmp.lt.s32.totalorder %s20, 1
      %s319 = scalar_select %p318, %s20, 1
      %s320 = smul.addr %s319, 4
      %s321 = smul.addr %s320, 8
      %s322 = scalar_lea.vmem %s9, %s321
      %p323 = scmp.lt.s32.totalorder %s20, 1
      %s324 = scalar_select %p323, %s20, 1
      %s325 = smul.addr %s324, 4
      %s326 = smul.addr %s325, 8
      %s327 = scalar_lea.vmem %s0, %s326
      %p328 = scmp.lt.s32.totalorder %s20, 1
      %s329 = scalar_select %p328, %s20, 1
      %s330 = smul.addr %s329, 4
      %s331 = smul.addr %s330, 8
      %s332 = scalar_lea.vmem %s9, %s331
      %v333 = vld [vmem:[%s327] sm:$0xff]
      %v334 = vld [vmem:[%s327 + $0x8] sm:$0xff]
      %v335 = vld [vmem:[%s327 + $0x10] sm:$0xff]
      %v336 = vld [vmem:[%s327 + $0x18] sm:$0xff]
      %v337 = vld [vmem:[%s2] sm:$0xff]
      %v338 = vld [vmem:[%s2 + $0x8] sm:$0xff]
      %v339 = vld [vmem:[%s3] sm:$0xff]
      %v340 = vld [vmem:[%s3 + $0x8] sm:$0xff]
      %vm341 = vcmask 261120
      %v343 = vsel %vm341, %v337, 0
      %v346 = vsel %vm341, %v338, 0
      %348 = vmatprep.subr.mxu0 0.0
      %349 = vmatpush1.msra.mxu0 %v333
      %350 = vmatprep.subr.mxu0 0.0
      %351 = vmatpush1.msra.mxu0 %v334
      %352 = vmatprep.subr.mxu0 0.0
      %353 = vmatpush1.msra.mxu0 %v335
      %354 = vmatprep.subr.mxu0 0.0
      %355 = vmatpush1.msra.mxu0 %v336
      %356 = vmatprep.subr.mxu0 0.0
      %357 = vmatpush1.msra.mxu0 0.0
      %358 = vmatprep.subr.mxu0 0.0
      %359 = vmatpush1.msra.mxu0 0.0
      %360 = vmatprep.subr.mxu0 0.0
      %361 = vmatpush1.msra.mxu0 0.0
      %362 = vmatprep.subr.mxu0 0.0
      %363 = vmatpush1.msra.mxu0 0.0
      %364 = vmatprep.subr.mxu0 0.0
      %365 = vmatpush1.msra.mxu0 0.0
      %366 = vmatprep.subr.mxu0 0.0
      %367 = vmatpush1.msra.mxu0 0.0
      %368 = vmatprep.subr.mxu0 0.0
      %369 = vmatpush1.msra.mxu0 0.0
      %370 = vmatprep.subr.mxu0 0.0
      %371 = vmatpush1.msra.mxu0 0.0
      %372 = vmatprep.subr.mxu0 0.0
      %373 = vmatpush1.msra.mxu0 0.0
      %374 = vmatprep.subr.mxu0 0.0
      %375 = vmatpush1.msra.mxu0 0.0
      %376 = vmatprep.subr.mxu0 0.0
      %377 = vmatpush1.msra.mxu0 0.0
      %378 = vmatprep.subr.mxu0 0.0
      %379 = vmatpush1.msra.mxu0 0.0
      %380 = vmatprep.subr.mxu0 0.0
      %381 = vmatpush1.msra.mxu0 0.0
      %382 = vmatprep.subr.mxu0 0.0
      %383 = vmatpush1.msra.mxu0 0.0
      %384 = vmatprep.subr.mxu0 0.0
      %385 = vmatpush1.msra.mxu0 0.0
      %386 = vmatprep.subr.mxu0 0.0
      %387 = vmatpush1.msra.mxu0 0.0
      %388 = vmatprep.subr.mxu0 0.0
      %389 = vmatpush1.msra.mxu0 0.0
      %390 = vmatprep.subr.mxu0 0.0
      %391 = vmatpush1.msra.mxu0 0.0
      %392 = vmatprep.subr.mxu0 0.0
      %393 = vmatpush1.msra.mxu0 0.0
      %394 = vmatprep.subr.mxu0 0.0
      %395 = vmatpush1.msra.mxu0 0.0
      %396 = vmatprep.subr.mxu0 0.0
      %397 = vmatpush1.msra.mxu0 0.0
      %398 = vmatprep.subr.mxu0 0.0
      %399 = vmatpush1.msra.mxu0 0.0
      %400 = vmatprep.subr.mxu0 0.0
      %401 = vmatpush1.msra.mxu0 0.0
      %402 = vmatprep.subr.mxu0 0.0
      %403 = vmatpush1.msra.mxu0 0.0
      %404 = vmatprep.subr.mxu0 0.0
      %405 = vmatpush1.msra.mxu0 0.0
      %406 = vmatprep.subr.mxu0 0.0
      %407 = vmatpush1.msra.mxu0 0.0
      %408 = vmatprep.subr.mxu0 0.0
      %409 = vmatpush1.msra.mxu0 0.0
      %410 = vmatprep.subr.mxu0 0.0
      %411 = vmatpush1.msra.mxu0 0.0
      %412 = vmatprep.mubr.f32.mxu0 0.0
      %413 = vmatmul.mubr.f32.gmra.mrb[0].mxu0 %v343
      %v414 = vpop.f32.mrb[0].mxu0
      %v415 = vadd.f32 %v339, %v414
      %v416 = vpop.f32.mrb[0].mxu0
      %417 = vmatprep.mubr.f32.mxu0 0.0
      %418 = vmatmul.mubr.f32.gmra.mrb[0].mxu0 %v346
      %v419 = vpop.f32.mrb[0].mxu0
      %v420 = vadd.f32 %v340, %v419
      %v421 = vpop.f32.mrb[0].mxu0
      %422 = vdwg.mxu0
      %v423 = vmax.f32 %v415, 0.0
      %v424 = vmax.f32 %v420, 0.0
      %s425 = scalar_lea.vmem %s4, 64
      %v426 = vld [vmem:[%s425] sm:$0xff]
      %v427 = vld [vmem:[%s425 + $0x8] sm:$0xff]
      %v428 = vld [vmem:[%s5] sm:$0xff]
      %v429 = vld [vmem:[%s5 + $0x8] sm:$0xff]
      %vm430 = vcmask 130048
      %v432 = vsel %vm430, %v426, 0
      %v435 = vsel %vm430, %v427, 0
      %437 = vmatprep.subr.mxu0 0.0
      %438 = vmatpush1.msra.mxu0 %v423
      %439 = vmatprep.subr.mxu0 0.0
      %440 = vmatpush1.msra.mxu0 %v424
      %441 = vmatprep.subr.mxu0 0.0
      %442 = vmatpush1.msra.mxu0 0.0
      %443 = vmatprep.subr.mxu0 0.0
      %444 = vmatpush1.msra.mxu0 0.0
      %445 = vmatprep.subr.mxu0 0.0
      %446 = vmatpush1.msra.mxu0 0.0
      %447 = vmatprep.subr.mxu0 0.0
      %448 = vmatpush1.msra.mxu0 0.0
      %449 = vmatprep.subr.mxu0 0.0
      %450 = vmatpush1.msra.mxu0 0.0
      %451 = vmatprep.subr.mxu0 0.0
      %452 = vmatpush1.msra.mxu0 0.0
      %453 = vmatprep.subr.mxu0 0.0
      %454 = vmatpush1.msra.mxu0 0.0
      %455 = vmatprep.subr.mxu0 0.0
      %456 = vmatpush1.msra.mxu0 0.0
      %457 = vmatprep.subr.mxu0 0.0
      %458 = vmatpush1.msra.mxu0 0.0
      %459 = vmatprep.subr.mxu0 0.0
      %460 = vmatpush1.msra.mxu0 0.0
      %461 = vmatprep.subr.mxu0 0.0
      %462 = vmatpush1.msra.mxu0 0.0
      %463 = vmatprep.subr.mxu0 0.0
      %464 = vmatpush1.msra.mxu0 0.0
      %465 = vmatprep.subr.mxu0 0.0
      %466 = vmatpush1.msra.mxu0 0.0
      %467 = vmatprep.subr.mxu0 0.0
      %468 = vmatpush1.msra.mxu0 0.0
      %469 = vmatprep.subr.mxu0 0.0
      %470 = vmatpush1.msra.mxu0 0.0
      %471 = vmatprep.subr.mxu0 0.0
      %472 = vmatpush1.msra.mxu0 0.0
      %473 = vmatprep.subr.mxu0 0.0
      %474 = vmatpush1.msra.mxu0 0.0
      %475 = vmatprep.subr.mxu0 0.0
      %476 = vmatpush1.msra.mxu0 0.0
      %477 = vmatprep.subr.mxu0 0.0
      %478 = vmatpush1.msra.mxu0 0.0
      %479 = vmatprep.subr.mxu0 0.0
      %480 = vmatpush1.msra.mxu0 0.0
      %481 = vmatprep.subr.mxu0 0.0
      %482 = vmatpush1.msra.mxu0 0.0
      %483 = vmatprep.subr.mxu0 0.0
      %484 = vmatpush1.msra.mxu0 0.0
      %485 = vmatprep.subr.mxu0 0.0
      %486 = vmatpush1.msra.mxu0 0.0
      %487 = vmatprep.subr.mxu0 0.0
      %488 = vmatpush1.msra.mxu0 0.0
      %489 = vmatprep.subr.mxu0 0.0
      %490 = vmatpush1.msra.mxu0 0.0
      %491 = vmatprep.subr.mxu0 0.0
      %492 = vmatpush1.msra.mxu0 0.0
      %493 = vmatprep.subr.mxu0 0.0
      %494 = vmatpush1.msra.mxu0 0.0
      %495 = vmatprep.subr.mxu0 0.0
      %496 = vmatpush1.msra.mxu0 0.0
      %497 = vmatprep.subr.mxu0 0.0
      %498 = vmatpush1.msra.mxu0 0.0
      %499 = vmatprep.subr.mxu0 0.0
      %500 = vmatpush1.msra.mxu0 0.0
      %501 = vmatprep.mubr.f32.mxu0 0.0
      %502 = vmatmul.mubr.f32.gmra.mrb[0].mxu0 %v432
      %v503 = vpop.f32.mrb[0].mxu0
      %v504 = vadd.f32 %v428, %v503
      %v505 = vpop.f32.mrb[0].mxu0
      %506 = vmatprep.mubr.f32.mxu0 0.0
      %507 = vmatmul.mubr.f32.gmra.mrb[0].mxu0 %v435
      %v508 = vpop.f32.mrb[0].mxu0
      %v509 = vadd.f32 %v429, %v508
      %v510 = vpop.f32.mrb[0].mxu0
      %511 = vdwg.mxu0
      %v512 = vmax.f32 %v504, 0.0
      %v513 = vmax.f32 %v509, 0.0
      %v514 = vld [vmem:[%s6] sm:$0xff]
      %v515 = vld [vmem:[%s6 + $0x8] sm:$0xff]
      %v516 = vld [vmem:[%s6 + $0x10] sm:$0xff]
      %v517 = vld [vmem:[%s6 + $0x18] sm:$0xff]
      %v518 = vld [vmem:[%s7] sm:$0xff]
      %v519 = vld [vmem:[%s7 + $0x8] sm:$0xff]
      %v520 = vld [vmem:[%s7 + $0x10] sm:$0xff]
      %v521 = vld [vmem:[%s7 + $0x18] sm:$0xff]
      %v523 = vsel %vm430, %v514, 0
      %v526 = vsel %vm430, %v515, 0
      %v529 = vsel %vm430, %v516, 0
      %v532 = vsel %vm430, %v517, 0
      %534 = vmatprep.subr.mxu0 0.0
      %535 = vmatpush1.msra.mxu0 %v512
      %536 = vmatprep.subr.mxu0 0.0
      %537 = vmatpush1.msra.mxu0 %v513
      %538 = vmatprep.subr.mxu0 0.0
      %539 = vmatpush1.msra.mxu0 0.0
      %540 = vmatprep.subr.mxu0 0.0
      %541 = vmatpush1.msra.mxu0 0.0
      %542 = vmatprep.subr.mxu0 0.0
      %543 = vmatpush1.msra.mxu0 0.0
      %544 = vmatprep.subr.mxu0 0.0
      %545 = vmatpush1.msra.mxu0 0.0
      %546 = vmatprep.subr.mxu0 0.0
      %547 = vmatpush1.msra.mxu0 0.0
      %548 = vmatprep.subr.mxu0 0.0
      %549 = vmatpush1.msra.mxu0 0.0
      %550 = vmatprep.subr.mxu0 0.0
      %551 = vmatpush1.msra.mxu0 0.0
      %552 = vmatprep.subr.mxu0 0.0
      %553 = vmatpush1.msra.mxu0 0.0
      %554 = vmatprep.subr.mxu0 0.0
      %555 = vmatpush1.msra.mxu0 0.0
      %556 = vmatprep.subr.mxu0 0.0
      %557 = vmatpush1.msra.mxu0 0.0
      %558 = vmatprep.subr.mxu0 0.0
      %559 = vmatpush1.msra.mxu0 0.0
      %560 = vmatprep.subr.mxu0 0.0
      %561 = vmatpush1.msra.mxu0 0.0
      %562 = vmatprep.subr.mxu0 0.0
      %563 = vmatpush1.msra.mxu0 0.0
      %564 = vmatprep.subr.mxu0 0.0
      %565 = vmatpush1.msra.mxu0 0.0
      %566 = vmatprep.subr.mxu0 0.0
      %567 = vmatpush1.msra.mxu0 0.0
      %568 = vmatprep.subr.mxu0 0.0
      %569 = vmatpush1.msra.mxu0 0.0
      %570 = vmatprep.subr.mxu0 0.0
      %571 = vmatpush1.msra.mxu0 0.0
      %572 = vmatprep.subr.mxu0 0.0
      %573 = vmatpush1.msra.mxu0 0.0
      %574 = vmatprep.subr.mxu0 0.0
      %575 = vmatpush1.msra.mxu0 0.0
      %576 = vmatprep.subr.mxu0 0.0
      %577 = vmatpush1.msra.mxu0 0.0
      %578 = vmatprep.subr.mxu0 0.0
      %579 = vmatpush1.msra.mxu0 0.0
      %580 = vmatprep.subr.mxu0 0.0
      %581 = vmatpush1.msra.mxu0 0.0
      %582 = vmatprep.subr.mxu0 0.0
      %583 = vmatpush1.msra.mxu0 0.0
      %584 = vmatprep.subr.mxu0 0.0
      %585 = vmatpush1.msra.mxu0 0.0
      %586 = vmatprep.subr.mxu0 0.0
      %587 = vmatpush1.msra.mxu0 0.0
      %588 = vmatprep.subr.mxu0 0.0
      %589 = vmatpush1.msra.mxu0 0.0
      %590 = vmatprep.subr.mxu0 0.0
      %591 = vmatpush1.msra.mxu0 0.0
      %592 = vmatprep.subr.mxu0 0.0
      %593 = vmatpush1.msra.mxu0 0.0
      %594 = vmatprep.subr.mxu0 0.0
      %595 = vmatpush1.msra.mxu0 0.0
      %596 = vmatprep.subr.mxu0 0.0
      %597 = vmatpush1.msra.mxu0 0.0
      %598 = vmatprep.mubr.f32.mxu0 0.0
      %599 = vmatmul.mubr.f32.gmra.mrb[0].mxu0 %v523
      %v600 = vpop.f32.mrb[0].mxu0
      %v601 = vadd.f32 %v518, %v600
      %v602 = vpop.f32.mrb[0].mxu0
      %603 = vmatprep.mubr.f32.mxu0 0.0
      %604 = vmatmul.mubr.f32.gmra.mrb[0].mxu0 %v526
      %v605 = vpop.f32.mrb[0].mxu0
      %v606 = vadd.f32 %v519, %v605
      %v607 = vpop.f32.mrb[0].mxu0
      %608 = vmatprep.mubr.f32.mxu0 0.0
      %609 = vmatmul.mubr.f32.gmra.mrb[0].mxu0 %v529
      %v610 = vpop.f32.mrb[0].mxu0
      %v611 = vadd.f32 %v520, %v610
      %v612 = vpop.f32.mrb[0].mxu0
      %613 = vmatprep.mubr.f32.mxu0 0.0
      %614 = vmatmul.mubr.f32.gmra.mrb[0].mxu0 %v532
      %v615 = vpop.f32.mrb[0].mxu0
      %v616 = vadd.f32 %v521, %v615
      %v617 = vpop.f32.mrb[0].mxu0
      %618 = vdwg.mxu0
      %v619 = vld [vmem:[%s8] sm:$0xff]
      %v620 = vld [vmem:[%s8 + $0x8] sm:$0xff]
      %v621 = vld [vmem:[%s8 + $0x10] sm:$0xff]
      %v622 = vld [vmem:[%s8 + $0x18] sm:$0xff]
      %v623 = vmul.f32 %v619, %v333
      %v624 = vmul.f32 %v620, %v334
      %v625 = vmul.f32 %v621, %v335
      %v626 = vmul.f32 %v622, %v336
      %v627 = vadd.f32 %v601, %v623
      %v628 = vadd.f32 %v606, %v624
      %v629 = vadd.f32 %v611, %v625
      %v630 = vadd.f32 %v616, %v626
      %v631 = vmax.f32 %v627, 0.0
      %v632 = vmax.f32 %v628, 0.0
      %v633 = vmax.f32 %v629, 0.0
      %v634 = vmax.f32 %v630, 0.0
      %vm635 = vcmask 7168
      %636 = vst.msk [vmem:[%s332] sm:$0xff] %vm635, %v631
      %637 = vst.msk [vmem:[%s332 + $0x8] sm:$0xff] %vm635, %v632
      %638 = vst.msk [vmem:[%s332 + $0x10] sm:$0xff] %vm635, %v633
      %639 = vst.msk [vmem:[%s332 + $0x18] sm:$0xff] %vm635, %v634
      %p640 = scmp.lt.s32.totalorder %s20, 1
      %s641 = scalar_select %p640, %s20, 1
      %s642 = smul.addr %s641, 4
      %s643 = smul.addr %s642, 8
      %s644 = scalar_lea.vmem %s9, %s643
      // Predicated region
      $region57: #{hand2d_to_3d_forward.37} parent=55 // pred_check
        %p645 = pneg %p232
      $region58: #{hand2d_to_3d_forward.37} parent=55 // pred_check_branch
        %647 = sbr.rel (%p645) target = $region60
      $region59: #{hand2d_to_3d_forward.37} parent=55 // pred_region
        _
      $region60: #{hand2d_to_3d_forward.37} parent=55 // pred_fallthru
        _
    $region56: #{hand2d_to_3d_forward.37} parent=5 // pred_fallthru
      _
    %p648 = scmp.le.s32.totalorder 2, %s15
    // Predicated region
    $region61: #{hand2d_to_3d_forward.37} parent=5 // pred_check
      %p649 = pneg %p648
    $region62: #{hand2d_to_3d_forward.37} parent=5 // pred_check_branch
      %651 = sbr.rel (%p649) target = $region64
    $region63: #{hand2d_to_3d_forward.37} parent=5 // pred_region
      %s652 = ssub.s32 %s15, 2
      // Predicated region
      $region65: #{hand2d_to_3d_forward.37} parent=63 // pred_check
        %p653 = pneg %p238
      $region66: #{hand2d_to_3d_forward.37} parent=63 // pred_check_branch
        %655 = sbr.rel (%p653) target = $region68
      $region67: #{hand2d_to_3d_forward.37} parent=63 // pred_region
        %p656 = scmp.lt.s32.totalorder %s21, 1
        %s657 = scalar_select %p656, %s21, 1
        %s658 = smul.addr %s657, 4
        %s659 = smul.addr %s658, 8
        %s660 = scalar_lea.vmem %s9, %s659
      $region68: #{hand2d_to_3d_forward.37} parent=63 // pred_fallthru
        _
    $region64: #{hand2d_to_3d_forward.37} parent=5 // pred_fallthru
      _
  $region6: #{hand2d_to_3d_forward.37} parent=0 // loop_footer
    %s19 = sadd.s32 1, %s15
  $region7: #{hand2d_to_3d_forward.37} parent=0 // loop_footer_branch
    %14 = sbr.rel target = $region3
  $region8: #{hand2d_to_3d_forward.37} parent=0 // loop_exit
    _

// kernel: hand2d_to_3d_forward.44
$region0: #{hand2d_to_3d_forward.44}
  #allocation0 [shape = 'u32[]', space=smem, size = 0x4, offset = 0x4, fixed_abs, tag = 'smem constant byte address 0x4 - core index']
  #allocation1 [shape = 'u32[144,128]{1,0:T(1,128)}', space=vmem, size = 0x12000, scoped, tag = 'internal scratch']
  %s0 = inlined_call_operand.vmem [shape: f32[2,32,256], index: 0, kind: input, shape index: {}]
  %s1 = inlined_call_operand.vmem [shape: f32[16,32], index: 1, kind: input, shape index: {}]
  %s2 = inlined_call_operand.vmem [shape: f32[16,1], index: 2, kind: input, shape index: {}]
  %s3 = inlined_call_operand.vmem [shape: f32[32,32], index: 3, kind: input, shape index: {}]
  %s4 = inlined_call_operand.vmem [shape: f32[32,16], index: 4, kind: input, shape index: {}]
  %s5 = inlined_call_operand.vmem [shape: f32[32,1], index: 5, kind: input, shape index: {}]
  %s6 = inlined_call_operand.vmem [shape: f32[2,16,256], index: 6, kind: output, shape index: {0}]
  %s7 = inlined_call_operand.vmem [shape: f32[2,32,256], index: 7, kind: output, shape index: {1}]
  %8 = xla_tuple %s6, %s7
  %s9 = sld [smem:[#allocation0]]
  $region65: #{hand2d_to_3d_forward.44} parent=0
    _
  %s11 = ssub.s32 1, %s9
  %s12 = scalar_select 0, %s11, %s9
  loop: start=0, step=1, limit=4
  $region2: #{hand2d_to_3d_forward.44} parent=0 // loop_pre_header
    _
  $region3: #{hand2d_to_3d_forward.44} parent=0 // loop_header
    %s14 = sphi 0, %s18
    %p15 = scmp.ge.s32.totalorder %s14, 4
    %s24 = sphi 0, %s26
    %s27 = sphi 0, %s24
    %s28 = sphi 0, %s27
    %s44 = sphi 0, %s28
    %s48 = sphi 0, %s48
    %s50 = sphi 0, %s48
    %s51 = sphi 0, %s50
    %s65 = sphi 0, %s51
    %s69 = sphi 0, %s69
    %s71 = sphi 0, %s69
    %s72 = sphi 0, %s71
    %s86 = sphi 0, %s72
    %s90 = sphi 0, %s90
    %s92 = sphi 0, %s90
    %s93 = sphi 0, %s92
    %s107 = sphi 0, %s93
    %s111 = sphi 0, %s111
    %s113 = sphi 0, %s111
    %s114 = sphi 0, %s113
    %s128 = sphi 0, %s114
    %s132 = sphi 0, %s132
    %s134 = sphi 0, %s132
    %s135 = sphi 0, %s134
    %s149 = sphi 0, %s135
    %s155 = sphi 0, %s157
    %s158 = sphi 0, %s155
    %s159 = sphi 0, %s158
    %s175 = sphi 0, %s159
    %s181 = sphi 0, %s183
    %s184 = sphi 0, %s181
    %s185 = sphi 0, %s184
    %s201 = sphi 0, %s185
  $region4: #{hand2d_to_3d_forward.44} parent=0 // loop_header_branch
    %17 = sbr.rel (%p15) target = $region8
  $region5: #{hand2d_to_3d_forward.44} parent=0 // loop_body
    %s19 = ssub.s32 %s14, 1
    %s20 = ssub.s32 %s14, 2
    %s21 = sadd.s32 %s14, 1
    %s22 = ssub.s32 %s14, %s21
    %p23 = scmp.eq.s32.totalorder %s22, 0
    %s25 = sadd.s32 %s24, 1
    %s26 = scalar_select %p23, %s24, %s25
    %p29 = pneg %p23
    %p30 = scmp.eq.s32.totalorder %s14, 1
    %p31 = por %p29, %p30
    %p32 = scmp.ne.s32.totalorder %s24, %s27
    %p33 = scmp.eq.s32.totalorder %s14, 0
    %p34 = por %p32, %p33
    %p35 = scmp.ne.s32.totalorder %s24, %s27
    %p36 = scmp.eq.s32.totalorder %s19, 1
    %p37 = por %p35, %p36
    %p38 = scmp.ne.s32.totalorder %s27, %s28
    %p39 = scmp.eq.s32.totalorder %s19, 0
    %p40 = por %p38, %p39
    %p41 = scmp.ne.s32.totalorder %s27, %s28
    %p42 = scmp.eq.s32.totalorder %s20, 1
    %p43 = por %p41, %p42
    %p45 = scmp.ne.s32.totalorder %s28, %s44
    %p46 = scmp.eq.s32.totalorder %s20, 0
    %p47 = por %p45, %p46
    %s49 = sadd.s32 %s48, 1
    %p52 = scmp.eq.s32.totalorder %s14, 1
    %p53 = scmp.ne.s32.totalorder %s48, %s50
    %p54 = scmp.eq.s32.totalorder %s14, 0
    %p55 = por %p53, %p54
    %p56 = scmp.ne.s32.totalorder %s48, %s50
    %p57 = scmp.eq.s32.totalorder %s19, 1
    %p58 = por %p56, %p57
    %p59 = scmp.ne.s32.totalorder %s50, %s51
    %p60 = scmp.eq.s32.totalorder %s19, 0
    %p61 = por %p59, %p60
    %p62 = scmp.ne.s32.totalorder %s50, %s51
    %p63 = scmp.eq.s32.totalorder %s20, 1
    %p64 = por %p62, %p63
    %p66 = scmp.ne.s32.totalorder %s51, %s65
    %p67 = scmp.eq.s32.totalorder %s20, 0
    %p68 = por %p66, %p67
    %s70 = sadd.s32 %s69, 1
    %p73 = scmp.eq.s32.totalorder %s14, 1
    %p74 = scmp.ne.s32.totalorder %s69, %s71
    %p75 = scmp.eq.s32.totalorder %s14, 0
    %p76 = por %p74, %p75
    %p77 = scmp.ne.s32.totalorder %s69, %s71
    %p78 = scmp.eq.s32.totalorder %s19, 1
    %p79 = por %p77, %p78
    %p80 = scmp.ne.s32.totalorder %s71, %s72
    %p81 = scmp.eq.s32.totalorder %s19, 0
    %p82 = por %p80, %p81
    %p83 = scmp.ne.s32.totalorder %s71, %s72
    %p84 = scmp.eq.s32.totalorder %s20, 1
    %p85 = por %p83, %p84
    %p87 = scmp.ne.s32.totalorder %s72, %s86
    %p88 = scmp.eq.s32.totalorder %s20, 0
    %p89 = por %p87, %p88
    %s91 = sadd.s32 %s90, 1
    %p94 = scmp.eq.s32.totalorder %s14, 1
    %p95 = scmp.ne.s32.totalorder %s90, %s92
    %p96 = scmp.eq.s32.totalorder %s14, 0
    %p97 = por %p95, %p96
    %p98 = scmp.ne.s32.totalorder %s90, %s92
    %p99 = scmp.eq.s32.totalorder %s19, 1
    %p100 = por %p98, %p99
    %p101 = scmp.ne.s32.totalorder %s92, %s93
    %p102 = scmp.eq.s32.totalorder %s19, 0
    %p103 = por %p101, %p102
    %p104 = scmp.ne.s32.totalorder %s92, %s93
    %p105 = scmp.eq.s32.totalorder %s20, 1
    %p106 = por %p104, %p105
    %p108 = scmp.ne.s32.totalorder %s93, %s107
    %p109 = scmp.eq.s32.totalorder %s20, 0
    %p110 = por %p108, %p109
    %s112 = sadd.s32 %s111, 1
    %p115 = scmp.eq.s32.totalorder %s14, 1
    %p116 = scmp.ne.s32.totalorder %s111, %s113
    %p117 = scmp.eq.s32.totalorder %s14, 0
    %p118 = por %p116, %p117
    %p119 = scmp.ne.s32.totalorder %s111, %s113
    %p120 = scmp.eq.s32.totalorder %s19, 1
    %p121 = por %p119, %p120
    %p122 = scmp.ne.s32.totalorder %s113, %s114
    %p123 = scmp.eq.s32.totalorder %s19, 0
    %p124 = por %p122, %p123
    %p125 = scmp.ne.s32.totalorder %s113, %s114
    %p126 = scmp.eq.s32.totalorder %s20, 1
    %p127 = por %p125, %p126
    %p129 = scmp.ne.s32.totalorder %s114, %s128
    %p130 = scmp.eq.s32.totalorder %s20, 0
    %p131 = por %p129, %p130
    %s133 = sadd.s32 %s132, 1
    %p136 = scmp.eq.s32.totalorder %s14, 1
    %p137 = scmp.ne.s32.totalorder %s132, %s134
    %p138 = scmp.eq.s32.totalorder %s14, 0
    %p139 = por %p137, %p138
    %p140 = scmp.ne.s32.totalorder %s132, %s134
    %p141 = scmp.eq.s32.totalorder %s19, 1
    %p142 = por %p140, %p141
    %p143 = scmp.ne.s32.totalorder %s134, %s135
    %p144 = scmp.eq.s32.totalorder %s19, 0
    %p145 = por %p143, %p144
    %p146 = scmp.ne.s32.totalorder %s134, %s135
    %p147 = scmp.eq.s32.totalorder %s20, 1
    %p148 = por %p146, %p147
    %p150 = scmp.ne.s32.totalorder %s135, %s149
    %p151 = scmp.eq.s32.totalorder %s20, 0
    %p152 = por %p150, %p151
    %s153 = ssub.s32 %s14, %s21
    %p154 = scmp.eq.s32.totalorder %s153, 0
    %s156 = sadd.s32 %s155, 1
    %s157 = scalar_select %p154, %s155, %s156
    %p160 = pneg %p154
    %p161 = scmp.eq.s32.totalorder %s14, 1
    %p162 = por %p160, %p161
    %p163 = scmp.ne.s32.totalorder %s155, %s158
    %p164 = scmp.eq.s32.totalorder %s14, 0
    %p165 = por %p163, %p164
    %p166 = scmp.ne.s32.totalorder %s155, %s158
    %p167 = scmp.eq.s32.totalorder %s19, 1
    %p168 = por %p166, %p167
    %p169 = scmp.ne.s32.totalorder %s158, %s159
    %p170 = scmp.eq.s32.totalorder %s19, 0
    %p171 = por %p169, %p170
    %p172 = scmp.ne.s32.totalorder %s158, %s159
    %p173 = scmp.eq.s32.totalorder %s20, 1
    %p174 = por %p172, %p173
    %p176 = scmp.ne.s32.totalorder %s159, %s175
    %p177 = scmp.eq.s32.totalorder %s20, 0
    %p178 = por %p176, %p177
    %s179 = ssub.s32 %s14, %s21
    %p180 = scmp.eq.s32.totalorder %s179, 0
    %s182 = sadd.s32 %s181, 1
    %s183 = scalar_select %p180, %s181, %s182
    %p186 = pneg %p180
    %p187 = scmp.eq.s32.totalorder %s14, 1
    %p188 = por %p186, %p187
    %p189 = scmp.ne.s32.totalorder %s181, %s184
    %p190 = scmp.eq.s32.totalorder %s14, 0
    %p191 = por %p189, %p190
    %p192 = scmp.ne.s32.totalorder %s181, %s184
    %p193 = scmp.eq.s32.totalorder %s19, 1
    %p194 = por %p192, %p193
    %p195 = scmp.ne.s32.totalorder %s184, %s185
    %p196 = scmp.eq.s32.totalorder %s19, 0
    %p197 = por %p195, %p196
    %p198 = scmp.ne.s32.totalorder %s184, %s185
    %p199 = scmp.eq.s32.totalorder %s20, 1
    %p200 = por %p198, %p199
    %p202 = scmp.ne.s32.totalorder %s185, %s201
    %p203 = scmp.eq.s32.totalorder %s20, 0
    %p204 = por %p202, %p203
    %p205 = scmp.le.s32.totalorder 1, %s14
    %p206 = scmp.lt.s32.totalorder %s14, 3
    %p207 = pnand %p205, %p206
    %p208 = pneg %p207
    // Predicated region
    $region9: #{hand2d_to_3d_forward.44} parent=5 // pred_check
      _
    $region10: #{hand2d_to_3d_forward.44} parent=5 // pred_check_branch
      %210 = sbr.rel (%p207) target = $region12
    $region11: #{hand2d_to_3d_forward.44} parent=5 // pred_region
      %s211 = ssub.s32 %s14, 1
      // Predicated region
      $region13: #{hand2d_to_3d_forward.44} parent=11 // pred_check
        %p212 = pneg %p61
      $region14: #{hand2d_to_3d_forward.44} parent=11 // pred_check_branch
        %214 = sbr.rel (%p212) target = $region16
      $region15: #{hand2d_to_3d_forward.44} parent=11 // pred_region
        _
      $region16: #{hand2d_to_3d_forward.44} parent=11 // pred_fallthru
        _
      // Predicated region
      $region17: #{hand2d_to_3d_forward.44} parent=11 // pred_check
        %p215 = pneg %p82
      $region18: #{hand2d_to_3d_forward.44} parent=11 // pred_check_branch
        %217 = sbr.rel (%p215) target = $region20
      $region19: #{hand2d_to_3d_forward.44} parent=11 // pred_region
        _
      $region20: #{hand2d_to_3d_forward.44} parent=11 // pred_fallthru
        _
      // Predicated region
      $region21: #{hand2d_to_3d_forward.44} parent=11 // pred_check
        %p218 = pneg %p103
      $region22: #{hand2d_to_3d_forward.44} parent=11 // pred_check_branch
        %220 = sbr.rel (%p218) target = $region24
      $region23: #{hand2d_to_3d_forward.44} parent=11 // pred_region
        _
      $region24: #{hand2d_to_3d_forward.44} parent=11 // pred_fallthru
        _
      // Predicated region
      $region25: #{hand2d_to_3d_forward.44} parent=11 // pred_check
        %p221 = pneg %p124
      $region26: #{hand2d_to_3d_forward.44} parent=11 // pred_check_branch
        %223 = sbr.rel (%p221) target = $region28
      $region27: #{hand2d_to_3d_forward.44} parent=11 // pred_region
        _
      $region28: #{hand2d_to_3d_forward.44} parent=11 // pred_fallthru
        _
      // Predicated region
      $region29: #{hand2d_to_3d_forward.44} parent=11 // pred_check
        %p224 = pneg %p145
      $region30: #{hand2d_to_3d_forward.44} parent=11 // pred_check_branch
        %226 = sbr.rel (%p224) target = $region32
      $region31: #{hand2d_to_3d_forward.44} parent=11 // pred_region
        _
      $region32: #{hand2d_to_3d_forward.44} parent=11 // pred_fallthru
        _
    $region12: #{hand2d_to_3d_forward.44} parent=5 // pred_fallthru
      _
    %p227 = scmp.lt.s32.totalorder %s14, 2
    // Predicated region
    $region33: #{hand2d_to_3d_forward.44} parent=5 // pred_check
      %p228 = pneg %p227
    $region34: #{hand2d_to_3d_forward.44} parent=5 // pred_check_branch
      %230 = sbr.rel (%p228) target = $region36
    $region35: #{hand2d_to_3d_forward.44} parent=5 // pred_region
      // Predicated region
      $region37: #{hand2d_to_3d_forward.44} parent=35 // pred_check
        %p231 = pneg %p34
      $region38: #{hand2d_to_3d_forward.44} parent=35 // pred_check_branch
        %233 = sbr.rel (%p231) target = $region40
      $region39: #{hand2d_to_3d_forward.44} parent=35 // pred_region
        %p234 = scmp.lt.s32.totalorder %s14, 1
        %s235 = scalar_select %p234, %s14, 1
        %s236 = smul.addr %s235, 8
        %s237 = smul.addr %s236, 8
        %s238 = scalar_lea.vmem %s0, %s237
      $region40: #{hand2d_to_3d_forward.44} parent=35 // pred_fallthru
        _
    $region36: #{hand2d_to_3d_forward.44} parent=5 // pred_fallthru
      _
    %p239 = scmp.le.s32.totalorder 1, %s14
    %p240 = scmp.lt.s32.totalorder %s14, 3
    %p241 = pnand %p239, %p240
    %p242 = pneg %p241
    // Predicated region
    $region41: #{hand2d_to_3d_forward.44} parent=5 // pred_check
      _
    $region42: #{hand2d_to_3d_forward.44} parent=5 // pred_check_branch
      %244 = sbr.rel (%p241) target = $region44
    $region43: #{hand2d_to_3d_forward.44} parent=5 // pred_region
      %s245 = ssub.s32 %s14, 1
      %p246 = scmp.lt.s32.totalorder %s19, 1
      %s247 = scalar_select %p246, %s19, 1
      %s248 = smul.addr %s247, 8
      %s249 = smul.addr %s248, 8
      %s250 = scalar_lea.vmem %s0, %s249
      %p251 = pneg %p40
      %p252 = pneg %p37
      %p253 = pneg %p61
      %p254 = pneg %p58
      %p255 = pneg %p82
      %p256 = pneg %p79
      %p257 = pneg %p103
      %p258 = pneg %p100
      %p259 = pneg %p124
      %p260 = pneg %p121
      %p261 = pneg %p145
      %p262 = pneg %p142
      %p263 = pneg %p171
      %p264 = pneg %p168
      %p265 = scmp.lt.s32.totalorder %s19, 1
      %s266 = scalar_select %p265, %s19, 1
      %s267 = smul.addr %s266, 4
      %s268 = smul.addr %s267, 8
      %s269 = scalar_lea.vmem %s6, %s268
      %p270 = pneg %p197
      %p271 = pneg %p194
      %p272 = scmp.lt.s32.totalorder %s19, 1
      %s273 = scalar_select %p272, %s19, 1
      %s274 = smul.addr %s273, 8
      %s275 = smul.addr %s274, 8
      %s276 = scalar_lea.vmem %s7, %s275
      %p277 = scmp.lt.s32.totalorder %s19, 1
      %s278 = scalar_select %p277, %s19, 1
      %s279 = smul.addr %s278, 8
      %s280 = smul.addr %s279, 8
      %s281 = scalar_lea.vmem %s0, %s280
      %p282 = scmp.lt.s32.totalorder %s19, 1
      %s283 = scalar_select %p282, %s19, 1
      %s284 = smul.addr %s283, 4
      %s285 = smul.addr %s284, 8
      %s286 = scalar_lea.vmem %s6, %s285
      %p287 = scmp.lt.s32.totalorder %s19, 1
      %s288 = scalar_select %p287, %s19, 1
      %s289 = smul.addr %s288, 8
      %s290 = smul.addr %s289, 8
      %s291 = scalar_lea.vmem %s7, %s290
      %v292 = vld [vmem:[%s281] sm:$0xff]
      %v293 = vld [vmem:[%s281 + $0x8] sm:$0xff]
      %v294 = vld [vmem:[%s281 + $0x10] sm:$0xff]
      %v295 = vld [vmem:[%s281 + $0x18] sm:$0xff]
      %v296 = vld [vmem:[%s281 + $0x20] sm:$0xff]
      %v297 = vld [vmem:[%s281 + $0x28] sm:$0xff]
      %v298 = vld [vmem:[%s281 + $0x30] sm:$0xff]
      %v299 = vld [vmem:[%s281 + $0x38] sm:$0xff]
      %v300 = vld [vmem:[%s1] sm:$0xff]
      %v301 = vld [vmem:[%s1 + $0x8] sm:$0xff]
      %v302 = vld [vmem:[%s2] sm:$0xff]
      %v303 = vld [vmem:[%s2 + $0x8] sm:$0xff]
      %305 = vset.pattern.permute.xlu0 0
      %306 = vperm.xlu0 %305, %v302
      %v307 = vpop.permute.xlu0 %306
      %310 = vset.pattern.permute.xlu0 0
      %311 = vperm.xlu0 %310, %v303
      %v312 = vpop.permute.xlu0 %311
      %vm314 = vcmask 261120
      %v316 = vsel %vm314, %v300, 0
      %v319 = vsel %vm314, %v301, 0
      %321 = vmatprep.subr.mxu0 %v293
      %322 = vmatpush1.msra.mxu0 %v292
      %323 = vmatprep.subr.mxu0 %v295
      %324 = vmatpush1.msra.mxu0 %v294
      %325 = vmatprep.subr.mxu0 %v297
      %326 = vmatpush1.msra.mxu0 %v296
      %327 = vmatprep.subr.mxu0 %v299
      %328 = vmatpush1.msra.mxu0 %v298
      %329 = vmatprep.subr.mxu0 0.0
      %330 = vmatpush1.msra.mxu0 0.0
      %331 = vmatprep.subr.mxu0 0.0
      %332 = vmatpush1.msra.mxu0 0.0
      %333 = vmatprep.subr.mxu0 0.0
      %334 = vmatpush1.msra.mxu0 0.0
      %335 = vmatprep.subr.mxu0 0.0
      %336 = vmatpush1.msra.mxu0 0.0
      %337 = vmatprep.subr.mxu0 0.0
      %338 = vmatpush1.msra.mxu0 0.0
      %339 = vmatprep.subr.mxu0 0.0
      %340 = vmatpush1.msra.mxu0 0.0
      %341 = vmatprep.subr.mxu0 0.0
      %342 = vmatpush1.msra.mxu0 0.0
      %343 = vmatprep.subr.mxu0 0.0
      %344 = vmatpush1.msra.mxu0 0.0
      %345 = vmatprep.subr.mxu0 0.0
      %346 = vmatpush1.msra.mxu0 0.0
      %347 = vmatprep.subr.mxu0 0.0
      %348 = vmatpush1.msra.mxu0 0.0
      %349 = vmatprep.subr.mxu0 0.0
      %350 = vmatpush1.msra.mxu0 0.0
      %351 = vmatprep.subr.mxu0 0.0
      %352 = vmatpush1.msra.mxu0 0.0
      %353 = vmatprep.subr.mxu0 0.0
      %354 = vmatpush1.msra.mxu0 0.0
      %355 = vmatprep.subr.mxu0 0.0
      %356 = vmatpush1.msra.mxu0 0.0
      %357 = vmatprep.subr.mxu0 0.0
      %358 = vmatpush1.msra.mxu0 0.0
      %359 = vmatprep.subr.mxu0 0.0
      %360 = vmatpush1.msra.mxu0 0.0
      %361 = vmatprep.subr.mxu0 0.0
      %362 = vmatpush1.msra.mxu0 0.0
      %363 = vmatprep.subr.mxu0 0.0
      %364 = vmatpush1.msra.mxu0 0.0
      %365 = vmatprep.subr.mxu0 0.0
      %366 = vmatpush1.msra.mxu0 0.0
      %367 = vmatprep.subr.mxu0 0.0
      %368 = vmatpush1.msra.mxu0 0.0
      %369 = vmatprep.subr.mxu0 0.0
      %370 = vmatpush1.msra.mxu0 0.0
      %371 = vmatprep.subr.mxu0 0.0
      %372 = vmatpush1.msra.mxu0 0.0
      %373 = vmatprep.subr.mxu0 0.0
      %374 = vmatpush1.msra.mxu0 0.0
      %375 = vmatprep.subr.mxu0 0.0
      %376 = vmatpush1.msra.mxu0 0.0
      %377 = vmatprep.subr.mxu0 0.0
      %378 = vmatpush1.msra.mxu0 0.0
      %379 = vmatprep.subr.mxu0 0.0
      %380 = vmatpush1.msra.mxu0 0.0
      %381 = vmatprep.subr.mxu0 0.0
      %382 = vmatpush1.msra.mxu0 0.0
      %383 = vmatprep.subr.mxu0 0.0
      %384 = vmatpush1.msra.mxu0 0.0
      %385 = vmatprep.mubr.f32.mxu0 0.0
      %386 = vmatmul.mubr.f32.gmra.mrb[0].mxu0 %v316
      %v387 = vpop.f32.mrb[0].mxu0
      %v388 = vadd.f32 %v307, %v387
      %v389 = vpop.f32.mrb[0].mxu0
      %v390 = vadd.f32 %v307, %v389
      %391 = vmatprep.mubr.f32.mxu0 0.0
      %392 = vmatmul.mubr.f32.gmra.mrb[0].mxu0 %v319
      %v393 = vpop.f32.mrb[0].mxu0
      %v394 = vadd.f32 %v312, %v393
      %v395 = vpop.f32.mrb[0].mxu0
      %v396 = vadd.f32 %v312, %v395
      %397 = vdwg.mxu0
      %v398 = vxor.u32 %v388, 2147483648
      %v399 = vxor.u32 %v390, 2147483648
      %v400 = vxor.u32 %v394, 2147483648
      %v401 = vxor.u32 %v396, 2147483648
      %v402 = vmul.f32 %v398, 1.442695
      %v403 = vpow.pop %v402
      %v404 = vmul.f32 %v399, 1.442695
      %v405 = vpow.pop %v404
      %v406 = vmul.f32 %v400, 1.442695
      %v407 = vpow.pop %v406
      %v408 = vmul.f32 %v401, 1.442695
      %v409 = vpow.pop %v408
      %v410 = vadd.f32 %v403, 1.0
      %v411 = vadd.f32 %v405, 1.0
      %v412 = vadd.f32 %v407, 1.0
      %v413 = vadd.f32 %v409, 1.0
      %v414 = vrcp.pop %v410
      %v415 = vmul.f32 1.0, %v414
      %v416 = vrcp.pop %v411
      %v417 = vmul.f32 1.0, %v416
      %v418 = vrcp.pop %v412
      %v419 = vmul.f32 1.0, %v418
      %v420 = vrcp.pop %v413
      %v421 = vmul.f32 1.0, %v420
      %v422 = vld [vmem:[%s3] sm:$0xff]
      %v423 = vld [vmem:[%s3 + $0x8] sm:$0xff]
      %v424 = vld [vmem:[%s3 + $0x10] sm:$0xff]
      %v425 = vld [vmem:[%s3 + $0x18] sm:$0xff]
      %v426 = vld [vmem:[%s4] sm:$0xff]
      %v427 = vld [vmem:[%s4 + $0x8] sm:$0xff]
      %v428 = vld [vmem:[%s4 + $0x10] sm:$0xff]
      %v429 = vld [vmem:[%s4 + $0x18] sm:$0xff]
      %vm430 = vcmask 130048
      %v432 = vsel %vm430, %v426, 0
      %v435 = vsel %vm430, %v427, 0
      %v438 = vsel %vm430, %v428, 0
      %v441 = vsel %vm430, %v429, 0
      %443 = vmatprep.subr.mxu0 %v417
      %444 = vmatpush1.msra.mxu0 %v415
      %445 = vmatprep.subr.mxu0 %v421
      %446 = vmatpush1.msra.mxu0 %v419
      %447 = vmatprep.subr.mxu0 0.0
      %448 = vmatpush1.msra.mxu0 0.0
      %449 = vmatprep.subr.mxu0 0.0
      %450 = vmatpush1.msra.mxu0 0.0
      %451 = vmatprep.subr.mxu0 0.0
      %452 = vmatpush1.msra.mxu0 0.0
      %453 = vmatprep.subr.mxu0 0.0
      %454 = vmatpush1.msra.mxu0 0.0
      %455 = vmatprep.subr.mxu0 0.0
      %456 = vmatpush1.msra.mxu0 0.0
      %457 = vmatprep.subr.mxu0 0.0
      %458 = vmatpush1.msra.mxu0 0.0
      %459 = vmatprep.subr.mxu0 0.0
      %460 = vmatpush1.msra.mxu0 0.0
      %461 = vmatprep.subr.mxu0 0.0
      %462 = vmatpush1.msra.mxu0 0.0
      %463 = vmatprep.subr.mxu0 0.0
      %464 = vmatpush1.msra.mxu0 0.0
      %465 = vmatprep.subr.mxu0 0.0
      %466 = vmatpush1.msra.mxu0 0.0
      %467 = vmatprep.subr.mxu0 0.0
      %468 = vmatpush1.msra.mxu0 0.0
      %469 = vmatprep.subr.mxu0 0.0
      %470 = vmatpush1.msra.mxu0 0.0
      %471 = vmatprep.subr.mxu0 0.0
      %472 = vmatpush1.msra.mxu0 0.0
      %473 = vmatprep.subr.mxu0 0.0
      %474 = vmatpush1.msra.mxu0 0.0
      %475 = vmatprep.subr.mxu0 0.0
      %476 = vmatpush1.msra.mxu0 0.0
      %477 = vmatprep.subr.mxu0 0.0
      %478 = vmatpush1.msra.mxu0 0.0
      %479 = vmatprep.subr.mxu0 0.0
      %480 = vmatpush1.msra.mxu0 0.0
      %481 = vmatprep.subr.mxu0 0.0
      %482 = vmatpush1.msra.mxu0 0.0
      %483 = vmatprep.subr.mxu0 0.0
      %484 = vmatpush1.msra.mxu0 0.0
      %485 = vmatprep.subr.mxu0 0.0
      %486 = vmatpush1.msra.mxu0 0.0
      %487 = vmatprep.subr.mxu0 0.0
      %488 = vmatpush1.msra.mxu0 0.0
      %489 = vmatprep.subr.mxu0 0.0
      %490 = vmatpush1.msra.mxu0 0.0
      %491 = vmatprep.subr.mxu0 0.0
      %492 = vmatpush1.msra.mxu0 0.0
      %493 = vmatprep.subr.mxu0 0.0
      %494 = vmatpush1.msra.mxu0 0.0
      %495 = vmatprep.subr.mxu0 0.0
      %496 = vmatpush1.msra.mxu0 0.0
      %497 = vmatprep.subr.mxu0 0.0
      %498 = vmatpush1.msra.mxu0 0.0
      %499 = vmatprep.subr.mxu0 0.0
      %500 = vmatpush1.msra.mxu0 0.0
      %501 = vmatprep.subr.mxu0 0.0
      %502 = vmatpush1.msra.mxu0 0.0
      %503 = vmatprep.subr.mxu0 0.0
      %504 = vmatpush1.msra.mxu0 0.0
      %505 = vmatprep.subr.mxu0 0.0
      %506 = vmatpush1.msra.mxu0 0.0
      %507 = vmatprep.mubr.f32.mxu0 0.0
      %508 = vmatmul.mubr.f32.gmra.mrb[0].mxu0 %v432
      %v509 = vpop.f32.mrb[0].mxu0
      %v510 = vadd.f32 0.0, %v509
      %v511 = vpop.f32.mrb[0].mxu0
      %v512 = vadd.f32 0.0, %v511
      %513 = vmatprep.mubr.f32.mxu0 0.0
      %514 = vmatmul.mubr.f32.gmra.mrb[0].mxu0 %v435
      %v515 = vpop.f32.mrb[0].mxu0
      %v516 = vadd.f32 0.0, %v515
      %v517 = vpop.f32.mrb[0].mxu0
      %v518 = vadd.f32 0.0, %v517
      %519 = vmatprep.mubr.f32.mxu0 0.0
      %520 = vmatmul.mubr.f32.gmra.mrb[0].mxu0 %v438
      %v521 = vpop.f32.mrb[0].mxu0
      %v522 = vadd.f32 0.0, %v521
      %v523 = vpop.f32.mrb[0].mxu0
      %v524 = vadd.f32 0.0, %v523
      %525 = vmatprep.mubr.f32.mxu0 0.0
      %526 = vmatmul.mubr.f32.gmra.mrb[0].mxu0 %v441
      %v527 = vpop.f32.mrb[0].mxu0
      %v528 = vadd.f32 0.0, %v527
      %v529 = vpop.f32.mrb[0].mxu0
      %v530 = vadd.f32 0.0, %v529
      %531 = vdwg.mxu0
      %v533 = vsel %vm314, %v422, 0
      %v536 = vsel %vm314, %v423, 0
      %v539 = vsel %vm314, %v424, 0
      %v542 = vsel %vm314, %v425, 0
      %544 = vmatprep.subr.mxu0 %v293
      %545 = vmatpush1.msra.mxu0 %v292
      %546 = vmatprep.subr.mxu0 %v295
      %547 = vmatpush1.msra.mxu0 %v294
      %548 = vmatprep.subr.mxu0 %v297
      %549 = vmatpush1.msra.mxu0 %v296
      %550 = vmatprep.subr.mxu0 %v299
      %551 = vmatpush1.msra.mxu0 %v298
      %552 = vmatprep.subr.mxu0 0.0
      %553 = vmatpush1.msra.mxu0 0.0
      %554 = vmatprep.subr.mxu0 0.0
      %555 = vmatpush1.msra.mxu0 0.0
      %556 = vmatprep.subr.mxu0 0.0
      %557 = vmatpush1.msra.mxu0 0.0
      %558 = vmatprep.subr.mxu0 0.0
      %559 = vmatpush1.msra.mxu0 0.0
      %560 = vmatprep.subr.mxu0 0.0
      %561 = vmatpush1.msra.mxu0 0.0
      %562 = vmatprep.subr.mxu0 0.0
      %563 = vmatpush1.msra.mxu0 0.0
      %564 = vmatprep.subr.mxu0 0.0
      %565 = vmatpush1.msra.mxu0 0.0
      %566 = vmatprep.subr.mxu0 0.0
      %567 = vmatpush1.msra.mxu0 0.0
      %568 = vmatprep.subr.mxu0 0.0
      %569 = vmatpush1.msra.mxu0 0.0
      %570 = vmatprep.subr.mxu0 0.0
      %571 = vmatpush1.msra.mxu0 0.0
      %572 = vmatprep.subr.mxu0 0.0
      %573 = vmatpush1.msra.mxu0 0.0
      %574 = vmatprep.subr.mxu0 0.0
      %575 = vmatpush1.msra.mxu0 0.0
      %576 = vmatprep.subr.mxu0 0.0
      %577 = vmatpush1.msra.mxu0 0.0
      %578 = vmatprep.subr.mxu0 0.0
      %579 = vmatpush1.msra.mxu0 0.0
      %580 = vmatprep.subr.mxu0 0.0
      %581 = vmatpush1.msra.mxu0 0.0
      %582 = vmatprep.subr.mxu0 0.0
      %583 = vmatpush1.msra.mxu0 0.0
      %584 = vmatprep.subr.mxu0 0.0
      %585 = vmatpush1.msra.mxu0 0.0
      %586 = vmatprep.subr.mxu0 0.0
      %587 = vmatpush1.msra.mxu0 0.0
      %588 = vmatprep.subr.mxu0 0.0
      %589 = vmatpush1.msra.mxu0 0.0
      %590 = vmatprep.subr.mxu0 0.0
      %591 = vmatpush1.msra.mxu0 0.0
      %592 = vmatprep.subr.mxu0 0.0
      %593 = vmatpush1.msra.mxu0 0.0
      %594 = vmatprep.subr.mxu0 0.0
      %595 = vmatpush1.msra.mxu0 0.0
      %596 = vmatprep.subr.mxu0 0.0
      %597 = vmatpush1.msra.mxu0 0.0
      %598 = vmatprep.subr.mxu0 0.0
      %599 = vmatpush1.msra.mxu0 0.0
      %600 = vmatprep.subr.mxu0 0.0
      %601 = vmatpush1.msra.mxu0 0.0
      %602 = vmatprep.subr.mxu0 0.0
      %603 = vmatpush1.msra.mxu0 0.0
      %604 = vmatprep.subr.mxu0 0.0
      %605 = vmatpush1.msra.mxu0 0.0
      %606 = vmatprep.subr.mxu0 0.0
      %607 = vmatpush1.msra.mxu0 0.0
      %608 = vmatprep.mubr.f32.mxu0 0.0
      %609 = vmatmul.mubr.f32.gmra.mrb[0].mxu0 %v533
      %v610 = vpop.f32.mrb[0].mxu0
      %v611 = vadd.f32 %v510, %v610
      %v612 = vpop.f32.mrb[0].mxu0
      %v613 = vadd.f32 %v512, %v612
      %614 = vmatprep.mubr.f32.mxu0 0.0
      %615 = vmatmul.mubr.f32.gmra.mrb[0].mxu0 %v536
      %v616 = vpop.f32.mrb[0].mxu0
      %v617 = vadd.f32 %v516, %v616
      %v618 = vpop.f32.mrb[0].mxu0
      %v619 = vadd.f32 %v518, %v618
      %620 = vmatprep.mubr.f32.mxu0 0.0
      %621 = vmatmul.mubr.f32.gmra.mrb[0].mxu0 %v539
      %v622 = vpop.f32.mrb[0].mxu0
      %v623 = vadd.f32 %v522, %v622
      %v624 = vpop.f32.mrb[0].mxu0
      %v625 = vadd.f32 %v524, %v624
      %626 = vmatprep.mubr.f32.mxu0 0.0
      %627 = vmatmul.mubr.f32.gmra.mrb[0].mxu0 %v542
      %v628 = vpop.f32.mrb[0].mxu0
      %v629 = vadd.f32 %v528, %v628
      %v630 = vpop.f32.mrb[0].mxu0
      %v631 = vadd.f32 %v530, %v630
      %632 = vdwg.mxu0
      %v633 = vld [vmem:[%s5] sm:$0xff]
      %v634 = vld [vmem:[%s5 + $0x8] sm:$0xff]
      %v635 = vld [vmem:[%s5 + $0x10] sm:$0xff]
      %v636 = vld [vmem:[%s5 + $0x18] sm:$0xff]
      %638 = vset.pattern.permute.xlu0 0
      %639 = vperm.xlu0 %638, %v633
      %v640 = vpop.permute.xlu0 %639
      %643 = vset.pattern.permute.xlu0 0
      %644 = vperm.xlu0 %643, %v634
      %v645 = vpop.permute.xlu0 %644
      %648 = vset.pattern.permute.xlu0 0
      %649 = vperm.xlu0 %648, %v635
      %v650 = vpop.permute.xlu0 %649
      %653 = vset.pattern.permute.xlu0 0
      %654 = vperm.xlu0 %653, %v636
      %v655 = vpop.permute.xlu0 %654
      %v657 = vadd.f32 %v611, %v640
      %v658 = vadd.f32 %v613, %v640
      %v659 = vadd.f32 %v617, %v645
      %v660 = vadd.f32 %v619, %v645
      %v661 = vadd.f32 %v623, %v650
      %v662 = vadd.f32 %v625, %v650
      %v663 = vadd.f32 %v629, %v655
      %v664 = vadd.f32 %v631, %v655
      %v665 = vmax.f32 %v657, 0.0
      %v666 = vmax.f32 %v658, 0.0
      %v667 = vmax.f32 %v659, 0.0
      %v668 = vmax.f32 %v660, 0.0
      %v669 = vmax.f32 %v661, 0.0
      %v670 = vmax.f32 %v662, 0.0
      %v671 = vmax.f32 %v663, 0.0
      %v672 = vmax.f32 %v664, 0.0
      %673 = vst [vmem:[%s286] sm:$0xff] %v415
      %674 = vst [vmem:[%s286 + $0x8] sm:$0xff] %v417
      %675 = vst [vmem:[%s286 + $0x10] sm:$0xff] %v419
      %676 = vst [vmem:[%s286 + $0x18] sm:$0xff] %v421
      %677 = vst [vmem:[%s291] sm:$0xff] %v665
      %678 = vst [vmem:[%s291 + $0x8] sm:$0xff] %v666
      %679 = vst [vmem:[%s291 + $0x10] sm:$0xff] %v667
      %680 = vst [vmem:[%s291 + $0x18] sm:$0xff] %v668
      %681 = vst [vmem:[%s291 + $0x20] sm:$0xff] %v669
      %682 = vst [vmem:[%s291 + $0x28] sm:$0xff] %v670
      %683 = vst [vmem:[%s291 + $0x30] sm:$0xff] %v671
      %684 = vst [vmem:[%s291 + $0x38] sm:$0xff] %v672
      %p685 = scmp.lt.s32.totalorder %s19, 1
      %s686 = scalar_select %p685, %s19, 1
      %s687 = smul.addr %s686, 4
      %s688 = smul.addr %s687, 8
      %s689 = scalar_lea.vmem %s6, %s688
      %p690 = scmp.lt.s32.totalorder %s19, 1
      %s691 = scalar_select %p690, %s19, 1
      %s692 = smul.addr %s691, 8
      %s693 = smul.addr %s692, 8
      %s694 = scalar_lea.vmem %s7, %s693
      // Predicated region
      $region45: #{hand2d_to_3d_forward.44} parent=43 // pred_check
        %p695 = pneg %p168
      $region46: #{hand2d_to_3d_forward.44} parent=43 // pred_check_branch
        %697 = sbr.rel (%p695) target = $region48
      $region47: #{hand2d_to_3d_forward.44} parent=43 // pred_region
        _
      $region48: #{hand2d_to_3d_forward.44} parent=43 // pred_fallthru
        _
      // Predicated region
      $region49: #{hand2d_to_3d_forward.44} parent=43 // pred_check
        %p698 = pneg %p194
      $region50: #{hand2d_to_3d_forward.44} parent=43 // pred_check_branch
        %700 = sbr.rel (%p698) target = $region52
      $region51: #{hand2d_to_3d_forward.44} parent=43 // pred_region
        _
      $region52: #{hand2d_to_3d_forward.44} parent=43 // pred_fallthru
        _
    $region44: #{hand2d_to_3d_forward.44} parent=5 // pred_fallthru
      _
    %p701 = scmp.le.s32.totalorder 2, %s14
    // Predicated region
    $region53: #{hand2d_to_3d_forward.44} parent=5 // pred_check
      %p702 = pneg %p701
    $region54: #{hand2d_to_3d_forward.44} parent=5 // pred_check_branch
      %704 = sbr.rel (%p702) target = $region56
    $region55: #{hand2d_to_3d_forward.44} parent=5 // pred_region
      %s705 = ssub.s32 %s14, 2
      // Predicated region
      $region57: #{hand2d_to_3d_forward.44} parent=55 // pred_check
        %p706 = pneg %p174
      $region58: #{hand2d_to_3d_forward.44} parent=55 // pred_check_branch
        %708 = sbr.rel (%p706) target = $region60
      $region59: #{hand2d_to_3d_forward.44} parent=55 // pred_region
        %p709 = scmp.lt.s32.totalorder %s20, 1
        %s710 = scalar_select %p709, %s20, 1
        %s711 = smul.addr %s710, 4
        %s712 = smul.addr %s711, 8
        %s713 = scalar_lea.vmem %s6, %s712
      $region60: #{hand2d_to_3d_forward.44} parent=55 // pred_fallthru
        _
      // Predicated region
      $region61: #{hand2d_to_3d_forward.44} parent=55 // pred_check
        %p714 = pneg %p200
      $region62: #{hand2d_to_3d_forward.44} parent=55 // pred_check_branch
        %716 = sbr.rel (%p714) target = $region64
      $region63: #{hand2d_to_3d_forward.44} parent=55 // pred_region
        %p717 = scmp.lt.s32.totalorder %s20, 1
        %s718 = scalar_select %p717, %s20, 1
        %s719 = smul.addr %s718, 8
        %s720 = smul.addr %s719, 8
        %s721 = scalar_lea.vmem %s7, %s720
      $region64: #{hand2d_to_3d_forward.44} parent=55 // pred_fallthru
        _
    $region56: #{hand2d_to_3d_forward.44} parent=5 // pred_fallthru
      _
  $region6: #{hand2d_to_3d_forward.44} parent=0 // loop_footer
    %s18 = sadd.s32 1, %s14
  $region7: #{hand2d_to_3d_forward.44} parent=0 // loop_footer_branch
    %13 = sbr.rel target = $region3
  $region8: #{hand2d_to_3d_forward.44} parent=0 // loop_exit
    _

// kernel: hand2d_to_3d_forward.30
$region0: #{hand2d_to_3d_forward.30}
  #allocation0 [shape = 'u32[]', space=smem, size = 0x4, offset = 0x4, fixed_abs, tag = 'smem constant byte address 0x4 - core index']
  #allocation1 [shape = 'u32[144,128]{1,0:T(1,128)}', space=vmem, size = 0x12000, scoped, tag = 'internal scratch']
  %s0 = inlined_call_operand.vmem [shape: f32[2,32,256], index: 0, kind: input, shape index: {}]
  %s1 = inlined_call_operand.vmem [shape: f32[9,1,256], index: 1, kind: input, shape index: {}]
  %s2 = inlined_call_operand.vmem [shape: f32[16,32], index: 2, kind: input, shape index: {}]
  %s3 = inlined_call_operand.vmem [shape: f32[16,1], index: 3, kind: input, shape index: {}]
  %s4 = inlined_call_operand.vmem [shape: f32[9,16,16], index: 4, kind: input, shape index: {}]
  %s5 = inlined_call_operand.vmem [shape: f32[16,1], index: 5, kind: input, shape index: {}]
  %s6 = inlined_call_operand.vmem [shape: f32[32,16], index: 6, kind: input, shape index: {}]
  %s7 = inlined_call_operand.vmem [shape: f32[32,1], index: 7, kind: input, shape index: {}]
  %s8 = inlined_call_operand.vmem [shape: f32[32,1], index: 8, kind: input, shape index: {}]
  %s9 = inlined_call_operand.vmem [shape: f32[2,32,256], index: 9, kind: output, shape index: {}]
  %s10 = sld [smem:[#allocation0]]
  $region69: #{hand2d_to_3d_forward.30} parent=0
    _
  %s12 = ssub.s32 1, %s10
  %s13 = scalar_select 0, %s12, %s10
  loop: start=0, step=1, limit=4
  $region2: #{hand2d_to_3d_forward.30} parent=0 // loop_pre_header
    _
  $region3: #{hand2d_to_3d_forward.30} parent=0 // loop_header
    %s15 = sphi 0, %s19
    %p16 = scmp.ge.s32.totalorder %s15, 4
    %s25 = sphi 0, %s27
    %s28 = sphi 0, %s25
    %s29 = sphi 0, %s28
    %s45 = sphi 0, %s29
    %s49 = sphi 0, %s49
    %s51 = sphi 0, %s49
    %s52 = sphi 0, %s51
    %s66 = sphi 0, %s52
    %s70 = sphi 0, %s70
    %s72 = sphi 0, %s70
    %s73 = sphi 0, %s72
    %s87 = sphi 0, %s73
    %s91 = sphi 0, %s91
    %s93 = sphi 0, %s91
    %s94 = sphi 0, %s93
    %s108 = sphi 0, %s94
    %s112 = sphi 0, %s112
    %s114 = sphi 0, %s112
    %s115 = sphi 0, %s114
    %s129 = sphi 0, %s115
    %s133 = sphi 0, %s133
    %s135 = sphi 0, %s133
    %s136 = sphi 0, %s135
    %s150 = sphi 0, %s136
    %s154 = sphi 0, %s154
    %s156 = sphi 0, %s154
    %s157 = sphi 0, %s156
    %s171 = sphi 0, %s157
    %s175 = sphi 0, %s175
    %s177 = sphi 0, %s175
    %s178 = sphi 0, %s177
    %s192 = sphi 0, %s178
    %s196 = sphi 0, %s196
    %s198 = sphi 0, %s196
    %s199 = sphi 0, %s198
    %s213 = sphi 0, %s199
    %s219 = sphi 0, %s221
    %s222 = sphi 0, %s219
    %s223 = sphi 0, %s222
    %s239 = sphi 0, %s223
  $region4: #{hand2d_to_3d_forward.30} parent=0 // loop_header_branch
    %18 = sbr.rel (%p16) target = $region8
  $region5: #{hand2d_to_3d_forward.30} parent=0 // loop_body
    %s20 = ssub.s32 %s15, 1
    %s21 = ssub.s32 %s15, 2
    %s22 = sadd.s32 %s15, 1
    %s23 = ssub.s32 %s15, %s22
    %p24 = scmp.eq.s32.totalorder %s23, 0
    %s26 = sadd.s32 %s25, 1
    %s27 = scalar_select %p24, %s25, %s26
    %p30 = pneg %p24
    %p31 = scmp.eq.s32.totalorder %s15, 1
    %p32 = por %p30, %p31
    %p33 = scmp.ne.s32.totalorder %s25, %s28
    %p34 = scmp.eq.s32.totalorder %s15, 0
    %p35 = por %p33, %p34
    %p36 = scmp.ne.s32.totalorder %s25, %s28
    %p37 = scmp.eq.s32.totalorder %s20, 1
    %p38 = por %p36, %p37
    %p39 = scmp.ne.s32.totalorder %s28, %s29
    %p40 = scmp.eq.s32.totalorder %s20, 0
    %p41 = por %p39, %p40
    %p42 = scmp.ne.s32.totalorder %s28, %s29
    %p43 = scmp.eq.s32.totalorder %s21, 1
    %p44 = por %p42, %p43
    %p46 = scmp.ne.s32.totalorder %s29, %s45
    %p47 = scmp.eq.s32.totalorder %s21, 0
    %p48 = por %p46, %p47
    %s50 = sadd.s32 %s49, 1
    %p53 = scmp.eq.s32.totalorder %s15, 1
    %p54 = scmp.ne.s32.totalorder %s49, %s51
    %p55 = scmp.eq.s32.totalorder %s15, 0
    %p56 = por %p54, %p55
    %p57 = scmp.ne.s32.totalorder %s49, %s51
    %p58 = scmp.eq.s32.totalorder %s20, 1
    %p59 = por %p57, %p58
    %p60 = scmp.ne.s32.totalorder %s51, %s52
    %p61 = scmp.eq.s32.totalorder %s20, 0
    %p62 = por %p60, %p61
    %p63 = scmp.ne.s32.totalorder %s51, %s52
    %p64 = scmp.eq.s32.totalorder %s21, 1
    %p65 = por %p63, %p64
    %p67 = scmp.ne.s32.totalorder %s52, %s66
    %p68 = scmp.eq.s32.totalorder %s21, 0
    %p69 = por %p67, %p68
    %s71 = sadd.s32 %s70, 1
    %p74 = scmp.eq.s32.totalorder %s15, 1
    %p75 = scmp.ne.s32.totalorder %s70, %s72
    %p76 = scmp.eq.s32.totalorder %s15, 0
    %p77 = por %p75, %p76
    %p78 = scmp.ne.s32.totalorder %s70, %s72
    %p79 = scmp.eq.s32.totalorder %s20, 1
    %p80 = por %p78, %p79
    %p81 = scmp.ne.s32.totalorder %s72, %s73
    %p82 = scmp.eq.s32.totalorder %s20, 0
    %p83 = por %p81, %p82
    %p84 = scmp.ne.s32.totalorder %s72, %s73
    %p85 = scmp.eq.s32.totalorder %s21, 1
    %p86 = por %p84, %p85
    %p88 = scmp.ne.s32.totalorder %s73, %s87
    %p89 = scmp.eq.s32.totalorder %s21, 0
    %p90 = por %p88, %p89
    %s92 = sadd.s32 %s91, 1
    %p95 = scmp.eq.s32.totalorder %s15, 1
    %p96 = scmp.ne.s32.totalorder %s91, %s93
    %p97 = scmp.eq.s32.totalorder %s15, 0
    %p98 = por %p96, %p97
    %p99 = scmp.ne.s32.totalorder %s91, %s93
    %p100 = scmp.eq.s32.totalorder %s20, 1
    %p101 = por %p99, %p100
    %p102 = scmp.ne.s32.totalorder %s93, %s94
    %p103 = scmp.eq.s32.totalorder %s20, 0
    %p104 = por %p102, %p103
    %p105 = scmp.ne.s32.totalorder %s93, %s94
    %p106 = scmp.eq.s32.totalorder %s21, 1
    %p107 = por %p105, %p106
    %p109 = scmp.ne.s32.totalorder %s94, %s108
    %p110 = scmp.eq.s32.totalorder %s21, 0
    %p111 = por %p109, %p110
    %s113 = sadd.s32 %s112, 1
    %p116 = scmp.eq.s32.totalorder %s15, 1
    %p117 = scmp.ne.s32.totalorder %s112, %s114
    %p118 = scmp.eq.s32.totalorder %s15, 0
    %p119 = por %p117, %p118
    %p120 = scmp.ne.s32.totalorder %s112, %s114
    %p121 = scmp.eq.s32.totalorder %s20, 1
    %p122 = por %p120, %p121
    %p123 = scmp.ne.s32.totalorder %s114, %s115
    %p124 = scmp.eq.s32.totalorder %s20, 0
    %p125 = por %p123, %p124
    %p126 = scmp.ne.s32.totalorder %s114, %s115
    %p127 = scmp.eq.s32.totalorder %s21, 1
    %p128 = por %p126, %p127
    %p130 = scmp.ne.s32.totalorder %s115, %s129
    %p131 = scmp.eq.s32.totalorder %s21, 0
    %p132 = por %p130, %p131
    %s134 = sadd.s32 %s133, 1
    %p137 = scmp.eq.s32.totalorder %s15, 1
    %p138 = scmp.ne.s32.totalorder %s133, %s135
    %p139 = scmp.eq.s32.totalorder %s15, 0
    %p140 = por %p138, %p139
    %p141 = scmp.ne.s32.totalorder %s133, %s135
    %p142 = scmp.eq.s32.totalorder %s20, 1
    %p143 = por %p141, %p142
    %p144 = scmp.ne.s32.totalorder %s135, %s136
    %p145 = scmp.eq.s32.totalorder %s20, 0
    %p146 = por %p144, %p145
    %p147 = scmp.ne.s32.totalorder %s135, %s136
    %p148 = scmp.eq.s32.totalorder %s21, 1
    %p149 = por %p147, %p148
    %p151 = scmp.ne.s32.totalorder %s136, %s150
    %p152 = scmp.eq.s32.totalorder %s21, 0
    %p153 = por %p151, %p152
    %s155 = sadd.s32 %s154, 1
    %p158 = scmp.eq.s32.totalorder %s15, 1
    %p159 = scmp.ne.s32.totalorder %s154, %s156
    %p160 = scmp.eq.s32.totalorder %s15, 0
    %p161 = por %p159, %p160
    %p162 = scmp.ne.s32.totalorder %s154, %s156
    %p163 = scmp.eq.s32.totalorder %s20, 1
    %p164 = por %p162, %p163
    %p165 = scmp.ne.s32.totalorder %s156, %s157
    %p166 = scmp.eq.s32.totalorder %s20, 0
    %p167 = por %p165, %p166
    %p168 = scmp.ne.s32.totalorder %s156, %s157
    %p169 = scmp.eq.s32.totalorder %s21, 1
    %p170 = por %p168, %p169
    %p172 = scmp.ne.s32.totalorder %s157, %s171
    %p173 = scmp.eq.s32.totalorder %s21, 0
    %p174 = por %p172, %p173
    %s176 = sadd.s32 %s175, 1
    %p179 = scmp.eq.s32.totalorder %s15, 1
    %p180 = scmp.ne.s32.totalorder %s175, %s177
    %p181 = scmp.eq.s32.totalorder %s15, 0
    %p182 = por %p180, %p181
    %p183 = scmp.ne.s32.totalorder %s175, %s177
    %p184 = scmp.eq.s32.totalorder %s20, 1
    %p185 = por %p183, %p184
    %p186 = scmp.ne.s32.totalorder %s177, %s178
    %p187 = scmp.eq.s32.totalorder %s20, 0
    %p188 = por %p186, %p187
    %p189 = scmp.ne.s32.totalorder %s177, %s178
    %p190 = scmp.eq.s32.totalorder %s21, 1
    %p191 = por %p189, %p190
    %p193 = scmp.ne.s32.totalorder %s178, %s192
    %p194 = scmp.eq.s32.totalorder %s21, 0
    %p195 = por %p193, %p194
    %s197 = sadd.s32 %s196, 1
    %p200 = scmp.eq.s32.totalorder %s15, 1
    %p201 = scmp.ne.s32.totalorder %s196, %s198
    %p202 = scmp.eq.s32.totalorder %s15, 0
    %p203 = por %p201, %p202
    %p204 = scmp.ne.s32.totalorder %s196, %s198
    %p205 = scmp.eq.s32.totalorder %s20, 1
    %p206 = por %p204, %p205
    %p207 = scmp.ne.s32.totalorder %s198, %s199
    %p208 = scmp.eq.s32.totalorder %s20, 0
    %p209 = por %p207, %p208
    %p210 = scmp.ne.s32.totalorder %s198, %s199
    %p211 = scmp.eq.s32.totalorder %s21, 1
    %p212 = por %p210, %p211
    %p214 = scmp.ne.s32.totalorder %s199, %s213
    %p215 = scmp.eq.s32.totalorder %s21, 0
    %p216 = por %p214, %p215
    %s217 = ssub.s32 %s15, %s22
    %p218 = scmp.eq.s32.totalorder %s217, 0
    %s220 = sadd.s32 %s219, 1
    %s221 = scalar_select %p218, %s219, %s220
    %p224 = pneg %p218
    %p225 = scmp.eq.s32.totalorder %s15, 1
    %p226 = por %p224, %p225
    %p227 = scmp.ne.s32.totalorder %s219, %s222
    %p228 = scmp.eq.s32.totalorder %s15, 0
    %p229 = por %p227, %p228
    %p230 = scmp.ne.s32.totalorder %s219, %s222
    %p231 = scmp.eq.s32.totalorder %s20, 1
    %p232 = por %p230, %p231
    %p233 = scmp.ne.s32.totalorder %s222, %s223
    %p234 = scmp.eq.s32.totalorder %s20, 0
    %p235 = por %p233, %p234
    %p236 = scmp.ne.s32.totalorder %s222, %s223
    %p237 = scmp.eq.s32.totalorder %s21, 1
    %p238 = por %p236, %p237
    %p240 = scmp.ne.s32.totalorder %s223, %s239
    %p241 = scmp.eq.s32.totalorder %s21, 0
    %p242 = por %p240, %p241
    %p243 = scmp.le.s32.totalorder 1, %s15
    %p244 = scmp.lt.s32.totalorder %s15, 3
    %p245 = pnand %p243, %p244
    %p246 = pneg %p245
    // Predicated region
    $region9: #{hand2d_to_3d_forward.30} parent=5 // pred_check
      _
    $region10: #{hand2d_to_3d_forward.30} parent=5 // pred_check_branch
      %248 = sbr.rel (%p245) target = $region12
    $region11: #{hand2d_to_3d_forward.30} parent=5 // pred_region
      %s249 = ssub.s32 %s15, 1
      // Predicated region
      $region13: #{hand2d_to_3d_forward.30} parent=11 // pred_check
        %p250 = pneg %p62
      $region14: #{hand2d_to_3d_forward.30} parent=11 // pred_check_branch
        %252 = sbr.rel (%p250) target = $region16
      $region15: #{hand2d_to_3d_forward.30} parent=11 // pred_region
        _
      $region16: #{hand2d_to_3d_forward.30} parent=11 // pred_fallthru
        _
      // Predicated region
      $region17: #{hand2d_to_3d_forward.30} parent=11 // pred_check
        %p253 = pneg %p83
      $region18: #{hand2d_to_3d_forward.30} parent=11 // pred_check_branch
        %255 = sbr.rel (%p253) target = $region20
      $region19: #{hand2d_to_3d_forward.30} parent=11 // pred_region
        _
      $region20: #{hand2d_to_3d_forward.30} parent=11 // pred_fallthru
        _
      // Predicated region
      $region21: #{hand2d_to_3d_forward.30} parent=11 // pred_check
        %p256 = pneg %p104
      $region22: #{hand2d_to_3d_forward.30} parent=11 // pred_check_branch
        %258 = sbr.rel (%p256) target = $region24
      $region23: #{hand2d_to_3d_forward.30} parent=11 // pred_region
        _
      $region24: #{hand2d_to_3d_forward.30} parent=11 // pred_fallthru
        _
      // Predicated region
      $region25: #{hand2d_to_3d_forward.30} parent=11 // pred_check
        %p259 = pneg %p125
      $region26: #{hand2d_to_3d_forward.30} parent=11 // pred_check_branch
        %261 = sbr.rel (%p259) target = $region28
      $region27: #{hand2d_to_3d_forward.30} parent=11 // pred_region
        _
      $region28: #{hand2d_to_3d_forward.30} parent=11 // pred_fallthru
        _
      // Predicated region
      $region29: #{hand2d_to_3d_forward.30} parent=11 // pred_check
        %p262 = pneg %p146
      $region30: #{hand2d_to_3d_forward.30} parent=11 // pred_check_branch
        %264 = sbr.rel (%p262) target = $region32
      $region31: #{hand2d_to_3d_forward.30} parent=11 // pred_region
        _
      $region32: #{hand2d_to_3d_forward.30} parent=11 // pred_fallthru
        _
      // Predicated region
      $region33: #{hand2d_to_3d_forward.30} parent=11 // pred_check
        %p265 = pneg %p167
      $region34: #{hand2d_to_3d_forward.30} parent=11 // pred_check_branch
        %267 = sbr.rel (%p265) target = $region36
      $region35: #{hand2d_to_3d_forward.30} parent=11 // pred_region
        _
      $region36: #{hand2d_to_3d_forward.30} parent=11 // pred_fallthru
        _
      // Predicated region
      $region37: #{hand2d_to_3d_forward.30} parent=11 // pred_check
        %p268 = pneg %p188
      $region38: #{hand2d_to_3d_forward.30} parent=11 // pred_check_branch
        %270 = sbr.rel (%p268) target = $region40
      $region39: #{hand2d_to_3d_forward.30} parent=11 // pred_region
        _
      $region40: #{hand2d_to_3d_forward.30} parent=11 // pred_fallthru
        _
      // Predicated region
      $region41: #{hand2d_to_3d_forward.30} parent=11 // pred_check
        %p271 = pneg %p209
      $region42: #{hand2d_to_3d_forward.30} parent=11 // pred_check_branch
        %273 = sbr.rel (%p271) target = $region44
      $region43: #{hand2d_to_3d_forward.30} parent=11 // pred_region
        _
      $region44: #{hand2d_to_3d_forward.30} parent=11 // pred_fallthru
        _
    $region12: #{hand2d_to_3d_forward.30} parent=5 // pred_fallthru
      _
    %p274 = scmp.lt.s32.totalorder %s15, 2
    // Predicated region
    $region45: #{hand2d_to_3d_forward.30} parent=5 // pred_check
      %p275 = pneg %p274
    $region46: #{hand2d_to_3d_forward.30} parent=5 // pred_check_branch
      %277 = sbr.rel (%p275) target = $region48
    $region47: #{hand2d_to_3d_forward.30} parent=5 // pred_region
      // Predicated region
      $region49: #{hand2d_to_3d_forward.30} parent=47 // pred_check
        %p278 = pneg %p35
      $region50: #{hand2d_to_3d_forward.30} parent=47 // pred_check_branch
        %280 = sbr.rel (%p278) target = $region52
      $region51: #{hand2d_to_3d_forward.30} parent=47 // pred_region
        %p281 = scmp.lt.s32.totalorder %s15, 1
        %s282 = scalar_select %p281, %s15, 1
        %s283 = smul.addr %s282, 8
        %s284 = smul.addr %s283, 8
        %s285 = scalar_lea.vmem %s0, %s284
      $region52: #{hand2d_to_3d_forward.30} parent=47 // pred_fallthru
        _
    $region48: #{hand2d_to_3d_forward.30} parent=5 // pred_fallthru
      _
    %p286 = scmp.le.s32.totalorder 1, %s15
    %p287 = scmp.lt.s32.totalorder %s15, 3
    %p288 = pnand %p286, %p287
    %p289 = pneg %p288
    // Predicated region
    $region53: #{hand2d_to_3d_forward.30} parent=5 // pred_check
      _
    $region54: #{hand2d_to_3d_forward.30} parent=5 // pred_check_branch
      %291 = sbr.rel (%p288) target = $region56
    $region55: #{hand2d_to_3d_forward.30} parent=5 // pred_region
      %s292 = ssub.s32 %s15, 1
      %p293 = scmp.lt.s32.totalorder %s20, 1
      %s294 = scalar_select %p293, %s20, 1
      %s295 = smul.addr %s294, 8
      %s296 = smul.addr %s295, 8
      %s297 = scalar_lea.vmem %s0, %s296
      %p298 = pneg %p41
      %p299 = pneg %p38
      %p300 = pneg %p62
      %p301 = pneg %p59
      %p302 = pneg %p83
      %p303 = pneg %p80
      %p304 = pneg %p104
      %p305 = pneg %p101
      %p306 = pneg %p125
      %p307 = pneg %p122
      %p308 = pneg %p146
      %p309 = pneg %p143
      %p310 = pneg %p167
      %p311 = pneg %p164
      %p312 = pneg %p188
      %p313 = pneg %p185
      %p314 = pneg %p209
      %p315 = pneg %p206
      %p316 = pneg %p235
      %p317 = pneg %p232
      %p318 = scmp.lt.s32.totalorder %s20, 1
      %s319 = scalar_select %p318, %s20, 1
      %s320 = smul.addr %s319, 8
      %s321 = smul.addr %s320, 8
      %s322 = scalar_lea.vmem %s9, %s321
      %p323 = scmp.lt.s32.totalorder %s20, 1
      %s324 = scalar_select %p323, %s20, 1
      %s325 = smul.addr %s324, 8
      %s326 = smul.addr %s325, 8
      %s327 = scalar_lea.vmem %s0, %s326
      %p328 = scmp.lt.s32.totalorder %s20, 1
      %s329 = scalar_select %p328, %s20, 1
      %s330 = smul.addr %s329, 8
      %s331 = smul.addr %s330, 8
      %s332 = scalar_lea.vmem %s9, %s331
      %v333 = vld [vmem:[%s327] sm:$0xff]
      %v334 = vld [vmem:[%s327 + $0x8] sm:$0xff]
      %v335 = vld [vmem:[%s327 + $0x10] sm:$0xff]
      %v336 = vld [vmem:[%s327 + $0x18] sm:$0xff]
      %v337 = vld [vmem:[%s327 + $0x20] sm:$0xff]
      %v338 = vld [vmem:[%s327 + $0x28] sm:$0xff]
      %v339 = vld [vmem:[%s327 + $0x30] sm:$0xff]
      %v340 = vld [vmem:[%s327 + $0x38] sm:$0xff]
      %v341 = vld [vmem:[%s2] sm:$0xff]
      %v342 = vld [vmem:[%s2 + $0x8] sm:$0xff]
      %v343 = vld [vmem:[%s3] sm:$0xff]
      %v344 = vld [vmem:[%s3 + $0x8] sm:$0xff]
      %346 = vset.pattern.permute.xlu0 0
      %347 = vperm.xlu0 %346, %v343
      %v348 = vpop.permute.xlu0 %347
      %351 = vset.pattern.permute.xlu0 0
      %352 = vperm.xlu0 %351, %v344
      %v353 = vpop.permute.xlu0 %352
      %vm355 = vcmask 261120
      %v357 = vsel %vm355, %v341, 0
      %v360 = vsel %vm355, %v342, 0
      %362 = vmatprep.subr.mxu0 %v334
      %363 = vmatpush1.msra.mxu0 %v333
      %364 = vmatprep.subr.mxu0 %v336
      %365 = vmatpush1.msra.mxu0 %v335
      %366 = vmatprep.subr.mxu0 %v338
      %367 = vmatpush1.msra.mxu0 %v337
      %368 = vmatprep.subr.mxu0 %v340
      %369 = vmatpush1.msra.mxu0 %v339
      %370 = vmatprep.subr.mxu0 0.0
      %371 = vmatpush1.msra.mxu0 0.0
      %372 = vmatprep.subr.mxu0 0.0
      %373 = vmatpush1.msra.mxu0 0.0
      %374 = vmatprep.subr.mxu0 0.0
      %375 = vmatpush1.msra.mxu0 0.0
      %376 = vmatprep.subr.mxu0 0.0
      %377 = vmatpush1.msra.mxu0 0.0
      %378 = vmatprep.subr.mxu0 0.0
      %379 = vmatpush1.msra.mxu0 0.0
      %380 = vmatprep.subr.mxu0 0.0
      %381 = vmatpush1.msra.mxu0 0.0
      %382 = vmatprep.subr.mxu0 0.0
      %383 = vmatpush1.msra.mxu0 0.0
      %384 = vmatprep.subr.mxu0 0.0
      %385 = vmatpush1.msra.mxu0 0.0
      %386 = vmatprep.subr.mxu0 0.0
      %387 = vmatpush1.msra.mxu0 0.0
      %388 = vmatprep.subr.mxu0 0.0
      %389 = vmatpush1.msra.mxu0 0.0
      %390 = vmatprep.subr.mxu0 0.0
      %391 = vmatpush1.msra.mxu0 0.0
      %392 = vmatprep.subr.mxu0 0.0
      %393 = vmatpush1.msra.mxu0 0.0
      %394 = vmatprep.subr.mxu0 0.0
      %395 = vmatpush1.msra.mxu0 0.0
      %396 = vmatprep.subr.mxu0 0.0
      %397 = vmatpush1.msra.mxu0 0.0
      %398 = vmatprep.subr.mxu0 0.0
      %399 = vmatpush1.msra.mxu0 0.0
      %400 = vmatprep.subr.mxu0 0.0
      %401 = vmatpush1.msra.mxu0 0.0
      %402 = vmatprep.subr.mxu0 0.0
      %403 = vmatpush1.msra.mxu0 0.0
      %404 = vmatprep.subr.mxu0 0.0
      %405 = vmatpush1.msra.mxu0 0.0
      %406 = vmatprep.subr.mxu0 0.0
      %407 = vmatpush1.msra.mxu0 0.0
      %408 = vmatprep.subr.mxu0 0.0
      %409 = vmatpush1.msra.mxu0 0.0
      %410 = vmatprep.subr.mxu0 0.0
      %411 = vmatpush1.msra.mxu0 0.0
      %412 = vmatprep.subr.mxu0 0.0
      %413 = vmatpush1.msra.mxu0 0.0
      %414 = vmatprep.subr.mxu0 0.0
      %415 = vmatpush1.msra.mxu0 0.0
      %416 = vmatprep.subr.mxu0 0.0
      %417 = vmatpush1.msra.mxu0 0.0
      %418 = vmatprep.subr.mxu0 0.0
      %419 = vmatpush1.msra.mxu0 0.0
      %420 = vmatprep.subr.mxu0 0.0
      %421 = vmatpush1.msra.mxu0 0.0
      %422 = vmatprep.subr.mxu0 0.0
      %423 = vmatpush1.msra.mxu0 0.0
      %424 = vmatprep.subr.mxu0 0.0
      %425 = vmatpush1.msra.mxu0 0.0
      %426 = vmatprep.mubr.f32.mxu0 0.0
      %427 = vmatmul.mubr.f32.gmra.mrb[0].mxu0 %v357
      %v428 = vpop.f32.mrb[0].mxu0
      %v429 = vadd.f32 %v348, %v428
      %v430 = vpop.f32.mrb[0].mxu0
      %v431 = vadd.f32 %v348, %v430
      %432 = vmatprep.mubr.f32.mxu0 0.0
      %433 = vmatmul.mubr.f32.gmra.mrb[0].mxu0 %v360
      %v434 = vpop.f32.mrb[0].mxu0
      %v435 = vadd.f32 %v353, %v434
      %v436 = vpop.f32.mrb[0].mxu0
      %v437 = vadd.f32 %v353, %v436
      %438 = vdwg.mxu0
      %v439 = vmax.f32 %v429, 0.0
      %v440 = vmax.f32 %v431, 0.0
      %v441 = vmax.f32 %v435, 0.0
      %v442 = vmax.f32 %v437, 0.0
      %447 = vrot.lane.b32.xlu0 %v439, 17
      %v448 = vpop.permute.xlu0 %447
      %449 = vrot.lane.b32.xlu0 %v440, 17
      %v450 = vpop.permute.xlu0 %449
      %451 = vrot.lane.b32.xlu0 %v441, 17
      %v452 = vpop.permute.xlu0 %451
      %453 = vrot.lane.b32.xlu0 %v442, 17
      %v454 = vpop.permute.xlu0 %453
      %vm455 = vcmask 138240
      %v456 = vsel %vm455, %v448, %v450
      %v457 = vsel %vm455, %v452, %v454
      %v462 = vsel %vm455, 0.0, %v448
      %v463 = vsel %vm455, 0.0, %v452
      %v464 = vld [vmem:[%s1] sm:$0x3]
      %v466 = vlaneseq
      %v467 = vshrl.u32 %v466, 7
      %v468 = vsub.s32 0, %v467
      %v469 = vrot.slane %v464, %v468
      %v470 = vlaneseq
      %v471 = vshrl.u32 %v470, 7
      %v472 = vsub.s32 1, %v471
      %v473 = vrot.slane %v464, %v472
      %v476 = vmul.f32 %v462, %v469
      %v477 = vmul.f32 %v456, %v473
      %v478 = vmul.f32 %v463, %v469
      %v479 = vmul.f32 %v457, %v473
      %v480 = vld [vmem:[%s4] sm:$0xff]
      %v481 = vld [vmem:[%s4 + $0x8] sm:$0xff]
      %482 = vrot.lane.b32.xlu0 %v439, 16
      %v483 = vpop.permute.xlu0 %482
      %484 = vrot.lane.b32.xlu0 %v440, 16
      %v485 = vpop.permute.xlu0 %484
      %486 = vrot.lane.b32.xlu0 %v441, 16
      %v487 = vpop.permute.xlu0 %486
      %488 = vrot.lane.b32.xlu0 %v442, 16
      %v489 = vpop.permute.xlu0 %488
      %vm490 = vcmask 130048
      %v491 = vsel %vm490, %v483, %v485
      %v492 = vsel %vm490, %v487, %v489
      %v497 = vsel %vm490, 0.0, %v483
      %v498 = vsel %vm490, 0.0, %v487
      %s499 = scalar_lea.vmem %s1, 2
      %v500 = vld [vmem:[%s499] sm:$0x3]
      %v502 = vlaneseq
      %v503 = vshrl.u32 %v502, 7
      %v504 = vsub.s32 0, %v503
      %v505 = vrot.slane %v500, %v504
      %v506 = vlaneseq
      %v507 = vshrl.u32 %v506, 7
      %v508 = vsub.s32 1, %v507
      %v509 = vrot.slane %v500, %v508
      %v512 = vmul.f32 %v497, %v505
      %v513 = vmul.f32 %v491, %v509
      %v514 = vmul.f32 %v498, %v505
      %v515 = vmul.f32 %v492, %v509
      %s516 = scalar_lea.vmem %s4, 16
      %v517 = vld [vmem:[%s516] sm:$0xff]
      %v518 = vld [vmem:[%s516 + $0x8] sm:$0xff]
      %v520 = vsel %vm490, %v517, 0
      %v523 = vsel %vm490, %v518, 0
      %525 = vmatprep.subr.mxu0 %v513
      %526 = vmatpush1.msra.mxu0 %v512
      %527 = vmatprep.subr.mxu0 %v515
      %528 = vmatpush1.msra.mxu0 %v514
      %529 = vmatprep.subr.mxu0 0.0
      %530 = vmatpush1.msra.mxu0 0.0
      %531 = vmatprep.subr.mxu0 0.0
      %532 = vmatpush1.msra.mxu0 0.0
      %533 = vmatprep.subr.mxu0 0.0
      %534 = vmatpush1.msra.mxu0 0.0
      %535 = vmatprep.subr.mxu0 0.0
      %536 = vmatpush1.msra.mxu0 0.0
      %537 = vmatprep.subr.mxu0 0.0
      %538 = vmatpush1.msra.mxu0 0.0
      %539 = vmatprep.subr.mxu0 0.0
      %540 = vmatpush1.msra.mxu0 0.0
      %541 = vmatprep.subr.mxu0 0.0
      %542 = vmatpush1.msra.mxu0 0.0
      %543 = vmatprep.subr.mxu0 0.0
      %544 = vmatpush1.msra.mxu0 0.0
      %545 = vmatprep.subr.mxu0 0.0
      %546 = vmatpush1.msra.mxu0 0.0
      %547 = vmatprep.subr.mxu0 0.0
      %548 = vmatpush1.msra.mxu0 0.0
      %549 = vmatprep.subr.mxu0 0.0
      %550 = vmatpush1.msra.mxu0 0.0
      %551 = vmatprep.subr.mxu0 0.0
      %552 = vmatpush1.msra.mxu0 0.0
      %553 = vmatprep.subr.mxu0 0.0
      %554 = vmatpush1.msra.mxu0 0.0
      %555 = vmatprep.subr.mxu0 0.0
      %556 = vmatpush1.msra.mxu0 0.0
      %557 = vmatprep.subr.mxu0 0.0
      %558 = vmatpush1.msra.mxu0 0.0
      %559 = vmatprep.subr.mxu0 0.0
      %560 = vmatpush1.msra.mxu0 0.0
      %561 = vmatprep.subr.mxu0 0.0
      %562 = vmatpush1.msra.mxu0 0.0
      %563 = vmatprep.subr.mxu0 0.0
      %564 = vmatpush1.msra.mxu0 0.0
      %565 = vmatprep.subr.mxu0 0.0
      %566 = vmatpush1.msra.mxu0 0.0
      %567 = vmatprep.subr.mxu0 0.0
      %568 = vmatpush1.msra.mxu0 0.0
      %569 = vmatprep.subr.mxu0 0.0
      %570 = vmatpush1.msra.mxu0 0.0
      %571 = vmatprep.subr.mxu0 0.0
      %572 = vmatpush1.msra.mxu0 0.0
      %573 = vmatprep.subr.mxu0 0.0
      %574 = vmatpush1.msra.mxu0 0.0
      %575 = vmatprep.subr.mxu0 0.0
      %576 = vmatpush1.msra.mxu0 0.0
      %577 = vmatprep.subr.mxu0 0.0
      %578 = vmatpush1.msra.mxu0 0.0
      %579 = vmatprep.subr.mxu0 0.0
      %580 = vmatpush1.msra.mxu0 0.0
      %581 = vmatprep.subr.mxu0 0.0
      %582 = vmatpush1.msra.mxu0 0.0
      %583 = vmatprep.subr.mxu0 0.0
      %584 = vmatpush1.msra.mxu0 0.0
      %585 = vmatprep.subr.mxu0 0.0
      %586 = vmatpush1.msra.mxu0 0.0
      %587 = vmatprep.subr.mxu0 0.0
      %588 = vmatpush1.msra.mxu0 0.0
      %589 = vmatprep.mubr.f32.mxu0 0.0
      %590 = vmatmul.mubr.f32.gmra.mrb[0].mxu0 %v520
      %v591 = vpop.f32.mrb[0].mxu0
      %v592 = vadd.f32 0.0, %v591
      %v593 = vpop.f32.mrb[0].mxu0
      %v594 = vadd.f32 0.0, %v593
      %595 = vmatprep.mubr.f32.mxu0 0.0
      %596 = vmatmul.mubr.f32.gmra.mrb[0].mxu0 %v523
      %v597 = vpop.f32.mrb[0].mxu0
      %v598 = vadd.f32 0.0, %v597
      %v599 = vpop.f32.mrb[0].mxu0
      %v600 = vadd.f32 0.0, %v599
      %601 = vdwg.mxu0
      %v603 = vsel %vm490, %v480, 0
      %v606 = vsel %vm490, %v481, 0
      %608 = vmatprep.subr.mxu0 %v477
      %609 = vmatpush1.msra.mxu0 %v476
      %610 = vmatprep.subr.mxu0 %v479
      %611 = vmatpush1.msra.mxu0 %v478
      %612 = vmatprep.subr.mxu0 0.0
      %613 = vmatpush1.msra.mxu0 0.0
      %614 = vmatprep.subr.mxu0 0.0
      %615 = vmatpush1.msra.mxu0 0.0
      %616 = vmatprep.subr.mxu0 0.0
      %617 = vmatpush1.msra.mxu0 0.0
      %618 = vmatprep.subr.mxu0 0.0
      %619 = vmatpush1.msra.mxu0 0.0
      %620 = vmatprep.subr.mxu0 0.0
      %621 = vmatpush1.msra.mxu0 0.0
      %622 = vmatprep.subr.mxu0 0.0
      %623 = vmatpush1.msra.mxu0 0.0
      %624 = vmatprep.subr.mxu0 0.0
      %625 = vmatpush1.msra.mxu0 0.0
      %626 = vmatprep.subr.mxu0 0.0
      %627 = vmatpush1.msra.mxu0 0.0
      %628 = vmatprep.subr.mxu0 0.0
      %629 = vmatpush1.msra.mxu0 0.0
      %630 = vmatprep.subr.mxu0 0.0
      %631 = vmatpush1.msra.mxu0 0.0
      %632 = vmatprep.subr.mxu0 0.0
      %633 = vmatpush1.msra.mxu0 0.0
      %634 = vmatprep.subr.mxu0 0.0
      %635 = vmatpush1.msra.mxu0 0.0
      %636 = vmatprep.subr.mxu0 0.0
      %637 = vmatpush1.msra.mxu0 0.0
      %638 = vmatprep.subr.mxu0 0.0
      %639 = vmatpush1.msra.mxu0 0.0
      %640 = vmatprep.subr.mxu0 0.0
      %641 = vmatpush1.msra.mxu0 0.0
      %642 = vmatprep.subr.mxu0 0.0
      %643 = vmatpush1.msra.mxu0 0.0
      %644 = vmatprep.subr.mxu0 0.0
      %645 = vmatpush1.msra.mxu0 0.0
      %646 = vmatprep.subr.mxu0 0.0
      %647 = vmatpush1.msra.mxu0 0.0
      %648 = vmatprep.subr.mxu0 0.0
      %649 = vmatpush1.msra.mxu0 0.0
      %650 = vmatprep.subr.mxu0 0.0
      %651 = vmatpush1.msra.mxu0 0.0
      %652 = vmatprep.subr.mxu0 0.0
      %653 = vmatpush1.msra.mxu0 0.0
      %654 = vmatprep.subr.mxu0 0.0
      %655 = vmatpush1.msra.mxu0 0.0
      %656 = vmatprep.subr.mxu0 0.0
      %657 = vmatpush1.msra.mxu0 0.0
      %658 = vmatprep.subr.mxu0 0.0
      %659 = vmatpush1.msra.mxu0 0.0
      %660 = vmatprep.subr.mxu0 0.0
      %661 = vmatpush1.msra.mxu0 0.0
      %662 = vmatprep.subr.mxu0 0.0
      %663 = vmatpush1.msra.mxu0 0.0
      %664 = vmatprep.subr.mxu0 0.0
      %665 = vmatpush1.msra.mxu0 0.0
      %666 = vmatprep.subr.mxu0 0.0
      %667 = vmatpush1.msra.mxu0 0.0
      %668 = vmatprep.subr.mxu0 0.0
      %669 = vmatpush1.msra.mxu0 0.0
      %670 = vmatprep.subr.mxu0 0.0
      %671 = vmatpush1.msra.mxu0 0.0
      %672 = vmatprep.mubr.f32.mxu0 0.0
      %673 = vmatmul.mubr.f32.gmra.mrb[0].mxu0 %v603
      %v674 = vpop.f32.mrb[0].mxu0
      %v675 = vadd.f32 %v592, %v674
      %v676 = vpop.f32.mrb[0].mxu0
      %v677 = vadd.f32 %v594, %v676
      %678 = vmatprep.mubr.f32.mxu0 0.0
      %679 = vmatmul.mubr.f32.gmra.mrb[0].mxu0 %v606
      %v680 = vpop.f32.mrb[0].mxu0
      %v681 = vadd.f32 %v598, %v680
      %v682 = vpop.f32.mrb[0].mxu0
      %v683 = vadd.f32 %v600, %v682
      %684 = vdwg.mxu0
      %685 = vrot.lane.b32.xlu0 %v439, 15
      %v686 = vpop.permute.xlu0 %685
      %687 = vrot.lane.b32.xlu0 %v440, 15
      %v688 = vpop.permute.xlu0 %687
      %689 = vrot.lane.b32.xlu0 %v441, 15
      %v690 = vpop.permute.xlu0 %689
      %691 = vrot.lane.b32.xlu0 %v442, 15
      %v692 = vpop.permute.xlu0 %691
      %vm693 = vcmask 121856
      %v694 = vsel %vm693, %v686, %v688
      %v695 = vsel %vm693, %v690, %v692
      %v700 = vsel %vm693, 0.0, %v686
      %v701 = vsel %vm693, 0.0, %v690
      %s702 = scalar_lea.vmem %s1, 4
      %v703 = vld [vmem:[%s702] sm:$0x3]
      %v705 = vlaneseq
      %v706 = vshrl.u32 %v705, 7
      %v707 = vsub.s32 0, %v706
      %v708 = vrot.slane %v703, %v707
      %v709 = vlaneseq
      %v710 = vshrl.u32 %v709, 7
      %v711 = vsub.s32 1, %v710
      %v712 = vrot.slane %v703, %v711
      %v715 = vmul.f32 %v700, %v708
      %v716 = vmul.f32 %v694, %v712
      %v717 = vmul.f32 %v701, %v708
      %v718 = vmul.f32 %v695, %v712
      %s719 = scalar_lea.vmem %s4, 32
      %v720 = vld [vmem:[%s719] sm:$0xff]
      %v721 = vld [vmem:[%s719 + $0x8] sm:$0xff]
      %v723 = vsel %vm490, %v720, 0
      %v726 = vsel %vm490, %v721, 0
      %728 = vmatprep.subr.mxu0 %v716
      %729 = vmatpush1.msra.mxu0 %v715
      %730 = vmatprep.subr.mxu0 %v718
      %731 = vmatpush1.msra.mxu0 %v717
      %732 = vmatprep.subr.mxu0 0.0
      %733 = vmatpush1.msra.mxu0 0.0
      %734 = vmatprep.subr.mxu0 0.0
      %735 = vmatpush1.msra.mxu0 0.0
      %736 = vmatprep.subr.mxu0 0.0
      %737 = vmatpush1.msra.mxu0 0.0
      %738 = vmatprep.subr.mxu0 0.0
      %739 = vmatpush1.msra.mxu0 0.0
      %740 = vmatprep.subr.mxu0 0.0
      %741 = vmatpush1.msra.mxu0 0.0
      %742 = vmatprep.subr.mxu0 0.0
      %743 = vmatpush1.msra.mxu0 0.0
      %744 = vmatprep.subr.mxu0 0.0
      %745 = vmatpush1.msra.mxu0 0.0
      %746 = vmatprep.subr.mxu0 0.0
      %747 = vmatpush1.msra.mxu0 0.0
      %748 = vmatprep.subr.mxu0 0.0
      %749 = vmatpush1.msra.mxu0 0.0
      %750 = vmatprep.subr.mxu0 0.0
      %751 = vmatpush1.msra.mxu0 0.0
      %752 = vmatprep.subr.mxu0 0.0
      %753 = vmatpush1.msra.mxu0 0.0
      %754 = vmatprep.subr.mxu0 0.0
      %755 = vmatpush1.msra.mxu0 0.0
      %756 = vmatprep.subr.mxu0 0.0
      %757 = vmatpush1.msra.mxu0 0.0
      %758 = vmatprep.subr.mxu0 0.0
      %759 = vmatpush1.msra.mxu0 0.0
      %760 = vmatprep.subr.mxu0 0.0
      %761 = vmatpush1.msra.mxu0 0.0
      %762 = vmatprep.subr.mxu0 0.0
      %763 = vmatpush1.msra.mxu0 0.0
      %764 = vmatprep.subr.mxu0 0.0
      %765 = vmatpush1.msra.mxu0 0.0
      %766 = vmatprep.subr.mxu0 0.0
      %767 = vmatpush1.msra.mxu0 0.0
      %768 = vmatprep.subr.mxu0 0.0
      %769 = vmatpush1.msra.mxu0 0.0
      %770 = vmatprep.subr.mxu0 0.0
      %771 = vmatpush1.msra.mxu0 0.0
      %772 = vmatprep.subr.mxu0 0.0
      %773 = vmatpush1.msra.mxu0 0.0
      %774 = vmatprep.subr.mxu0 0.0
      %775 = vmatpush1.msra.mxu0 0.0
      %776 = vmatprep.subr.mxu0 0.0
      %777 = vmatpush1.msra.mxu0 0.0
      %778 = vmatprep.subr.mxu0 0.0
      %779 = vmatpush1.msra.mxu0 0.0
      %780 = vmatprep.subr.mxu0 0.0
      %781 = vmatpush1.msra.mxu0 0.0
      %782 = vmatprep.subr.mxu0 0.0
      %783 = vmatpush1.msra.mxu0 0.0
      %784 = vmatprep.subr.mxu0 0.0
      %785 = vmatpush1.msra.mxu0 0.0
      %786 = vmatprep.subr.mxu0 0.0
      %787 = vmatpush1.msra.mxu0 0.0
      %788 = vmatprep.subr.mxu0 0.0
      %789 = vmatpush1.msra.mxu0 0.0
      %790 = vmatprep.subr.mxu0 0.0
      %791 = vmatpush1.msra.mxu0 0.0
      %792 = vmatprep.mubr.f32.mxu0 0.0
      %793 = vmatmul.mubr.f32.gmra.mrb[0].mxu0 %v723
      %v794 = vpop.f32.mrb[0].mxu0
      %v795 = vadd.f32 0.0, %v794
      %v796 = vpop.f32.mrb[0].mxu0
      %v797 = vadd.f32 0.0, %v796
      %798 = vmatprep.mubr.f32.mxu0 0.0
      %799 = vmatmul.mubr.f32.gmra.mrb[0].mxu0 %v726
      %v800 = vpop.f32.mrb[0].mxu0
      %v801 = vadd.f32 0.0, %v800
      %v802 = vpop.f32.mrb[0].mxu0
      %v803 = vadd.f32 0.0, %v802
      %804 = vdwg.mxu0
      %v805 = vadd.f32 %v675, %v795
      %v806 = vadd.f32 %v677, %v797
      %v807 = vadd.f32 %v681, %v801
      %v808 = vadd.f32 %v683, %v803
      %809 = vrot.lane.b32.xlu0 %v439, 1
      %v810 = vpop.permute.xlu0 %809
      %811 = vrot.lane.b32.xlu0 %v440, 1
      %v812 = vpop.permute.xlu0 %811
      %813 = vrot.lane.b32.xlu0 %v441, 1
      %v814 = vpop.permute.xlu0 %813
      %815 = vrot.lane.b32.xlu0 %v442, 1
      %v816 = vpop.permute.xlu0 %815
      %vm817 = vcmask 7168
      %v818 = vsel %vm817, %v810, %v812
      %v819 = vsel %vm817, %v814, %v816
      %v824 = vsel %vm817, 0.0, %v810
      %v825 = vsel %vm817, 0.0, %v814
      %s826 = scalar_lea.vmem %s1, 6
      %v827 = vld [vmem:[%s826] sm:$0x3]
      %v829 = vlaneseq
      %v830 = vshrl.u32 %v829, 7
      %v831 = vsub.s32 0, %v830
      %v832 = vrot.slane %v827, %v831
      %v833 = vlaneseq
      %v834 = vshrl.u32 %v833, 7
      %v835 = vsub.s32 1, %v834
      %v836 = vrot.slane %v827, %v835
      %v839 = vmul.f32 %v824, %v832
      %v840 = vmul.f32 %v818, %v836
      %v841 = vmul.f32 %v825, %v832
      %v842 = vmul.f32 %v819, %v836
      %s843 = scalar_lea.vmem %s4, 48
      %v844 = vld [vmem:[%s843] sm:$0xff]
      %v845 = vld [vmem:[%s843 + $0x8] sm:$0xff]
      %v847 = vsel %vm490, %v844, 0
      %v850 = vsel %vm490, %v845, 0
      %852 = vmatprep.subr.mxu0 %v840
      %853 = vmatpush1.msra.mxu0 %v839
      %854 = vmatprep.subr.mxu0 %v842
      %855 = vmatpush1.msra.mxu0 %v841
      %856 = vmatprep.subr.mxu0 0.0
      %857 = vmatpush1.msra.mxu0 0.0
      %858 = vmatprep.subr.mxu0 0.0
      %859 = vmatpush1.msra.mxu0 0.0
      %860 = vmatprep.subr.mxu0 0.0
      %861 = vmatpush1.msra.mxu0 0.0
      %862 = vmatprep.subr.mxu0 0.0
      %863 = vmatpush1.msra.mxu0 0.0
      %864 = vmatprep.subr.mxu0 0.0
      %865 = vmatpush1.msra.mxu0 0.0
      %866 = vmatprep.subr.mxu0 0.0
      %867 = vmatpush1.msra.mxu0 0.0
      %868 = vmatprep.subr.mxu0 0.0
      %869 = vmatpush1.msra.mxu0 0.0
      %870 = vmatprep.subr.mxu0 0.0
      %871 = vmatpush1.msra.mxu0 0.0
      %872 = vmatprep.subr.mxu0 0.0
      %873 = vmatpush1.msra.mxu0 0.0
      %874 = vmatprep.subr.mxu0 0.0
      %875 = vmatpush1.msra.mxu0 0.0
      %876 = vmatprep.subr.mxu0 0.0
      %877 = vmatpush1.msra.mxu0 0.0
      %878 = vmatprep.subr.mxu0 0.0
      %879 = vmatpush1.msra.mxu0 0.0
      %880 = vmatprep.subr.mxu0 0.0
      %881 = vmatpush1.msra.mxu0 0.0
      %882 = vmatprep.subr.mxu0 0.0
      %883 = vmatpush1.msra.mxu0 0.0
      %884 = vmatprep.subr.mxu0 0.0
      %885 = vmatpush1.msra.mxu0 0.0
      %886 = vmatprep.subr.mxu0 0.0
      %887 = vmatpush1.msra.mxu0 0.0
      %888 = vmatprep.subr.mxu0 0.0
      %889 = vmatpush1.msra.mxu0 0.0
      %890 = vmatprep.subr.mxu0 0.0
      %891 = vmatpush1.msra.mxu0 0.0
      %892 = vmatprep.subr.mxu0 0.0
      %893 = vmatpush1.msra.mxu0 0.0
      %894 = vmatprep.subr.mxu0 0.0
      %895 = vmatpush1.msra.mxu0 0.0
      %896 = vmatprep.subr.mxu0 0.0
      %897 = vmatpush1.msra.mxu0 0.0
      %898 = vmatprep.subr.mxu0 0.0
      %899 = vmatpush1.msra.mxu0 0.0
      %900 = vmatprep.subr.mxu0 0.0
      %901 = vmatpush1.msra.mxu0 0.0
      %902 = vmatprep.subr.mxu0 0.0
      %903 = vmatpush1.msra.mxu0 0.0
      %904 = vmatprep.subr.mxu0 0.0
      %905 = vmatpush1.msra.mxu0 0.0
      %906 = vmatprep.subr.mxu0 0.0
      %907 = vmatpush1.msra.mxu0 0.0
      %908 = vmatprep.subr.mxu0 0.0
      %909 = vmatpush1.msra.mxu0 0.0
      %910 = vmatprep.subr.mxu0 0.0
      %911 = vmatpush1.msra.mxu0 0.0
      %912 = vmatprep.subr.mxu0 0.0
      %913 = vmatpush1.msra.mxu0 0.0
      %914 = vmatprep.subr.mxu0 0.0
      %915 = vmatpush1.msra.mxu0 0.0
      %916 = vmatprep.mubr.f32.mxu0 0.0
      %917 = vmatmul.mubr.f32.gmra.mrb[0].mxu0 %v847
      %v918 = vpop.f32.mrb[0].mxu0
      %v919 = vadd.f32 0.0, %v918
      %v920 = vpop.f32.mrb[0].mxu0
      %v921 = vadd.f32 0.0, %v920
      %922 = vmatprep.mubr.f32.mxu0 0.0
      %923 = vmatmul.mubr.f32.gmra.mrb[0].mxu0 %v850
      %v924 = vpop.f32.mrb[0].mxu0
      %v925 = vadd.f32 0.0, %v924
      %v926 = vpop.f32.mrb[0].mxu0
      %v927 = vadd.f32 0.0, %v926
      %928 = vdwg.mxu0
      %v929 = vadd.f32 %v805, %v919
      %v930 = vadd.f32 %v806, %v921
      %v931 = vadd.f32 %v807, %v925
      %v932 = vadd.f32 %v808, %v927
      %s933 = scalar_lea.vmem %s4, 64
      %v934 = vld [vmem:[%s933] sm:$0xff]
      %v935 = vld [vmem:[%s933 + $0x8] sm:$0xff]
      %v937 = vsel %vm490, %v934, 0
      %v940 = vsel %vm490, %v935, 0
      %942 = vmatprep.subr.mxu0 %v440
      %943 = vmatpush1.msra.mxu0 %v439
      %944 = vmatprep.subr.mxu0 %v442
      %945 = vmatpush1.msra.mxu0 %v441
      %946 = vmatprep.subr.mxu0 0.0
      %947 = vmatpush1.msra.mxu0 0.0
      %948 = vmatprep.subr.mxu0 0.0
      %949 = vmatpush1.msra.mxu0 0.0
      %950 = vmatprep.subr.mxu0 0.0
      %951 = vmatpush1.msra.mxu0 0.0
      %952 = vmatprep.subr.mxu0 0.0
      %953 = vmatpush1.msra.mxu0 0.0
      %954 = vmatprep.subr.mxu0 0.0
      %955 = vmatpush1.msra.mxu0 0.0
      %956 = vmatprep.subr.mxu0 0.0
      %957 = vmatpush1.msra.mxu0 0.0
      %958 = vmatprep.subr.mxu0 0.0
      %959 = vmatpush1.msra.mxu0 0.0
      %960 = vmatprep.subr.mxu0 0.0
      %961 = vmatpush1.msra.mxu0 0.0
      %962 = vmatprep.subr.mxu0 0.0
      %963 = vmatpush1.msra.mxu0 0.0
      %964 = vmatprep.subr.mxu0 0.0
      %965 = vmatpush1.msra.mxu0 0.0
      %966 = vmatprep.subr.mxu0 0.0
      %967 = vmatpush1.msra.mxu0 0.0
      %968 = vmatprep.subr.mxu0 0.0
      %969 = vmatpush1.msra.mxu0 0.0
      %970 = vmatprep.subr.mxu0 0.0
      %971 = vmatpush1.msra.mxu0 0.0
      %972 = vmatprep.subr.mxu0 0.0
      %973 = vmatpush1.msra.mxu0 0.0
      %974 = vmatprep.subr.mxu0 0.0
      %975 = vmatpush1.msra.mxu0 0.0
      %976 = vmatprep.subr.mxu0 0.0
      %977 = vmatpush1.msra.mxu0 0.0
      %978 = vmatprep.subr.mxu0 0.0
      %979 = vmatpush1.msra.mxu0 0.0
      %980 = vmatprep.subr.mxu0 0.0
      %981 = vmatpush1.msra.mxu0 0.0
      %982 = vmatprep.subr.mxu0 0.0
      %983 = vmatpush1.msra.mxu0 0.0
      %984 = vmatprep.subr.mxu0 0.0
      %985 = vmatpush1.msra.mxu0 0.0
      %986 = vmatprep.subr.mxu0 0.0
      %987 = vmatpush1.msra.mxu0 0.0
      %988 = vmatprep.subr.mxu0 0.0
      %989 = vmatpush1.msra.mxu0 0.0
      %990 = vmatprep.subr.mxu0 0.0
      %991 = vmatpush1.msra.mxu0 0.0
      %992 = vmatprep.subr.mxu0 0.0
      %993 = vmatpush1.msra.mxu0 0.0
      %994 = vmatprep.subr.mxu0 0.0
      %995 = vmatpush1.msra.mxu0 0.0
      %996 = vmatprep.subr.mxu0 0.0
      %997 = vmatpush1.msra.mxu0 0.0
      %998 = vmatprep.subr.mxu0 0.0
      %999 = vmatpush1.msra.mxu0 0.0
      %1000 = vmatprep.subr.mxu0 0.0
      %1001 = vmatpush1.msra.mxu0 0.0
      %1002 = vmatprep.subr.mxu0 0.0
      %1003 = vmatpush1.msra.mxu0 0.0
      %1004 = vmatprep.subr.mxu0 0.0
      %1005 = vmatpush1.msra.mxu0 0.0
      %1006 = vmatprep.mubr.f32.mxu0 0.0
      %1007 = vmatmul.mubr.f32.gmra.mrb[0].mxu0 %v937
      %v1008 = vpop.f32.mrb[0].mxu0
      %v1009 = vadd.f32 0.0, %v1008
      %v1010 = vpop.f32.mrb[0].mxu0
      %v1011 = vadd.f32 0.0, %v1010
      %1012 = vmatprep.mubr.f32.mxu0 0.0
      %1013 = vmatmul.mubr.f32.gmra.mrb[0].mxu0 %v940
      %v1014 = vpop.f32.mrb[0].mxu0
      %v1015 = vadd.f32 0.0, %v1014
      %v1016 = vpop.f32.mrb[0].mxu0
      %v1017 = vadd.f32 0.0, %v1016
      %1018 = vdwg.mxu0
      %v1019 = vadd.f32 %v929, %v1009
      %v1020 = vadd.f32 %v930, %v1011
      %v1021 = vadd.f32 %v931, %v1015
      %v1022 = vadd.f32 %v932, %v1017
      %1023 = vrot.lane.b32.xlu0 %v439, 127
      %v1024 = vpop.permute.xlu0 %1023
      %1025 = vrot.lane.b32.xlu0 %v440, 127
      %v1026 = vpop.permute.xlu0 %1025
      %1027 = vrot.lane.b32.xlu0 %v441, 127
      %v1028 = vpop.permute.xlu0 %1027
      %1029 = vrot.lane.b32.xlu0 %v442, 127
      %v1030 = vpop.permute.xlu0 %1029
      %vm1031 = vcmask 1039360
      %v1032 = vsel %vm1031, %v1024, %v1026
      %v1033 = vsel %vm1031, %v1028, %v1030
      %v1038 = vsel %vm1031, %v1026, 0.0
      %v1039 = vsel %vm1031, %v1030, 0.0
      %s1040 = scalar_lea.vmem %s1, 10
      %v1041 = vld [vmem:[%s1040] sm:$0x3]
      %v1043 = vlaneseq
      %v1044 = vshrl.u32 %v1043, 7
      %v1045 = vsub.s32 0, %v1044
      %v1046 = vrot.slane %v1041, %v1045
      %v1047 = vlaneseq
      %v1048 = vshrl.u32 %v1047, 7
      %v1049 = vsub.s32 1, %v1048
      %v1050 = vrot.slane %v1041, %v1049
      %v1053 = vmul.f32 %v1032, %v1046
      %v1054 = vmul.f32 %v1038, %v1050
      %v1055 = vmul.f32 %v1033, %v1046
      %v1056 = vmul.f32 %v1039, %v1050
      %s1057 = scalar_lea.vmem %s4, 80
      %v1058 = vld [vmem:[%s1057] sm:$0xff]
      %v1059 = vld [vmem:[%s1057 + $0x8] sm:$0xff]
      %v1061 = vsel %vm490, %v1058, 0
      %v1064 = vsel %vm490, %v1059, 0
      %1066 = vmatprep.subr.mxu0 %v1054
      %1067 = vmatpush1.msra.mxu0 %v1053
      %1068 = vmatprep.subr.mxu0 %v1056
      %1069 = vmatpush1.msra.mxu0 %v1055
      %1070 = vmatprep.subr.mxu0 0.0
      %1071 = vmatpush1.msra.mxu0 0.0
      %1072 = vmatprep.subr.mxu0 0.0
      %1073 = vmatpush1.msra.mxu0 0.0
      %1074 = vmatprep.subr.mxu0 0.0
      %1075 = vmatpush1.msra.mxu0 0.0
      %1076 = vmatprep.subr.mxu0 0.0
      %1077 = vmatpush1.msra.mxu0 0.0
      %1078 = vmatprep.subr.mxu0 0.0
      %1079 = vmatpush1.msra.mxu0 0.0
      %1080 = vmatprep.subr.mxu0 0.0
      %1081 = vmatpush1.msra.mxu0 0.0
      %1082 = vmatprep.subr.mxu0 0.0
      %1083 = vmatpush1.msra.mxu0 0.0
      %1084 = vmatprep.subr.mxu0 0.0
      %1085 = vmatpush1.msra.mxu0 0.0
      %1086 = vmatprep.subr.mxu0 0.0
      %1087 = vmatpush1.msra.mxu0 0.0
      %1088 = vmatprep.subr.mxu0 0.0
      %1089 = vmatpush1.msra.mxu0 0.0
      %1090 = vmatprep.subr.mxu0 0.0
      %1091 = vmatpush1.msra.mxu0 0.0
      %1092 = vmatprep.subr.mxu0 0.0
      %1093 = vmatpush1.msra.mxu0 0.0
      %1094 = vmatprep.subr.mxu0 0.0
      %1095 = vmatpush1.msra.mxu0 0.0
      %1096 = vmatprep.subr.mxu0 0.0
      %1097 = vmatpush1.msra.mxu0 0.0
      %1098 = vmatprep.subr.mxu0 0.0
      %1099 = vmatpush1.msra.mxu0 0.0
      %1100 = vmatprep.subr.mxu0 0.0
      %1101 = vmatpush1.msra.mxu0 0.0
      %1102 = vmatprep.subr.mxu0 0.0
      %1103 = vmatpush1.msra.mxu0 0.0
      %1104 = vmatprep.subr.mxu0 0.0
      %1105 = vmatpush1.msra.mxu0 0.0
      %1106 = vmatprep.subr.mxu0 0.0
      %1107 = vmatpush1.msra.mxu0 0.0
      %1108 = vmatprep.subr.mxu0 0.0
      %1109 = vmatpush1.msra.mxu0 0.0
      %1110 = vmatprep.subr.mxu0 0.0
      %1111 = vmatpush1.msra.mxu0 0.0
      %1112 = vmatprep.subr.mxu0 0.0
      %1113 = vmatpush1.msra.mxu0 0.0
      %1114 = vmatprep.subr.mxu0 0.0
      %1115 = vmatpush1.msra.mxu0 0.0
      %1116 = vmatprep.subr.mxu0 0.0
      %1117 = vmatpush1.msra.mxu0 0.0
      %1118 = vmatprep.subr.mxu0 0.0
      %1119 = vmatpush1.msra.mxu0 0.0
      %1120 = vmatprep.subr.mxu0 0.0
      %1121 = vmatpush1.msra.mxu0 0.0
      %1122 = vmatprep.subr.mxu0 0.0
      %1123 = vmatpush1.msra.mxu0 0.0
      %1124 = vmatprep.subr.mxu0 0.0
      %1125 = vmatpush1.msra.mxu0 0.0
      %1126 = vmatprep.subr.mxu0 0.0
      %1127 = vmatpush1.msra.mxu0 0.0
      %1128 = vmatprep.subr.mxu0 0.0
      %1129 = vmatpush1.msra.mxu0 0.0
      %1130 = vmatprep.mubr.f32.mxu0 0.0
      %1131 = vmatmul.mubr.f32.gmra.mrb[0].mxu0 %v1061
      %v1132 = vpop.f32.mrb[0].mxu0
      %v1133 = vadd.f32 0.0, %v1132
      %v1134 = vpop.f32.mrb[0].mxu0
      %v1135 = vadd.f32 0.0, %v1134
      %1136 = vmatprep.mubr.f32.mxu0 0.0
      %1137 = vmatmul.mubr.f32.gmra.mrb[0].mxu0 %v1064
      %v1138 = vpop.f32.mrb[0].mxu0
      %v1139 = vadd.f32 0.0, %v1138
      %v1140 = vpop.f32.mrb[0].mxu0
      %v1141 = vadd.f32 0.0, %v1140
      %1142 = vdwg.mxu0
      %v1143 = vadd.f32 %v1019, %v1133
      %v1144 = vadd.f32 %v1020, %v1135
      %v1145 = vadd.f32 %v1021, %v1139
      %v1146 = vadd.f32 %v1022, %v1141
      %1147 = vrot.lane.b32.xlu0 %v439, 113
      %v1148 = vpop.permute.xlu0 %1147
      %1149 = vrot.lane.b32.xlu0 %v440, 113
      %v1150 = vpop.permute.xlu0 %1149
      %1151 = vrot.lane.b32.xlu0 %v441, 113
      %v1152 = vpop.permute.xlu0 %1151
      %1153 = vrot.lane.b32.xlu0 %v442, 113
      %v1154 = vpop.permute.xlu0 %1153
      %vm1155 = vcmask 924672
      %v1156 = vsel %vm1155, %v1148, %v1150
      %v1157 = vsel %vm1155, %v1152, %v1154
      %v1162 = vsel %vm1155, %v1150, 0.0
      %v1163 = vsel %vm1155, %v1154, 0.0
      %s1164 = scalar_lea.vmem %s1, 12
      %v1165 = vld [vmem:[%s1164] sm:$0x3]
      %v1167 = vlaneseq
      %v1168 = vshrl.u32 %v1167, 7
      %v1169 = vsub.s32 0, %v1168
      %v1170 = vrot.slane %v1165, %v1169
      %v1171 = vlaneseq
      %v1172 = vshrl.u32 %v1171, 7
      %v1173 = vsub.s32 1, %v1172
      %v1174 = vrot.slane %v1165, %v1173
      %v1177 = vmul.f32 %v1156, %v1170
      %v1178 = vmul.f32 %v1162, %v1174
      %v1179 = vmul.f32 %v1157, %v1170
      %v1180 = vmul.f32 %v1163, %v1174
      %s1181 = scalar_lea.vmem %s4, 96
      %v1182 = vld [vmem:[%s1181] sm:$0xff]
      %v1183 = vld [vmem:[%s1181 + $0x8] sm:$0xff]
      %v1185 = vsel %vm490, %v1182, 0
      %v1188 = vsel %vm490, %v1183, 0
      %1190 = vmatprep.subr.mxu0 %v1178
      %1191 = vmatpush1.msra.mxu0 %v1177
      %1192 = vmatprep.subr.mxu0 %v1180
      %1193 = vmatpush1.msra.mxu0 %v1179
      %1194 = vmatprep.subr.mxu0 0.0
      %1195 = vmatpush1.msra.mxu0 0.0
      %1196 = vmatprep.subr.mxu0 0.0
      %1197 = vmatpush1.msra.mxu0 0.0
      %1198 = vmatprep.subr.mxu0 0.0
      %1199 = vmatpush1.msra.mxu0 0.0
      %1200 = vmatprep.subr.mxu0 0.0
      %1201 = vmatpush1.msra.mxu0 0.0
      %1202 = vmatprep.subr.mxu0 0.0
      %1203 = vmatpush1.msra.mxu0 0.0
      %1204 = vmatprep.subr.mxu0 0.0
      %1205 = vmatpush1.msra.mxu0 0.0
      %1206 = vmatprep.subr.mxu0 0.0
      %1207 = vmatpush1.msra.mxu0 0.0
      %1208 = vmatprep.subr.mxu0 0.0
      %1209 = vmatpush1.msra.mxu0 0.0
      %1210 = vmatprep.subr.mxu0 0.0
      %1211 = vmatpush1.msra.mxu0 0.0
      %1212 = vmatprep.subr.mxu0 0.0
      %1213 = vmatpush1.msra.mxu0 0.0
      %1214 = vmatprep.subr.mxu0 0.0
      %1215 = vmatpush1.msra.mxu0 0.0
      %1216 = vmatprep.subr.mxu0 0.0
      %1217 = vmatpush1.msra.mxu0 0.0
      %1218 = vmatprep.subr.mxu0 0.0
      %1219 = vmatpush1.msra.mxu0 0.0
      %1220 = vmatprep.subr.mxu0 0.0
      %1221 = vmatpush1.msra.mxu0 0.0
      %1222 = vmatprep.subr.mxu0 0.0
      %1223 = vmatpush1.msra.mxu0 0.0
      %1224 = vmatprep.subr.mxu0 0.0
      %1225 = vmatpush1.msra.mxu0 0.0
      %1226 = vmatprep.subr.mxu0 0.0
      %1227 = vmatpush1.msra.mxu0 0.0
      %1228 = vmatprep.subr.mxu0 0.0
      %1229 = vmatpush1.msra.mxu0 0.0
      %1230 = vmatprep.subr.mxu0 0.0
      %1231 = vmatpush1.msra.mxu0 0.0
      %1232 = vmatprep.subr.mxu0 0.0
      %1233 = vmatpush1.msra.mxu0 0.0
      %1234 = vmatprep.subr.mxu0 0.0
      %1235 = vmatpush1.msra.mxu0 0.0
      %1236 = vmatprep.subr.mxu0 0.0
      %1237 = vmatpush1.msra.mxu0 0.0
      %1238 = vmatprep.subr.mxu0 0.0
      %1239 = vmatpush1.msra.mxu0 0.0
      %1240 = vmatprep.subr.mxu0 0.0
      %1241 = vmatpush1.msra.mxu0 0.0
      %1242 = vmatprep.subr.mxu0 0.0
      %1243 = vmatpush1.msra.mxu0 0.0
      %1244 = vmatprep.subr.mxu0 0.0
      %1245 = vmatpush1.msra.mxu0 0.0
      %1246 = vmatprep.subr.mxu0 0.0
      %1247 = vmatpush1.msra.mxu0 0.0
      %1248 = vmatprep.subr.mxu0 0.0
      %1249 = vmatpush1.msra.mxu0 0.0
      %1250 = vmatprep.subr.mxu0 0.0
      %1251 = vmatpush1.msra.mxu0 0.0
      %1252 = vmatprep.subr.mxu0 0.0
      %1253 = vmatpush1.msra.mxu0 0.0
      %1254 = vmatprep.mubr.f32.mxu0 0.0
      %1255 = vmatmul.mubr.f32.gmra.mrb[0].mxu0 %v1185
      %v1256 = vpop.f32.mrb[0].mxu0
      %v1257 = vadd.f32 0.0, %v1256
      %v1258 = vpop.f32.mrb[0].mxu0
      %v1259 = vadd.f32 0.0, %v1258
      %1260 = vmatprep.mubr.f32.mxu0 0.0
      %1261 = vmatmul.mubr.f32.gmra.mrb[0].mxu0 %v1188
      %v1262 = vpop.f32.mrb[0].mxu0
      %v1263 = vadd.f32 0.0, %v1262
      %v1264 = vpop.f32.mrb[0].mxu0
      %v1265 = vadd.f32 0.0, %v1264
      %1266 = vdwg.mxu0
      %v1267 = vadd.f32 %v1143, %v1257
      %v1268 = vadd.f32 %v1144, %v1259
      %v1269 = vadd.f32 %v1145, %v1263
      %v1270 = vadd.f32 %v1146, %v1265
      %1271 = vrot.lane.b32.xlu0 %v439, 112
      %v1272 = vpop.permute.xlu0 %1271
      %1273 = vrot.lane.b32.xlu0 %v440, 112
      %v1274 = vpop.permute.xlu0 %1273
      %1275 = vrot.lane.b32.xlu0 %v441, 112
      %v1276 = vpop.permute.xlu0 %1275
      %1277 = vrot.lane.b32.xlu0 %v442, 112
      %v1278 = vpop.permute.xlu0 %1277
      %vm1279 = vcmask 916480
      %v1280 = vsel %vm1279, %v1272, %v1274
      %v1281 = vsel %vm1279, %v1276, %v1278
      %v1286 = vsel %vm1279, %v1274, 0.0
      %v1287 = vsel %vm1279, %v1278, 0.0
      %s1288 = scalar_lea.vmem %s1, 14
      %v1289 = vld [vmem:[%s1288] sm:$0x3]
      %v1291 = vlaneseq
      %v1292 = vshrl.u32 %v1291, 7
      %v1293 = vsub.s32 0, %v1292
      %v1294 = vrot.slane %v1289, %v1293
      %v1295 = vlaneseq
      %v1296 = vshrl.u32 %v1295, 7
      %v1297 = vsub.s32 1, %v1296
      %v1298 = vrot.slane %v1289, %v1297
      %v1301 = vmul.f32 %v1280, %v1294
      %v1302 = vmul.f32 %v1286, %v1298
      %v1303 = vmul.f32 %v1281, %v1294
      %v1304 = vmul.f32 %v1287, %v1298
      %s1305 = scalar_lea.vmem %s4, 112
      %v1306 = vld [vmem:[%s1305] sm:$0xff]
      %v1307 = vld [vmem:[%s1305 + $0x8] sm:$0xff]
      %v1309 = vsel %vm490, %v1306, 0
      %v1312 = vsel %vm490, %v1307, 0
      %1314 = vmatprep.subr.mxu0 %v1302
      %1315 = vmatpush1.msra.mxu0 %v1301
      %1316 = vmatprep.subr.mxu0 %v1304
      %1317 = vmatpush1.msra.mxu0 %v1303
      %1318 = vmatprep.subr.mxu0 0.0
      %1319 = vmatpush1.msra.mxu0 0.0
      %1320 = vmatprep.subr.mxu0 0.0
      %1321 = vmatpush1.msra.mxu0 0.0
      %1322 = vmatprep.subr.mxu0 0.0
      %1323 = vmatpush1.msra.mxu0 0.0
      %1324 = vmatprep.subr.mxu0 0.0
      %1325 = vmatpush1.msra.mxu0 0.0
      %1326 = vmatprep.subr.mxu0 0.0
      %1327 = vmatpush1.msra.mxu0 0.0
      %1328 = vmatprep.subr.mxu0 0.0
      %1329 = vmatpush1.msra.mxu0 0.0
      %1330 = vmatprep.subr.mxu0 0.0
      %1331 = vmatpush1.msra.mxu0 0.0
      %1332 = vmatprep.subr.mxu0 0.0
      %1333 = vmatpush1.msra.mxu0 0.0
      %1334 = vmatprep.subr.mxu0 0.0
      %1335 = vmatpush1.msra.mxu0 0.0
      %1336 = vmatprep.subr.mxu0 0.0
      %1337 = vmatpush1.msra.mxu0 0.0
      %1338 = vmatprep.subr.mxu0 0.0
      %1339 = vmatpush1.msra.mxu0 0.0
      %1340 = vmatprep.subr.mxu0 0.0
      %1341 = vmatpush1.msra.mxu0 0.0
      %1342 = vmatprep.subr.mxu0 0.0
      %1343 = vmatpush1.msra.mxu0 0.0
      %1344 = vmatprep.subr.mxu0 0.0
      %1345 = vmatpush1.msra.mxu0 0.0
      %1346 = vmatprep.subr.mxu0 0.0
      %1347 = vmatpush1.msra.mxu0 0.0
      %1348 = vmatprep.subr.mxu0 0.0
      %1349 = vmatpush1.msra.mxu0 0.0
      %1350 = vmatprep.subr.mxu0 0.0
      %1351 = vmatpush1.msra.mxu0 0.0
      %1352 = vmatprep.subr.mxu0 0.0
      %1353 = vmatpush1.msra.mxu0 0.0
      %1354 = vmatprep.subr.mxu0 0.0
      %1355 = vmatpush1.msra.mxu0 0.0
      %1356 = vmatprep.subr.mxu0 0.0
      %1357 = vmatpush1.msra.mxu0 0.0
      %1358 = vmatprep.subr.mxu0 0.0
      %1359 = vmatpush1.msra.mxu0 0.0
      %1360 = vmatprep.subr.mxu0 0.0
      %1361 = vmatpush1.msra.mxu0 0.0
      %1362 = vmatprep.subr.mxu0 0.0
      %1363 = vmatpush1.msra.mxu0 0.0
      %1364 = vmatprep.subr.mxu0 0.0
      %1365 = vmatpush1.msra.mxu0 0.0
      %1366 = vmatprep.subr.mxu0 0.0
      %1367 = vmatpush1.msra.mxu0 0.0
      %1368 = vmatprep.subr.mxu0 0.0
      %1369 = vmatpush1.msra.mxu0 0.0
      %1370 = vmatprep.subr.mxu0 0.0
      %1371 = vmatpush1.msra.mxu0 0.0
      %1372 = vmatprep.subr.mxu0 0.0
      %1373 = vmatpush1.msra.mxu0 0.0
      %1374 = vmatprep.subr.mxu0 0.0
      %1375 = vmatpush1.msra.mxu0 0.0
      %1376 = vmatprep.subr.mxu0 0.0
      %1377 = vmatpush1.msra.mxu0 0.0
      %1378 = vmatprep.mubr.f32.mxu0 0.0
      %1379 = vmatmul.mubr.f32.gmra.mrb[0].mxu0 %v1309
      %v1380 = vpop.f32.mrb[0].mxu0
      %v1381 = vadd.f32 0.0, %v1380
      %v1382 = vpop.f32.mrb[0].mxu0
      %v1383 = vadd.f32 0.0, %v1382
      %1384 = vmatprep.mubr.f32.mxu0 0.0
      %1385 = vmatmul.mubr.f32.gmra.mrb[0].mxu0 %v1312
      %v1386 = vpop.f32.mrb[0].mxu0
      %v1387 = vadd.f32 0.0, %v1386
      %v1388 = vpop.f32.mrb[0].mxu0
      %v1389 = vadd.f32 0.0, %v1388
      %1390 = vdwg.mxu0
      %v1391 = vadd.f32 %v1267, %v1381
      %v1392 = vadd.f32 %v1268, %v1383
      %v1393 = vadd.f32 %v1269, %v1387
      %v1394 = vadd.f32 %v1270, %v1389
      %1395 = vrot.lane.b32.xlu0 %v439, 111
      %v1396 = vpop.permute.xlu0 %1395
      %1397 = vrot.lane.b32.xlu0 %v440, 111
      %v1398 = vpop.permute.xlu0 %1397
      %1399 = vrot.lane.b32.xlu0 %v441, 111
      %v1400 = vpop.permute.xlu0 %1399
      %1401 = vrot.lane.b32.xlu0 %v442, 111
      %v1402 = vpop.permute.xlu0 %1401
      %vm1403 = vcmask 908288
      %v1404 = vsel %vm1403, %v1396, %v1398
      %v1405 = vsel %vm1403, %v1400, %v1402
      %v1410 = vsel %vm1403, %v1398, 0.0
      %v1411 = vsel %vm1403, %v1402, 0.0
      %s1412 = scalar_lea.vmem %s1, 16
      %v1413 = vld [vmem:[%s1412] sm:$0x3]
      %v1415 = vlaneseq
      %v1416 = vshrl.u32 %v1415, 7
      %v1417 = vsub.s32 0, %v1416
      %v1418 = vrot.slane %v1413, %v1417
      %v1419 = vlaneseq
      %v1420 = vshrl.u32 %v1419, 7
      %v1421 = vsub.s32 1, %v1420
      %v1422 = vrot.slane %v1413, %v1421
      %v1425 = vmul.f32 %v1404, %v1418
      %v1426 = vmul.f32 %v1410, %v1422
      %v1427 = vmul.f32 %v1405, %v1418
      %v1428 = vmul.f32 %v1411, %v1422
      %s1429 = scalar_lea.vmem %s4, 128
      %v1430 = vld [vmem:[%s1429] sm:$0xff]
      %v1431 = vld [vmem:[%s1429 + $0x8] sm:$0xff]
      %v1433 = vsel %vm490, %v1430, 0
      %v1436 = vsel %vm490, %v1431, 0
      %1438 = vmatprep.subr.mxu0 %v1426
      %1439 = vmatpush1.msra.mxu0 %v1425
      %1440 = vmatprep.subr.mxu0 %v1428
      %1441 = vmatpush1.msra.mxu0 %v1427
      %1442 = vmatprep.subr.mxu0 0.0
      %1443 = vmatpush1.msra.mxu0 0.0
      %1444 = vmatprep.subr.mxu0 0.0
      %1445 = vmatpush1.msra.mxu0 0.0
      %1446 = vmatprep.subr.mxu0 0.0
      %1447 = vmatpush1.msra.mxu0 0.0
      %1448 = vmatprep.subr.mxu0 0.0
      %1449 = vmatpush1.msra.mxu0 0.0
      %1450 = vmatprep.subr.mxu0 0.0
      %1451 = vmatpush1.msra.mxu0 0.0
      %1452 = vmatprep.subr.mxu0 0.0
      %1453 = vmatpush1.msra.mxu0 0.0
      %1454 = vmatprep.subr.mxu0 0.0
      %1455 = vmatpush1.msra.mxu0 0.0
      %1456 = vmatprep.subr.mxu0 0.0
      %1457 = vmatpush1.msra.mxu0 0.0
      %1458 = vmatprep.subr.mxu0 0.0
      %1459 = vmatpush1.msra.mxu0 0.0
      %1460 = vmatprep.subr.mxu0 0.0
      %1461 = vmatpush1.msra.mxu0 0.0
      %1462 = vmatprep.subr.mxu0 0.0
      %1463 = vmatpush1.msra.mxu0 0.0
      %1464 = vmatprep.subr.mxu0 0.0
      %1465 = vmatpush1.msra.mxu0 0.0
      %1466 = vmatprep.subr.mxu0 0.0
      %1467 = vmatpush1.msra.mxu0 0.0
      %1468 = vmatprep.subr.mxu0 0.0
      %1469 = vmatpush1.msra.mxu0 0.0
      %1470 = vmatprep.subr.mxu0 0.0
      %1471 = vmatpush1.msra.mxu0 0.0
      %1472 = vmatprep.subr.mxu0 0.0
      %1473 = vmatpush1.msra.mxu0 0.0
      %1474 = vmatprep.subr.mxu0 0.0
      %1475 = vmatpush1.msra.mxu0 0.0
      %1476 = vmatprep.subr.mxu0 0.0
      %1477 = vmatpush1.msra.mxu0 0.0
      %1478 = vmatprep.subr.mxu0 0.0
      %1479 = vmatpush1.msra.mxu0 0.0
      %1480 = vmatprep.subr.mxu0 0.0
      %1481 = vmatpush1.msra.mxu0 0.0
      %1482 = vmatprep.subr.mxu0 0.0
      %1483 = vmatpush1.msra.mxu0 0.0
      %1484 = vmatprep.subr.mxu0 0.0
      %1485 = vmatpush1.msra.mxu0 0.0
      %1486 = vmatprep.subr.mxu0 0.0
      %1487 = vmatpush1.msra.mxu0 0.0
      %1488 = vmatprep.subr.mxu0 0.0
      %1489 = vmatpush1.msra.mxu0 0.0
      %1490 = vmatprep.subr.mxu0 0.0
      %1491 = vmatpush1.msra.mxu0 0.0
      %1492 = vmatprep.subr.mxu0 0.0
      %1493 = vmatpush1.msra.mxu0 0.0
      %1494 = vmatprep.subr.mxu0 0.0
      %1495 = vmatpush1.msra.mxu0 0.0
      %1496 = vmatprep.subr.mxu0 0.0
      %1497 = vmatpush1.msra.mxu0 0.0
      %1498 = vmatprep.subr.mxu0 0.0
      %1499 = vmatpush1.msra.mxu0 0.0
      %1500 = vmatprep.subr.mxu0 0.0
      %1501 = vmatpush1.msra.mxu0 0.0
      %1502 = vmatprep.mubr.f32.mxu0 0.0
      %1503 = vmatmul.mubr.f32.gmra.mrb[0].mxu0 %v1433
      %v1504 = vpop.f32.mrb[0].mxu0
      %v1505 = vadd.f32 0.0, %v1504
      %v1506 = vpop.f32.mrb[0].mxu0
      %v1507 = vadd.f32 0.0, %v1506
      %1508 = vmatprep.mubr.f32.mxu0 0.0
      %1509 = vmatmul.mubr.f32.gmra.mrb[0].mxu0 %v1436
      %v1510 = vpop.f32.mrb[0].mxu0
      %v1511 = vadd.f32 0.0, %v1510
      %v1512 = vpop.f32.mrb[0].mxu0
      %v1513 = vadd.f32 0.0, %v1512
      %1514 = vdwg.mxu0
      %v1515 = vadd.f32 %v1391, %v1505
      %v1516 = vadd.f32 %v1392, %v1507
      %v1517 = vadd.f32 %v1393, %v1511
      %v1518 = vadd.f32 %v1394, %v1513
      %v1519 = vld [vmem:[%s5] sm:$0xff]
      %v1520 = vld [vmem:[%s5 + $0x8] sm:$0xff]
      %1522 = vset.pattern.permute.xlu0 0
      %1523 = vperm.xlu0 %1522, %v1519
      %v1524 = vpop.permute.xlu0 %1523
      %1527 = vset.pattern.permute.xlu0 0
      %1528 = vperm.xlu0 %1527, %v1520
      %v1529 = vpop.permute.xlu0 %1528
      %v1531 = vadd.f32 %v1515, %v1524
      %v1532 = vadd.f32 %v1516, %v1524
      %v1533 = vadd.f32 %v1517, %v1529
      %v1534 = vadd.f32 %v1518, %v1529
      %v1535 = vmax.f32 %v1531, 0.0
      %v1536 = vmax.f32 %v1532, 0.0
      %v1537 = vmax.f32 %v1533, 0.0
      %v1538 = vmax.f32 %v1534, 0.0
      %v1539 = vld [vmem:[%s6] sm:$0xff]
      %v1540 = vld [vmem:[%s6 + $0x8] sm:$0xff]
      %v1541 = vld [vmem:[%s6 + $0x10] sm:$0xff]
      %v1542 = vld [vmem:[%s6 + $0x18] sm:$0xff]
      %v1543 = vld [vmem:[%s7] sm:$0xff]
      %v1544 = vld [vmem:[%s7 + $0x8] sm:$0xff]
      %v1545 = vld [vmem:[%s7 + $0x10] sm:$0xff]
      %v1546 = vld [vmem:[%s7 + $0x18] sm:$0xff]
      %1548 = vset.pattern.permute.xlu0 0
      %1549 = vperm.xlu0 %1548, %v1543
      %v1550 = vpop.permute.xlu0 %1549
      %1553 = vset.pattern.permute.xlu0 0
      %1554 = vperm.xlu0 %1553, %v1544
      %v1555 = vpop.permute.xlu0 %1554
      %1558 = vset.pattern.permute.xlu0 0
      %1559 = vperm.xlu0 %1558, %v1545
      %v1560 = vpop.permute.xlu0 %1559
      %1563 = vset.pattern.permute.xlu0 0
      %1564 = vperm.xlu0 %1563, %v1546
      %v1565 = vpop.permute.xlu0 %1564
      %v1568 = vsel %vm490, %v1539, 0
      %v1571 = vsel %vm490, %v1540, 0
      %v1574 = vsel %vm490, %v1541, 0
      %v1577 = vsel %vm490, %v1542, 0
      %1579 = vmatprep.subr.mxu0 %v1536
      %1580 = vmatpush1.msra.mxu0 %v1535
      %1581 = vmatprep.subr.mxu0 %v1538
      %1582 = vmatpush1.msra.mxu0 %v1537
      %1583 = vmatprep.subr.mxu0 0.0
      %1584 = vmatpush1.msra.mxu0 0.0
      %1585 = vmatprep.subr.mxu0 0.0
      %1586 = vmatpush1.msra.mxu0 0.0
      %1587 = vmatprep.subr.mxu0 0.0
      %1588 = vmatpush1.msra.mxu0 0.0
      %1589 = vmatprep.subr.mxu0 0.0
      %1590 = vmatpush1.msra.mxu0 0.0
      %1591 = vmatprep.subr.mxu0 0.0
      %1592 = vmatpush1.msra.mxu0 0.0
      %1593 = vmatprep.subr.mxu0 0.0
      %1594 = vmatpush1.msra.mxu0 0.0
      %1595 = vmatprep.subr.mxu0 0.0
      %1596 = vmatpush1.msra.mxu0 0.0
      %1597 = vmatprep.subr.mxu0 0.0
      %1598 = vmatpush1.msra.mxu0 0.0
      %1599 = vmatprep.subr.mxu0 0.0
      %1600 = vmatpush1.msra.mxu0 0.0
      %1601 = vmatprep.subr.mxu0 0.0
      %1602 = vmatpush1.msra.mxu0 0.0
      %1603 = vmatprep.subr.mxu0 0.0
      %1604 = vmatpush1.msra.mxu0 0.0
      %1605 = vmatprep.subr.mxu0 0.0
      %1606 = vmatpush1.msra.mxu0 0.0
      %1607 = vmatprep.subr.mxu0 0.0
      %1608 = vmatpush1.msra.mxu0 0.0
      %1609 = vmatprep.subr.mxu0 0.0
      %1610 = vmatpush1.msra.mxu0 0.0
      %1611 = vmatprep.subr.mxu0 0.0
      %1612 = vmatpush1.msra.mxu0 0.0
      %1613 = vmatprep.subr.mxu0 0.0
      %1614 = vmatpush1.msra.mxu0 0.0
      %1615 = vmatprep.subr.mxu0 0.0
      %1616 = vmatpush1.msra.mxu0 0.0
      %1617 = vmatprep.subr.mxu0 0.0
      %1618 = vmatpush1.msra.mxu0 0.0
      %1619 = vmatprep.subr.mxu0 0.0
      %1620 = vmatpush1.msra.mxu0 0.0
      %1621 = vmatprep.subr.mxu0 0.0
      %1622 = vmatpush1.msra.mxu0 0.0
      %1623 = vmatprep.subr.mxu0 0.0
      %1624 = vmatpush1.msra.mxu0 0.0
      %1625 = vmatprep.subr.mxu0 0.0
      %1626 = vmatpush1.msra.mxu0 0.0
      %1627 = vmatprep.subr.mxu0 0.0
      %1628 = vmatpush1.msra.mxu0 0.0
      %1629 = vmatprep.subr.mxu0 0.0
      %1630 = vmatpush1.msra.mxu0 0.0
      %1631 = vmatprep.subr.mxu0 0.0
      %1632 = vmatpush1.msra.mxu0 0.0
      %1633 = vmatprep.subr.mxu0 0.0
      %1634 = vmatpush1.msra.mxu0 0.0
      %1635 = vmatprep.subr.mxu0 0.0
      %1636 = vmatpush1.msra.mxu0 0.0
      %1637 = vmatprep.subr.mxu0 0.0
      %1638 = vmatpush1.msra.mxu0 0.0
      %1639 = vmatprep.subr.mxu0 0.0
      %1640 = vmatpush1.msra.mxu0 0.0
      %1641 = vmatprep.subr.mxu0 0.0
      %1642 = vmatpush1.msra.mxu0 0.0
      %1643 = vmatprep.mubr.f32.mxu0 0.0
      %1644 = vmatmul.mubr.f32.gmra.mrb[0].mxu0 %v1568
      %v1645 = vpop.f32.mrb[0].mxu0
      %v1646 = vadd.f32 %v1550, %v1645
      %v1647 = vpop.f32.mrb[0].mxu0
      %v1648 = vadd.f32 %v1550, %v1647
      %1649 = vmatprep.mubr.f32.mxu0 0.0
      %1650 = vmatmul.mubr.f32.gmra.mrb[0].mxu0 %v1571
      %v1651 = vpop.f32.mrb[0].mxu0
      %v1652 = vadd.f32 %v1555, %v1651
      %v1653 = vpop.f32.mrb[0].mxu0
      %v1654 = vadd.f32 %v1555, %v1653
      %1655 = vmatprep.mubr.f32.mxu0 0.0
      %1656 = vmatmul.mubr.f32.gmra.mrb[0].mxu0 %v1574
      %v1657 = vpop.f32.mrb[0].mxu0
      %v1658 = vadd.f32 %v1560, %v1657
      %v1659 = vpop.f32.mrb[0].mxu0
      %v1660 = vadd.f32 %v1560, %v1659
      %1661 = vmatprep.mubr.f32.mxu0 0.0
      %1662 = vmatmul.mubr.f32.gmra.mrb[0].mxu0 %v1577
      %v1663 = vpop.f32.mrb[0].mxu0
      %v1664 = vadd.f32 %v1565, %v1663
      %v1665 = vpop.f32.mrb[0].mxu0
      %v1666 = vadd.f32 %v1565, %v1665
      %1667 = vdwg.mxu0
      %v1668 = vld [vmem:[%s8] sm:$0xff]
      %v1669 = vld [vmem:[%s8 + $0x8] sm:$0xff]
      %v1670 = vld [vmem:[%s8 + $0x10] sm:$0xff]
      %v1671 = vld [vmem:[%s8 + $0x18] sm:$0xff]
      %1673 = vset.pattern.permute.xlu0 0
      %1674 = vperm.xlu0 %1673, %v1668
      %v1675 = vpop.permute.xlu0 %1674
      %1678 = vset.pattern.permute.xlu0 0
      %1679 = vperm.xlu0 %1678, %v1669
      %v1680 = vpop.permute.xlu0 %1679
      %1683 = vset.pattern.permute.xlu0 0
      %1684 = vperm.xlu0 %1683, %v1670
      %v1685 = vpop.permute.xlu0 %1684
      %1688 = vset.pattern.permute.xlu0 0
      %1689 = vperm.xlu0 %1688, %v1671
      %v1690 = vpop.permute.xlu0 %1689
      %v1692 = vmul.f32 %v1675, %v333
      %v1693 = vmul.f32 %v1675, %v334
      %v1694 = vmul.f32 %v1680, %v335
      %v1695 = vmul.f32 %v1680, %v336
      %v1696 = vmul.f32 %v1685, %v337
      %v1697 = vmul.f32 %v1685, %v338
      %v1698 = vmul.f32 %v1690, %v339
      %v1699 = vmul.f32 %v1690, %v340
      %v1700 = vadd.f32 %v1646, %v1692
      %v1701 = vadd.f32 %v1648, %v1693
      %v1702 = vadd.f32 %v1652, %v1694
      %v1703 = vadd.f32 %v1654, %v1695
      %v1704 = vadd.f32 %v1658, %v1696
      %v1705 = vadd.f32 %v1660, %v1697
      %v1706 = vadd.f32 %v1664, %v1698
      %v1707 = vadd.f32 %v1666, %v1699
      %v1708 = vmax.f32 %v1700, 0.0
      %v1709 = vmax.f32 %v1701, 0.0
      %v1710 = vmax.f32 %v1702, 0.0
      %v1711 = vmax.f32 %v1703, 0.0
      %v1712 = vmax.f32 %v1704, 0.0
      %v1713 = vmax.f32 %v1705, 0.0
      %v1714 = vmax.f32 %v1706, 0.0
      %v1715 = vmax.f32 %v1707, 0.0
      %1716 = vst [vmem:[%s332] sm:$0xff] %v1708
      %1717 = vst [vmem:[%s332 + $0x8] sm:$0xff] %v1709
      %1718 = vst [vmem:[%s332 + $0x10] sm:$0xff] %v1710
      %1719 = vst [vmem:[%s332 + $0x18] sm:$0xff] %v1711
      %1720 = vst [vmem:[%s332 + $0x20] sm:$0xff] %v1712
      %1721 = vst [vmem:[%s332 + $0x28] sm:$0xff] %v1713
      %1722 = vst [vmem:[%s332 + $0x30] sm:$0xff] %v1714
      %1723 = vst [vmem:[%s332 + $0x38] sm:$0xff] %v1715
      %p1724 = scmp.lt.s32.totalorder %s20, 1
      %s1725 = scalar_select %p1724, %s20, 1
      %s1726 = smul.addr %s1725, 8
      %s1727 = smul.addr %s1726, 8
      %s1728 = scalar_lea.vmem %s9, %s1727
      // Predicated region
      $region57: #{hand2d_to_3d_forward.30} parent=55 // pred_check
        %p1729 = pneg %p232
      $region58: #{hand2d_to_3d_forward.30} parent=55 // pred_check_branch
        %1731 = sbr.rel (%p1729) target = $region60
      $region59: #{hand2d_to_3d_forward.30} parent=55 // pred_region
        _
      $region60: #{hand2d_to_3d_forward.30} parent=55 // pred_fallthru
        _
    $region56: #{hand2d_to_3d_forward.30} parent=5 // pred_fallthru
      _
    %p1732 = scmp.le.s32.totalorder 2, %s15
    // Predicated region
    $region61: #{hand2d_to_3d_forward.30} parent=5 // pred_check
      %p1733 = pneg %p1732
    $region62: #{hand2d_to_3d_forward.30} parent=5 // pred_check_branch
      %1735 = sbr.rel (%p1733) target = $region64
    $region63: #{hand2d_to_3d_forward.30} parent=5 // pred_region
      %s1736 = ssub.s32 %s15, 2
      // Predicated region
      $region65: #{hand2d_to_3d_forward.30} parent=63 // pred_check
        %p1737 = pneg %p238
      $region66: #{hand2d_to_3d_forward.30} parent=63 // pred_check_branch
        %1739 = sbr.rel (%p1737) target = $region68
      $region67: #{hand2d_to_3d_forward.30} parent=63 // pred_region
        %p1740 = scmp.lt.s32.totalorder %s21, 1
        %s1741 = scalar_select %p1740, %s21, 1
        %s1742 = smul.addr %s1741, 8
        %s1743 = smul.addr %s1742, 8
        %s1744 = scalar_lea.vmem %s9, %s1743
      $region68: #{hand2d_to_3d_forward.30} parent=63 // pred_fallthru
        _
    $region64: #{hand2d_to_3d_forward.30} parent=5 // pred_fallthru
      _
  $region6: #{hand2d_to_3d_forward.30} parent=0 // loop_footer
    %s19 = sadd.s32 1, %s15
  $region7: #{hand2d_to_3d_forward.30} parent=0 // loop_footer_branch
    %14 = sbr.rel target = $region3
  $region8: #{hand2d_to_3d_forward.30} parent=0 // loop_exit
    _

</llo_original>
